<compile_context>
chip_gen: v7x
topology: tpu7x:2x2x1
jax: 0.10.0
libtpu: 0.0.40
codegen_flags: <defaults>
</compile_context>

<pallas_src>
import functools

import jax
import jax.numpy as jnp
from jax.experimental import pallas as pl
from jax.experimental.pallas import tpu as pltpu

EPS = 1e-5
_PAD = 8  # sublane-tile-aligned zero-halo offset for the conv2 scratch


def _rescnn_kernel(xp_ref, w1_ref, sc1_ref, sh1_ref, w2_ref, sc2_ref, sh2_ref,
                   wr_ref, br_ref, o_ref, h1pad_scr, *, fuse_taps):
    """Fused ResCNN_block forward for one batch element.

    xp_ref : (H+2, W+2, Cin)   zero-padded input, bf16
    w1_ref : (9*Cin, Cout)     conv1 taps packed as (tap*Cin + ci, co), bf16
    w2_ref : (9*Cout, Cout)    conv2 taps packed likewise, bf16
    sc*/sh*: (1, Cout)         folded (conv bias + BatchNorm) scale / shift, f32
    wr_ref : (Cin, Cout)       1x1 residual conv weight, bf16
    br_ref : (1, Cout)         1x1 residual conv bias, f32
    o_ref  : (H*W, Cout)       output, f32
    h1pad_scr: VMEM scratch holding the zero-haloed conv1 activation, f32
    """
    hp, wp, cin = xp_ref.shape
    h, w = hp - 2, wp - 2
    s = h * w
    cout = o_ref.shape[1]

    def conv3x3(src, off, c, w_packed_ref):
        # src: zero-haloed f32 value; output pixel (i,j) reads src[off+i+kh, off+j+kw].
        # Windows are built from the VMEM-resident block (never materialized in HBM).
        wins = []
        for kh in range(3):
            for kw in range(3):
                win = src[off + kh:off + kh + h, off + kw:off + kw + w, :]
                wins.append(win.reshape(s, c))
        if fuse_taps:
            # All 9 taps + channels in ONE MXU contraction (K = 9*c) instead of
            # 9 tiny K=c matmuls.
            patches = jnp.concatenate(wins, axis=-1)                 # (S, 9c) f32
            return jnp.dot(patches.astype(jnp.bfloat16), w_packed_ref[...],
                           preferred_element_type=jnp.float32)       # (S, Cout) f32
        # Fallback: accumulate 9 matmuls (row-slices of the packed weights are
        # 8-aligned along sublanes).
        acc = jnp.zeros((s, cout), jnp.float32)
        for k in range(9):
            acc = acc + jnp.dot(wins[k].astype(jnp.bfloat16),
                                w_packed_ref[k * c:(k + 1) * c, :],
                                preferred_element_type=jnp.float32)
        return acc

    # Load the padded input once (bf16 in HBM -> f32 in registers).
    xp = xp_ref[...].astype(jnp.float32)                              # (H+2, W+2, Cin)

    # --- conv1 (3x3) + folded BatchNorm1 + ReLU --------------------------------
    a1 = conv3x3(xp, 0, cin, w1_ref)
    h1 = jnp.maximum(a1 * sc1_ref[...] + sh1_ref[...], 0.0)           # (S, Cout) f32

    # --- zero-halo h1 in VMEM (aligned offsets), conv2 + BN2 + ReLU ------------
    h1pad_scr[...] = jnp.zeros_like(h1pad_scr)
    h1pad_scr[_PAD:_PAD + h, _PAD:_PAD + w, :] = h1.reshape(h, w, cout)
    a2 = conv3x3(h1pad_scr[...], _PAD - 1, cout, w2_ref)
    h2 = jnp.maximum(a2 * sc2_ref[...] + sh2_ref[...], 0.0)           # (S, Cout) f32

    # --- residual 1x1 conv on the original input -------------------------------
    xc = xp[1:1 + h, 1:1 + w, :].reshape(s, cin)
    res = jnp.dot(xc.astype(jnp.bfloat16), wr_ref[...],
                  preferred_element_type=jnp.float32) + br_ref[...]

    o_ref[...] = (h2 + res).astype(o_ref.dtype)


def rescnn_block(x_nchw, p, *, fuse_taps=True):
    """Pallas implementation of ResCNN_block.forward.  x: (N, Cin, H, W) NCHW."""
    n, cin, hh, ww = x_nchw.shape
    cout = p["w1"].shape[-1]
    s = hh * ww

    # --- XLA-side glue: layout + parameter folding only (no im2col in HBM) -----
    x_nhwc = jnp.transpose(x_nchw, (0, 2, 3, 1))
    xp = jnp.pad(x_nhwc, ((0, 0), (1, 1), (1, 1), (0, 0))).astype(jnp.bfloat16)

    def fold(b, g, beta, m, v):
        sc = g * jax.lax.rsqrt(v + EPS)
        sh = (b - m) * sc + beta
        return (sc.reshape(1, cout).astype(jnp.float32),
                sh.reshape(1, cout).astype(jnp.float32))

    sc1, sh1 = fold(p["b1"], p["g1"], p["beta1"], p["m1"], p["v1"])
    sc2, sh2 = fold(p["b2"], p["g2"], p["beta2"], p["m2"], p["v2"])

    # Weights packed as (tap*C + ci, co), tap = kh*3 + kw (matches the in-kernel
    # window order).  bf16 operands for the MXU, f32 accumulation.
    w1p = p["w1"].reshape(9 * cin, cout).astype(jnp.bfloat16)
    w2p = p["w2"].reshape(9 * cout, cout).astype(jnp.bfloat16)
    wrp = p["wr"].astype(jnp.bfloat16)
    brp = p["br"].reshape(1, cout).astype(jnp.float32)

    kernel = functools.partial(_rescnn_kernel, fuse_taps=fuse_taps)
    out = pl.pallas_call(
        kernel,
        out_shape=jax.ShapeDtypeStruct((n, s, cout), jnp.float32),
        grid=(n,),
        in_specs=[
            pl.BlockSpec((None, hh + 2, ww + 2, cin), lambda i: (i, 0, 0, 0)),
            pl.BlockSpec((9 * cin, cout), lambda i: (0, 0)),
            pl.BlockSpec((1, cout), lambda i: (0, 0)),
            pl.BlockSpec((1, cout), lambda i: (0, 0)),
            pl.BlockSpec((9 * cout, cout), lambda i: (0, 0)),
            pl.BlockSpec((1, cout), lambda i: (0, 0)),
            pl.BlockSpec((1, cout), lambda i: (0, 0)),
            pl.BlockSpec((cin, cout), lambda i: (0, 0)),
            pl.BlockSpec((1, cout), lambda i: (0, 0)),
        ],
        out_specs=pl.BlockSpec((None, s, cout), lambda i: (i, 0, 0)),
        scratch_shapes=[
            pltpu.VMEM((_PAD + hh + 2, _PAD + ww + 2, cout), jnp.float32),
        ],
        compiler_params=pltpu.CompilerParams(dimension_semantics=("parallel",)),
    )(xp, w1p, sc1, sh1, w2p, sc2, sh2, wrp, brp)

    out = out.reshape(n, hh, ww, cout)
    return jnp.transpose(out, (0, 3, 1, 2))  # back to NCHW


# ------------------------------ reference ------------------------------------
def _round_bf16(x):
    return x.astype(jnp.bfloat16).astype(jnp.float32)


def rescnn_block_reference(x_nchw, p):
    """Pure-JAX reference (eval-mode BatchNorm), using the same precision policy
    as the kernel: bf16 conv/matmul operands, f32 accumulation and pointwise math."""
    x = jnp.transpose(x_nchw, (0, 2, 3, 1)).astype(jnp.float32)  # NHWC

    def conv3x3(inp, w_hwio, b):
        y = jax.lax.conv_general_dilated(
            _round_bf16(inp), _round_bf16(w_hwio), window_strides=(1, 1),
            padding="SAME", dimension_numbers=("NHWC", "HWIO", "NHWC"))
        return y + b

    def bn(y, g, beta, m, v):
        return (y - m) * jax.lax.rsqrt(v + EPS) * g + beta

    h1 = jax.nn.relu(bn(conv3x3(x, p["w1"], p["b1"]),
                        p["g1"], p["beta1"], p["m1"], p["v1"]))
    h2 = jax.nn.relu(bn(conv3x3(h1, p["w2"], p["b2"]),
                        p["g2"], p["beta2"], p["m2"], p["v2"]))
    res = jnp.einsum("nhwc,cd->nhwd", _round_bf16(x), _round_bf16(p["wr"])) + p["br"]
    return jnp.transpose(h2 + res, (0, 3, 1, 2))  # NCHW


def init_params(key, cin, cout):
    ks = jax.random.split(key, 14)

    def nrm(k, shape, scale):
        return scale * jax.random.normal(k, shape, jnp.float32)

    return dict(
        w1=nrm(ks[0], (3, 3, cin, cout), (9 * cin) ** -0.5),
        b1=nrm(ks[1], (cout,), 0.1),
        g1=1.0 + nrm(ks[2], (cout,), 0.1),
        beta1=nrm(ks[3], (cout,), 0.1),
        m1=nrm(ks[4], (cout,), 0.1),
        v1=0.5 + jax.random.uniform(ks[5], (cout,), jnp.float32),
        w2=nrm(ks[6], (3, 3, cout, cout), (9 * cout) ** -0.5),
        b2=nrm(ks[7], (cout,), 0.1),
        g2=1.0 + nrm(ks[8], (cout,), 0.1),
        beta2=nrm(ks[9], (cout,), 0.1),
        m2=nrm(ks[10], (cout,), 0.1),
        v2=0.5 + jax.random.uniform(ks[11], (cout,), jnp.float32),
        wr=nrm(ks[12], (cin, cout), cin ** -0.5),
        br=nrm(ks[13], (cout,), 0.1),
    )


if __name__ == "__main__":
    N, C_IN, C_OUT, H, W = 2, 8, 16, 16, 16

    key = jax.random.PRNGKey(0)
    kx, kp = jax.random.split(key)
    x = jax.random.normal(kx, (N, C_IN, H, W), dtype=jnp.float32)  # NCHW like PyTorch
    params = init_params(kp, C_IN, C_OUT)

    def run(fuse_taps):
        fn = jax.jit(functools.partial(rescnn_block, fuse_taps=fuse_taps))
        return jax.block_until_ready(fn(x, params))

    try:
        out = run(True)   # preferred: single K = 9*C contraction per conv
    except Exception:
        # Fallback for Mosaic versions without unaligned minor-dim concatenation.
        out = run(False)

    ref = jax.block_until_ready(rescnn_block_reference(x, params))
    if not jnp.allclose(out, ref, atol=1e-2, rtol=1e-2):
        max_err = float(jnp.max(jnp.abs(out - ref)))
        raise AssertionError(f"Pallas output mismatch vs reference, max abs err={max_err}")

    print("KERNEL_OK")
</pallas_src>

<mosaic_0001>
module attributes {stable_mosaic.version = 11 : i64} {
  func.func @_rescnn_kernel(%arg0: i32, %arg1: memref<1x18x18x8xbf16, #tpu.memory_space<vmem>>, %arg2: memref<72x16xbf16, #tpu.memory_space<vmem>>, %arg3: memref<1x16xf32, #tpu.memory_space<vmem>>, %arg4: memref<1x16xf32, #tpu.memory_space<vmem>>, %arg5: memref<144x16xbf16, #tpu.memory_space<vmem>>, %arg6: memref<1x16xf32, #tpu.memory_space<vmem>>, %arg7: memref<1x16xf32, #tpu.memory_space<vmem>>, %arg8: memref<8x16xbf16, #tpu.memory_space<vmem>>, %arg9: memref<1x16xf32, #tpu.memory_space<vmem>>, %arg10: memref<1x256x16xf32, #tpu.memory_space<vmem>>, %arg11: memref<26x26x16xf32, #tpu.memory_space<vmem>>) attributes {dimension_semantics = [#tpu.dimension_semantics<parallel>], iteration_bounds = array<i64: 2>, scalar_prefetch = 0 : i64, scratch_operands = 1 : i64, tpu.core_type = #tpu.core_type<tc>, window_params = [{transform_indices = @transform_0, window_bounds = array<i64: 1, 18, 18, 8>}, {pipeline_mode = #tpu.pipeline_mode<synchronous>, transform_indices = @transform_1, window_bounds = array<i64: 72, 16>}, {pipeline_mode = #tpu.pipeline_mode<synchronous>, transform_indices = @transform_2, window_bounds = array<i64: 1, 16>}, {pipeline_mode = #tpu.pipeline_mode<synchronous>, transform_indices = @transform_3, window_bounds = array<i64: 1, 16>}, {pipeline_mode = #tpu.pipeline_mode<synchronous>, transform_indices = @transform_4, window_bounds = array<i64: 144, 16>}, {pipeline_mode = #tpu.pipeline_mode<synchronous>, transform_indices = @transform_5, window_bounds = array<i64: 1, 16>}, {pipeline_mode = #tpu.pipeline_mode<synchronous>, transform_indices = @transform_6, window_bounds = array<i64: 1, 16>}, {pipeline_mode = #tpu.pipeline_mode<synchronous>, transform_indices = @transform_7, window_bounds = array<i64: 8, 16>}, {pipeline_mode = #tpu.pipeline_mode<synchronous>, transform_indices = @transform_8, window_bounds = array<i64: 1, 16>}, {transform_indices = @transform_9, window_bounds = array<i64: 1, 256, 16>}]} {
    %c0 = arith.constant 0 : index
    %c0_0 = arith.constant 0 : index
    %c0_1 = arith.constant 0 : index
    %c0_2 = arith.constant 0 : index
    %0 = vector.load %arg1[%c0, %c0_0, %c0_1, %c0_2] : memref<1x18x18x8xbf16, #tpu.memory_space<vmem>>, vector<1x18x18x8xbf16>
    %1 = vector.shape_cast %0 : vector<1x18x18x8xbf16> to vector<18x18x8xbf16>
    %2 = arith.extf %1 : vector<18x18x8xbf16> to vector<18x18x8xf32>
    %3 = vector.extract_strided_slice %2 {offsets = [0, 0, 0], sizes = [16, 16, 8], strides = [1, 1, 1]} : vector<18x18x8xf32> to vector<16x16x8xf32>
    %4 = vector.shape_cast %3 : vector<16x16x8xf32> to vector<256x8xf32>
    %5 = vector.extract_strided_slice %2 {offsets = [0, 1, 0], sizes = [16, 16, 8], strides = [1, 1, 1]} : vector<18x18x8xf32> to vector<16x16x8xf32>
    %6 = vector.shape_cast %5 : vector<16x16x8xf32> to vector<256x8xf32>
    %7 = vector.extract_strided_slice %2 {offsets = [0, 2, 0], sizes = [16, 16, 8], strides = [1, 1, 1]} : vector<18x18x8xf32> to vector<16x16x8xf32>
    %8 = vector.shape_cast %7 : vector<16x16x8xf32> to vector<256x8xf32>
    %9 = vector.extract_strided_slice %2 {offsets = [1, 0, 0], sizes = [16, 16, 8], strides = [1, 1, 1]} : vector<18x18x8xf32> to vector<16x16x8xf32>
    %10 = vector.shape_cast %9 : vector<16x16x8xf32> to vector<256x8xf32>
    %11 = vector.extract_strided_slice %2 {offsets = [1, 1, 0], sizes = [16, 16, 8], strides = [1, 1, 1]} : vector<18x18x8xf32> to vector<16x16x8xf32>
    %12 = vector.shape_cast %11 : vector<16x16x8xf32> to vector<256x8xf32>
    %13 = vector.extract_strided_slice %2 {offsets = [1, 2, 0], sizes = [16, 16, 8], strides = [1, 1, 1]} : vector<18x18x8xf32> to vector<16x16x8xf32>
    %14 = vector.shape_cast %13 : vector<16x16x8xf32> to vector<256x8xf32>
    %15 = vector.extract_strided_slice %2 {offsets = [2, 0, 0], sizes = [16, 16, 8], strides = [1, 1, 1]} : vector<18x18x8xf32> to vector<16x16x8xf32>
    %16 = vector.shape_cast %15 : vector<16x16x8xf32> to vector<256x8xf32>
    %17 = vector.extract_strided_slice %2 {offsets = [2, 1, 0], sizes = [16, 16, 8], strides = [1, 1, 1]} : vector<18x18x8xf32> to vector<16x16x8xf32>
    %18 = vector.shape_cast %17 : vector<16x16x8xf32> to vector<256x8xf32>
    %19 = vector.extract_strided_slice %2 {offsets = [2, 2, 0], sizes = [16, 16, 8], strides = [1, 1, 1]} : vector<18x18x8xf32> to vector<16x16x8xf32>
    %20 = vector.shape_cast %19 : vector<16x16x8xf32> to vector<256x8xf32>
    %21 = tpu.concatenate %4, %6, %8, %10, %12, %14, %16, %18, %20 in 1 : vector<256x8xf32>, vector<256x8xf32>, vector<256x8xf32>, vector<256x8xf32>, vector<256x8xf32>, vector<256x8xf32>, vector<256x8xf32>, vector<256x8xf32>, vector<256x8xf32> -> vector<256x72xf32>
    %22 = arith.truncf %21 : vector<256x72xf32> to vector<256x72xbf16>
    %c0_3 = arith.constant 0 : index
    %c0_4 = arith.constant 0 : index
    %23 = vector.load %arg2[%c0_3, %c0_4] : memref<72x16xbf16, #tpu.memory_space<vmem>>, vector<72x16xbf16>
    %cst = arith.constant dense<0.000000e+00> : vector<256x16xf32>
    %24 = tpu.matmul %22, %23, %cst {dimension_numbers = #tpu.dot_dimension_numbers<[1], [0], [0], [1], [0, 0, 1, 1], [], []>} : vector<256x72xbf16>, vector<72x16xbf16>, vector<256x16xf32> -> vector<256x16xf32>
    %c0_5 = arith.constant 0 : index
    %c0_6 = arith.constant 0 : index
    %25 = vector.load %arg3[%c0_5, %c0_6] : memref<1x16xf32, #tpu.memory_space<vmem>>, vector<1x16xf32>
    %26 = vector.broadcast %25 : vector<1x16xf32> to vector<256x16xf32>
    %27 = arith.mulf %24, %26 : vector<256x16xf32>
    %c0_7 = arith.constant 0 : index
    %c0_8 = arith.constant 0 : index
    %28 = vector.load %arg4[%c0_7, %c0_8] : memref<1x16xf32, #tpu.memory_space<vmem>>, vector<1x16xf32>
    %29 = vector.broadcast %28 : vector<1x16xf32> to vector<256x16xf32>
    %30 = arith.addf %27, %29 : vector<256x16xf32>
    %cst_9 = arith.constant 0.000000e+00 : f32
    %31 = vector.broadcast %cst_9 : f32 to vector<256x16xf32>
    %32 = arith.maximumf %30, %31 : vector<256x16xf32>
    %cst_10 = arith.constant 0.000000e+00 : f32
    %33 = vector.broadcast %cst_10 : f32 to vector<26x26x16xf32>
    %c0_11 = arith.constant 0 : index
    %c0_12 = arith.constant 0 : index
    %c0_13 = arith.constant 0 : index
    %34 = vector.load %arg11[%c0_11, %c0_12, %c0_13] : memref<26x26x16xf32, #tpu.memory_space<vmem>>, vector<26x26x16xf32>
    tpu.vector_store %arg11[%c0_11, %c0_12, %c0_13], %33 {strides = array<i32>} : memref<26x26x16xf32, #tpu.memory_space<vmem>>, vector<26x26x16xf32>,
    %35 = vector.shape_cast %32 : vector<256x16xf32> to vector<16x16x16xf32>
    %c8 = arith.constant 8 : index
    %c8_14 = arith.constant 8 : index
    %c0_15 = arith.constant 0 : index
    %36 = vector.load %arg11[%c8, %c8_14, %c0_15] : memref<26x26x16xf32, #tpu.memory_space<vmem>>, vector<16x16x16xf32>
    tpu.vector_store %arg11[%c8, %c8_14, %c0_15], %35 {strides = array<i32>} : memref<26x26x16xf32, #tpu.memory_space<vmem>>, vector<16x16x16xf32>,
    %c0_16 = arith.constant 0 : index
    %c0_17 = arith.constant 0 : index
    %c0_18 = arith.constant 0 : index
    %37 = vector.load %arg11[%c0_16, %c0_17, %c0_18] : memref<26x26x16xf32, #tpu.memory_space<vmem>>, vector<26x26x16xf32>
    %38 = vector.extract_strided_slice %37 {offsets = [7, 7, 0], sizes = [16, 16, 16], strides = [1, 1, 1]} : vector<26x26x16xf32> to vector<16x16x16xf32>
    %39 = vector.shape_cast %38 : vector<16x16x16xf32> to vector<256x16xf32>
    %40 = vector.extract_strided_slice %37 {offsets = [7, 8, 0], sizes = [16, 16, 16], strides = [1, 1, 1]} : vector<26x26x16xf32> to vector<16x16x16xf32>
    %41 = vector.shape_cast %40 : vector<16x16x16xf32> to vector<256x16xf32>
    %42 = vector.extract_strided_slice %37 {offsets = [7, 9, 0], sizes = [16, 16, 16], strides = [1, 1, 1]} : vector<26x26x16xf32> to vector<16x16x16xf32>
    %43 = vector.shape_cast %42 : vector<16x16x16xf32> to vector<256x16xf32>
    %44 = vector.extract_strided_slice %37 {offsets = [8, 7, 0], sizes = [16, 16, 16], strides = [1, 1, 1]} : vector<26x26x16xf32> to vector<16x16x16xf32>
    %45 = vector.shape_cast %44 : vector<16x16x16xf32> to vector<256x16xf32>
    %46 = vector.extract_strided_slice %37 {offsets = [8, 8, 0], sizes = [16, 16, 16], strides = [1, 1, 1]} : vector<26x26x16xf32> to vector<16x16x16xf32>
    %47 = vector.shape_cast %46 : vector<16x16x16xf32> to vector<256x16xf32>
    %48 = vector.extract_strided_slice %37 {offsets = [8, 9, 0], sizes = [16, 16, 16], strides = [1, 1, 1]} : vector<26x26x16xf32> to vector<16x16x16xf32>
    %49 = vector.shape_cast %48 : vector<16x16x16xf32> to vector<256x16xf32>
    %50 = vector.extract_strided_slice %37 {offsets = [9, 7, 0], sizes = [16, 16, 16], strides = [1, 1, 1]} : vector<26x26x16xf32> to vector<16x16x16xf32>
    %51 = vector.shape_cast %50 : vector<16x16x16xf32> to vector<256x16xf32>
    %52 = vector.extract_strided_slice %37 {offsets = [9, 8, 0], sizes = [16, 16, 16], strides = [1, 1, 1]} : vector<26x26x16xf32> to vector<16x16x16xf32>
    %53 = vector.shape_cast %52 : vector<16x16x16xf32> to vector<256x16xf32>
    %54 = vector.extract_strided_slice %37 {offsets = [9, 9, 0], sizes = [16, 16, 16], strides = [1, 1, 1]} : vector<26x26x16xf32> to vector<16x16x16xf32>
    %55 = vector.shape_cast %54 : vector<16x16x16xf32> to vector<256x16xf32>
    %56 = tpu.concatenate %39, %41, %43, %45, %47, %49, %51, %53, %55 in 1 : vector<256x16xf32>, vector<256x16xf32>, vector<256x16xf32>, vector<256x16xf32>, vector<256x16xf32>, vector<256x16xf32>, vector<256x16xf32>, vector<256x16xf32>, vector<256x16xf32> -> vector<256x144xf32>
    %57 = arith.truncf %56 : vector<256x144xf32> to vector<256x144xbf16>
    %c0_19 = arith.constant 0 : index
    %c0_20 = arith.constant 0 : index
    %58 = vector.load %arg5[%c0_19, %c0_20] : memref<144x16xbf16, #tpu.memory_space<vmem>>, vector<144x16xbf16>
    %cst_21 = arith.constant dense<0.000000e+00> : vector<256x16xf32>
    %59 = tpu.matmul %57, %58, %cst_21 {dimension_numbers = #tpu.dot_dimension_numbers<[1], [0], [0], [1], [0, 0, 1, 1], [], []>} : vector<256x144xbf16>, vector<144x16xbf16>, vector<256x16xf32> -> vector<256x16xf32>
    %c0_22 = arith.constant 0 : index
    %c0_23 = arith.constant 0 : index
    %60 = vector.load %arg6[%c0_22, %c0_23] : memref<1x16xf32, #tpu.memory_space<vmem>>, vector<1x16xf32>
    %61 = vector.broadcast %60 : vector<1x16xf32> to vector<256x16xf32>
    %62 = arith.mulf %59, %61 : vector<256x16xf32>
    %c0_24 = arith.constant 0 : index
    %c0_25 = arith.constant 0 : index
    %63 = vector.load %arg7[%c0_24, %c0_25] : memref<1x16xf32, #tpu.memory_space<vmem>>, vector<1x16xf32>
    %64 = vector.broadcast %63 : vector<1x16xf32> to vector<256x16xf32>
    %65 = arith.addf %62, %64 : vector<256x16xf32>
    %cst_26 = arith.constant 0.000000e+00 : f32
    %66 = vector.broadcast %cst_26 : f32 to vector<256x16xf32>
    %67 = arith.maximumf %65, %66 : vector<256x16xf32>
    %68 = vector.extract_strided_slice %2 {offsets = [1, 1, 0], sizes = [16, 16, 8], strides = [1, 1, 1]} : vector<18x18x8xf32> to vector<16x16x8xf32>
    %69 = vector.shape_cast %68 : vector<16x16x8xf32> to vector<256x8xf32>
    %70 = arith.truncf %69 : vector<256x8xf32> to vector<256x8xbf16>
    %c0_27 = arith.constant 0 : index
    %c0_28 = arith.constant 0 : index
    %71 = vector.load %arg8[%c0_27, %c0_28] : memref<8x16xbf16, #tpu.memory_space<vmem>>, vector<8x16xbf16>
    %cst_29 = arith.constant dense<0.000000e+00> : vector<256x16xf32>
    %72 = tpu.matmul %70, %71, %cst_29 {dimension_numbers = #tpu.dot_dimension_numbers<[1], [0], [0], [1], [0, 0, 1, 1], [], []>} : vector<256x8xbf16>, vector<8x16xbf16>, vector<256x16xf32> -> vector<256x16xf32>
    %c0_30 = arith.constant 0 : index
    %c0_31 = arith.constant 0 : index
    %73 = vector.load %arg9[%c0_30, %c0_31] : memref<1x16xf32, #tpu.memory_space<vmem>>, vector<1x16xf32>
    %74 = vector.broadcast %73 : vector<1x16xf32> to vector<256x16xf32>
    %75 = arith.addf %72, %74 : vector<256x16xf32>
    %76 = arith.addf %67, %75 : vector<256x16xf32>
    %c0_32 = arith.constant 0 : index
    %c0_33 = arith.constant 0 : index
    %c0_34 = arith.constant 0 : index
    %77 = vector.load %arg10[%c0_32, %c0_33, %c0_34] : memref<1x256x16xf32, #tpu.memory_space<vmem>>, vector<1x256x16xf32>
    %78 = vector.shape_cast %77 : vector<1x256x16xf32> to vector<256x16xf32>
    %79 = vector.shape_cast %76 : vector<256x16xf32> to vector<1x256x16xf32>
    tpu.vector_store %arg10[%c0_32, %c0_33, %c0_34], %79 {strides = array<i32>} : memref<1x256x16xf32, #tpu.memory_space<vmem>>, vector<1x256x16xf32>,
    return
  }
  func.func @transform_0(%arg0: i32) -> (i32, i32, i32, i32) {
    %c0_i32 = arith.constant 0 : i32
    %c0_i32_0 = arith.constant 0 : i32
    %c0_i32_1 = arith.constant 0 : i32
    %c0_i32_2 = arith.constant 0 : i32
    return %arg0, %c0_i32, %c0_i32_0, %c0_i32_1 : i32, i32, i32, i32
  }
  func.func @transform_1(%arg0: i32) -> (i32, i32) {
    %c0_i32 = arith.constant 0 : i32
    %c0_i32_0 = arith.constant 0 : i32
    %c0_i32_1 = arith.constant 0 : i32
    return %c0_i32, %c0_i32_0 : i32, i32
  }
  func.func @transform_2(%arg0: i32) -> (i32, i32) {
    %c0_i32 = arith.constant 0 : i32
    %c0_i32_0 = arith.constant 0 : i32
    %c0_i32_1 = arith.constant 0 : i32
    return %c0_i32, %c0_i32_0 : i32, i32
  }
  func.func @transform_3(%arg0: i32) -> (i32, i32) {
    %c0_i32 = arith.constant 0 : i32
    %c0_i32_0 = arith.constant 0 : i32
    %c0_i32_1 = arith.constant 0 : i32
    return %c0_i32, %c0_i32_0 : i32, i32
  }
  func.func @transform_4(%arg0: i32) -> (i32, i32) {
    %c0_i32 = arith.constant 0 : i32
    %c0_i32_0 = arith.constant 0 : i32
    %c0_i32_1 = arith.constant 0 : i32
    return %c0_i32, %c0_i32_0 : i32, i32
  }
  func.func @transform_5(%arg0: i32) -> (i32, i32) {
    %c0_i32 = arith.constant 0 : i32
    %c0_i32_0 = arith.constant 0 : i32
    %c0_i32_1 = arith.constant 0 : i32
    return %c0_i32, %c0_i32_0 : i32, i32
  }
  func.func @transform_6(%arg0: i32) -> (i32, i32) {
    %c0_i32 = arith.constant 0 : i32
    %c0_i32_0 = arith.constant 0 : i32
    %c0_i32_1 = arith.constant 0 : i32
    return %c0_i32, %c0_i32_0 : i32, i32
  }
  func.func @transform_7(%arg0: i32) -> (i32, i32) {
    %c0_i32 = arith.constant 0 : i32
    %c0_i32_0 = arith.constant 0 : i32
    %c0_i32_1 = arith.constant 0 : i32
    return %c0_i32, %c0_i32_0 : i32, i32
  }
  func.func @transform_8(%arg0: i32) -> (i32, i32) {
    %c0_i32 = arith.constant 0 : i32
    %c0_i32_0 = arith.constant 0 : i32
    %c0_i32_1 = arith.constant 0 : i32
    return %c0_i32, %c0_i32_0 : i32, i32
  }
  func.func @transform_9(%arg0: i32) -> (i32, i32, i32) {
    %c0_i32 = arith.constant 0 : i32
    %c0_i32_0 = arith.constant 0 : i32
    %c0_i32_1 = arith.constant 0 : i32
    return %arg0, %c0_i32, %c0_i32_0 : i32, i32, i32
  }
}

module attributes {stable_mosaic.version = 11 : i64} {
  func.func @_rescnn_kernel(%arg0: i32, %arg1: memref<1x18x18x8xbf16, #tpu.memory_space<vmem>>, %arg2: memref<72x16xbf16, #tpu.memory_space<vmem>>, %arg3: memref<1x16xf32, #tpu.memory_space<vmem>>, %arg4: memref<1x16xf32, #tpu.memory_space<vmem>>, %arg5: memref<144x16xbf16, #tpu.memory_space<vmem>>, %arg6: memref<1x16xf32, #tpu.memory_space<vmem>>, %arg7: memref<1x16xf32, #tpu.memory_space<vmem>>, %arg8: memref<8x16xbf16, #tpu.memory_space<vmem>>, %arg9: memref<1x16xf32, #tpu.memory_space<vmem>>, %arg10: memref<1x256x16xf32, #tpu.memory_space<vmem>>, %arg11: memref<26x26x16xf32, #tpu.memory_space<vmem>>) attributes {dimension_semantics = [#tpu.dimension_semantics<parallel>], iteration_bounds = array<i64: 2>, scalar_prefetch = 0 : i64, scratch_operands = 1 : i64, tpu.core_type = #tpu.core_type<tc>, window_params = [{transform_indices = @transform_0, window_bounds = array<i64: 1, 18, 18, 8>}, {pipeline_mode = #tpu.pipeline_mode<synchronous>, transform_indices = @transform_1, window_bounds = array<i64: 72, 16>}, {pipeline_mode = #tpu.pipeline_mode<synchronous>, transform_indices = @transform_2, window_bounds = array<i64: 1, 16>}, {pipeline_mode = #tpu.pipeline_mode<synchronous>, transform_indices = @transform_3, window_bounds = array<i64: 1, 16>}, {pipeline_mode = #tpu.pipeline_mode<synchronous>, transform_indices = @transform_4, window_bounds = array<i64: 144, 16>}, {pipeline_mode = #tpu.pipeline_mode<synchronous>, transform_indices = @transform_5, window_bounds = array<i64: 1, 16>}, {pipeline_mode = #tpu.pipeline_mode<synchronous>, transform_indices = @transform_6, window_bounds = array<i64: 1, 16>}, {pipeline_mode = #tpu.pipeline_mode<synchronous>, transform_indices = @transform_7, window_bounds = array<i64: 8, 16>}, {pipeline_mode = #tpu.pipeline_mode<synchronous>, transform_indices = @transform_8, window_bounds = array<i64: 1, 16>}, {transform_indices = @transform_9, window_bounds = array<i64: 1, 256, 16>}]} {
    %c0 = arith.constant 0 : index
    %c0_0 = arith.constant 0 : index
    %c0_1 = arith.constant 0 : index
    %c0_2 = arith.constant 0 : index
    %0 = vector.load %arg1[%c0, %c0_0, %c0_1, %c0_2] : memref<1x18x18x8xbf16, #tpu.memory_space<vmem>>, vector<1x18x18x8xbf16>
    %1 = vector.shape_cast %0 : vector<1x18x18x8xbf16> to vector<18x18x8xbf16>
    %2 = arith.extf %1 : vector<18x18x8xbf16> to vector<18x18x8xf32>
    %3 = vector.extract_strided_slice %2 {offsets = [0, 0, 0], sizes = [16, 16, 8], strides = [1, 1, 1]} : vector<18x18x8xf32> to vector<16x16x8xf32>
    %4 = vector.shape_cast %3 : vector<16x16x8xf32> to vector<256x8xf32>
    %5 = vector.extract_strided_slice %2 {offsets = [0, 1, 0], sizes = [16, 16, 8], strides = [1, 1, 1]} : vector<18x18x8xf32> to vector<16x16x8xf32>
    %6 = vector.shape_cast %5 : vector<16x16x8xf32> to vector<256x8xf32>
    %7 = vector.extract_strided_slice %2 {offsets = [0, 2, 0], sizes = [16, 16, 8], strides = [1, 1, 1]} : vector<18x18x8xf32> to vector<16x16x8xf32>
    %8 = vector.shape_cast %7 : vector<16x16x8xf32> to vector<256x8xf32>
    %9 = vector.extract_strided_slice %2 {offsets = [1, 0, 0], sizes = [16, 16, 8], strides = [1, 1, 1]} : vector<18x18x8xf32> to vector<16x16x8xf32>
    %10 = vector.shape_cast %9 : vector<16x16x8xf32> to vector<256x8xf32>
    %11 = vector.extract_strided_slice %2 {offsets = [1, 1, 0], sizes = [16, 16, 8], strides = [1, 1, 1]} : vector<18x18x8xf32> to vector<16x16x8xf32>
    %12 = vector.shape_cast %11 : vector<16x16x8xf32> to vector<256x8xf32>
    %13 = vector.extract_strided_slice %2 {offsets = [1, 2, 0], sizes = [16, 16, 8], strides = [1, 1, 1]} : vector<18x18x8xf32> to vector<16x16x8xf32>
    %14 = vector.shape_cast %13 : vector<16x16x8xf32> to vector<256x8xf32>
    %15 = vector.extract_strided_slice %2 {offsets = [2, 0, 0], sizes = [16, 16, 8], strides = [1, 1, 1]} : vector<18x18x8xf32> to vector<16x16x8xf32>
    %16 = vector.shape_cast %15 : vector<16x16x8xf32> to vector<256x8xf32>
    %17 = vector.extract_strided_slice %2 {offsets = [2, 1, 0], sizes = [16, 16, 8], strides = [1, 1, 1]} : vector<18x18x8xf32> to vector<16x16x8xf32>
    %18 = vector.shape_cast %17 : vector<16x16x8xf32> to vector<256x8xf32>
    %19 = vector.extract_strided_slice %2 {offsets = [2, 2, 0], sizes = [16, 16, 8], strides = [1, 1, 1]} : vector<18x18x8xf32> to vector<16x16x8xf32>
    %20 = vector.shape_cast %19 : vector<16x16x8xf32> to vector<256x8xf32>
    %cst = arith.constant 0.000000e+00 : f32
    %21 = vector.broadcast %cst : f32 to vector<256x16xf32>
    %22 = arith.truncf %4 : vector<256x8xf32> to vector<256x8xbf16>
    %c0_3 = arith.constant 0 : index
    %c0_4 = arith.constant 0 : index
    %23 = vector.load %arg2[%c0_3, %c0_4] : memref<72x16xbf16, #tpu.memory_space<vmem>>, vector<8x16xbf16>
    %cst_5 = arith.constant dense<0.000000e+00> : vector<256x16xf32>
    %24 = tpu.matmul %22, %23, %cst_5 {dimension_numbers = #tpu.dot_dimension_numbers<[1], [0], [0], [1], [0, 0, 1, 1], [], []>} : vector<256x8xbf16>, vector<8x16xbf16>, vector<256x16xf32> -> vector<256x16xf32>
    %25 = arith.addf %21, %24 : vector<256x16xf32>
    %26 = arith.truncf %6 : vector<256x8xf32> to vector<256x8xbf16>
    %c8 = arith.constant 8 : index
    %c0_6 = arith.constant 0 : index
    %27 = vector.load %arg2[%c8, %c0_6] : memref<72x16xbf16, #tpu.memory_space<vmem>>, vector<8x16xbf16>
    %cst_7 = arith.constant dense<0.000000e+00> : vector<256x16xf32>
    %28 = tpu.matmul %26, %27, %cst_7 {dimension_numbers = #tpu.dot_dimension_numbers<[1], [0], [0], [1], [0, 0, 1, 1], [], []>} : vector<256x8xbf16>, vector<8x16xbf16>, vector<256x16xf32> -> vector<256x16xf32>
    %29 = arith.addf %25, %28 : vector<256x16xf32>
    %30 = arith.truncf %8 : vector<256x8xf32> to vector<256x8xbf16>
    %c16 = arith.constant 16 : index
    %c0_8 = arith.constant 0 : index
    %31 = vector.load %arg2[%c16, %c0_8] : memref<72x16xbf16, #tpu.memory_space<vmem>>, vector<8x16xbf16>
    %cst_9 = arith.constant dense<0.000000e+00> : vector<256x16xf32>
    %32 = tpu.matmul %30, %31, %cst_9 {dimension_numbers = #tpu.dot_dimension_numbers<[1], [0], [0], [1], [0, 0, 1, 1], [], []>} : vector<256x8xbf16>, vector<8x16xbf16>, vector<256x16xf32> -> vector<256x16xf32>
    %33 = arith.addf %29, %32 : vector<256x16xf32>
    %34 = arith.truncf %10 : vector<256x8xf32> to vector<256x8xbf16>
    %c24 = arith.constant 24 : index
    %c0_10 = arith.constant 0 : index
    %35 = vector.load %arg2[%c24, %c0_10] : memref<72x16xbf16, #tpu.memory_space<vmem>>, vector<8x16xbf16>
    %cst_11 = arith.constant dense<0.000000e+00> : vector<256x16xf32>
    %36 = tpu.matmul %34, %35, %cst_11 {dimension_numbers = #tpu.dot_dimension_numbers<[1], [0], [0], [1], [0, 0, 1, 1], [], []>} : vector<256x8xbf16>, vector<8x16xbf16>, vector<256x16xf32> -> vector<256x16xf32>
    %37 = arith.addf %33, %36 : vector<256x16xf32>
    %38 = arith.truncf %12 : vector<256x8xf32> to vector<256x8xbf16>
    %c32 = arith.constant 32 : index
    %c0_12 = arith.constant 0 : index
    %39 = vector.load %arg2[%c32, %c0_12] : memref<72x16xbf16, #tpu.memory_space<vmem>>, vector<8x16xbf16>
    %cst_13 = arith.constant dense<0.000000e+00> : vector<256x16xf32>
    %40 = tpu.matmul %38, %39, %cst_13 {dimension_numbers = #tpu.dot_dimension_numbers<[1], [0], [0], [1], [0, 0, 1, 1], [], []>} : vector<256x8xbf16>, vector<8x16xbf16>, vector<256x16xf32> -> vector<256x16xf32>
    %41 = arith.addf %37, %40 : vector<256x16xf32>
    %42 = arith.truncf %14 : vector<256x8xf32> to vector<256x8xbf16>
    %c40 = arith.constant 40 : index
    %c0_14 = arith.constant 0 : index
    %43 = vector.load %arg2[%c40, %c0_14] : memref<72x16xbf16, #tpu.memory_space<vmem>>, vector<8x16xbf16>
    %cst_15 = arith.constant dense<0.000000e+00> : vector<256x16xf32>
    %44 = tpu.matmul %42, %43, %cst_15 {dimension_numbers = #tpu.dot_dimension_numbers<[1], [0], [0], [1], [0, 0, 1, 1], [], []>} : vector<256x8xbf16>, vector<8x16xbf16>, vector<256x16xf32> -> vector<256x16xf32>
    %45 = arith.addf %41, %44 : vector<256x16xf32>
    %46 = arith.truncf %16 : vector<256x8xf32> to vector<256x8xbf16>
    %c48 = arith.constant 48 : index
    %c0_16 = arith.constant 0 : index
    %47 = vector.load %arg2[%c48, %c0_16] : memref<72x16xbf16, #tpu.memory_space<vmem>>, vector<8x16xbf16>
    %cst_17 = arith.constant dense<0.000000e+00> : vector<256x16xf32>
    %48 = tpu.matmul %46, %47, %cst_17 {dimension_numbers = #tpu.dot_dimension_numbers<[1], [0], [0], [1], [0, 0, 1, 1], [], []>} : vector<256x8xbf16>, vector<8x16xbf16>, vector<256x16xf32> -> vector<256x16xf32>
    %49 = arith.addf %45, %48 : vector<256x16xf32>
    %50 = arith.truncf %18 : vector<256x8xf32> to vector<256x8xbf16>
    %c56 = arith.constant 56 : index
    %c0_18 = arith.constant 0 : index
    %51 = vector.load %arg2[%c56, %c0_18] : memref<72x16xbf16, #tpu.memory_space<vmem>>, vector<8x16xbf16>
    %cst_19 = arith.constant dense<0.000000e+00> : vector<256x16xf32>
    %52 = tpu.matmul %50, %51, %cst_19 {dimension_numbers = #tpu.dot_dimension_numbers<[1], [0], [0], [1], [0, 0, 1, 1], [], []>} : vector<256x8xbf16>, vector<8x16xbf16>, vector<256x16xf32> -> vector<256x16xf32>
    %53 = arith.addf %49, %52 : vector<256x16xf32>
    %54 = arith.truncf %20 : vector<256x8xf32> to vector<256x8xbf16>
    %c64 = arith.constant 64 : index
    %c0_20 = arith.constant 0 : index
    %55 = vector.load %arg2[%c64, %c0_20] : memref<72x16xbf16, #tpu.memory_space<vmem>>, vector<8x16xbf16>
    %cst_21 = arith.constant dense<0.000000e+00> : vector<256x16xf32>
    %56 = tpu.matmul %54, %55, %cst_21 {dimension_numbers = #tpu.dot_dimension_numbers<[1], [0], [0], [1], [0, 0, 1, 1], [], []>} : vector<256x8xbf16>, vector<8x16xbf16>, vector<256x16xf32> -> vector<256x16xf32>
    %57 = arith.addf %53, %56 : vector<256x16xf32>
    %c0_22 = arith.constant 0 : index
    %c0_23 = arith.constant 0 : index
    %58 = vector.load %arg3[%c0_22, %c0_23] : memref<1x16xf32, #tpu.memory_space<vmem>>, vector<1x16xf32>
    %59 = vector.broadcast %58 : vector<1x16xf32> to vector<256x16xf32>
    %60 = arith.mulf %57, %59 : vector<256x16xf32>
    %c0_24 = arith.constant 0 : index
    %c0_25 = arith.constant 0 : index
    %61 = vector.load %arg4[%c0_24, %c0_25] : memref<1x16xf32, #tpu.memory_space<vmem>>, vector<1x16xf32>
    %62 = vector.broadcast %61 : vector<1x16xf32> to vector<256x16xf32>
    %63 = arith.addf %60, %62 : vector<256x16xf32>
    %cst_26 = arith.constant 0.000000e+00 : f32
    %64 = vector.broadcast %cst_26 : f32 to vector<256x16xf32>
    %65 = arith.maximumf %63, %64 : vector<256x16xf32>
    %cst_27 = arith.constant 0.000000e+00 : f32
    %66 = vector.broadcast %cst_27 : f32 to vector<26x26x16xf32>
    %c0_28 = arith.constant 0 : index
    %c0_29 = arith.constant 0 : index
    %c0_30 = arith.constant 0 : index
    %67 = vector.load %arg11[%c0_28, %c0_29, %c0_30] : memref<26x26x16xf32, #tpu.memory_space<vmem>>, vector<26x26x16xf32>
    tpu.vector_store %arg11[%c0_28, %c0_29, %c0_30], %66 {strides = array<i32>} : memref<26x26x16xf32, #tpu.memory_space<vmem>>, vector<26x26x16xf32>,
    %68 = vector.shape_cast %65 : vector<256x16xf32> to vector<16x16x16xf32>
    %c8_31 = arith.constant 8 : index
    %c8_32 = arith.constant 8 : index
    %c0_33 = arith.constant 0 : index
    %69 = vector.load %arg11[%c8_31, %c8_32, %c0_33] : memref<26x26x16xf32, #tpu.memory_space<vmem>>, vector<16x16x16xf32>
    tpu.vector_store %arg11[%c8_31, %c8_32, %c0_33], %68 {strides = array<i32>} : memref<26x26x16xf32, #tpu.memory_space<vmem>>, vector<16x16x16xf32>,
    %c0_34 = arith.constant 0 : index
    %c0_35 = arith.constant 0 : index
    %c0_36 = arith.constant 0 : index
    %70 = vector.load %arg11[%c0_34, %c0_35, %c0_36] : memref<26x26x16xf32, #tpu.memory_space<vmem>>, vector<26x26x16xf32>
    %71 = vector.extract_strided_slice %70 {offsets = [7, 7, 0], sizes = [16, 16, 16], strides = [1, 1, 1]} : vector<26x26x16xf32> to vector<16x16x16xf32>
    %72 = vector.shape_cast %71 : vector<16x16x16xf32> to vector<256x16xf32>
    %73 = vector.extract_strided_slice %70 {offsets = [7, 8, 0], sizes = [16, 16, 16], strides = [1, 1, 1]} : vector<26x26x16xf32> to vector<16x16x16xf32>
    %74 = vector.shape_cast %73 : vector<16x16x16xf32> to vector<256x16xf32>
    %75 = vector.extract_strided_slice %70 {offsets = [7, 9, 0], sizes = [16, 16, 16], strides = [1, 1, 1]} : vector<26x26x16xf32> to vector<16x16x16xf32>
    %76 = vector.shape_cast %75 : vector<16x16x16xf32> to vector<256x16xf32>
    %77 = vector.extract_strided_slice %70 {offsets = [8, 7, 0], sizes = [16, 16, 16], strides = [1, 1, 1]} : vector<26x26x16xf32> to vector<16x16x16xf32>
    %78 = vector.shape_cast %77 : vector<16x16x16xf32> to vector<256x16xf32>
    %79 = vector.extract_strided_slice %70 {offsets = [8, 8, 0], sizes = [16, 16, 16], strides = [1, 1, 1]} : vector<26x26x16xf32> to vector<16x16x16xf32>
    %80 = vector.shape_cast %79 : vector<16x16x16xf32> to vector<256x16xf32>
    %81 = vector.extract_strided_slice %70 {offsets = [8, 9, 0], sizes = [16, 16, 16], strides = [1, 1, 1]} : vector<26x26x16xf32> to vector<16x16x16xf32>
    %82 = vector.shape_cast %81 : vector<16x16x16xf32> to vector<256x16xf32>
    %83 = vector.extract_strided_slice %70 {offsets = [9, 7, 0], sizes = [16, 16, 16], strides = [1, 1, 1]} : vector<26x26x16xf32> to vector<16x16x16xf32>
    %84 = vector.shape_cast %83 : vector<16x16x16xf32> to vector<256x16xf32>
    %85 = vector.extract_strided_slice %70 {offsets = [9, 8, 0], sizes = [16, 16, 16], strides = [1, 1, 1]} : vector<26x26x16xf32> to vector<16x16x16xf32>
    %86 = vector.shape_cast %85 : vector<16x16x16xf32> to vector<256x16xf32>
    %87 = vector.extract_strided_slice %70 {offsets = [9, 9, 0], sizes = [16, 16, 16], strides = [1, 1, 1]} : vector<26x26x16xf32> to vector<16x16x16xf32>
    %88 = vector.shape_cast %87 : vector<16x16x16xf32> to vector<256x16xf32>
    %cst_37 = arith.constant 0.000000e+00 : f32
    %89 = vector.broadcast %cst_37 : f32 to vector<256x16xf32>
    %90 = arith.truncf %72 : vector<256x16xf32> to vector<256x16xbf16>
    %c0_38 = arith.constant 0 : index
    %c0_39 = arith.constant 0 : index
    %91 = vector.load %arg5[%c0_38, %c0_39] : memref<144x16xbf16, #tpu.memory_space<vmem>>, vector<16x16xbf16>
    %cst_40 = arith.constant dense<0.000000e+00> : vector<256x16xf32>
    %92 = tpu.matmul %90, %91, %cst_40 {dimension_numbers = #tpu.dot_dimension_numbers<[1], [0], [0], [1], [0, 0, 1, 1], [], []>} : vector<256x16xbf16>, vector<16x16xbf16>, vector<256x16xf32> -> vector<256x16xf32>
    %93 = arith.addf %89, %92 : vector<256x16xf32>
    %94 = arith.truncf %74 : vector<256x16xf32> to vector<256x16xbf16>
    %c16_41 = arith.constant 16 : index
    %c0_42 = arith.constant 0 : index
    %95 = vector.load %arg5[%c16_41, %c0_42] : memref<144x16xbf16, #tpu.memory_space<vmem>>, vector<16x16xbf16>
    %cst_43 = arith.constant dense<0.000000e+00> : vector<256x16xf32>
    %96 = tpu.matmul %94, %95, %cst_43 {dimension_numbers = #tpu.dot_dimension_numbers<[1], [0], [0], [1], [0, 0, 1, 1], [], []>} : vector<256x16xbf16>, vector<16x16xbf16>, vector<256x16xf32> -> vector<256x16xf32>
    %97 = arith.addf %93, %96 : vector<256x16xf32>
    %98 = arith.truncf %76 : vector<256x16xf32> to vector<256x16xbf16>
    %c32_44 = arith.constant 32 : index
    %c0_45 = arith.constant 0 : index
    %99 = vector.load %arg5[%c32_44, %c0_45] : memref<144x16xbf16, #tpu.memory_space<vmem>>, vector<16x16xbf16>
    %cst_46 = arith.constant dense<0.000000e+00> : vector<256x16xf32>
    %100 = tpu.matmul %98, %99, %cst_46 {dimension_numbers = #tpu.dot_dimension_numbers<[1], [0], [0], [1], [0, 0, 1, 1], [], []>} : vector<256x16xbf16>, vector<16x16xbf16>, vector<256x16xf32> -> vector<256x16xf32>
    %101 = arith.addf %97, %100 : vector<256x16xf32>
    %102 = arith.truncf %78 : vector<256x16xf32> to vector<256x16xbf16>
    %c48_47 = arith.constant 48 : index
    %c0_48 = arith.constant 0 : index
    %103 = vector.load %arg5[%c48_47, %c0_48] : memref<144x16xbf16, #tpu.memory_space<vmem>>, vector<16x16xbf16>
    %cst_49 = arith.constant dense<0.000000e+00> : vector<256x16xf32>
    %104 = tpu.matmul %102, %103, %cst_49 {dimension_numbers = #tpu.dot_dimension_numbers<[1], [0], [0], [1], [0, 0, 1, 1], [], []>} : vector<256x16xbf16>, vector<16x16xbf16>, vector<256x16xf32> -> vector<256x16xf32>
    %105 = arith.addf %101, %104 : vector<256x16xf32>
    %106 = arith.truncf %80 : vector<256x16xf32> to vector<256x16xbf16>
    %c64_50 = arith.constant 64 : index
    %c0_51 = arith.constant 0 : index
    %107 = vector.load %arg5[%c64_50, %c0_51] : memref<144x16xbf16, #tpu.memory_space<vmem>>, vector<16x16xbf16>
    %cst_52 = arith.constant dense<0.000000e+00> : vector<256x16xf32>
    %108 = tpu.matmul %106, %107, %cst_52 {dimension_numbers = #tpu.dot_dimension_numbers<[1], [0], [0], [1], [0, 0, 1, 1], [], []>} : vector<256x16xbf16>, vector<16x16xbf16>, vector<256x16xf32> -> vector<256x16xf32>
    %109 = arith.addf %105, %108 : vector<256x16xf32>
    %110 = arith.truncf %82 : vector<256x16xf32> to vector<256x16xbf16>
    %c80 = arith.constant 80 : index
    %c0_53 = arith.constant 0 : index
    %111 = vector.load %arg5[%c80, %c0_53] : memref<144x16xbf16, #tpu.memory_space<vmem>>, vector<16x16xbf16>
    %cst_54 = arith.constant dense<0.000000e+00> : vector<256x16xf32>
    %112 = tpu.matmul %110, %111, %cst_54 {dimension_numbers = #tpu.dot_dimension_numbers<[1], [0], [0], [1], [0, 0, 1, 1], [], []>} : vector<256x16xbf16>, vector<16x16xbf16>, vector<256x16xf32> -> vector<256x16xf32>
    %113 = arith.addf %109, %112 : vector<256x16xf32>
    %114 = arith.truncf %84 : vector<256x16xf32> to vector<256x16xbf16>
    %c96 = arith.constant 96 : index
    %c0_55 = arith.constant 0 : index
    %115 = vector.load %arg5[%c96, %c0_55] : memref<144x16xbf16, #tpu.memory_space<vmem>>, vector<16x16xbf16>
    %cst_56 = arith.constant dense<0.000000e+00> : vector<256x16xf32>
    %116 = tpu.matmul %114, %115, %cst_56 {dimension_numbers = #tpu.dot_dimension_numbers<[1], [0], [0], [1], [0, 0, 1, 1], [], []>} : vector<256x16xbf16>, vector<16x16xbf16>, vector<256x16xf32> -> vector<256x16xf32>
    %117 = arith.addf %113, %116 : vector<256x16xf32>
    %118 = arith.truncf %86 : vector<256x16xf32> to vector<256x16xbf16>
    %c112 = arith.constant 112 : index
    %c0_57 = arith.constant 0 : index
    %119 = vector.load %arg5[%c112, %c0_57] : memref<144x16xbf16, #tpu.memory_space<vmem>>, vector<16x16xbf16>
    %cst_58 = arith.constant dense<0.000000e+00> : vector<256x16xf32>
    %120 = tpu.matmul %118, %119, %cst_58 {dimension_numbers = #tpu.dot_dimension_numbers<[1], [0], [0], [1], [0, 0, 1, 1], [], []>} : vector<256x16xbf16>, vector<16x16xbf16>, vector<256x16xf32> -> vector<256x16xf32>
    %121 = arith.addf %117, %120 : vector<256x16xf32>
    %122 = arith.truncf %88 : vector<256x16xf32> to vector<256x16xbf16>
    %c128 = arith.constant 128 : index
    %c0_59 = arith.constant 0 : index
    %123 = vector.load %arg5[%c128, %c0_59] : memref<144x16xbf16, #tpu.memory_space<vmem>>, vector<16x16xbf16>
    %cst_60 = arith.constant dense<0.000000e+00> : vector<256x16xf32>
    %124 = tpu.matmul %122, %123, %cst_60 {dimension_numbers = #tpu.dot_dimension_numbers<[1], [0], [0], [1], [0, 0, 1, 1], [], []>} : vector<256x16xbf16>, vector<16x16xbf16>, vector<256x16xf32> -> vector<256x16xf32>
    %125 = arith.addf %121, %124 : vector<256x16xf32>
    %c0_61 = arith.constant 0 : index
    %c0_62 = arith.constant 0 : index
    %126 = vector.load %arg6[%c0_61, %c0_62] : memref<1x16xf32, #tpu.memory_space<vmem>>, vector<1x16xf32>
    %127 = vector.broadcast %126 : vector<1x16xf32> to vector<256x16xf32>
    %128 = arith.mulf %125, %127 : vector<256x16xf32>
    %c0_63 = arith.constant 0 : index
    %c0_64 = arith.constant 0 : index
    %129 = vector.load %arg7[%c0_63, %c0_64] : memref<1x16xf32, #tpu.memory_space<vmem>>, vector<1x16xf32>
    %130 = vector.broadcast %129 : vector<1x16xf32> to vector<256x16xf32>
    %131 = arith.addf %128, %130 : vector<256x16xf32>
    %cst_65 = arith.constant 0.000000e+00 : f32
    %132 = vector.broadcast %cst_65 : f32 to vector<256x16xf32>
    %133 = arith.maximumf %131, %132 : vector<256x16xf32>
    %134 = vector.extract_strided_slice %2 {offsets = [1, 1, 0], sizes = [16, 16, 8], strides = [1, 1, 1]} : vector<18x18x8xf32> to vector<16x16x8xf32>
    %135 = vector.shape_cast %134 : vector<16x16x8xf32> to vector<256x8xf32>
    %136 = arith.truncf %135 : vector<256x8xf32> to vector<256x8xbf16>
    %c0_66 = arith.constant 0 : index
    %c0_67 = arith.constant 0 : index
    %137 = vector.load %arg8[%c0_66, %c0_67] : memref<8x16xbf16, #tpu.memory_space<vmem>>, vector<8x16xbf16>
    %cst_68 = arith.constant dense<0.000000e+00> : vector<256x16xf32>
    %138 = tpu.matmul %136, %137, %cst_68 {dimension_numbers = #tpu.dot_dimension_numbers<[1], [0], [0], [1], [0, 0, 1, 1], [], []>} : vector<256x8xbf16>, vector<8x16xbf16>, vector<256x16xf32> -> vector<256x16xf32>
    %c0_69 = arith.constant 0 : index
    %c0_70 = arith.constant 0 : index
    %139 = vector.load %arg9[%c0_69, %c0_70] : memref<1x16xf32, #tpu.memory_space<vmem>>, vector<1x16xf32>
    %140 = vector.broadcast %139 : vector<1x16xf32> to vector<256x16xf32>
    %141 = arith.addf %138, %140 : vector<256x16xf32>
    %142 = arith.addf %133, %141 : vector<256x16xf32>
    %c0_71 = arith.constant 0 : index
    %c0_72 = arith.constant 0 : index
    %c0_73 = arith.constant 0 : index
    %143 = vector.load %arg10[%c0_71, %c0_72, %c0_73] : memref<1x256x16xf32, #tpu.memory_space<vmem>>, vector<1x256x16xf32>
    %144 = vector.shape_cast %143 : vector<1x256x16xf32> to vector<256x16xf32>
    %145 = vector.shape_cast %142 : vector<256x16xf32> to vector<1x256x16xf32>
    tpu.vector_store %arg10[%c0_71, %c0_72, %c0_73], %145 {strides = array<i32>} : memref<1x256x16xf32, #tpu.memory_space<vmem>>, vector<1x256x16xf32>,
    return
  }
  func.func @transform_0(%arg0: i32) -> (i32, i32, i32, i32) {
    %c0_i32 = arith.constant 0 : i32
    %c0_i32_0 = arith.constant 0 : i32
    %c0_i32_1 = arith.constant 0 : i32
    %c0_i32_2 = arith.constant 0 : i32
    return %arg0, %c0_i32, %c0_i32_0, %c0_i32_1 : i32, i32, i32, i32
  }
  func.func @transform_1(%arg0: i32) -> (i32, i32) {
    %c0_i32 = arith.constant 0 : i32
    %c0_i32_0 = arith.constant 0 : i32
    %c0_i32_1 = arith.constant 0 : i32
    return %c0_i32, %c0_i32_0 : i32, i32
  }
  func.func @transform_2(%arg0: i32) -> (i32, i32) {
    %c0_i32 = arith.constant 0 : i32
    %c0_i32_0 = arith.constant 0 : i32
    %c0_i32_1 = arith.constant 0 : i32
    return %c0_i32, %c0_i32_0 : i32, i32
  }
  func.func @transform_3(%arg0: i32) -> (i32, i32) {
    %c0_i32 = arith.constant 0 : i32
    %c0_i32_0 = arith.constant 0 : i32
    %c0_i32_1 = arith.constant 0 : i32
    return %c0_i32, %c0_i32_0 : i32, i32
  }
  func.func @transform_4(%arg0: i32) -> (i32, i32) {
    %c0_i32 = arith.constant 0 : i32
    %c0_i32_0 = arith.constant 0 : i32
    %c0_i32_1 = arith.constant 0 : i32
    return %c0_i32, %c0_i32_0 : i32, i32
  }
  func.func @transform_5(%arg0: i32) -> (i32, i32) {
    %c0_i32 = arith.constant 0 : i32
    %c0_i32_0 = arith.constant 0 : i32
    %c0_i32_1 = arith.constant 0 : i32
    return %c0_i32, %c0_i32_0 : i32, i32
  }
  func.func @transform_6(%arg0: i32) -> (i32, i32) {
    %c0_i32 = arith.constant 0 : i32
    %c0_i32_0 = arith.constant 0 : i32
    %c0_i32_1 = arith.constant 0 : i32
    return %c0_i32, %c0_i32_0 : i32, i32
  }
  func.func @transform_7(%arg0: i32) -> (i32, i32) {
    %c0_i32 = arith.constant 0 : i32
    %c0_i32_0 = arith.constant 0 : i32
    %c0_i32_1 = arith.constant 0 : i32
    return %c0_i32, %c0_i32_0 : i32, i32
  }
  func.func @transform_8(%arg0: i32) -> (i32, i32) {
    %c0_i32 = arith.constant 0 : i32
    %c0_i32_0 = arith.constant 0 : i32
    %c0_i32_1 = arith.constant 0 : i32
    return %c0_i32, %c0_i32_0 : i32, i32
  }
  func.func @transform_9(%arg0: i32) -> (i32, i32, i32) {
    %c0_i32 = arith.constant 0 : i32
    %c0_i32_0 = arith.constant 0 : i32
    %c0_i32_1 = arith.constant 0 : i32
    return %arg0, %c0_i32, %c0_i32_0 : i32, i32, i32
  }
}

</mosaic_0001>

<llo_original>
// kernel: rescnn_block.1
$region0: #{rescnn_block.1}
  #allocation0 [shape = 'u32[]', space=smem, size = 0x4, offset = 0x4, fixed_abs, tag = 'smem constant byte address 0x4 - core index']
  #allocation1 [shape = 'u32[144,128]{1,0:T(1,128)}', space=vmem, size = 0x12000, scoped, tag = 'internal scratch']
  #allocation2 [shape = 'f32[26,26,16]{2,1,0:T(8,128)}', space=vmem, size = 0x68000, scoped, tag = 'scratch operand']
  %s0 = inlined_call_operand.vmem [shape: bf16[2,18,18,8], index: 0, kind: input, shape index: {}]
  %s1 = inlined_call_operand.vmem [shape: bf16[72,16], index: 1, kind: input, shape index: {}]
  %s2 = inlined_call_operand.vmem [shape: f32[1,16], index: 2, kind: input, shape index: {}]
  %s3 = inlined_call_operand.vmem [shape: f32[1,16], index: 3, kind: input, shape index: {}]
  %s4 = inlined_call_operand.vmem [shape: bf16[144,16], index: 4, kind: input, shape index: {}]
  %s5 = inlined_call_operand.vmem [shape: f32[1,16], index: 5, kind: input, shape index: {}]
  %s6 = inlined_call_operand.vmem [shape: f32[1,16], index: 6, kind: input, shape index: {}]
  %s7 = inlined_call_operand.vmem [shape: bf16[8,16], index: 7, kind: input, shape index: {}]
  %s8 = inlined_call_operand.vmem [shape: f32[1,16], index: 8, kind: input, shape index: {}]
  %s9 = inlined_call_operand.vmem [shape: f32[2,256,16], index: 9, kind: output, shape index: {}]
  %s10 = sld [smem:[#allocation0]]
  $region69: #{rescnn_block.1} parent=0
    _
  %s12 = ssub.s32 1, %s10
  %s13 = scalar_select 0, %s12, %s10
  loop: start=0, step=1, limit=4
  $region2: #{rescnn_block.1} parent=0 // loop_pre_header
    _
  $region3: #{rescnn_block.1} parent=0 // loop_header
    %s15 = sphi 0, %s19
    %p16 = scmp.ge.s32.totalorder %s15, 4
    %s25 = sphi 0, %s27
    %s28 = sphi 0, %s25
    %s29 = sphi 0, %s28
    %s45 = sphi 0, %s29
    %s49 = sphi 0, %s49
    %s51 = sphi 0, %s49
    %s52 = sphi 0, %s51
    %s66 = sphi 0, %s52
    %s70 = sphi 0, %s70
    %s72 = sphi 0, %s70
    %s73 = sphi 0, %s72
    %s87 = sphi 0, %s73
    %s91 = sphi 0, %s91
    %s93 = sphi 0, %s91
    %s94 = sphi 0, %s93
    %s108 = sphi 0, %s94
    %s112 = sphi 0, %s112
    %s114 = sphi 0, %s112
    %s115 = sphi 0, %s114
    %s129 = sphi 0, %s115
    %s133 = sphi 0, %s133
    %s135 = sphi 0, %s133
    %s136 = sphi 0, %s135
    %s150 = sphi 0, %s136
    %s154 = sphi 0, %s154
    %s156 = sphi 0, %s154
    %s157 = sphi 0, %s156
    %s171 = sphi 0, %s157
    %s175 = sphi 0, %s175
    %s177 = sphi 0, %s175
    %s178 = sphi 0, %s177
    %s192 = sphi 0, %s178
    %s196 = sphi 0, %s196
    %s198 = sphi 0, %s196
    %s199 = sphi 0, %s198
    %s213 = sphi 0, %s199
    %s219 = sphi 0, %s221
    %s222 = sphi 0, %s219
    %s223 = sphi 0, %s222
    %s239 = sphi 0, %s223
  $region4: #{rescnn_block.1} parent=0 // loop_header_branch
    %18 = sbr.rel (%p16) target = $region8
  $region5: #{rescnn_block.1} parent=0 // loop_body
    %s20 = ssub.s32 %s15, 1
    %s21 = ssub.s32 %s15, 2
    %s22 = sadd.s32 %s15, 1
    %s23 = ssub.s32 %s15, %s22
    %p24 = scmp.eq.s32.totalorder %s23, 0
    %s26 = sadd.s32 %s25, 1
    %s27 = scalar_select %p24, %s25, %s26
    %p30 = pneg %p24
    %p31 = scmp.eq.s32.totalorder %s15, 1
    %p32 = por %p30, %p31
    %p33 = scmp.ne.s32.totalorder %s25, %s28
    %p34 = scmp.eq.s32.totalorder %s15, 0
    %p35 = por %p33, %p34
    %p36 = scmp.ne.s32.totalorder %s25, %s28
    %p37 = scmp.eq.s32.totalorder %s20, 1
    %p38 = por %p36, %p37
    %p39 = scmp.ne.s32.totalorder %s28, %s29
    %p40 = scmp.eq.s32.totalorder %s20, 0
    %p41 = por %p39, %p40
    %p42 = scmp.ne.s32.totalorder %s28, %s29
    %p43 = scmp.eq.s32.totalorder %s21, 1
    %p44 = por %p42, %p43
    %p46 = scmp.ne.s32.totalorder %s29, %s45
    %p47 = scmp.eq.s32.totalorder %s21, 0
    %p48 = por %p46, %p47
    %s50 = sadd.s32 %s49, 1
    %p53 = scmp.eq.s32.totalorder %s15, 1
    %p54 = scmp.ne.s32.totalorder %s49, %s51
    %p55 = scmp.eq.s32.totalorder %s15, 0
    %p56 = por %p54, %p55
    %p57 = scmp.ne.s32.totalorder %s49, %s51
    %p58 = scmp.eq.s32.totalorder %s20, 1
    %p59 = por %p57, %p58
    %p60 = scmp.ne.s32.totalorder %s51, %s52
    %p61 = scmp.eq.s32.totalorder %s20, 0
    %p62 = por %p60, %p61
    %p63 = scmp.ne.s32.totalorder %s51, %s52
    %p64 = scmp.eq.s32.totalorder %s21, 1
    %p65 = por %p63, %p64
    %p67 = scmp.ne.s32.totalorder %s52, %s66
    %p68 = scmp.eq.s32.totalorder %s21, 0
    %p69 = por %p67, %p68
    %s71 = sadd.s32 %s70, 1
    %p74 = scmp.eq.s32.totalorder %s15, 1
    %p75 = scmp.ne.s32.totalorder %s70, %s72
    %p76 = scmp.eq.s32.totalorder %s15, 0
    %p77 = por %p75, %p76
    %p78 = scmp.ne.s32.totalorder %s70, %s72
    %p79 = scmp.eq.s32.totalorder %s20, 1
    %p80 = por %p78, %p79
    %p81 = scmp.ne.s32.totalorder %s72, %s73
    %p82 = scmp.eq.s32.totalorder %s20, 0
    %p83 = por %p81, %p82
    %p84 = scmp.ne.s32.totalorder %s72, %s73
    %p85 = scmp.eq.s32.totalorder %s21, 1
    %p86 = por %p84, %p85
    %p88 = scmp.ne.s32.totalorder %s73, %s87
    %p89 = scmp.eq.s32.totalorder %s21, 0
    %p90 = por %p88, %p89
    %s92 = sadd.s32 %s91, 1
    %p95 = scmp.eq.s32.totalorder %s15, 1
    %p96 = scmp.ne.s32.totalorder %s91, %s93
    %p97 = scmp.eq.s32.totalorder %s15, 0
    %p98 = por %p96, %p97
    %p99 = scmp.ne.s32.totalorder %s91, %s93
    %p100 = scmp.eq.s32.totalorder %s20, 1
    %p101 = por %p99, %p100
    %p102 = scmp.ne.s32.totalorder %s93, %s94
    %p103 = scmp.eq.s32.totalorder %s20, 0
    %p104 = por %p102, %p103
    %p105 = scmp.ne.s32.totalorder %s93, %s94
    %p106 = scmp.eq.s32.totalorder %s21, 1
    %p107 = por %p105, %p106
    %p109 = scmp.ne.s32.totalorder %s94, %s108
    %p110 = scmp.eq.s32.totalorder %s21, 0
    %p111 = por %p109, %p110
    %s113 = sadd.s32 %s112, 1
    %p116 = scmp.eq.s32.totalorder %s15, 1
    %p117 = scmp.ne.s32.totalorder %s112, %s114
    %p118 = scmp.eq.s32.totalorder %s15, 0
    %p119 = por %p117, %p118
    %p120 = scmp.ne.s32.totalorder %s112, %s114
    %p121 = scmp.eq.s32.totalorder %s20, 1
    %p122 = por %p120, %p121
    %p123 = scmp.ne.s32.totalorder %s114, %s115
    %p124 = scmp.eq.s32.totalorder %s20, 0
    %p125 = por %p123, %p124
    %p126 = scmp.ne.s32.totalorder %s114, %s115
    %p127 = scmp.eq.s32.totalorder %s21, 1
    %p128 = por %p126, %p127
    %p130 = scmp.ne.s32.totalorder %s115, %s129
    %p131 = scmp.eq.s32.totalorder %s21, 0
    %p132 = por %p130, %p131
    %s134 = sadd.s32 %s133, 1
    %p137 = scmp.eq.s32.totalorder %s15, 1
    %p138 = scmp.ne.s32.totalorder %s133, %s135
    %p139 = scmp.eq.s32.totalorder %s15, 0
    %p140 = por %p138, %p139
    %p141 = scmp.ne.s32.totalorder %s133, %s135
    %p142 = scmp.eq.s32.totalorder %s20, 1
    %p143 = por %p141, %p142
    %p144 = scmp.ne.s32.totalorder %s135, %s136
    %p145 = scmp.eq.s32.totalorder %s20, 0
    %p146 = por %p144, %p145
    %p147 = scmp.ne.s32.totalorder %s135, %s136
    %p148 = scmp.eq.s32.totalorder %s21, 1
    %p149 = por %p147, %p148
    %p151 = scmp.ne.s32.totalorder %s136, %s150
    %p152 = scmp.eq.s32.totalorder %s21, 0
    %p153 = por %p151, %p152
    %s155 = sadd.s32 %s154, 1
    %p158 = scmp.eq.s32.totalorder %s15, 1
    %p159 = scmp.ne.s32.totalorder %s154, %s156
    %p160 = scmp.eq.s32.totalorder %s15, 0
    %p161 = por %p159, %p160
    %p162 = scmp.ne.s32.totalorder %s154, %s156
    %p163 = scmp.eq.s32.totalorder %s20, 1
    %p164 = por %p162, %p163
    %p165 = scmp.ne.s32.totalorder %s156, %s157
    %p166 = scmp.eq.s32.totalorder %s20, 0
    %p167 = por %p165, %p166
    %p168 = scmp.ne.s32.totalorder %s156, %s157
    %p169 = scmp.eq.s32.totalorder %s21, 1
    %p170 = por %p168, %p169
    %p172 = scmp.ne.s32.totalorder %s157, %s171
    %p173 = scmp.eq.s32.totalorder %s21, 0
    %p174 = por %p172, %p173
    %s176 = sadd.s32 %s175, 1
    %p179 = scmp.eq.s32.totalorder %s15, 1
    %p180 = scmp.ne.s32.totalorder %s175, %s177
    %p181 = scmp.eq.s32.totalorder %s15, 0
    %p182 = por %p180, %p181
    %p183 = scmp.ne.s32.totalorder %s175, %s177
    %p184 = scmp.eq.s32.totalorder %s20, 1
    %p185 = por %p183, %p184
    %p186 = scmp.ne.s32.totalorder %s177, %s178
    %p187 = scmp.eq.s32.totalorder %s20, 0
    %p188 = por %p186, %p187
    %p189 = scmp.ne.s32.totalorder %s177, %s178
    %p190 = scmp.eq.s32.totalorder %s21, 1
    %p191 = por %p189, %p190
    %p193 = scmp.ne.s32.totalorder %s178, %s192
    %p194 = scmp.eq.s32.totalorder %s21, 0
    %p195 = por %p193, %p194
    %s197 = sadd.s32 %s196, 1
    %p200 = scmp.eq.s32.totalorder %s15, 1
    %p201 = scmp.ne.s32.totalorder %s196, %s198
    %p202 = scmp.eq.s32.totalorder %s15, 0
    %p203 = por %p201, %p202
    %p204 = scmp.ne.s32.totalorder %s196, %s198
    %p205 = scmp.eq.s32.totalorder %s20, 1
    %p206 = por %p204, %p205
    %p207 = scmp.ne.s32.totalorder %s198, %s199
    %p208 = scmp.eq.s32.totalorder %s20, 0
    %p209 = por %p207, %p208
    %p210 = scmp.ne.s32.totalorder %s198, %s199
    %p211 = scmp.eq.s32.totalorder %s21, 1
    %p212 = por %p210, %p211
    %p214 = scmp.ne.s32.totalorder %s199, %s213
    %p215 = scmp.eq.s32.totalorder %s21, 0
    %p216 = por %p214, %p215
    %s217 = ssub.s32 %s15, %s22
    %p218 = scmp.eq.s32.totalorder %s217, 0
    %s220 = sadd.s32 %s219, 1
    %s221 = scalar_select %p218, %s219, %s220
    %p224 = pneg %p218
    %p225 = scmp.eq.s32.totalorder %s15, 1
    %p226 = por %p224, %p225
    %p227 = scmp.ne.s32.totalorder %s219, %s222
    %p228 = scmp.eq.s32.totalorder %s15, 0
    %p229 = por %p227, %p228
    %p230 = scmp.ne.s32.totalorder %s219, %s222
    %p231 = scmp.eq.s32.totalorder %s20, 1
    %p232 = por %p230, %p231
    %p233 = scmp.ne.s32.totalorder %s222, %s223
    %p234 = scmp.eq.s32.totalorder %s20, 0
    %p235 = por %p233, %p234
    %p236 = scmp.ne.s32.totalorder %s222, %s223
    %p237 = scmp.eq.s32.totalorder %s21, 1
    %p238 = por %p236, %p237
    %p240 = scmp.ne.s32.totalorder %s223, %s239
    %p241 = scmp.eq.s32.totalorder %s21, 0
    %p242 = por %p240, %p241
    %p243 = scmp.le.s32.totalorder 1, %s15
    %p244 = scmp.lt.s32.totalorder %s15, 3
    %p245 = pnand %p243, %p244
    %p246 = pneg %p245
    // Predicated region
    $region9: #{rescnn_block.1} parent=5 // pred_check
      _
    $region10: #{rescnn_block.1} parent=5 // pred_check_branch
      %248 = sbr.rel (%p245) target = $region12
    $region11: #{rescnn_block.1} parent=5 // pred_region
      %s249 = ssub.s32 %s15, 1
      // Predicated region
      $region13: #{rescnn_block.1} parent=11 // pred_check
        %p250 = pneg %p62
      $region14: #{rescnn_block.1} parent=11 // pred_check_branch
        %252 = sbr.rel (%p250) target = $region16
      $region15: #{rescnn_block.1} parent=11 // pred_region
        _
      $region16: #{rescnn_block.1} parent=11 // pred_fallthru
        _
      // Predicated region
      $region17: #{rescnn_block.1} parent=11 // pred_check
        %p253 = pneg %p83
      $region18: #{rescnn_block.1} parent=11 // pred_check_branch
        %255 = sbr.rel (%p253) target = $region20
      $region19: #{rescnn_block.1} parent=11 // pred_region
        _
      $region20: #{rescnn_block.1} parent=11 // pred_fallthru
        _
      // Predicated region
      $region21: #{rescnn_block.1} parent=11 // pred_check
        %p256 = pneg %p104
      $region22: #{rescnn_block.1} parent=11 // pred_check_branch
        %258 = sbr.rel (%p256) target = $region24
      $region23: #{rescnn_block.1} parent=11 // pred_region
        _
      $region24: #{rescnn_block.1} parent=11 // pred_fallthru
        _
      // Predicated region
      $region25: #{rescnn_block.1} parent=11 // pred_check
        %p259 = pneg %p125
      $region26: #{rescnn_block.1} parent=11 // pred_check_branch
        %261 = sbr.rel (%p259) target = $region28
      $region27: #{rescnn_block.1} parent=11 // pred_region
        _
      $region28: #{rescnn_block.1} parent=11 // pred_fallthru
        _
      // Predicated region
      $region29: #{rescnn_block.1} parent=11 // pred_check
        %p262 = pneg %p146
      $region30: #{rescnn_block.1} parent=11 // pred_check_branch
        %264 = sbr.rel (%p262) target = $region32
      $region31: #{rescnn_block.1} parent=11 // pred_region
        _
      $region32: #{rescnn_block.1} parent=11 // pred_fallthru
        _
      // Predicated region
      $region33: #{rescnn_block.1} parent=11 // pred_check
        %p265 = pneg %p167
      $region34: #{rescnn_block.1} parent=11 // pred_check_branch
        %267 = sbr.rel (%p265) target = $region36
      $region35: #{rescnn_block.1} parent=11 // pred_region
        _
      $region36: #{rescnn_block.1} parent=11 // pred_fallthru
        _
      // Predicated region
      $region37: #{rescnn_block.1} parent=11 // pred_check
        %p268 = pneg %p188
      $region38: #{rescnn_block.1} parent=11 // pred_check_branch
        %270 = sbr.rel (%p268) target = $region40
      $region39: #{rescnn_block.1} parent=11 // pred_region
        _
      $region40: #{rescnn_block.1} parent=11 // pred_fallthru
        _
      // Predicated region
      $region41: #{rescnn_block.1} parent=11 // pred_check
        %p271 = pneg %p209
      $region42: #{rescnn_block.1} parent=11 // pred_check_branch
        %273 = sbr.rel (%p271) target = $region44
      $region43: #{rescnn_block.1} parent=11 // pred_region
        _
      $region44: #{rescnn_block.1} parent=11 // pred_fallthru
        _
    $region12: #{rescnn_block.1} parent=5 // pred_fallthru
      _
    %p274 = scmp.lt.s32.totalorder %s15, 2
    // Predicated region
    $region45: #{rescnn_block.1} parent=5 // pred_check
      %p275 = pneg %p274
    $region46: #{rescnn_block.1} parent=5 // pred_check_branch
      %277 = sbr.rel (%p275) target = $region48
    $region47: #{rescnn_block.1} parent=5 // pred_region
      // Predicated region
      $region49: #{rescnn_block.1} parent=47 // pred_check
        %p278 = pneg %p35
      $region50: #{rescnn_block.1} parent=47 // pred_check_branch
        %280 = sbr.rel (%p278) target = $region52
      $region51: #{rescnn_block.1} parent=47 // pred_region
        %p281 = scmp.lt.s32.totalorder %s15, 1
        %s282 = scalar_select %p281, %s15, 1
        %s283 = smul.addr %s282, 54
        %s284 = smul.addr %s283, 4
        %s285 = scalar_lea.vmem %s0, %s284
      $region52: #{rescnn_block.1} parent=47 // pred_fallthru
        _
    $region48: #{rescnn_block.1} parent=5 // pred_fallthru
      _
    %p286 = scmp.le.s32.totalorder 1, %s15
    %p287 = scmp.lt.s32.totalorder %s15, 3
    %p288 = pnand %p286, %p287
    %p289 = pneg %p288
    // Predicated region
    $region53: #{rescnn_block.1} parent=5 // pred_check
      _
    $region54: #{rescnn_block.1} parent=5 // pred_check_branch
      %291 = sbr.rel (%p288) target = $region56
    $region55: #{rescnn_block.1} parent=5 // pred_region
      %s292 = ssub.s32 %s15, 1
      %p293 = scmp.lt.s32.totalorder %s20, 1
      %s294 = scalar_select %p293, %s20, 1
      %s295 = smul.addr %s294, 54
      %s296 = smul.addr %s295, 4
      %s297 = scalar_lea.vmem %s0, %s296
      %p298 = pneg %p41
      %p299 = pneg %p38
      %p300 = pneg %p62
      %p301 = pneg %p59
      %p302 = pneg %p83
      %p303 = pneg %p80
      %p304 = pneg %p104
      %p305 = pneg %p101
      %p306 = pneg %p125
      %p307 = pneg %p122
      %p308 = pneg %p146
      %p309 = pneg %p143
      %p310 = pneg %p167
      %p311 = pneg %p164
      %p312 = pneg %p188
      %p313 = pneg %p185
      %p314 = pneg %p209
      %p315 = pneg %p206
      %p316 = pneg %p235
      %p317 = pneg %p232
      %p318 = scmp.lt.s32.totalorder %s20, 1
      %s319 = scalar_select %p318, %s20, 1
      %s320 = smul.addr %s319, 32
      %s321 = smul.addr %s320, 8
      %s322 = scalar_lea.vmem %s9, %s321
      %p323 = scmp.lt.s32.totalorder %s20, 1
      %s324 = scalar_select %p323, %s20, 1
      %s325 = smul.addr %s324, 54
      %s326 = smul.addr %s325, 4
      %s327 = scalar_lea.vmem %s0, %s326
      %p328 = scmp.lt.s32.totalorder %s20, 1
      %s329 = scalar_select %p328, %s20, 1
      %s330 = smul.addr %s329, 32
      %s331 = smul.addr %s330, 8
      %s332 = scalar_lea.vmem %s9, %s331
      %v334 = vld [vmem:[%s327] sm:$0xf]
      %v335 = vld [vmem:[%s327 + $0x4] sm:$0xf]
      %v336 = vld [vmem:[%s327 + $0x8] sm:$0x1]
      %v337 = vld [vmem:[%s327 + $0xc] sm:$0xf]
      %v338 = vld [vmem:[%s327 + $0x10] sm:$0xf]
      %v339 = vld [vmem:[%s327 + $0x14] sm:$0x1]
      %v340 = vld [vmem:[%s327 + $0x18] sm:$0xf]
      %v341 = vld [vmem:[%s327 + $0x1c] sm:$0xf]
      %v342 = vld [vmem:[%s327 + $0x20] sm:$0x1]
      %v343 = vld [vmem:[%s327 + $0x24] sm:$0xf]
      %v344 = vld [vmem:[%s327 + $0x28] sm:$0xf]
      %v345 = vld [vmem:[%s327 + $0x2c] sm:$0x1]
      %v346 = vld [vmem:[%s327 + $0x30] sm:$0xf]
      %v347 = vld [vmem:[%s327 + $0x34] sm:$0xf]
      %v348 = vld [vmem:[%s327 + $0x38] sm:$0x1]
      %v349 = vld [vmem:[%s327 + $0x3c] sm:$0xf]
      %v350 = vld [vmem:[%s327 + $0x40] sm:$0xf]
      %v351 = vld [vmem:[%s327 + $0x44] sm:$0x1]
      %v352 = vld [vmem:[%s327 + $0x48] sm:$0xf]
      %v353 = vld [vmem:[%s327 + $0x4c] sm:$0xf]
      %v354 = vld [vmem:[%s327 + $0x50] sm:$0x1]
      %v355 = vld [vmem:[%s327 + $0x54] sm:$0xf]
      %v356 = vld [vmem:[%s327 + $0x58] sm:$0xf]
      %v357 = vld [vmem:[%s327 + $0x5c] sm:$0x1]
      %v358 = vld [vmem:[%s327 + $0x60] sm:$0xf]
      %v359 = vld [vmem:[%s327 + $0x64] sm:$0xf]
      %v360 = vld [vmem:[%s327 + $0x68] sm:$0x1]
      %v361 = vld [vmem:[%s327 + $0x6c] sm:$0xf]
      %v362 = vld [vmem:[%s327 + $0x70] sm:$0xf]
      %v363 = vld [vmem:[%s327 + $0x74] sm:$0x1]
      %v364 = vld [vmem:[%s327 + $0x78] sm:$0xf]
      %v365 = vld [vmem:[%s327 + $0x7c] sm:$0xf]
      %v366 = vld [vmem:[%s327 + $0x80] sm:$0x1]
      %v367 = vld [vmem:[%s327 + $0x84] sm:$0xf]
      %v368 = vld [vmem:[%s327 + $0x88] sm:$0xf]
      %v369 = vld [vmem:[%s327 + $0x8c] sm:$0x1]
      %v370 = vld [vmem:[%s327 + $0x90] sm:$0xf]
      %v371 = vld [vmem:[%s327 + $0x94] sm:$0xf]
      %v372 = vld [vmem:[%s327 + $0x98] sm:$0x1]
      %v373 = vld [vmem:[%s327 + $0x9c] sm:$0xf]
      %v374 = vld [vmem:[%s327 + $0xa0] sm:$0xf]
      %v375 = vld [vmem:[%s327 + $0xa4] sm:$0x1]
      %v376 = vld [vmem:[%s327 + $0xa8] sm:$0xf]
      %v377 = vld [vmem:[%s327 + $0xac] sm:$0xf]
      %v378 = vld [vmem:[%s327 + $0xb0] sm:$0x1]
      %v379 = vld [vmem:[%s327 + $0xb4] sm:$0xf]
      %v380 = vld [vmem:[%s327 + $0xb8] sm:$0xf]
      %v381 = vld [vmem:[%s327 + $0xbc] sm:$0x1]
      %v382 = vld [vmem:[%s327 + $0xc0] sm:$0xf]
      %v383 = vld [vmem:[%s327 + $0xc4] sm:$0xf]
      %v384 = vld [vmem:[%s327 + $0xc8] sm:$0x1]
      %v385 = vld [vmem:[%s327 + $0xcc] sm:$0xf]
      %v386 = vld [vmem:[%s327 + $0xd0] sm:$0xf]
      %v387 = vld [vmem:[%s327 + $0xd4] sm:$0x1]
      %v388 = vunpack.c.l.bf16 %v334
      %v389 = vunpack.c.l.bf16 %v335
      %v390 = vunpack.c.l.bf16 %v336
      %v391 = vunpack.c.l.bf16 %v337
      %v392 = vunpack.c.l.bf16 %v338
      %v393 = vunpack.c.l.bf16 %v339
      %v394 = vunpack.c.l.bf16 %v340
      %v395 = vunpack.c.l.bf16 %v341
      %v396 = vunpack.c.l.bf16 %v342
      %v397 = vunpack.c.l.bf16 %v343
      %v398 = vunpack.c.l.bf16 %v344
      %v399 = vunpack.c.l.bf16 %v345
      %v400 = vunpack.c.l.bf16 %v346
      %v401 = vunpack.c.l.bf16 %v347
      %v402 = vunpack.c.l.bf16 %v348
      %v403 = vunpack.c.l.bf16 %v349
      %v404 = vunpack.c.l.bf16 %v350
      %v405 = vunpack.c.l.bf16 %v351
      %v406 = vunpack.c.l.bf16 %v352
      %v407 = vunpack.c.l.bf16 %v353
      %v408 = vunpack.c.l.bf16 %v354
      %v409 = vunpack.c.l.bf16 %v355
      %v410 = vunpack.c.l.bf16 %v356
      %v411 = vunpack.c.l.bf16 %v357
      %v412 = vunpack.c.l.bf16 %v358
      %v413 = vunpack.c.l.bf16 %v359
      %v414 = vunpack.c.l.bf16 %v360
      %v415 = vunpack.c.l.bf16 %v361
      %v416 = vunpack.c.l.bf16 %v362
      %v417 = vunpack.c.l.bf16 %v363
      %v418 = vunpack.c.l.bf16 %v364
      %v419 = vunpack.c.l.bf16 %v365
      %v420 = vunpack.c.l.bf16 %v366
      %v421 = vunpack.c.l.bf16 %v367
      %v422 = vunpack.c.l.bf16 %v368
      %v423 = vunpack.c.l.bf16 %v369
      %v424 = vunpack.c.l.bf16 %v370
      %v425 = vunpack.c.l.bf16 %v371
      %v426 = vunpack.c.l.bf16 %v372
      %v427 = vunpack.c.l.bf16 %v373
      %v428 = vunpack.c.l.bf16 %v374
      %v429 = vunpack.c.l.bf16 %v375
      %v430 = vunpack.c.l.bf16 %v376
      %v431 = vunpack.c.l.bf16 %v377
      %v432 = vunpack.c.l.bf16 %v378
      %v433 = vunpack.c.l.bf16 %v379
      %v434 = vunpack.c.l.bf16 %v380
      %v435 = vunpack.c.l.bf16 %v381
      %v436 = vunpack.c.l.bf16 %v382
      %v437 = vunpack.c.l.bf16 %v383
      %v438 = vunpack.c.l.bf16 %v384
      %v439 = vunpack.c.l.bf16 %v385
      %v440 = vunpack.c.l.bf16 %v386
      %v441 = vunpack.c.l.bf16 %v387
      %vm490 = vcmask 1046528
      %v491 = vrot.slane %v388, 1
      %v492 = vrot.slane %v389, 1
      %v493 = vsel %vm490, %v491, %v492
      %v494 = vrot.slane %v390, 1
      %v495 = vsel %vm490, %v492, %v494
      %v496 = vrot.slane %v391, 1
      %v497 = vrot.slane %v392, 1
      %v498 = vsel %vm490, %v496, %v497
      %v499 = vrot.slane %v393, 1
      %v500 = vsel %vm490, %v497, %v499
      %v501 = vrot.slane %v394, 1
      %v502 = vrot.slane %v395, 1
      %v503 = vsel %vm490, %v501, %v502
      %v504 = vrot.slane %v396, 1
      %v505 = vsel %vm490, %v502, %v504
      %v506 = vrot.slane %v397, 1
      %v507 = vrot.slane %v398, 1
      %v508 = vsel %vm490, %v506, %v507
      %v509 = vrot.slane %v399, 1
      %v510 = vsel %vm490, %v507, %v509
      %v511 = vrot.slane %v400, 1
      %v512 = vrot.slane %v401, 1
      %v513 = vsel %vm490, %v511, %v512
      %v514 = vrot.slane %v402, 1
      %v515 = vsel %vm490, %v512, %v514
      %v516 = vrot.slane %v403, 1
      %v517 = vrot.slane %v404, 1
      %v518 = vsel %vm490, %v516, %v517
      %v519 = vrot.slane %v405, 1
      %v520 = vsel %vm490, %v517, %v519
      %v521 = vrot.slane %v406, 1
      %v522 = vrot.slane %v407, 1
      %v523 = vsel %vm490, %v521, %v522
      %v524 = vrot.slane %v408, 1
      %v525 = vsel %vm490, %v522, %v524
      %v526 = vrot.slane %v409, 1
      %v527 = vrot.slane %v410, 1
      %v528 = vsel %vm490, %v526, %v527
      %v529 = vrot.slane %v411, 1
      %v530 = vsel %vm490, %v527, %v529
      %v531 = vrot.slane %v412, 1
      %v532 = vrot.slane %v413, 1
      %v533 = vsel %vm490, %v531, %v532
      %v534 = vrot.slane %v414, 1
      %v535 = vsel %vm490, %v532, %v534
      %v536 = vrot.slane %v415, 1
      %v537 = vrot.slane %v416, 1
      %v538 = vsel %vm490, %v536, %v537
      %v539 = vrot.slane %v417, 1
      %v540 = vsel %vm490, %v537, %v539
      %v541 = vrot.slane %v418, 1
      %v542 = vrot.slane %v419, 1
      %v543 = vsel %vm490, %v541, %v542
      %v544 = vrot.slane %v420, 1
      %v545 = vsel %vm490, %v542, %v544
      %v546 = vrot.slane %v421, 1
      %v547 = vrot.slane %v422, 1
      %v548 = vsel %vm490, %v546, %v547
      %v549 = vrot.slane %v423, 1
      %v550 = vsel %vm490, %v547, %v549
      %v551 = vrot.slane %v424, 1
      %v552 = vrot.slane %v425, 1
      %v553 = vsel %vm490, %v551, %v552
      %v554 = vrot.slane %v426, 1
      %v555 = vsel %vm490, %v552, %v554
      %v556 = vrot.slane %v427, 1
      %v557 = vrot.slane %v428, 1
      %v558 = vsel %vm490, %v556, %v557
      %v559 = vrot.slane %v429, 1
      %v560 = vsel %vm490, %v557, %v559
      %v561 = vrot.slane %v430, 1
      %v562 = vrot.slane %v431, 1
      %v563 = vsel %vm490, %v561, %v562
      %v564 = vrot.slane %v432, 1
      %v565 = vsel %vm490, %v562, %v564
      %v566 = vrot.slane %v433, 1
      %v567 = vrot.slane %v434, 1
      %v568 = vsel %vm490, %v566, %v567
      %v569 = vrot.slane %v435, 1
      %v570 = vsel %vm490, %v567, %v569
      %vm571 = vcmask 1045504
      %v572 = vrot.slane %v388, 2
      %v573 = vrot.slane %v389, 2
      %v574 = vsel %vm571, %v572, %v573
      %v575 = vrot.slane %v390, 2
      %v576 = vsel %vm571, %v573, %v575
      %v577 = vrot.slane %v391, 2
      %v578 = vrot.slane %v392, 2
      %v579 = vsel %vm571, %v577, %v578
      %v580 = vrot.slane %v393, 2
      %v581 = vsel %vm571, %v578, %v580
      %v582 = vrot.slane %v394, 2
      %v583 = vrot.slane %v395, 2
      %v584 = vsel %vm571, %v582, %v583
      %v585 = vrot.slane %v396, 2
      %v586 = vsel %vm571, %v583, %v585
      %v587 = vrot.slane %v397, 2
      %v588 = vrot.slane %v398, 2
      %v589 = vsel %vm571, %v587, %v588
      %v590 = vrot.slane %v399, 2
      %v591 = vsel %vm571, %v588, %v590
      %v592 = vrot.slane %v400, 2
      %v593 = vrot.slane %v401, 2
      %v594 = vsel %vm571, %v592, %v593
      %v595 = vrot.slane %v402, 2
      %v596 = vsel %vm571, %v593, %v595
      %v597 = vrot.slane %v403, 2
      %v598 = vrot.slane %v404, 2
      %v599 = vsel %vm571, %v597, %v598
      %v600 = vrot.slane %v405, 2
      %v601 = vsel %vm571, %v598, %v600
      %v602 = vrot.slane %v406, 2
      %v603 = vrot.slane %v407, 2
      %v604 = vsel %vm571, %v602, %v603
      %v605 = vrot.slane %v408, 2
      %v606 = vsel %vm571, %v603, %v605
      %v607 = vrot.slane %v409, 2
      %v608 = vrot.slane %v410, 2
      %v609 = vsel %vm571, %v607, %v608
      %v610 = vrot.slane %v411, 2
      %v611 = vsel %vm571, %v608, %v610
      %v612 = vrot.slane %v412, 2
      %v613 = vrot.slane %v413, 2
      %v614 = vsel %vm571, %v612, %v613
      %v615 = vrot.slane %v414, 2
      %v616 = vsel %vm571, %v613, %v615
      %v617 = vrot.slane %v415, 2
      %v618 = vrot.slane %v416, 2
      %v619 = vsel %vm571, %v617, %v618
      %v620 = vrot.slane %v417, 2
      %v621 = vsel %vm571, %v618, %v620
      %v622 = vrot.slane %v418, 2
      %v623 = vrot.slane %v419, 2
      %v624 = vsel %vm571, %v622, %v623
      %v625 = vrot.slane %v420, 2
      %v626 = vsel %vm571, %v623, %v625
      %v627 = vrot.slane %v421, 2
      %v628 = vrot.slane %v422, 2
      %v629 = vsel %vm571, %v627, %v628
      %v630 = vrot.slane %v423, 2
      %v631 = vsel %vm571, %v628, %v630
      %v632 = vrot.slane %v424, 2
      %v633 = vrot.slane %v425, 2
      %v634 = vsel %vm571, %v632, %v633
      %v635 = vrot.slane %v426, 2
      %v636 = vsel %vm571, %v633, %v635
      %v637 = vrot.slane %v427, 2
      %v638 = vrot.slane %v428, 2
      %v639 = vsel %vm571, %v637, %v638
      %v640 = vrot.slane %v429, 2
      %v641 = vsel %vm571, %v638, %v640
      %v642 = vrot.slane %v430, 2
      %v643 = vrot.slane %v431, 2
      %v644 = vsel %vm571, %v642, %v643
      %v645 = vrot.slane %v432, 2
      %v646 = vsel %vm571, %v643, %v645
      %v647 = vrot.slane %v433, 2
      %v648 = vrot.slane %v434, 2
      %v649 = vsel %vm571, %v647, %v648
      %v650 = vrot.slane %v435, 2
      %v651 = vsel %vm571, %v648, %v650
      %v655 = vrot.slane %v436, 1
      %v656 = vrot.slane %v437, 1
      %v657 = vsel %vm490, %v655, %v656
      %v658 = vrot.slane %v438, 1
      %v659 = vsel %vm490, %v656, %v658
      %v692 = vrot.slane %v436, 2
      %v693 = vrot.slane %v437, 2
      %v694 = vsel %vm571, %v692, %v693
      %v695 = vrot.slane %v438, 2
      %v696 = vsel %vm571, %v693, %v695
      %v700 = vrot.slane %v439, 1
      %v701 = vrot.slane %v440, 1
      %v702 = vsel %vm490, %v700, %v701
      %v703 = vrot.slane %v441, 1
      %v704 = vsel %vm490, %v701, %v703
      %v705 = vrot.slane %v439, 2
      %v706 = vrot.slane %v440, 2
      %v707 = vsel %vm571, %v705, %v706
      %v708 = vrot.slane %v441, 2
      %v709 = vsel %vm571, %v706, %v708
      %710 = vrot.lane.b32.xlu0 %v493, 8
      %v711 = vpop.permute.xlu0 %710
      %712 = vrot.lane.b32.xlu0 %v495, 8
      %v713 = vpop.permute.xlu0 %712
      %714 = vrot.lane.b32.xlu0 %v498, 8
      %v715 = vpop.permute.xlu0 %714
      %716 = vrot.lane.b32.xlu0 %v500, 8
      %v717 = vpop.permute.xlu0 %716
      %718 = vrot.lane.b32.xlu0 %v503, 8
      %v719 = vpop.permute.xlu0 %718
      %720 = vrot.lane.b32.xlu0 %v505, 8
      %v721 = vpop.permute.xlu0 %720
      %722 = vrot.lane.b32.xlu0 %v508, 8
      %v723 = vpop.permute.xlu0 %722
      %724 = vrot.lane.b32.xlu0 %v510, 8
      %v725 = vpop.permute.xlu0 %724
      %726 = vrot.lane.b32.xlu0 %v513, 8
      %v727 = vpop.permute.xlu0 %726
      %728 = vrot.lane.b32.xlu0 %v515, 8
      %v729 = vpop.permute.xlu0 %728
      %730 = vrot.lane.b32.xlu0 %v518, 8
      %v731 = vpop.permute.xlu0 %730
      %732 = vrot.lane.b32.xlu0 %v520, 8
      %v733 = vpop.permute.xlu0 %732
      %734 = vrot.lane.b32.xlu0 %v523, 8
      %v735 = vpop.permute.xlu0 %734
      %736 = vrot.lane.b32.xlu0 %v525, 8
      %v737 = vpop.permute.xlu0 %736
      %738 = vrot.lane.b32.xlu0 %v528, 8
      %v739 = vpop.permute.xlu0 %738
      %740 = vrot.lane.b32.xlu0 %v530, 8
      %v741 = vpop.permute.xlu0 %740
      %742 = vrot.lane.b32.xlu0 %v533, 8
      %v743 = vpop.permute.xlu0 %742
      %744 = vrot.lane.b32.xlu0 %v535, 8
      %v745 = vpop.permute.xlu0 %744
      %746 = vrot.lane.b32.xlu0 %v538, 8
      %v747 = vpop.permute.xlu0 %746
      %748 = vrot.lane.b32.xlu0 %v540, 8
      %v749 = vpop.permute.xlu0 %748
      %750 = vrot.lane.b32.xlu0 %v543, 8
      %v751 = vpop.permute.xlu0 %750
      %752 = vrot.lane.b32.xlu0 %v545, 8
      %v753 = vpop.permute.xlu0 %752
      %754 = vrot.lane.b32.xlu0 %v548, 8
      %v755 = vpop.permute.xlu0 %754
      %756 = vrot.lane.b32.xlu0 %v550, 8
      %v757 = vpop.permute.xlu0 %756
      %758 = vrot.lane.b32.xlu0 %v553, 8
      %v759 = vpop.permute.xlu0 %758
      %760 = vrot.lane.b32.xlu0 %v555, 8
      %v761 = vpop.permute.xlu0 %760
      %762 = vrot.lane.b32.xlu0 %v558, 8
      %v763 = vpop.permute.xlu0 %762
      %764 = vrot.lane.b32.xlu0 %v560, 8
      %v765 = vpop.permute.xlu0 %764
      %766 = vrot.lane.b32.xlu0 %v563, 8
      %v767 = vpop.permute.xlu0 %766
      %768 = vrot.lane.b32.xlu0 %v565, 8
      %v769 = vpop.permute.xlu0 %768
      %770 = vrot.lane.b32.xlu0 %v568, 8
      %v771 = vpop.permute.xlu0 %770
      %772 = vrot.lane.b32.xlu0 %v570, 8
      %v773 = vpop.permute.xlu0 %772
      %806 = vrot.lane.b32.xlu0 %v574, 16
      %v807 = vpop.permute.xlu0 %806
      %808 = vrot.lane.b32.xlu0 %v576, 16
      %v809 = vpop.permute.xlu0 %808
      %810 = vrot.lane.b32.xlu0 %v579, 16
      %v811 = vpop.permute.xlu0 %810
      %812 = vrot.lane.b32.xlu0 %v581, 16
      %v813 = vpop.permute.xlu0 %812
      %814 = vrot.lane.b32.xlu0 %v584, 16
      %v815 = vpop.permute.xlu0 %814
      %816 = vrot.lane.b32.xlu0 %v586, 16
      %v817 = vpop.permute.xlu0 %816
      %818 = vrot.lane.b32.xlu0 %v589, 16
      %v819 = vpop.permute.xlu0 %818
      %820 = vrot.lane.b32.xlu0 %v591, 16
      %v821 = vpop.permute.xlu0 %820
      %822 = vrot.lane.b32.xlu0 %v594, 16
      %v823 = vpop.permute.xlu0 %822
      %824 = vrot.lane.b32.xlu0 %v596, 16
      %v825 = vpop.permute.xlu0 %824
      %826 = vrot.lane.b32.xlu0 %v599, 16
      %v827 = vpop.permute.xlu0 %826
      %828 = vrot.lane.b32.xlu0 %v601, 16
      %v829 = vpop.permute.xlu0 %828
      %830 = vrot.lane.b32.xlu0 %v604, 16
      %v831 = vpop.permute.xlu0 %830
      %832 = vrot.lane.b32.xlu0 %v606, 16
      %v833 = vpop.permute.xlu0 %832
      %834 = vrot.lane.b32.xlu0 %v609, 16
      %v835 = vpop.permute.xlu0 %834
      %836 = vrot.lane.b32.xlu0 %v611, 16
      %v837 = vpop.permute.xlu0 %836
      %838 = vrot.lane.b32.xlu0 %v614, 16
      %v839 = vpop.permute.xlu0 %838
      %840 = vrot.lane.b32.xlu0 %v616, 16
      %v841 = vpop.permute.xlu0 %840
      %842 = vrot.lane.b32.xlu0 %v619, 16
      %v843 = vpop.permute.xlu0 %842
      %844 = vrot.lane.b32.xlu0 %v621, 16
      %v845 = vpop.permute.xlu0 %844
      %846 = vrot.lane.b32.xlu0 %v624, 16
      %v847 = vpop.permute.xlu0 %846
      %848 = vrot.lane.b32.xlu0 %v626, 16
      %v849 = vpop.permute.xlu0 %848
      %850 = vrot.lane.b32.xlu0 %v629, 16
      %v851 = vpop.permute.xlu0 %850
      %852 = vrot.lane.b32.xlu0 %v631, 16
      %v853 = vpop.permute.xlu0 %852
      %854 = vrot.lane.b32.xlu0 %v634, 16
      %v855 = vpop.permute.xlu0 %854
      %856 = vrot.lane.b32.xlu0 %v636, 16
      %v857 = vpop.permute.xlu0 %856
      %858 = vrot.lane.b32.xlu0 %v639, 16
      %v859 = vpop.permute.xlu0 %858
      %860 = vrot.lane.b32.xlu0 %v641, 16
      %v861 = vpop.permute.xlu0 %860
      %862 = vrot.lane.b32.xlu0 %v644, 16
      %v863 = vpop.permute.xlu0 %862
      %864 = vrot.lane.b32.xlu0 %v646, 16
      %v865 = vpop.permute.xlu0 %864
      %866 = vrot.lane.b32.xlu0 %v649, 16
      %v867 = vpop.permute.xlu0 %866
      %868 = vrot.lane.b32.xlu0 %v651, 16
      %v869 = vpop.permute.xlu0 %868
      %902 = vrot.lane.b32.xlu0 %v391, 24
      %v903 = vpop.permute.xlu0 %902
      %904 = vrot.lane.b32.xlu0 %v392, 24
      %v905 = vpop.permute.xlu0 %904
      %906 = vrot.lane.b32.xlu0 %v394, 24
      %v907 = vpop.permute.xlu0 %906
      %908 = vrot.lane.b32.xlu0 %v395, 24
      %v909 = vpop.permute.xlu0 %908
      %910 = vrot.lane.b32.xlu0 %v397, 24
      %v911 = vpop.permute.xlu0 %910
      %912 = vrot.lane.b32.xlu0 %v398, 24
      %v913 = vpop.permute.xlu0 %912
      %914 = vrot.lane.b32.xlu0 %v400, 24
      %v915 = vpop.permute.xlu0 %914
      %916 = vrot.lane.b32.xlu0 %v401, 24
      %v917 = vpop.permute.xlu0 %916
      %918 = vrot.lane.b32.xlu0 %v403, 24
      %v919 = vpop.permute.xlu0 %918
      %920 = vrot.lane.b32.xlu0 %v404, 24
      %v921 = vpop.permute.xlu0 %920
      %922 = vrot.lane.b32.xlu0 %v406, 24
      %v923 = vpop.permute.xlu0 %922
      %924 = vrot.lane.b32.xlu0 %v407, 24
      %v925 = vpop.permute.xlu0 %924
      %926 = vrot.lane.b32.xlu0 %v409, 24
      %v927 = vpop.permute.xlu0 %926
      %928 = vrot.lane.b32.xlu0 %v410, 24
      %v929 = vpop.permute.xlu0 %928
      %930 = vrot.lane.b32.xlu0 %v412, 24
      %v931 = vpop.permute.xlu0 %930
      %932 = vrot.lane.b32.xlu0 %v413, 24
      %v933 = vpop.permute.xlu0 %932
      %934 = vrot.lane.b32.xlu0 %v415, 24
      %v935 = vpop.permute.xlu0 %934
      %936 = vrot.lane.b32.xlu0 %v416, 24
      %v937 = vpop.permute.xlu0 %936
      %938 = vrot.lane.b32.xlu0 %v418, 24
      %v939 = vpop.permute.xlu0 %938
      %940 = vrot.lane.b32.xlu0 %v419, 24
      %v941 = vpop.permute.xlu0 %940
      %942 = vrot.lane.b32.xlu0 %v421, 24
      %v943 = vpop.permute.xlu0 %942
      %944 = vrot.lane.b32.xlu0 %v422, 24
      %v945 = vpop.permute.xlu0 %944
      %946 = vrot.lane.b32.xlu0 %v424, 24
      %v947 = vpop.permute.xlu0 %946
      %948 = vrot.lane.b32.xlu0 %v425, 24
      %v949 = vpop.permute.xlu0 %948
      %950 = vrot.lane.b32.xlu0 %v427, 24
      %v951 = vpop.permute.xlu0 %950
      %952 = vrot.lane.b32.xlu0 %v428, 24
      %v953 = vpop.permute.xlu0 %952
      %954 = vrot.lane.b32.xlu0 %v430, 24
      %v955 = vpop.permute.xlu0 %954
      %956 = vrot.lane.b32.xlu0 %v431, 24
      %v957 = vpop.permute.xlu0 %956
      %958 = vrot.lane.b32.xlu0 %v433, 24
      %v959 = vpop.permute.xlu0 %958
      %960 = vrot.lane.b32.xlu0 %v434, 24
      %v961 = vpop.permute.xlu0 %960
      %962 = vrot.lane.b32.xlu0 %v436, 24
      %v963 = vpop.permute.xlu0 %962
      %964 = vrot.lane.b32.xlu0 %v437, 24
      %v965 = vpop.permute.xlu0 %964
      %998 = vrot.lane.b32.xlu0 %v498, 32
      %v999 = vpop.permute.xlu0 %998
      %1000 = vrot.lane.b32.xlu0 %v500, 32
      %v1001 = vpop.permute.xlu0 %1000
      %1002 = vrot.lane.b32.xlu0 %v503, 32
      %v1003 = vpop.permute.xlu0 %1002
      %1004 = vrot.lane.b32.xlu0 %v505, 32
      %v1005 = vpop.permute.xlu0 %1004
      %1006 = vrot.lane.b32.xlu0 %v508, 32
      %v1007 = vpop.permute.xlu0 %1006
      %1008 = vrot.lane.b32.xlu0 %v510, 32
      %v1009 = vpop.permute.xlu0 %1008
      %1010 = vrot.lane.b32.xlu0 %v513, 32
      %v1011 = vpop.permute.xlu0 %1010
      %1012 = vrot.lane.b32.xlu0 %v515, 32
      %v1013 = vpop.permute.xlu0 %1012
      %1014 = vrot.lane.b32.xlu0 %v518, 32
      %v1015 = vpop.permute.xlu0 %1014
      %1016 = vrot.lane.b32.xlu0 %v520, 32
      %v1017 = vpop.permute.xlu0 %1016
      %1018 = vrot.lane.b32.xlu0 %v523, 32
      %v1019 = vpop.permute.xlu0 %1018
      %1020 = vrot.lane.b32.xlu0 %v525, 32
      %v1021 = vpop.permute.xlu0 %1020
      %1022 = vrot.lane.b32.xlu0 %v528, 32
      %v1023 = vpop.permute.xlu0 %1022
      %1024 = vrot.lane.b32.xlu0 %v530, 32
      %v1025 = vpop.permute.xlu0 %1024
      %1026 = vrot.lane.b32.xlu0 %v533, 32
      %v1027 = vpop.permute.xlu0 %1026
      %1028 = vrot.lane.b32.xlu0 %v535, 32
      %v1029 = vpop.permute.xlu0 %1028
      %1030 = vrot.lane.b32.xlu0 %v538, 32
      %v1031 = vpop.permute.xlu0 %1030
      %1032 = vrot.lane.b32.xlu0 %v540, 32
      %v1033 = vpop.permute.xlu0 %1032
      %1034 = vrot.lane.b32.xlu0 %v543, 32
      %v1035 = vpop.permute.xlu0 %1034
      %1036 = vrot.lane.b32.xlu0 %v545, 32
      %v1037 = vpop.permute.xlu0 %1036
      %1038 = vrot.lane.b32.xlu0 %v548, 32
      %v1039 = vpop.permute.xlu0 %1038
      %1040 = vrot.lane.b32.xlu0 %v550, 32
      %v1041 = vpop.permute.xlu0 %1040
      %1042 = vrot.lane.b32.xlu0 %v553, 32
      %v1043 = vpop.permute.xlu0 %1042
      %1044 = vrot.lane.b32.xlu0 %v555, 32
      %v1045 = vpop.permute.xlu0 %1044
      %1046 = vrot.lane.b32.xlu0 %v558, 32
      %v1047 = vpop.permute.xlu0 %1046
      %1048 = vrot.lane.b32.xlu0 %v560, 32
      %v1049 = vpop.permute.xlu0 %1048
      %1050 = vrot.lane.b32.xlu0 %v563, 32
      %v1051 = vpop.permute.xlu0 %1050
      %1052 = vrot.lane.b32.xlu0 %v565, 32
      %v1053 = vpop.permute.xlu0 %1052
      %1054 = vrot.lane.b32.xlu0 %v568, 32
      %v1055 = vpop.permute.xlu0 %1054
      %1056 = vrot.lane.b32.xlu0 %v570, 32
      %v1057 = vpop.permute.xlu0 %1056
      %1058 = vrot.lane.b32.xlu0 %v657, 32
      %v1059 = vpop.permute.xlu0 %1058
      %1060 = vrot.lane.b32.xlu0 %v659, 32
      %v1061 = vpop.permute.xlu0 %1060
      %1094 = vrot.lane.b32.xlu0 %v579, 40
      %v1095 = vpop.permute.xlu0 %1094
      %1096 = vrot.lane.b32.xlu0 %v581, 40
      %v1097 = vpop.permute.xlu0 %1096
      %1098 = vrot.lane.b32.xlu0 %v584, 40
      %v1099 = vpop.permute.xlu0 %1098
      %1100 = vrot.lane.b32.xlu0 %v586, 40
      %v1101 = vpop.permute.xlu0 %1100
      %1102 = vrot.lane.b32.xlu0 %v589, 40
      %v1103 = vpop.permute.xlu0 %1102
      %1104 = vrot.lane.b32.xlu0 %v591, 40
      %v1105 = vpop.permute.xlu0 %1104
      %1106 = vrot.lane.b32.xlu0 %v594, 40
      %v1107 = vpop.permute.xlu0 %1106
      %1108 = vrot.lane.b32.xlu0 %v596, 40
      %v1109 = vpop.permute.xlu0 %1108
      %1110 = vrot.lane.b32.xlu0 %v599, 40
      %v1111 = vpop.permute.xlu0 %1110
      %1112 = vrot.lane.b32.xlu0 %v601, 40
      %v1113 = vpop.permute.xlu0 %1112
      %1114 = vrot.lane.b32.xlu0 %v604, 40
      %v1115 = vpop.permute.xlu0 %1114
      %1116 = vrot.lane.b32.xlu0 %v606, 40
      %v1117 = vpop.permute.xlu0 %1116
      %1118 = vrot.lane.b32.xlu0 %v609, 40
      %v1119 = vpop.permute.xlu0 %1118
      %1120 = vrot.lane.b32.xlu0 %v611, 40
      %v1121 = vpop.permute.xlu0 %1120
      %1122 = vrot.lane.b32.xlu0 %v614, 40
      %v1123 = vpop.permute.xlu0 %1122
      %1124 = vrot.lane.b32.xlu0 %v616, 40
      %v1125 = vpop.permute.xlu0 %1124
      %1126 = vrot.lane.b32.xlu0 %v619, 40
      %v1127 = vpop.permute.xlu0 %1126
      %1128 = vrot.lane.b32.xlu0 %v621, 40
      %v1129 = vpop.permute.xlu0 %1128
      %1130 = vrot.lane.b32.xlu0 %v624, 40
      %v1131 = vpop.permute.xlu0 %1130
      %1132 = vrot.lane.b32.xlu0 %v626, 40
      %v1133 = vpop.permute.xlu0 %1132
      %1134 = vrot.lane.b32.xlu0 %v629, 40
      %v1135 = vpop.permute.xlu0 %1134
      %1136 = vrot.lane.b32.xlu0 %v631, 40
      %v1137 = vpop.permute.xlu0 %1136
      %1138 = vrot.lane.b32.xlu0 %v634, 40
      %v1139 = vpop.permute.xlu0 %1138
      %1140 = vrot.lane.b32.xlu0 %v636, 40
      %v1141 = vpop.permute.xlu0 %1140
      %1142 = vrot.lane.b32.xlu0 %v639, 40
      %v1143 = vpop.permute.xlu0 %1142
      %1144 = vrot.lane.b32.xlu0 %v641, 40
      %v1145 = vpop.permute.xlu0 %1144
      %1146 = vrot.lane.b32.xlu0 %v644, 40
      %v1147 = vpop.permute.xlu0 %1146
      %1148 = vrot.lane.b32.xlu0 %v646, 40
      %v1149 = vpop.permute.xlu0 %1148
      %1150 = vrot.lane.b32.xlu0 %v649, 40
      %v1151 = vpop.permute.xlu0 %1150
      %1152 = vrot.lane.b32.xlu0 %v651, 40
      %v1153 = vpop.permute.xlu0 %1152
      %1154 = vrot.lane.b32.xlu0 %v694, 40
      %v1155 = vpop.permute.xlu0 %1154
      %1156 = vrot.lane.b32.xlu0 %v696, 40
      %v1157 = vpop.permute.xlu0 %1156
      %1190 = vrot.lane.b32.xlu0 %v394, 48
      %v1191 = vpop.permute.xlu0 %1190
      %1192 = vrot.lane.b32.xlu0 %v395, 48
      %v1193 = vpop.permute.xlu0 %1192
      %1194 = vrot.lane.b32.xlu0 %v397, 48
      %v1195 = vpop.permute.xlu0 %1194
      %1196 = vrot.lane.b32.xlu0 %v398, 48
      %v1197 = vpop.permute.xlu0 %1196
      %1198 = vrot.lane.b32.xlu0 %v400, 48
      %v1199 = vpop.permute.xlu0 %1198
      %1200 = vrot.lane.b32.xlu0 %v401, 48
      %v1201 = vpop.permute.xlu0 %1200
      %1202 = vrot.lane.b32.xlu0 %v403, 48
      %v1203 = vpop.permute.xlu0 %1202
      %1204 = vrot.lane.b32.xlu0 %v404, 48
      %v1205 = vpop.permute.xlu0 %1204
      %1206 = vrot.lane.b32.xlu0 %v406, 48
      %v1207 = vpop.permute.xlu0 %1206
      %1208 = vrot.lane.b32.xlu0 %v407, 48
      %v1209 = vpop.permute.xlu0 %1208
      %1210 = vrot.lane.b32.xlu0 %v409, 48
      %v1211 = vpop.permute.xlu0 %1210
      %1212 = vrot.lane.b32.xlu0 %v410, 48
      %v1213 = vpop.permute.xlu0 %1212
      %1214 = vrot.lane.b32.xlu0 %v412, 48
      %v1215 = vpop.permute.xlu0 %1214
      %1216 = vrot.lane.b32.xlu0 %v413, 48
      %v1217 = vpop.permute.xlu0 %1216
      %1218 = vrot.lane.b32.xlu0 %v415, 48
      %v1219 = vpop.permute.xlu0 %1218
      %1220 = vrot.lane.b32.xlu0 %v416, 48
      %v1221 = vpop.permute.xlu0 %1220
      %1222 = vrot.lane.b32.xlu0 %v418, 48
      %v1223 = vpop.permute.xlu0 %1222
      %1224 = vrot.lane.b32.xlu0 %v419, 48
      %v1225 = vpop.permute.xlu0 %1224
      %1226 = vrot.lane.b32.xlu0 %v421, 48
      %v1227 = vpop.permute.xlu0 %1226
      %1228 = vrot.lane.b32.xlu0 %v422, 48
      %v1229 = vpop.permute.xlu0 %1228
      %1230 = vrot.lane.b32.xlu0 %v424, 48
      %v1231 = vpop.permute.xlu0 %1230
      %1232 = vrot.lane.b32.xlu0 %v425, 48
      %v1233 = vpop.permute.xlu0 %1232
      %1234 = vrot.lane.b32.xlu0 %v427, 48
      %v1235 = vpop.permute.xlu0 %1234
      %1236 = vrot.lane.b32.xlu0 %v428, 48
      %v1237 = vpop.permute.xlu0 %1236
      %1238 = vrot.lane.b32.xlu0 %v430, 48
      %v1239 = vpop.permute.xlu0 %1238
      %1240 = vrot.lane.b32.xlu0 %v431, 48
      %v1241 = vpop.permute.xlu0 %1240
      %1242 = vrot.lane.b32.xlu0 %v433, 48
      %v1243 = vpop.permute.xlu0 %1242
      %1244 = vrot.lane.b32.xlu0 %v434, 48
      %v1245 = vpop.permute.xlu0 %1244
      %1246 = vrot.lane.b32.xlu0 %v436, 48
      %v1247 = vpop.permute.xlu0 %1246
      %1248 = vrot.lane.b32.xlu0 %v437, 48
      %v1249 = vpop.permute.xlu0 %1248
      %1250 = vrot.lane.b32.xlu0 %v439, 48
      %v1251 = vpop.permute.xlu0 %1250
      %1252 = vrot.lane.b32.xlu0 %v440, 48
      %v1253 = vpop.permute.xlu0 %1252
      %1286 = vrot.lane.b32.xlu0 %v503, 56
      %v1287 = vpop.permute.xlu0 %1286
      %1288 = vrot.lane.b32.xlu0 %v505, 56
      %v1289 = vpop.permute.xlu0 %1288
      %1290 = vrot.lane.b32.xlu0 %v508, 56
      %v1291 = vpop.permute.xlu0 %1290
      %1292 = vrot.lane.b32.xlu0 %v510, 56
      %v1293 = vpop.permute.xlu0 %1292
      %1294 = vrot.lane.b32.xlu0 %v513, 56
      %v1295 = vpop.permute.xlu0 %1294
      %1296 = vrot.lane.b32.xlu0 %v515, 56
      %v1297 = vpop.permute.xlu0 %1296
      %1298 = vrot.lane.b32.xlu0 %v518, 56
      %v1299 = vpop.permute.xlu0 %1298
      %1300 = vrot.lane.b32.xlu0 %v520, 56
      %v1301 = vpop.permute.xlu0 %1300
      %1302 = vrot.lane.b32.xlu0 %v523, 56
      %v1303 = vpop.permute.xlu0 %1302
      %1304 = vrot.lane.b32.xlu0 %v525, 56
      %v1305 = vpop.permute.xlu0 %1304
      %1306 = vrot.lane.b32.xlu0 %v528, 56
      %v1307 = vpop.permute.xlu0 %1306
      %1308 = vrot.lane.b32.xlu0 %v530, 56
      %v1309 = vpop.permute.xlu0 %1308
      %1310 = vrot.lane.b32.xlu0 %v533, 56
      %v1311 = vpop.permute.xlu0 %1310
      %1312 = vrot.lane.b32.xlu0 %v535, 56
      %v1313 = vpop.permute.xlu0 %1312
      %1314 = vrot.lane.b32.xlu0 %v538, 56
      %v1315 = vpop.permute.xlu0 %1314
      %1316 = vrot.lane.b32.xlu0 %v540, 56
      %v1317 = vpop.permute.xlu0 %1316
      %1318 = vrot.lane.b32.xlu0 %v543, 56
      %v1319 = vpop.permute.xlu0 %1318
      %1320 = vrot.lane.b32.xlu0 %v545, 56
      %v1321 = vpop.permute.xlu0 %1320
      %1322 = vrot.lane.b32.xlu0 %v548, 56
      %v1323 = vpop.permute.xlu0 %1322
      %1324 = vrot.lane.b32.xlu0 %v550, 56
      %v1325 = vpop.permute.xlu0 %1324
      %1326 = vrot.lane.b32.xlu0 %v553, 56
      %v1327 = vpop.permute.xlu0 %1326
      %1328 = vrot.lane.b32.xlu0 %v555, 56
      %v1329 = vpop.permute.xlu0 %1328
      %1330 = vrot.lane.b32.xlu0 %v558, 56
      %v1331 = vpop.permute.xlu0 %1330
      %1332 = vrot.lane.b32.xlu0 %v560, 56
      %v1333 = vpop.permute.xlu0 %1332
      %1334 = vrot.lane.b32.xlu0 %v563, 56
      %v1335 = vpop.permute.xlu0 %1334
      %1336 = vrot.lane.b32.xlu0 %v565, 56
      %v1337 = vpop.permute.xlu0 %1336
      %1338 = vrot.lane.b32.xlu0 %v568, 56
      %v1339 = vpop.permute.xlu0 %1338
      %1340 = vrot.lane.b32.xlu0 %v570, 56
      %v1341 = vpop.permute.xlu0 %1340
      %1342 = vrot.lane.b32.xlu0 %v657, 56
      %v1343 = vpop.permute.xlu0 %1342
      %1344 = vrot.lane.b32.xlu0 %v659, 56
      %v1345 = vpop.permute.xlu0 %1344
      %1346 = vrot.lane.b32.xlu0 %v702, 56
      %v1347 = vpop.permute.xlu0 %1346
      %1348 = vrot.lane.b32.xlu0 %v704, 56
      %v1349 = vpop.permute.xlu0 %1348
      %1382 = vrot.lane.b32.xlu0 %v584, 64
      %v1383 = vpop.permute.xlu0 %1382
      %1384 = vrot.lane.b32.xlu0 %v586, 64
      %v1385 = vpop.permute.xlu0 %1384
      %1386 = vrot.lane.b32.xlu0 %v589, 64
      %v1387 = vpop.permute.xlu0 %1386
      %1388 = vrot.lane.b32.xlu0 %v591, 64
      %v1389 = vpop.permute.xlu0 %1388
      %1390 = vrot.lane.b32.xlu0 %v594, 64
      %v1391 = vpop.permute.xlu0 %1390
      %1392 = vrot.lane.b32.xlu0 %v596, 64
      %v1393 = vpop.permute.xlu0 %1392
      %1394 = vrot.lane.b32.xlu0 %v599, 64
      %v1395 = vpop.permute.xlu0 %1394
      %1396 = vrot.lane.b32.xlu0 %v601, 64
      %v1397 = vpop.permute.xlu0 %1396
      %1398 = vrot.lane.b32.xlu0 %v604, 64
      %v1399 = vpop.permute.xlu0 %1398
      %1400 = vrot.lane.b32.xlu0 %v606, 64
      %v1401 = vpop.permute.xlu0 %1400
      %1402 = vrot.lane.b32.xlu0 %v609, 64
      %v1403 = vpop.permute.xlu0 %1402
      %1404 = vrot.lane.b32.xlu0 %v611, 64
      %v1405 = vpop.permute.xlu0 %1404
      %1406 = vrot.lane.b32.xlu0 %v614, 64
      %v1407 = vpop.permute.xlu0 %1406
      %1408 = vrot.lane.b32.xlu0 %v616, 64
      %v1409 = vpop.permute.xlu0 %1408
      %1410 = vrot.lane.b32.xlu0 %v619, 64
      %v1411 = vpop.permute.xlu0 %1410
      %1412 = vrot.lane.b32.xlu0 %v621, 64
      %v1413 = vpop.permute.xlu0 %1412
      %1414 = vrot.lane.b32.xlu0 %v624, 64
      %v1415 = vpop.permute.xlu0 %1414
      %1416 = vrot.lane.b32.xlu0 %v626, 64
      %v1417 = vpop.permute.xlu0 %1416
      %1418 = vrot.lane.b32.xlu0 %v629, 64
      %v1419 = vpop.permute.xlu0 %1418
      %1420 = vrot.lane.b32.xlu0 %v631, 64
      %v1421 = vpop.permute.xlu0 %1420
      %1422 = vrot.lane.b32.xlu0 %v634, 64
      %v1423 = vpop.permute.xlu0 %1422
      %1424 = vrot.lane.b32.xlu0 %v636, 64
      %v1425 = vpop.permute.xlu0 %1424
      %1426 = vrot.lane.b32.xlu0 %v639, 64
      %v1427 = vpop.permute.xlu0 %1426
      %1428 = vrot.lane.b32.xlu0 %v641, 64
      %v1429 = vpop.permute.xlu0 %1428
      %1430 = vrot.lane.b32.xlu0 %v644, 64
      %v1431 = vpop.permute.xlu0 %1430
      %1432 = vrot.lane.b32.xlu0 %v646, 64
      %v1433 = vpop.permute.xlu0 %1432
      %1434 = vrot.lane.b32.xlu0 %v649, 64
      %v1435 = vpop.permute.xlu0 %1434
      %1436 = vrot.lane.b32.xlu0 %v651, 64
      %v1437 = vpop.permute.xlu0 %1436
      %1438 = vrot.lane.b32.xlu0 %v694, 64
      %v1439 = vpop.permute.xlu0 %1438
      %1440 = vrot.lane.b32.xlu0 %v696, 64
      %v1441 = vpop.permute.xlu0 %1440
      %1442 = vrot.lane.b32.xlu0 %v707, 64
      %v1443 = vpop.permute.xlu0 %1442
      %1444 = vrot.lane.b32.xlu0 %v709, 64
      %v1445 = vpop.permute.xlu0 %1444
      %vm1478 = vcmask 64512
      %v1479 = vsel %vm1478, %v388, %v711
      %v1480 = vsel %vm1478, %v389, %v713
      %v1481 = vsel %vm1478, %v391, %v715
      %v1482 = vsel %vm1478, %v392, %v717
      %v1483 = vsel %vm1478, %v394, %v719
      %v1484 = vsel %vm1478, %v395, %v721
      %v1485 = vsel %vm1478, %v397, %v723
      %v1486 = vsel %vm1478, %v398, %v725
      %v1487 = vsel %vm1478, %v400, %v727
      %v1488 = vsel %vm1478, %v401, %v729
      %v1489 = vsel %vm1478, %v403, %v731
      %v1490 = vsel %vm1478, %v404, %v733
      %v1491 = vsel %vm1478, %v406, %v735
      %v1492 = vsel %vm1478, %v407, %v737
      %v1493 = vsel %vm1478, %v409, %v739
      %v1494 = vsel %vm1478, %v410, %v741
      %v1495 = vsel %vm1478, %v412, %v743
      %v1496 = vsel %vm1478, %v413, %v745
      %v1497 = vsel %vm1478, %v415, %v747
      %v1498 = vsel %vm1478, %v416, %v749
      %v1499 = vsel %vm1478, %v418, %v751
      %v1500 = vsel %vm1478, %v419, %v753
      %v1501 = vsel %vm1478, %v421, %v755
      %v1502 = vsel %vm1478, %v422, %v757
      %v1503 = vsel %vm1478, %v424, %v759
      %v1504 = vsel %vm1478, %v425, %v761
      %v1505 = vsel %vm1478, %v427, %v763
      %v1506 = vsel %vm1478, %v428, %v765
      %v1507 = vsel %vm1478, %v430, %v767
      %v1508 = vsel %vm1478, %v431, %v769
      %v1509 = vsel %vm1478, %v433, %v771
      %v1510 = vsel %vm1478, %v434, %v773
      %vm1511 = vcmask 130048
      %v1512 = vsel %vm1511, %v1479, %v807
      %v1513 = vsel %vm1511, %v1480, %v809
      %v1514 = vsel %vm1511, %v1481, %v811
      %v1515 = vsel %vm1511, %v1482, %v813
      %v1516 = vsel %vm1511, %v1483, %v815
      %v1517 = vsel %vm1511, %v1484, %v817
      %v1518 = vsel %vm1511, %v1485, %v819
      %v1519 = vsel %vm1511, %v1486, %v821
      %v1520 = vsel %vm1511, %v1487, %v823
      %v1521 = vsel %vm1511, %v1488, %v825
      %v1522 = vsel %vm1511, %v1489, %v827
      %v1523 = vsel %vm1511, %v1490, %v829
      %v1524 = vsel %vm1511, %v1491, %v831
      %v1525 = vsel %vm1511, %v1492, %v833
      %v1526 = vsel %vm1511, %v1493, %v835
      %v1527 = vsel %vm1511, %v1494, %v837
      %v1528 = vsel %vm1511, %v1495, %v839
      %v1529 = vsel %vm1511, %v1496, %v841
      %v1530 = vsel %vm1511, %v1497, %v843
      %v1531 = vsel %vm1511, %v1498, %v845
      %v1532 = vsel %vm1511, %v1499, %v847
      %v1533 = vsel %vm1511, %v1500, %v849
      %v1534 = vsel %vm1511, %v1501, %v851
      %v1535 = vsel %vm1511, %v1502, %v853
      %v1536 = vsel %vm1511, %v1503, %v855
      %v1537 = vsel %vm1511, %v1504, %v857
      %v1538 = vsel %vm1511, %v1505, %v859
      %v1539 = vsel %vm1511, %v1506, %v861
      %v1540 = vsel %vm1511, %v1507, %v863
      %v1541 = vsel %vm1511, %v1508, %v865
      %v1542 = vsel %vm1511, %v1509, %v867
      %v1543 = vsel %vm1511, %v1510, %v869
      %vm1544 = vcmask 195584
      %v1545 = vsel %vm1544, %v1512, %v903
      %v1546 = vsel %vm1544, %v1513, %v905
      %v1547 = vsel %vm1544, %v1514, %v907
      %v1548 = vsel %vm1544, %v1515, %v909
      %v1549 = vsel %vm1544, %v1516, %v911
      %v1550 = vsel %vm1544, %v1517, %v913
      %v1551 = vsel %vm1544, %v1518, %v915
      %v1552 = vsel %vm1544, %v1519, %v917
      %v1553 = vsel %vm1544, %v1520, %v919
      %v1554 = vsel %vm1544, %v1521, %v921
      %v1555 = vsel %vm1544, %v1522, %v923
      %v1556 = vsel %vm1544, %v1523, %v925
      %v1557 = vsel %vm1544, %v1524, %v927
      %v1558 = vsel %vm1544, %v1525, %v929
      %v1559 = vsel %vm1544, %v1526, %v931
      %v1560 = vsel %vm1544, %v1527, %v933
      %v1561 = vsel %vm1544, %v1528, %v935
      %v1562 = vsel %vm1544, %v1529, %v937
      %v1563 = vsel %vm1544, %v1530, %v939
      %v1564 = vsel %vm1544, %v1531, %v941
      %v1565 = vsel %vm1544, %v1532, %v943
      %v1566 = vsel %vm1544, %v1533, %v945
      %v1567 = vsel %vm1544, %v1534, %v947
      %v1568 = vsel %vm1544, %v1535, %v949
      %v1569 = vsel %vm1544, %v1536, %v951
      %v1570 = vsel %vm1544, %v1537, %v953
      %v1571 = vsel %vm1544, %v1538, %v955
      %v1572 = vsel %vm1544, %v1539, %v957
      %v1573 = vsel %vm1544, %v1540, %v959
      %v1574 = vsel %vm1544, %v1541, %v961
      %v1575 = vsel %vm1544, %v1542, %v963
      %v1576 = vsel %vm1544, %v1543, %v965
      %vm1577 = vcmask 261120
      %v1578 = vsel %vm1577, %v1545, %v999
      %v1579 = vsel %vm1577, %v1546, %v1001
      %v1580 = vsel %vm1577, %v1547, %v1003
      %v1581 = vsel %vm1577, %v1548, %v1005
      %v1582 = vsel %vm1577, %v1549, %v1007
      %v1583 = vsel %vm1577, %v1550, %v1009
      %v1584 = vsel %vm1577, %v1551, %v1011
      %v1585 = vsel %vm1577, %v1552, %v1013
      %v1586 = vsel %vm1577, %v1553, %v1015
      %v1587 = vsel %vm1577, %v1554, %v1017
      %v1588 = vsel %vm1577, %v1555, %v1019
      %v1589 = vsel %vm1577, %v1556, %v1021
      %v1590 = vsel %vm1577, %v1557, %v1023
      %v1591 = vsel %vm1577, %v1558, %v1025
      %v1592 = vsel %vm1577, %v1559, %v1027
      %v1593 = vsel %vm1577, %v1560, %v1029
      %v1594 = vsel %vm1577, %v1561, %v1031
      %v1595 = vsel %vm1577, %v1562, %v1033
      %v1596 = vsel %vm1577, %v1563, %v1035
      %v1597 = vsel %vm1577, %v1564, %v1037
      %v1598 = vsel %vm1577, %v1565, %v1039
      %v1599 = vsel %vm1577, %v1566, %v1041
      %v1600 = vsel %vm1577, %v1567, %v1043
      %v1601 = vsel %vm1577, %v1568, %v1045
      %v1602 = vsel %vm1577, %v1569, %v1047
      %v1603 = vsel %vm1577, %v1570, %v1049
      %v1604 = vsel %vm1577, %v1571, %v1051
      %v1605 = vsel %vm1577, %v1572, %v1053
      %v1606 = vsel %vm1577, %v1573, %v1055
      %v1607 = vsel %vm1577, %v1574, %v1057
      %v1608 = vsel %vm1577, %v1575, %v1059
      %v1609 = vsel %vm1577, %v1576, %v1061
      %vm1610 = vcmask 326656
      %v1611 = vsel %vm1610, %v1578, %v1095
      %v1612 = vsel %vm1610, %v1579, %v1097
      %v1613 = vsel %vm1610, %v1580, %v1099
      %v1614 = vsel %vm1610, %v1581, %v1101
      %v1615 = vsel %vm1610, %v1582, %v1103
      %v1616 = vsel %vm1610, %v1583, %v1105
      %v1617 = vsel %vm1610, %v1584, %v1107
      %v1618 = vsel %vm1610, %v1585, %v1109
      %v1619 = vsel %vm1610, %v1586, %v1111
      %v1620 = vsel %vm1610, %v1587, %v1113
      %v1621 = vsel %vm1610, %v1588, %v1115
      %v1622 = vsel %vm1610, %v1589, %v1117
      %v1623 = vsel %vm1610, %v1590, %v1119
      %v1624 = vsel %vm1610, %v1591, %v1121
      %v1625 = vsel %vm1610, %v1592, %v1123
      %v1626 = vsel %vm1610, %v1593, %v1125
      %v1627 = vsel %vm1610, %v1594, %v1127
      %v1628 = vsel %vm1610, %v1595, %v1129
      %v1629 = vsel %vm1610, %v1596, %v1131
      %v1630 = vsel %vm1610, %v1597, %v1133
      %v1631 = vsel %vm1610, %v1598, %v1135
      %v1632 = vsel %vm1610, %v1599, %v1137
      %v1633 = vsel %vm1610, %v1600, %v1139
      %v1634 = vsel %vm1610, %v1601, %v1141
      %v1635 = vsel %vm1610, %v1602, %v1143
      %v1636 = vsel %vm1610, %v1603, %v1145
      %v1637 = vsel %vm1610, %v1604, %v1147
      %v1638 = vsel %vm1610, %v1605, %v1149
      %v1639 = vsel %vm1610, %v1606, %v1151
      %v1640 = vsel %vm1610, %v1607, %v1153
      %v1641 = vsel %vm1610, %v1608, %v1155
      %v1642 = vsel %vm1610, %v1609, %v1157
      %vm1643 = vcmask 392192
      %v1644 = vsel %vm1643, %v1611, %v1191
      %v1645 = vsel %vm1643, %v1612, %v1193
      %v1646 = vsel %vm1643, %v1613, %v1195
      %v1647 = vsel %vm1643, %v1614, %v1197
      %v1648 = vsel %vm1643, %v1615, %v1199
      %v1649 = vsel %vm1643, %v1616, %v1201
      %v1650 = vsel %vm1643, %v1617, %v1203
      %v1651 = vsel %vm1643, %v1618, %v1205
      %v1652 = vsel %vm1643, %v1619, %v1207
      %v1653 = vsel %vm1643, %v1620, %v1209
      %v1654 = vsel %vm1643, %v1621, %v1211
      %v1655 = vsel %vm1643, %v1622, %v1213
      %v1656 = vsel %vm1643, %v1623, %v1215
      %v1657 = vsel %vm1643, %v1624, %v1217
      %v1658 = vsel %vm1643, %v1625, %v1219
      %v1659 = vsel %vm1643, %v1626, %v1221
      %v1660 = vsel %vm1643, %v1627, %v1223
      %v1661 = vsel %vm1643, %v1628, %v1225
      %v1662 = vsel %vm1643, %v1629, %v1227
      %v1663 = vsel %vm1643, %v1630, %v1229
      %v1664 = vsel %vm1643, %v1631, %v1231
      %v1665 = vsel %vm1643, %v1632, %v1233
      %v1666 = vsel %vm1643, %v1633, %v1235
      %v1667 = vsel %vm1643, %v1634, %v1237
      %v1668 = vsel %vm1643, %v1635, %v1239
      %v1669 = vsel %vm1643, %v1636, %v1241
      %v1670 = vsel %vm1643, %v1637, %v1243
      %v1671 = vsel %vm1643, %v1638, %v1245
      %v1672 = vsel %vm1643, %v1639, %v1247
      %v1673 = vsel %vm1643, %v1640, %v1249
      %v1674 = vsel %vm1643, %v1641, %v1251
      %v1675 = vsel %vm1643, %v1642, %v1253
      %vm1676 = vcmask 457728
      %v1677 = vsel %vm1676, %v1644, %v1287
      %v1678 = vsel %vm1676, %v1645, %v1289
      %v1679 = vsel %vm1676, %v1646, %v1291
      %v1680 = vsel %vm1676, %v1647, %v1293
      %v1681 = vsel %vm1676, %v1648, %v1295
      %v1682 = vsel %vm1676, %v1649, %v1297
      %v1683 = vsel %vm1676, %v1650, %v1299
      %v1684 = vsel %vm1676, %v1651, %v1301
      %v1685 = vsel %vm1676, %v1652, %v1303
      %v1686 = vsel %vm1676, %v1653, %v1305
      %v1687 = vsel %vm1676, %v1654, %v1307
      %v1688 = vsel %vm1676, %v1655, %v1309
      %v1689 = vsel %vm1676, %v1656, %v1311
      %v1690 = vsel %vm1676, %v1657, %v1313
      %v1691 = vsel %vm1676, %v1658, %v1315
      %v1692 = vsel %vm1676, %v1659, %v1317
      %v1693 = vsel %vm1676, %v1660, %v1319
      %v1694 = vsel %vm1676, %v1661, %v1321
      %v1695 = vsel %vm1676, %v1662, %v1323
      %v1696 = vsel %vm1676, %v1663, %v1325
      %v1697 = vsel %vm1676, %v1664, %v1327
      %v1698 = vsel %vm1676, %v1665, %v1329
      %v1699 = vsel %vm1676, %v1666, %v1331
      %v1700 = vsel %vm1676, %v1667, %v1333
      %v1701 = vsel %vm1676, %v1668, %v1335
      %v1702 = vsel %vm1676, %v1669, %v1337
      %v1703 = vsel %vm1676, %v1670, %v1339
      %v1704 = vsel %vm1676, %v1671, %v1341
      %v1705 = vsel %vm1676, %v1672, %v1343
      %v1706 = vsel %vm1676, %v1673, %v1345
      %v1707 = vsel %vm1676, %v1674, %v1347
      %v1708 = vsel %vm1676, %v1675, %v1349
      %vm1709 = vcmask 523264
      %v1710 = vsel %vm1709, %v1677, %v1383
      %v1711 = vsel %vm1709, %v1678, %v1385
      %v1712 = vsel %vm1709, %v1679, %v1387
      %v1713 = vsel %vm1709, %v1680, %v1389
      %v1714 = vsel %vm1709, %v1681, %v1391
      %v1715 = vsel %vm1709, %v1682, %v1393
      %v1716 = vsel %vm1709, %v1683, %v1395
      %v1717 = vsel %vm1709, %v1684, %v1397
      %v1718 = vsel %vm1709, %v1685, %v1399
      %v1719 = vsel %vm1709, %v1686, %v1401
      %v1720 = vsel %vm1709, %v1687, %v1403
      %v1721 = vsel %vm1709, %v1688, %v1405
      %v1722 = vsel %vm1709, %v1689, %v1407
      %v1723 = vsel %vm1709, %v1690, %v1409
      %v1724 = vsel %vm1709, %v1691, %v1411
      %v1725 = vsel %vm1709, %v1692, %v1413
      %v1726 = vsel %vm1709, %v1693, %v1415
      %v1727 = vsel %vm1709, %v1694, %v1417
      %v1728 = vsel %vm1709, %v1695, %v1419
      %v1729 = vsel %vm1709, %v1696, %v1421
      %v1730 = vsel %vm1709, %v1697, %v1423
      %v1731 = vsel %vm1709, %v1698, %v1425
      %v1732 = vsel %vm1709, %v1699, %v1427
      %v1733 = vsel %vm1709, %v1700, %v1429
      %v1734 = vsel %vm1709, %v1701, %v1431
      %v1735 = vsel %vm1709, %v1702, %v1433
      %v1736 = vsel %vm1709, %v1703, %v1435
      %v1737 = vsel %vm1709, %v1704, %v1437
      %v1738 = vsel %vm1709, %v1705, %v1439
      %v1739 = vsel %vm1709, %v1706, %v1441
      %v1740 = vsel %vm1709, %v1707, %v1443
      %v1741 = vsel %vm1709, %v1708, %v1445
      %v1742 = vpack.c.bf16 %v1711, %v1710
      %v1743 = vpack.c.bf16 %v1713, %v1712
      %v1744 = vpack.c.bf16 %v1715, %v1714
      %v1745 = vpack.c.bf16 %v1717, %v1716
      %v1746 = vpack.c.bf16 %v1719, %v1718
      %v1747 = vpack.c.bf16 %v1721, %v1720
      %v1748 = vpack.c.bf16 %v1723, %v1722
      %v1749 = vpack.c.bf16 %v1725, %v1724
      %v1750 = vpack.c.bf16 %v1727, %v1726
      %v1751 = vpack.c.bf16 %v1729, %v1728
      %v1752 = vpack.c.bf16 %v1731, %v1730
      %v1753 = vpack.c.bf16 %v1733, %v1732
      %v1754 = vpack.c.bf16 %v1735, %v1734
      %v1755 = vpack.c.bf16 %v1737, %v1736
      %v1756 = vpack.c.bf16 %v1739, %v1738
      %v1757 = vpack.c.bf16 %v1741, %v1740
      %v1758 = vld [vmem:[%s1] sm:$0xf]
      %v1759 = vld [vmem:[%s1 + $0x4] sm:$0xf]
      %v1760 = vld [vmem:[%s1 + $0x8] sm:$0xf]
      %v1761 = vld [vmem:[%s1 + $0xc] sm:$0xf]
      %v1762 = vld [vmem:[%s1 + $0x10] sm:$0xf]
      %v1763 = vld [vmem:[%s1 + $0x14] sm:$0xf]
      %v1764 = vld [vmem:[%s1 + $0x18] sm:$0xf]
      %v1765 = vld [vmem:[%s1 + $0x1c] sm:$0xf]
      %v1766 = vld [vmem:[%s1 + $0x20] sm:$0xf]
      %v1776 = vunpack.c.l.b16 %v1758
      %v1777 = vunpack.c.l.b16 %v1759
      %v1778 = vunpack.c.l.b16 %v1760
      %v1779 = vunpack.c.l.b16 %v1761
      %v1780 = vunpack.c.l.b16 %v1762
      %v1781 = vunpack.c.l.b16 %v1763
      %v1782 = vunpack.c.l.b16 %v1764
      %v1783 = vunpack.c.l.b16 %v1765
      %v1784 = vunpack.c.l.b16 %v1766
      %v1785 = vpack.c.b16 %v1777, %v1776
      %v1786 = vpack.c.b16 %v1779, %v1778
      %v1787 = vpack.c.b16 %v1781, %v1780
      %v1788 = vpack.c.b16 %v1783, %v1782
      %v1789 = vpack.c.b16 %v1784, %v1784
      %vm1794 = vcmask 588800
      %v1796 = vsel %vm1794, %v1742, 0
      %v1799 = vsel %vm1794, %v1743, 0
      %v1802 = vsel %vm1794, %v1744, 0
      %v1805 = vsel %vm1794, %v1745, 0
      %v1808 = vsel %vm1794, %v1746, 0
      %v1811 = vsel %vm1794, %v1747, 0
      %v1814 = vsel %vm1794, %v1748, 0
      %v1817 = vsel %vm1794, %v1749, 0
      %v1820 = vsel %vm1794, %v1750, 0
      %v1823 = vsel %vm1794, %v1751, 0
      %v1826 = vsel %vm1794, %v1752, 0
      %v1829 = vsel %vm1794, %v1753, 0
      %v1832 = vsel %vm1794, %v1754, 0
      %v1835 = vsel %vm1794, %v1755, 0
      %v1838 = vsel %vm1794, %v1756, 0
      %v1841 = vsel %vm1794, %v1757, 0
      %vm1843 = vcmask 1043456
      %v1845 = vsel %vm1843, %v1789, 0
      %1847 = vmatprep.subr.bf16.mxu0 0
      %1848 = vmatpush1.bf16.msra.mxu0 %v1785
      %1849 = vmatprep.subr.bf16.mxu0 0
      %1850 = vmatpush1.bf16.msra.mxu0 %v1786
      %1851 = vmatprep.subr.bf16.mxu0 0
      %1852 = vmatpush1.bf16.msra.mxu0 %v1787
      %1853 = vmatprep.subr.bf16.mxu0 0
      %1854 = vmatpush1.bf16.msra.mxu0 %v1788
      %1855 = vmatprep.subr.bf16.mxu0 0
      %1856 = vmatpush1.bf16.msra.mxu0 %v1845
      %1857 = vmatprep.subr.bf16.mxu0 0
      %1858 = vmatpush1.bf16.msra.mxu0 0
      %1859 = vmatprep.subr.bf16.mxu0 0
      %1860 = vmatpush1.bf16.msra.mxu0 0
      %1861 = vmatprep.subr.bf16.mxu0 0
      %1862 = vmatpush1.bf16.msra.mxu0 0
      %1863 = vmatprep.subr.bf16.mxu0 0
      %1864 = vmatpush1.bf16.msra.mxu0 0
      %1865 = vmatprep.subr.bf16.mxu0 0
      %1866 = vmatpush1.bf16.msra.mxu0 0
      %1867 = vmatprep.subr.bf16.mxu0 0
      %1868 = vmatpush1.bf16.msra.mxu0 0
      %1869 = vmatprep.subr.bf16.mxu0 0
      %1870 = vmatpush1.bf16.msra.mxu0 0
      %1871 = vmatprep.subr.bf16.mxu0 0
      %1872 = vmatpush1.bf16.msra.mxu0 0
      %1873 = vmatprep.subr.bf16.mxu0 0
      %1874 = vmatpush1.bf16.msra.mxu0 0
      %1875 = vmatprep.subr.bf16.mxu0 0
      %1876 = vmatpush1.bf16.msra.mxu0 0
      %1877 = vmatprep.subr.bf16.mxu0 0
      %1878 = vmatpush1.bf16.msra.mxu0 0
      %1879 = vmatprep.mubr.bf16.mxu0 0
      %1880 = vmatmul.mubr.bf16.gmra.mrb[0].mxu0 %v1796
      %v1881 = vpop.f32.mrb[0].mxu0
      %v1882 = vadd.f32 0.0, %v1881
      %v1883 = vpop.f32.mrb[0].mxu0
      %v1884 = vpop.f32.mrb[0].mxu0
      %v1885 = vadd.f32 0.0, %v1884
      %v1886 = vpop.f32.mrb[0].mxu0
      %1887 = vmatprep.mubr.bf16.mxu0 0
      %1888 = vmatmul.mubr.bf16.gmra.mrb[0].mxu0 %v1799
      %v1889 = vpop.f32.mrb[0].mxu0
      %v1890 = vadd.f32 0.0, %v1889
      %v1891 = vpop.f32.mrb[0].mxu0
      %v1892 = vpop.f32.mrb[0].mxu0
      %v1893 = vadd.f32 0.0, %v1892
      %v1894 = vpop.f32.mrb[0].mxu0
      %1895 = vmatprep.mubr.bf16.mxu0 0
      %1896 = vmatmul.mubr.bf16.gmra.mrb[0].mxu0 %v1802
      %v1897 = vpop.f32.mrb[0].mxu0
      %v1898 = vadd.f32 0.0, %v1897
      %v1899 = vpop.f32.mrb[0].mxu0
      %v1900 = vpop.f32.mrb[0].mxu0
      %v1901 = vadd.f32 0.0, %v1900
      %v1902 = vpop.f32.mrb[0].mxu0
      %1903 = vmatprep.mubr.bf16.mxu0 0
      %1904 = vmatmul.mubr.bf16.gmra.mrb[0].mxu0 %v1805
      %v1905 = vpop.f32.mrb[0].mxu0
      %v1906 = vadd.f32 0.0, %v1905
      %v1907 = vpop.f32.mrb[0].mxu0
      %v1908 = vpop.f32.mrb[0].mxu0
      %v1909 = vadd.f32 0.0, %v1908
      %v1910 = vpop.f32.mrb[0].mxu0
      %1911 = vmatprep.mubr.bf16.mxu0 0
      %1912 = vmatmul.mubr.bf16.gmra.mrb[0].mxu0 %v1808
      %v1913 = vpop.f32.mrb[0].mxu0
      %v1914 = vadd.f32 0.0, %v1913
      %v1915 = vpop.f32.mrb[0].mxu0
      %v1916 = vpop.f32.mrb[0].mxu0
      %v1917 = vadd.f32 0.0, %v1916
      %v1918 = vpop.f32.mrb[0].mxu0
      %1919 = vmatprep.mubr.bf16.mxu0 0
      %1920 = vmatmul.mubr.bf16.gmra.mrb[0].mxu0 %v1811
      %v1921 = vpop.f32.mrb[0].mxu0
      %v1922 = vadd.f32 0.0, %v1921
      %v1923 = vpop.f32.mrb[0].mxu0
      %v1924 = vpop.f32.mrb[0].mxu0
      %v1925 = vadd.f32 0.0, %v1924
      %v1926 = vpop.f32.mrb[0].mxu0
      %1927 = vmatprep.mubr.bf16.mxu0 0
      %1928 = vmatmul.mubr.bf16.gmra.mrb[0].mxu0 %v1814
      %v1929 = vpop.f32.mrb[0].mxu0
      %v1930 = vadd.f32 0.0, %v1929
      %v1931 = vpop.f32.mrb[0].mxu0
      %v1932 = vpop.f32.mrb[0].mxu0
      %v1933 = vadd.f32 0.0, %v1932
      %v1934 = vpop.f32.mrb[0].mxu0
      %1935 = vmatprep.mubr.bf16.mxu0 0
      %1936 = vmatmul.mubr.bf16.gmra.mrb[0].mxu0 %v1817
      %v1937 = vpop.f32.mrb[0].mxu0
      %v1938 = vadd.f32 0.0, %v1937
      %v1939 = vpop.f32.mrb[0].mxu0
      %v1940 = vpop.f32.mrb[0].mxu0
      %v1941 = vadd.f32 0.0, %v1940
      %v1942 = vpop.f32.mrb[0].mxu0
      %1943 = vmatprep.mubr.bf16.mxu0 0
      %1944 = vmatmul.mubr.bf16.gmra.mrb[0].mxu0 %v1820
      %v1945 = vpop.f32.mrb[0].mxu0
      %v1946 = vadd.f32 0.0, %v1945
      %v1947 = vpop.f32.mrb[0].mxu0
      %v1948 = vpop.f32.mrb[0].mxu0
      %v1949 = vadd.f32 0.0, %v1948
      %v1950 = vpop.f32.mrb[0].mxu0
      %1951 = vmatprep.mubr.bf16.mxu0 0
      %1952 = vmatmul.mubr.bf16.gmra.mrb[0].mxu0 %v1823
      %v1953 = vpop.f32.mrb[0].mxu0
      %v1954 = vadd.f32 0.0, %v1953
      %v1955 = vpop.f32.mrb[0].mxu0
      %v1956 = vpop.f32.mrb[0].mxu0
      %v1957 = vadd.f32 0.0, %v1956
      %v1958 = vpop.f32.mrb[0].mxu0
      %1959 = vmatprep.mubr.bf16.mxu0 0
      %1960 = vmatmul.mubr.bf16.gmra.mrb[0].mxu0 %v1826
      %v1961 = vpop.f32.mrb[0].mxu0
      %v1962 = vadd.f32 0.0, %v1961
      %v1963 = vpop.f32.mrb[0].mxu0
      %v1964 = vpop.f32.mrb[0].mxu0
      %v1965 = vadd.f32 0.0, %v1964
      %v1966 = vpop.f32.mrb[0].mxu0
      %1967 = vmatprep.mubr.bf16.mxu0 0
      %1968 = vmatmul.mubr.bf16.gmra.mrb[0].mxu0 %v1829
      %v1969 = vpop.f32.mrb[0].mxu0
      %v1970 = vadd.f32 0.0, %v1969
      %v1971 = vpop.f32.mrb[0].mxu0
      %v1972 = vpop.f32.mrb[0].mxu0
      %v1973 = vadd.f32 0.0, %v1972
      %v1974 = vpop.f32.mrb[0].mxu0
      %1975 = vmatprep.mubr.bf16.mxu0 0
      %1976 = vmatmul.mubr.bf16.gmra.mrb[0].mxu0 %v1832
      %v1977 = vpop.f32.mrb[0].mxu0
      %v1978 = vadd.f32 0.0, %v1977
      %v1979 = vpop.f32.mrb[0].mxu0
      %v1980 = vpop.f32.mrb[0].mxu0
      %v1981 = vadd.f32 0.0, %v1980
      %v1982 = vpop.f32.mrb[0].mxu0
      %1983 = vmatprep.mubr.bf16.mxu0 0
      %1984 = vmatmul.mubr.bf16.gmra.mrb[0].mxu0 %v1835
      %v1985 = vpop.f32.mrb[0].mxu0
      %v1986 = vadd.f32 0.0, %v1985
      %v1987 = vpop.f32.mrb[0].mxu0
      %v1988 = vpop.f32.mrb[0].mxu0
      %v1989 = vadd.f32 0.0, %v1988
      %v1990 = vpop.f32.mrb[0].mxu0
      %1991 = vmatprep.mubr.bf16.mxu0 0
      %1992 = vmatmul.mubr.bf16.gmra.mrb[0].mxu0 %v1838
      %v1993 = vpop.f32.mrb[0].mxu0
      %v1994 = vadd.f32 0.0, %v1993
      %v1995 = vpop.f32.mrb[0].mxu0
      %v1996 = vpop.f32.mrb[0].mxu0
      %v1997 = vadd.f32 0.0, %v1996
      %v1998 = vpop.f32.mrb[0].mxu0
      %1999 = vmatprep.mubr.bf16.mxu0 0
      %2000 = vmatmul.mubr.bf16.gmra.mrb[0].mxu0 %v1841
      %v2001 = vpop.f32.mrb[0].mxu0
      %v2002 = vadd.f32 0.0, %v2001
      %v2003 = vpop.f32.mrb[0].mxu0
      %v2004 = vpop.f32.mrb[0].mxu0
      %v2005 = vadd.f32 0.0, %v2004
      %v2006 = vpop.f32.mrb[0].mxu0
      %2007 = vdwg.mxu0
      %v2008 = vld [vmem:[%s2] sm:$0x1]
      %v2010 = vlaneseq
      %v2011 = vshrl.u32 %v2010, 7
      %v2012 = vsub.s32 0, %v2011
      %v2013 = vrot.slane %v2008, %v2012
      %v2015 = vmul.f32 %v1882, %v2013
      %v2016 = vmul.f32 %v1885, %v2013
      %v2017 = vmul.f32 %v1890, %v2013
      %v2018 = vmul.f32 %v1893, %v2013
      %v2019 = vmul.f32 %v1898, %v2013
      %v2020 = vmul.f32 %v1901, %v2013
      %v2021 = vmul.f32 %v1906, %v2013
      %v2022 = vmul.f32 %v1909, %v2013
      %v2023 = vmul.f32 %v1914, %v2013
      %v2024 = vmul.f32 %v1917, %v2013
      %v2025 = vmul.f32 %v1922, %v2013
      %v2026 = vmul.f32 %v1925, %v2013
      %v2027 = vmul.f32 %v1930, %v2013
      %v2028 = vmul.f32 %v1933, %v2013
      %v2029 = vmul.f32 %v1938, %v2013
      %v2030 = vmul.f32 %v1941, %v2013
      %v2031 = vmul.f32 %v1946, %v2013
      %v2032 = vmul.f32 %v1949, %v2013
      %v2033 = vmul.f32 %v1954, %v2013
      %v2034 = vmul.f32 %v1957, %v2013
      %v2035 = vmul.f32 %v1962, %v2013
      %v2036 = vmul.f32 %v1965, %v2013
      %v2037 = vmul.f32 %v1970, %v2013
      %v2038 = vmul.f32 %v1973, %v2013
      %v2039 = vmul.f32 %v1978, %v2013
      %v2040 = vmul.f32 %v1981, %v2013
      %v2041 = vmul.f32 %v1986, %v2013
      %v2042 = vmul.f32 %v1989, %v2013
      %v2043 = vmul.f32 %v1994, %v2013
      %v2044 = vmul.f32 %v1997, %v2013
      %v2045 = vmul.f32 %v2002, %v2013
      %v2046 = vmul.f32 %v2005, %v2013
      %v2047 = vld [vmem:[%s3] sm:$0x1]
      %v2049 = vlaneseq
      %v2050 = vshrl.u32 %v2049, 7
      %v2051 = vsub.s32 0, %v2050
      %v2052 = vrot.slane %v2047, %v2051
      %v2054 = vadd.f32 %v2015, %v2052
      %v2055 = vadd.f32 %v2016, %v2052
      %v2056 = vadd.f32 %v2017, %v2052
      %v2057 = vadd.f32 %v2018, %v2052
      %v2058 = vadd.f32 %v2019, %v2052
      %v2059 = vadd.f32 %v2020, %v2052
      %v2060 = vadd.f32 %v2021, %v2052
      %v2061 = vadd.f32 %v2022, %v2052
      %v2062 = vadd.f32 %v2023, %v2052
      %v2063 = vadd.f32 %v2024, %v2052
      %v2064 = vadd.f32 %v2025, %v2052
      %v2065 = vadd.f32 %v2026, %v2052
      %v2066 = vadd.f32 %v2027, %v2052
      %v2067 = vadd.f32 %v2028, %v2052
      %v2068 = vadd.f32 %v2029, %v2052
      %v2069 = vadd.f32 %v2030, %v2052
      %v2070 = vadd.f32 %v2031, %v2052
      %v2071 = vadd.f32 %v2032, %v2052
      %v2072 = vadd.f32 %v2033, %v2052
      %v2073 = vadd.f32 %v2034, %v2052
      %v2074 = vadd.f32 %v2035, %v2052
      %v2075 = vadd.f32 %v2036, %v2052
      %v2076 = vadd.f32 %v2037, %v2052
      %v2077 = vadd.f32 %v2038, %v2052
      %v2078 = vadd.f32 %v2039, %v2052
      %v2079 = vadd.f32 %v2040, %v2052
      %v2080 = vadd.f32 %v2041, %v2052
      %v2081 = vadd.f32 %v2042, %v2052
      %v2082 = vadd.f32 %v2043, %v2052
      %v2083 = vadd.f32 %v2044, %v2052
      %v2084 = vadd.f32 %v2045, %v2052
      %v2085 = vadd.f32 %v2046, %v2052
      %v2086 = vmax.f32 %v2054, 0.0
      %v2087 = vmax.f32 %v2055, 0.0
      %v2088 = vmax.f32 %v2056, 0.0
      %v2089 = vmax.f32 %v2057, 0.0
      %v2090 = vmax.f32 %v2058, 0.0
      %v2091 = vmax.f32 %v2059, 0.0
      %v2092 = vmax.f32 %v2060, 0.0
      %v2093 = vmax.f32 %v2061, 0.0
      %v2094 = vmax.f32 %v2062, 0.0
      %v2095 = vmax.f32 %v2063, 0.0
      %v2096 = vmax.f32 %v2064, 0.0
      %v2097 = vmax.f32 %v2065, 0.0
      %v2098 = vmax.f32 %v2066, 0.0
      %v2099 = vmax.f32 %v2067, 0.0
      %v2100 = vmax.f32 %v2068, 0.0
      %v2101 = vmax.f32 %v2069, 0.0
      %v2102 = vmax.f32 %v2070, 0.0
      %v2103 = vmax.f32 %v2071, 0.0
      %v2104 = vmax.f32 %v2072, 0.0
      %v2105 = vmax.f32 %v2073, 0.0
      %v2106 = vmax.f32 %v2074, 0.0
      %v2107 = vmax.f32 %v2075, 0.0
      %v2108 = vmax.f32 %v2076, 0.0
      %v2109 = vmax.f32 %v2077, 0.0
      %v2110 = vmax.f32 %v2078, 0.0
      %v2111 = vmax.f32 %v2079, 0.0
      %v2112 = vmax.f32 %v2080, 0.0
      %v2113 = vmax.f32 %v2081, 0.0
      %v2114 = vmax.f32 %v2082, 0.0
      %v2115 = vmax.f32 %v2083, 0.0
      %v2116 = vmax.f32 %v2084, 0.0
      %v2117 = vmax.f32 %v2085, 0.0
      %2118 = vst.msk [vmem:[#allocation2] sm:$0xff] %vm1511, 0.0
      %2119 = vst.msk [vmem:[#allocation2 + $0x8] sm:$0xff] %vm1511, 0.0
      %2120 = vst.msk [vmem:[#allocation2 + $0x10] sm:$0xff] %vm1511, 0.0
      %vm2121 = vcmask 123904
      %2122 = vst.msk [vmem:[#allocation2 + $0x18] sm:$0x3] %vm2121, 0.0
      %2123 = vst.msk [vmem:[#allocation2 + $0x20] sm:$0xff] %vm1511, 0.0
      %2124 = vst.msk [vmem:[#allocation2 + $0x28] sm:$0xff] %vm1511, 0.0
      %2125 = vst.msk [vmem:[#allocation2 + $0x30] sm:$0xff] %vm1511, 0.0
      %2126 = vst.msk [vmem:[#allocation2 + $0x38] sm:$0x3] %vm2121, 0.0
      %2127 = vst.msk [vmem:[#allocation2 + $0x40] sm:$0xff] %vm1511, 0.0
      %2128 = vst.msk [vmem:[#allocation2 + $0x48] sm:$0xff] %vm1511, 0.0
      %2129 = vst.msk [vmem:[#allocation2 + $0x50] sm:$0xff] %vm1511, 0.0
      %2130 = vst.msk [vmem:[#allocation2 + $0x58] sm:$0x3] %vm2121, 0.0
      %2131 = vst.msk [vmem:[#allocation2 + $0x60] sm:$0xff] %vm1511, 0.0
      %2132 = vst.msk [vmem:[#allocation2 + $0x68] sm:$0xff] %vm1511, 0.0
      %2133 = vst.msk [vmem:[#allocation2 + $0x70] sm:$0xff] %vm1511, 0.0
      %2134 = vst.msk [vmem:[#allocation2 + $0x78] sm:$0x3] %vm2121, 0.0
      %2135 = vst.msk [vmem:[#allocation2 + $0x80] sm:$0xff] %vm1511, 0.0
      %2136 = vst.msk [vmem:[#allocation2 + $0x88] sm:$0xff] %vm1511, 0.0
      %2137 = vst.msk [vmem:[#allocation2 + $0x90] sm:$0xff] %vm1511, 0.0
      %2138 = vst.msk [vmem:[#allocation2 + $0x98] sm:$0x3] %vm2121, 0.0
      %2139 = vst.msk [vmem:[#allocation2 + $0xa0] sm:$0xff] %vm1511, 0.0
      %2140 = vst.msk [vmem:[#allocation2 + $0xa8] sm:$0xff] %vm1511, 0.0
      %2141 = vst.msk [vmem:[#allocation2 + $0xb0] sm:$0xff] %vm1511, 0.0
      %2142 = vst.msk [vmem:[#allocation2 + $0xb8] sm:$0x3] %vm2121, 0.0
      %2143 = vst.msk [vmem:[#allocation2 + $0xc0] sm:$0xff] %vm1511, 0.0
      %2144 = vst.msk [vmem:[#allocation2 + $0xc8] sm:$0xff] %vm1511, 0.0
      %2145 = vst.msk [vmem:[#allocation2 + $0xd0] sm:$0xff] %vm1511, 0.0
      %2146 = vst.msk [vmem:[#allocation2 + $0xd8] sm:$0x3] %vm2121, 0.0
      %2147 = vst.msk [vmem:[#allocation2 + $0xe0] sm:$0xff] %vm1511, 0.0
      %2148 = vst.msk [vmem:[#allocation2 + $0xe8] sm:$0xff] %vm1511, 0.0
      %2149 = vst.msk [vmem:[#allocation2 + $0xf0] sm:$0xff] %vm1511, 0.0
      %2150 = vst.msk [vmem:[#allocation2 + $0xf8] sm:$0x3] %vm2121, 0.0
      %2151 = vst.msk [vmem:[#allocation2 + $0x100] sm:$0xff] %vm1511, 0.0
      %2152 = vst.msk [vmem:[#allocation2 + $0x108] sm:$0xff] %vm1511, 0.0
      %2153 = vst.msk [vmem:[#allocation2 + $0x110] sm:$0xff] %vm1511, 0.0
      %2154 = vst.msk [vmem:[#allocation2 + $0x118] sm:$0x3] %vm2121, 0.0
      %2155 = vst.msk [vmem:[#allocation2 + $0x120] sm:$0xff] %vm1511, 0.0
      %2156 = vst.msk [vmem:[#allocation2 + $0x128] sm:$0xff] %vm1511, 0.0
      %2157 = vst.msk [vmem:[#allocation2 + $0x130] sm:$0xff] %vm1511, 0.0
      %2158 = vst.msk [vmem:[#allocation2 + $0x138] sm:$0x3] %vm2121, 0.0
      %2159 = vst.msk [vmem:[#allocation2 + $0x140] sm:$0xff] %vm1511, 0.0
      %2160 = vst.msk [vmem:[#allocation2 + $0x148] sm:$0xff] %vm1511, 0.0
      %2161 = vst.msk [vmem:[#allocation2 + $0x150] sm:$0xff] %vm1511, 0.0
      %2162 = vst.msk [vmem:[#allocation2 + $0x158] sm:$0x3] %vm2121, 0.0
      %2163 = vst.msk [vmem:[#allocation2 + $0x160] sm:$0xff] %vm1511, 0.0
      %2164 = vst.msk [vmem:[#allocation2 + $0x168] sm:$0xff] %vm1511, 0.0
      %2165 = vst.msk [vmem:[#allocation2 + $0x170] sm:$0xff] %vm1511, 0.0
      %2166 = vst.msk [vmem:[#allocation2 + $0x178] sm:$0x3] %vm2121, 0.0
      %2167 = vst.msk [vmem:[#allocation2 + $0x180] sm:$0xff] %vm1511, 0.0
      %2168 = vst.msk [vmem:[#allocation2 + $0x188] sm:$0xff] %vm1511, 0.0
      %2169 = vst.msk [vmem:[#allocation2 + $0x190] sm:$0xff] %vm1511, 0.0
      %2170 = vst.msk [vmem:[#allocation2 + $0x198] sm:$0x3] %vm2121, 0.0
      %2171 = vst.msk [vmem:[#allocation2 + $0x1a0] sm:$0xff] %vm1511, 0.0
      %2172 = vst.msk [vmem:[#allocation2 + $0x1a8] sm:$0xff] %vm1511, 0.0
      %2173 = vst.msk [vmem:[#allocation2 + $0x1b0] sm:$0xff] %vm1511, 0.0
      %2174 = vst.msk [vmem:[#allocation2 + $0x1b8] sm:$0x3] %vm2121, 0.0
      %2175 = vst.msk [vmem:[#allocation2 + $0x1c0] sm:$0xff] %vm1511, 0.0
      %2176 = vst.msk [vmem:[#allocation2 + $0x1c8] sm:$0xff] %vm1511, 0.0
      %2177 = vst.msk [vmem:[#allocation2 + $0x1d0] sm:$0xff] %vm1511, 0.0
      %2178 = vst.msk [vmem:[#allocation2 + $0x1d8] sm:$0x3] %vm2121, 0.0
      %2179 = vst.msk [vmem:[#allocation2 + $0x1e0] sm:$0xff] %vm1511, 0.0
      %2180 = vst.msk [vmem:[#allocation2 + $0x1e8] sm:$0xff] %vm1511, 0.0
      %2181 = vst.msk [vmem:[#allocation2 + $0x1f0] sm:$0xff] %vm1511, 0.0
      %2182 = vst.msk [vmem:[#allocation2 + $0x1f8] sm:$0x3] %vm2121, 0.0
      %2183 = vst.msk [vmem:[#allocation2 + $0x200] sm:$0xff] %vm1511, 0.0
      %2184 = vst.msk [vmem:[#allocation2 + $0x208] sm:$0xff] %vm1511, 0.0
      %2185 = vst.msk [vmem:[#allocation2 + $0x210] sm:$0xff] %vm1511, 0.0
      %2186 = vst.msk [vmem:[#allocation2 + $0x218] sm:$0x3] %vm2121, 0.0
      %2187 = vst.msk [vmem:[#allocation2 + $0x220] sm:$0xff] %vm1511, 0.0
      %2188 = vst.msk [vmem:[#allocation2 + $0x228] sm:$0xff] %vm1511, 0.0
      %2189 = vst.msk [vmem:[#allocation2 + $0x230] sm:$0xff] %vm1511, 0.0
      %2190 = vst.msk [vmem:[#allocation2 + $0x238] sm:$0x3] %vm2121, 0.0
      %2191 = vst.msk [vmem:[#allocation2 + $0x240] sm:$0xff] %vm1511, 0.0
      %2192 = vst.msk [vmem:[#allocation2 + $0x248] sm:$0xff] %vm1511, 0.0
      %2193 = vst.msk [vmem:[#allocation2 + $0x250] sm:$0xff] %vm1511, 0.0
      %2194 = vst.msk [vmem:[#allocation2 + $0x258] sm:$0x3] %vm2121, 0.0
      %2195 = vst.msk [vmem:[#allocation2 + $0x260] sm:$0xff] %vm1511, 0.0
      %2196 = vst.msk [vmem:[#allocation2 + $0x268] sm:$0xff] %vm1511, 0.0
      %2197 = vst.msk [vmem:[#allocation2 + $0x270] sm:$0xff] %vm1511, 0.0
      %2198 = vst.msk [vmem:[#allocation2 + $0x278] sm:$0x3] %vm2121, 0.0
      %2199 = vst.msk [vmem:[#allocation2 + $0x280] sm:$0xff] %vm1511, 0.0
      %2200 = vst.msk [vmem:[#allocation2 + $0x288] sm:$0xff] %vm1511, 0.0
      %2201 = vst.msk [vmem:[#allocation2 + $0x290] sm:$0xff] %vm1511, 0.0
      %2202 = vst.msk [vmem:[#allocation2 + $0x298] sm:$0x3] %vm2121, 0.0
      %2203 = vst.msk [vmem:[#allocation2 + $0x2a0] sm:$0xff] %vm1511, 0.0
      %2204 = vst.msk [vmem:[#allocation2 + $0x2a8] sm:$0xff] %vm1511, 0.0
      %2205 = vst.msk [vmem:[#allocation2 + $0x2b0] sm:$0xff] %vm1511, 0.0
      %2206 = vst.msk [vmem:[#allocation2 + $0x2b8] sm:$0x3] %vm2121, 0.0
      %2207 = vst.msk [vmem:[#allocation2 + $0x2c0] sm:$0xff] %vm1511, 0.0
      %2208 = vst.msk [vmem:[#allocation2 + $0x2c8] sm:$0xff] %vm1511, 0.0
      %2209 = vst.msk [vmem:[#allocation2 + $0x2d0] sm:$0xff] %vm1511, 0.0
      %2210 = vst.msk [vmem:[#allocation2 + $0x2d8] sm:$0x3] %vm2121, 0.0
      %2211 = vst.msk [vmem:[#allocation2 + $0x2e0] sm:$0xff] %vm1511, 0.0
      %2212 = vst.msk [vmem:[#allocation2 + $0x2e8] sm:$0xff] %vm1511, 0.0
      %2213 = vst.msk [vmem:[#allocation2 + $0x2f0] sm:$0xff] %vm1511, 0.0
      %2214 = vst.msk [vmem:[#allocation2 + $0x2f8] sm:$0x3] %vm2121, 0.0
      %2215 = vst.msk [vmem:[#allocation2 + $0x300] sm:$0xff] %vm1511, 0.0
      %2216 = vst.msk [vmem:[#allocation2 + $0x308] sm:$0xff] %vm1511, 0.0
      %2217 = vst.msk [vmem:[#allocation2 + $0x310] sm:$0xff] %vm1511, 0.0
      %2218 = vst.msk [vmem:[#allocation2 + $0x318] sm:$0x3] %vm2121, 0.0
      %2219 = vst.msk [vmem:[#allocation2 + $0x320] sm:$0xff] %vm1511, 0.0
      %2220 = vst.msk [vmem:[#allocation2 + $0x328] sm:$0xff] %vm1511, 0.0
      %2221 = vst.msk [vmem:[#allocation2 + $0x330] sm:$0xff] %vm1511, 0.0
      %2222 = vst.msk [vmem:[#allocation2 + $0x338] sm:$0x3] %vm2121, 0.0
      %s2223 = scalar_lea.vmem [#allocation2], 256
      %2224 = vst.msk [vmem:[%s2223 + $0x8] sm:$0xff] %vm1511, %v2086
      %2225 = vst.msk [vmem:[%s2223 + $0x10] sm:$0xff] %vm1511, %v2087
      %2226 = vst.msk [vmem:[%s2223 + $0x28] sm:$0xff] %vm1511, %v2088
      %2227 = vst.msk [vmem:[%s2223 + $0x30] sm:$0xff] %vm1511, %v2089
      %2228 = vst.msk [vmem:[%s2223 + $0x48] sm:$0xff] %vm1511, %v2090
      %2229 = vst.msk [vmem:[%s2223 + $0x50] sm:$0xff] %vm1511, %v2091
      %2230 = vst.msk [vmem:[%s2223 + $0x68] sm:$0xff] %vm1511, %v2092
      %2231 = vst.msk [vmem:[%s2223 + $0x70] sm:$0xff] %vm1511, %v2093
      %2232 = vst.msk [vmem:[%s2223 + $0x88] sm:$0xff] %vm1511, %v2094
      %2233 = vst.msk [vmem:[%s2223 + $0x90] sm:$0xff] %vm1511, %v2095
      %2234 = vst.msk [vmem:[%s2223 + $0xa8] sm:$0xff] %vm1511, %v2096
      %2235 = vst.msk [vmem:[%s2223 + $0xb0] sm:$0xff] %vm1511, %v2097
      %2236 = vst.msk [vmem:[%s2223 + $0xc8] sm:$0xff] %vm1511, %v2098
      %2237 = vst.msk [vmem:[%s2223 + $0xd0] sm:$0xff] %vm1511, %v2099
      %2238 = vst.msk [vmem:[%s2223 + $0xe8] sm:$0xff] %vm1511, %v2100
      %2239 = vst.msk [vmem:[%s2223 + $0xf0] sm:$0xff] %vm1511, %v2101
      %2240 = vst.msk [vmem:[%s2223 + $0x108] sm:$0xff] %vm1511, %v2102
      %2241 = vst.msk [vmem:[%s2223 + $0x110] sm:$0xff] %vm1511, %v2103
      %2242 = vst.msk [vmem:[%s2223 + $0x128] sm:$0xff] %vm1511, %v2104
      %2243 = vst.msk [vmem:[%s2223 + $0x130] sm:$0xff] %vm1511, %v2105
      %2244 = vst.msk [vmem:[%s2223 + $0x148] sm:$0xff] %vm1511, %v2106
      %2245 = vst.msk [vmem:[%s2223 + $0x150] sm:$0xff] %vm1511, %v2107
      %2246 = vst.msk [vmem:[%s2223 + $0x168] sm:$0xff] %vm1511, %v2108
      %2247 = vst.msk [vmem:[%s2223 + $0x170] sm:$0xff] %vm1511, %v2109
      %2248 = vst.msk [vmem:[%s2223 + $0x188] sm:$0xff] %vm1511, %v2110
      %2249 = vst.msk [vmem:[%s2223 + $0x190] sm:$0xff] %vm1511, %v2111
      %2250 = vst.msk [vmem:[%s2223 + $0x1a8] sm:$0xff] %vm1511, %v2112
      %2251 = vst.msk [vmem:[%s2223 + $0x1b0] sm:$0xff] %vm1511, %v2113
      %2252 = vst.msk [vmem:[%s2223 + $0x1c8] sm:$0xff] %vm1511, %v2114
      %2253 = vst.msk [vmem:[%s2223 + $0x1d0] sm:$0xff] %vm1511, %v2115
      %2254 = vst.msk [vmem:[%s2223 + $0x1e8] sm:$0xff] %vm1511, %v2116
      %2255 = vst.msk [vmem:[%s2223 + $0x1f0] sm:$0xff] %vm1511, %v2117
      %v2256 = vld [vmem:[#allocation2 + $0xe0] sm:$0xff]
      %v2257 = vld [vmem:[#allocation2 + $0xe8] sm:$0xff]
      %v2258 = vld [vmem:[#allocation2 + $0xf0] sm:$0xff]
      %v2259 = vld [vmem:[#allocation2 + $0xf8] sm:$0x3]
      %v2260 = vld [vmem:[#allocation2 + $0x100] sm:$0xff]
      %v2261 = vld [vmem:[#allocation2 + $0x108] sm:$0xff]
      %v2262 = vld [vmem:[#allocation2 + $0x110] sm:$0xff]
      %v2263 = vld [vmem:[#allocation2 + $0x118] sm:$0x3]
      %v2264 = vld [vmem:[#allocation2 + $0x120] sm:$0xff]
      %v2265 = vld [vmem:[#allocation2 + $0x128] sm:$0xff]
      %v2266 = vld [vmem:[#allocation2 + $0x130] sm:$0xff]
      %v2267 = vld [vmem:[#allocation2 + $0x138] sm:$0x3]
      %v2268 = vld [vmem:[#allocation2 + $0x140] sm:$0xff]
      %v2269 = vld [vmem:[#allocation2 + $0x148] sm:$0xff]
      %v2270 = vld [vmem:[#allocation2 + $0x150] sm:$0xff]
      %v2271 = vld [vmem:[#allocation2 + $0x158] sm:$0x3]
      %v2272 = vld [vmem:[#allocation2 + $0x160] sm:$0xff]
      %v2273 = vld [vmem:[#allocation2 + $0x168] sm:$0xff]
      %v2274 = vld [vmem:[#allocation2 + $0x170] sm:$0xff]
      %v2275 = vld [vmem:[#allocation2 + $0x178] sm:$0x3]
      %v2276 = vld [vmem:[#allocation2 + $0x180] sm:$0xff]
      %v2277 = vld [vmem:[#allocation2 + $0x188] sm:$0xff]
      %v2278 = vld [vmem:[#allocation2 + $0x190] sm:$0xff]
      %v2279 = vld [vmem:[#allocation2 + $0x198] sm:$0x3]
      %v2280 = vld [vmem:[#allocation2 + $0x1a0] sm:$0xff]
      %v2281 = vld [vmem:[#allocation2 + $0x1a8] sm:$0xff]
      %v2282 = vld [vmem:[#allocation2 + $0x1b0] sm:$0xff]
      %v2283 = vld [vmem:[#allocation2 + $0x1b8] sm:$0x3]
      %v2284 = vld [vmem:[#allocation2 + $0x1c0] sm:$0xff]
      %v2285 = vld [vmem:[#allocation2 + $0x1c8] sm:$0xff]
      %v2286 = vld [vmem:[#allocation2 + $0x1d0] sm:$0xff]
      %v2287 = vld [vmem:[#allocation2 + $0x1d8] sm:$0x3]
      %v2288 = vld [vmem:[#allocation2 + $0x1e0] sm:$0xff]
      %v2289 = vld [vmem:[#allocation2 + $0x1e8] sm:$0xff]
      %v2290 = vld [vmem:[#allocation2 + $0x1f0] sm:$0xff]
      %v2291 = vld [vmem:[#allocation2 + $0x1f8] sm:$0x3]
      %v2292 = vld [vmem:[#allocation2 + $0x200] sm:$0xff]
      %v2293 = vld [vmem:[#allocation2 + $0x208] sm:$0xff]
      %v2294 = vld [vmem:[#allocation2 + $0x210] sm:$0xff]
      %v2295 = vld [vmem:[#allocation2 + $0x218] sm:$0x3]
      %v2296 = vld [vmem:[#allocation2 + $0x220] sm:$0xff]
      %v2297 = vld [vmem:[#allocation2 + $0x228] sm:$0xff]
      %v2298 = vld [vmem:[#allocation2 + $0x230] sm:$0xff]
      %v2299 = vld [vmem:[#allocation2 + $0x238] sm:$0x3]
      %v2300 = vld [vmem:[#allocation2 + $0x240] sm:$0xff]
      %v2301 = vld [vmem:[#allocation2 + $0x248] sm:$0xff]
      %v2302 = vld [vmem:[#allocation2 + $0x250] sm:$0xff]
      %v2303 = vld [vmem:[#allocation2 + $0x258] sm:$0x3]
      %v2304 = vld [vmem:[#allocation2 + $0x260] sm:$0xff]
      %v2305 = vld [vmem:[#allocation2 + $0x268] sm:$0xff]
      %v2306 = vld [vmem:[#allocation2 + $0x270] sm:$0xff]
      %v2307 = vld [vmem:[#allocation2 + $0x278] sm:$0x3]
      %v2308 = vld [vmem:[#allocation2 + $0x280] sm:$0xff]
      %v2309 = vld [vmem:[#allocation2 + $0x288] sm:$0xff]
      %v2310 = vld [vmem:[#allocation2 + $0x290] sm:$0xff]
      %v2311 = vld [vmem:[#allocation2 + $0x298] sm:$0x3]
      %v2312 = vld [vmem:[#allocation2 + $0x2a0] sm:$0xff]
      %v2313 = vld [vmem:[#allocation2 + $0x2a8] sm:$0xff]
      %v2314 = vld [vmem:[#allocation2 + $0x2b0] sm:$0xff]
      %v2315 = vld [vmem:[#allocation2 + $0x2b8] sm:$0x3]
      %v2316 = vld [vmem:[#allocation2 + $0x2c0] sm:$0xff]
      %v2317 = vld [vmem:[#allocation2 + $0x2c8] sm:$0xff]
      %v2318 = vld [vmem:[#allocation2 + $0x2d0] sm:$0xff]
      %v2319 = vld [vmem:[#allocation2 + $0x2d8] sm:$0x3]
      %v2320 = vld [vmem:[#allocation2 + $0x2e0] sm:$0xff]
      %v2321 = vld [vmem:[#allocation2 + $0x2e8] sm:$0xff]
      %v2322 = vld [vmem:[#allocation2 + $0x2f0] sm:$0xff]
      %v2323 = vld [vmem:[#allocation2 + $0x2f8] sm:$0x3]
      %v2324 = vld [vmem:[#allocation2 + $0x300] sm:$0xff]
      %v2325 = vld [vmem:[#allocation2 + $0x308] sm:$0xff]
      %v2326 = vld [vmem:[#allocation2 + $0x310] sm:$0xff]
      %v2327 = vld [vmem:[#allocation2 + $0x318] sm:$0x3]
      %vm2376 = vcmask 1040384
      %v2377 = vrot.slane %v2256, 7
      %v2378 = vrot.slane %v2257, 7
      %v2379 = vsel %vm2376, %v2377, %v2378
      %v2380 = vrot.slane %v2258, 7
      %v2381 = vsel %vm2376, %v2378, %v2380
      %v2382 = vrot.slane %v2260, 7
      %v2383 = vrot.slane %v2261, 7
      %v2384 = vsel %vm2376, %v2382, %v2383
      %v2385 = vrot.slane %v2262, 7
      %v2386 = vsel %vm2376, %v2383, %v2385
      %v2387 = vrot.slane %v2264, 7
      %v2388 = vrot.slane %v2265, 7
      %v2389 = vsel %vm2376, %v2387, %v2388
      %v2390 = vrot.slane %v2266, 7
      %v2391 = vsel %vm2376, %v2388, %v2390
      %v2392 = vrot.slane %v2268, 7
      %v2393 = vrot.slane %v2269, 7
      %v2394 = vsel %vm2376, %v2392, %v2393
      %v2395 = vrot.slane %v2270, 7
      %v2396 = vsel %vm2376, %v2393, %v2395
      %v2397 = vrot.slane %v2272, 7
      %v2398 = vrot.slane %v2273, 7
      %v2399 = vsel %vm2376, %v2397, %v2398
      %v2400 = vrot.slane %v2274, 7
      %v2401 = vsel %vm2376, %v2398, %v2400
      %v2402 = vrot.slane %v2276, 7
      %v2403 = vrot.slane %v2277, 7
      %v2404 = vsel %vm2376, %v2402, %v2403
      %v2405 = vrot.slane %v2278, 7
      %v2406 = vsel %vm2376, %v2403, %v2405
      %v2407 = vrot.slane %v2280, 7
      %v2408 = vrot.slane %v2281, 7
      %v2409 = vsel %vm2376, %v2407, %v2408
      %v2410 = vrot.slane %v2282, 7
      %v2411 = vsel %vm2376, %v2408, %v2410
      %v2412 = vrot.slane %v2284, 7
      %v2413 = vrot.slane %v2285, 7
      %v2414 = vsel %vm2376, %v2412, %v2413
      %v2415 = vrot.slane %v2286, 7
      %v2416 = vsel %vm2376, %v2413, %v2415
      %v2417 = vrot.slane %v2288, 7
      %v2418 = vrot.slane %v2289, 7
      %v2419 = vsel %vm2376, %v2417, %v2418
      %v2420 = vrot.slane %v2290, 7
      %v2421 = vsel %vm2376, %v2418, %v2420
      %v2422 = vrot.slane %v2292, 7
      %v2423 = vrot.slane %v2293, 7
      %v2424 = vsel %vm2376, %v2422, %v2423
      %v2425 = vrot.slane %v2294, 7
      %v2426 = vsel %vm2376, %v2423, %v2425
      %v2427 = vrot.slane %v2296, 7
      %v2428 = vrot.slane %v2297, 7
      %v2429 = vsel %vm2376, %v2427, %v2428
      %v2430 = vrot.slane %v2298, 7
      %v2431 = vsel %vm2376, %v2428, %v2430
      %v2432 = vrot.slane %v2300, 7
      %v2433 = vrot.slane %v2301, 7
      %v2434 = vsel %vm2376, %v2432, %v2433
      %v2435 = vrot.slane %v2302, 7
      %v2436 = vsel %vm2376, %v2433, %v2435
      %v2437 = vrot.slane %v2304, 7
      %v2438 = vrot.slane %v2305, 7
      %v2439 = vsel %vm2376, %v2437, %v2438
      %v2440 = vrot.slane %v2306, 7
      %v2441 = vsel %vm2376, %v2438, %v2440
      %v2442 = vrot.slane %v2308, 7
      %v2443 = vrot.slane %v2309, 7
      %v2444 = vsel %vm2376, %v2442, %v2443
      %v2445 = vrot.slane %v2310, 7
      %v2446 = vsel %vm2376, %v2443, %v2445
      %v2447 = vrot.slane %v2312, 7
      %v2448 = vrot.slane %v2313, 7
      %v2449 = vsel %vm2376, %v2447, %v2448
      %v2450 = vrot.slane %v2314, 7
      %v2451 = vsel %vm2376, %v2448, %v2450
      %v2452 = vrot.slane %v2316, 7
      %v2453 = vrot.slane %v2317, 7
      %v2454 = vsel %vm2376, %v2452, %v2453
      %v2455 = vrot.slane %v2318, 7
      %v2456 = vsel %vm2376, %v2453, %v2455
      %v2505 = vrot.slane %v2257, 1
      %v2506 = vrot.slane %v2258, 1
      %v2507 = vsel %vm490, %v2505, %v2506
      %v2508 = vrot.slane %v2259, 1
      %v2509 = vsel %vm490, %v2506, %v2508
      %v2510 = vrot.slane %v2261, 1
      %v2511 = vrot.slane %v2262, 1
      %v2512 = vsel %vm490, %v2510, %v2511
      %v2513 = vrot.slane %v2263, 1
      %v2514 = vsel %vm490, %v2511, %v2513
      %v2515 = vrot.slane %v2265, 1
      %v2516 = vrot.slane %v2266, 1
      %v2517 = vsel %vm490, %v2515, %v2516
      %v2518 = vrot.slane %v2267, 1
      %v2519 = vsel %vm490, %v2516, %v2518
      %v2520 = vrot.slane %v2269, 1
      %v2521 = vrot.slane %v2270, 1
      %v2522 = vsel %vm490, %v2520, %v2521
      %v2523 = vrot.slane %v2271, 1
      %v2524 = vsel %vm490, %v2521, %v2523
      %v2525 = vrot.slane %v2273, 1
      %v2526 = vrot.slane %v2274, 1
      %v2527 = vsel %vm490, %v2525, %v2526
      %v2528 = vrot.slane %v2275, 1
      %v2529 = vsel %vm490, %v2526, %v2528
      %v2530 = vrot.slane %v2277, 1
      %v2531 = vrot.slane %v2278, 1
      %v2532 = vsel %vm490, %v2530, %v2531
      %v2533 = vrot.slane %v2279, 1
      %v2534 = vsel %vm490, %v2531, %v2533
      %v2535 = vrot.slane %v2281, 1
      %v2536 = vrot.slane %v2282, 1
      %v2537 = vsel %vm490, %v2535, %v2536
      %v2538 = vrot.slane %v2283, 1
      %v2539 = vsel %vm490, %v2536, %v2538
      %v2540 = vrot.slane %v2285, 1
      %v2541 = vrot.slane %v2286, 1
      %v2542 = vsel %vm490, %v2540, %v2541
      %v2543 = vrot.slane %v2287, 1
      %v2544 = vsel %vm490, %v2541, %v2543
      %v2545 = vrot.slane %v2289, 1
      %v2546 = vrot.slane %v2290, 1
      %v2547 = vsel %vm490, %v2545, %v2546
      %v2548 = vrot.slane %v2291, 1
      %v2549 = vsel %vm490, %v2546, %v2548
      %v2550 = vrot.slane %v2293, 1
      %v2551 = vrot.slane %v2294, 1
      %v2552 = vsel %vm490, %v2550, %v2551
      %v2553 = vrot.slane %v2295, 1
      %v2554 = vsel %vm490, %v2551, %v2553
      %v2555 = vrot.slane %v2297, 1
      %v2556 = vrot.slane %v2298, 1
      %v2557 = vsel %vm490, %v2555, %v2556
      %v2558 = vrot.slane %v2299, 1
      %v2559 = vsel %vm490, %v2556, %v2558
      %v2560 = vrot.slane %v2301, 1
      %v2561 = vrot.slane %v2302, 1
      %v2562 = vsel %vm490, %v2560, %v2561
      %v2563 = vrot.slane %v2303, 1
      %v2564 = vsel %vm490, %v2561, %v2563
      %v2565 = vrot.slane %v2305, 1
      %v2566 = vrot.slane %v2306, 1
      %v2567 = vsel %vm490, %v2565, %v2566
      %v2568 = vrot.slane %v2307, 1
      %v2569 = vsel %vm490, %v2566, %v2568
      %v2570 = vrot.slane %v2309, 1
      %v2571 = vrot.slane %v2310, 1
      %v2572 = vsel %vm490, %v2570, %v2571
      %v2573 = vrot.slane %v2311, 1
      %v2574 = vsel %vm490, %v2571, %v2573
      %v2575 = vrot.slane %v2313, 1
      %v2576 = vrot.slane %v2314, 1
      %v2577 = vsel %vm490, %v2575, %v2576
      %v2578 = vrot.slane %v2315, 1
      %v2579 = vsel %vm490, %v2576, %v2578
      %v2580 = vrot.slane %v2317, 1
      %v2581 = vrot.slane %v2318, 1
      %v2582 = vsel %vm490, %v2580, %v2581
      %v2583 = vrot.slane %v2319, 1
      %v2584 = vsel %vm490, %v2581, %v2583
      %v2588 = vrot.slane %v2320, 7
      %v2589 = vrot.slane %v2321, 7
      %v2590 = vsel %vm2376, %v2588, %v2589
      %v2591 = vrot.slane %v2322, 7
      %v2592 = vsel %vm2376, %v2589, %v2591
      %v2594 = vrot.slane %v2321, 1
      %v2595 = vrot.slane %v2322, 1
      %v2596 = vsel %vm490, %v2594, %v2595
      %v2597 = vrot.slane %v2323, 1
      %v2598 = vsel %vm490, %v2595, %v2597
      %v2602 = vrot.slane %v2324, 7
      %v2603 = vrot.slane %v2325, 7
      %v2604 = vsel %vm2376, %v2602, %v2603
      %v2605 = vrot.slane %v2326, 7
      %v2606 = vsel %vm2376, %v2603, %v2605
      %v2608 = vrot.slane %v2325, 1
      %v2609 = vrot.slane %v2326, 1
      %v2610 = vsel %vm490, %v2608, %v2609
      %v2611 = vrot.slane %v2327, 1
      %v2612 = vsel %vm490, %v2609, %v2611
      %2645 = vrot.lane.b32.xlu0 %v2257, 16
      %v2646 = vpop.permute.xlu0 %2645
      %2647 = vrot.lane.b32.xlu0 %v2258, 16
      %v2648 = vpop.permute.xlu0 %2647
      %2649 = vrot.lane.b32.xlu0 %v2261, 16
      %v2650 = vpop.permute.xlu0 %2649
      %2651 = vrot.lane.b32.xlu0 %v2262, 16
      %v2652 = vpop.permute.xlu0 %2651
      %2653 = vrot.lane.b32.xlu0 %v2265, 16
      %v2654 = vpop.permute.xlu0 %2653
      %2655 = vrot.lane.b32.xlu0 %v2266, 16
      %v2656 = vpop.permute.xlu0 %2655
      %2657 = vrot.lane.b32.xlu0 %v2269, 16
      %v2658 = vpop.permute.xlu0 %2657
      %2659 = vrot.lane.b32.xlu0 %v2270, 16
      %v2660 = vpop.permute.xlu0 %2659
      %2661 = vrot.lane.b32.xlu0 %v2273, 16
      %v2662 = vpop.permute.xlu0 %2661
      %2663 = vrot.lane.b32.xlu0 %v2274, 16
      %v2664 = vpop.permute.xlu0 %2663
      %2665 = vrot.lane.b32.xlu0 %v2277, 16
      %v2666 = vpop.permute.xlu0 %2665
      %2667 = vrot.lane.b32.xlu0 %v2278, 16
      %v2668 = vpop.permute.xlu0 %2667
      %2669 = vrot.lane.b32.xlu0 %v2281, 16
      %v2670 = vpop.permute.xlu0 %2669
      %2671 = vrot.lane.b32.xlu0 %v2282, 16
      %v2672 = vpop.permute.xlu0 %2671
      %2673 = vrot.lane.b32.xlu0 %v2285, 16
      %v2674 = vpop.permute.xlu0 %2673
      %2675 = vrot.lane.b32.xlu0 %v2286, 16
      %v2676 = vpop.permute.xlu0 %2675
      %2677 = vrot.lane.b32.xlu0 %v2289, 16
      %v2678 = vpop.permute.xlu0 %2677
      %2679 = vrot.lane.b32.xlu0 %v2290, 16
      %v2680 = vpop.permute.xlu0 %2679
      %2681 = vrot.lane.b32.xlu0 %v2293, 16
      %v2682 = vpop.permute.xlu0 %2681
      %2683 = vrot.lane.b32.xlu0 %v2294, 16
      %v2684 = vpop.permute.xlu0 %2683
      %2685 = vrot.lane.b32.xlu0 %v2297, 16
      %v2686 = vpop.permute.xlu0 %2685
      %2687 = vrot.lane.b32.xlu0 %v2298, 16
      %v2688 = vpop.permute.xlu0 %2687
      %2689 = vrot.lane.b32.xlu0 %v2301, 16
      %v2690 = vpop.permute.xlu0 %2689
      %2691 = vrot.lane.b32.xlu0 %v2302, 16
      %v2692 = vpop.permute.xlu0 %2691
      %2693 = vrot.lane.b32.xlu0 %v2305, 16
      %v2694 = vpop.permute.xlu0 %2693
      %2695 = vrot.lane.b32.xlu0 %v2306, 16
      %v2696 = vpop.permute.xlu0 %2695
      %2697 = vrot.lane.b32.xlu0 %v2309, 16
      %v2698 = vpop.permute.xlu0 %2697
      %2699 = vrot.lane.b32.xlu0 %v2310, 16
      %v2700 = vpop.permute.xlu0 %2699
      %2701 = vrot.lane.b32.xlu0 %v2313, 16
      %v2702 = vpop.permute.xlu0 %2701
      %2703 = vrot.lane.b32.xlu0 %v2314, 16
      %v2704 = vpop.permute.xlu0 %2703
      %2705 = vrot.lane.b32.xlu0 %v2317, 16
      %v2706 = vpop.permute.xlu0 %2705
      %2707 = vrot.lane.b32.xlu0 %v2318, 16
      %v2708 = vpop.permute.xlu0 %2707
      %2741 = vrot.lane.b32.xlu0 %v2507, 32
      %v2742 = vpop.permute.xlu0 %2741
      %2743 = vrot.lane.b32.xlu0 %v2509, 32
      %v2744 = vpop.permute.xlu0 %2743
      %2745 = vrot.lane.b32.xlu0 %v2512, 32
      %v2746 = vpop.permute.xlu0 %2745
      %2747 = vrot.lane.b32.xlu0 %v2514, 32
      %v2748 = vpop.permute.xlu0 %2747
      %2749 = vrot.lane.b32.xlu0 %v2517, 32
      %v2750 = vpop.permute.xlu0 %2749
      %2751 = vrot.lane.b32.xlu0 %v2519, 32
      %v2752 = vpop.permute.xlu0 %2751
      %2753 = vrot.lane.b32.xlu0 %v2522, 32
      %v2754 = vpop.permute.xlu0 %2753
      %2755 = vrot.lane.b32.xlu0 %v2524, 32
      %v2756 = vpop.permute.xlu0 %2755
      %2757 = vrot.lane.b32.xlu0 %v2527, 32
      %v2758 = vpop.permute.xlu0 %2757
      %2759 = vrot.lane.b32.xlu0 %v2529, 32
      %v2760 = vpop.permute.xlu0 %2759
      %2761 = vrot.lane.b32.xlu0 %v2532, 32
      %v2762 = vpop.permute.xlu0 %2761
      %2763 = vrot.lane.b32.xlu0 %v2534, 32
      %v2764 = vpop.permute.xlu0 %2763
      %2765 = vrot.lane.b32.xlu0 %v2537, 32
      %v2766 = vpop.permute.xlu0 %2765
      %2767 = vrot.lane.b32.xlu0 %v2539, 32
      %v2768 = vpop.permute.xlu0 %2767
      %2769 = vrot.lane.b32.xlu0 %v2542, 32
      %v2770 = vpop.permute.xlu0 %2769
      %2771 = vrot.lane.b32.xlu0 %v2544, 32
      %v2772 = vpop.permute.xlu0 %2771
      %2773 = vrot.lane.b32.xlu0 %v2547, 32
      %v2774 = vpop.permute.xlu0 %2773
      %2775 = vrot.lane.b32.xlu0 %v2549, 32
      %v2776 = vpop.permute.xlu0 %2775
      %2777 = vrot.lane.b32.xlu0 %v2552, 32
      %v2778 = vpop.permute.xlu0 %2777
      %2779 = vrot.lane.b32.xlu0 %v2554, 32
      %v2780 = vpop.permute.xlu0 %2779
      %2781 = vrot.lane.b32.xlu0 %v2557, 32
      %v2782 = vpop.permute.xlu0 %2781
      %2783 = vrot.lane.b32.xlu0 %v2559, 32
      %v2784 = vpop.permute.xlu0 %2783
      %2785 = vrot.lane.b32.xlu0 %v2562, 32
      %v2786 = vpop.permute.xlu0 %2785
      %2787 = vrot.lane.b32.xlu0 %v2564, 32
      %v2788 = vpop.permute.xlu0 %2787
      %2789 = vrot.lane.b32.xlu0 %v2567, 32
      %v2790 = vpop.permute.xlu0 %2789
      %2791 = vrot.lane.b32.xlu0 %v2569, 32
      %v2792 = vpop.permute.xlu0 %2791
      %2793 = vrot.lane.b32.xlu0 %v2572, 32
      %v2794 = vpop.permute.xlu0 %2793
      %2795 = vrot.lane.b32.xlu0 %v2574, 32
      %v2796 = vpop.permute.xlu0 %2795
      %2797 = vrot.lane.b32.xlu0 %v2577, 32
      %v2798 = vpop.permute.xlu0 %2797
      %2799 = vrot.lane.b32.xlu0 %v2579, 32
      %v2800 = vpop.permute.xlu0 %2799
      %2801 = vrot.lane.b32.xlu0 %v2582, 32
      %v2802 = vpop.permute.xlu0 %2801
      %2803 = vrot.lane.b32.xlu0 %v2584, 32
      %v2804 = vpop.permute.xlu0 %2803
      %2837 = vrot.lane.b32.xlu0 %v2384, 48
      %v2838 = vpop.permute.xlu0 %2837
      %2839 = vrot.lane.b32.xlu0 %v2386, 48
      %v2840 = vpop.permute.xlu0 %2839
      %2841 = vrot.lane.b32.xlu0 %v2389, 48
      %v2842 = vpop.permute.xlu0 %2841
      %2843 = vrot.lane.b32.xlu0 %v2391, 48
      %v2844 = vpop.permute.xlu0 %2843
      %2845 = vrot.lane.b32.xlu0 %v2394, 48
      %v2846 = vpop.permute.xlu0 %2845
      %2847 = vrot.lane.b32.xlu0 %v2396, 48
      %v2848 = vpop.permute.xlu0 %2847
      %2849 = vrot.lane.b32.xlu0 %v2399, 48
      %v2850 = vpop.permute.xlu0 %2849
      %2851 = vrot.lane.b32.xlu0 %v2401, 48
      %v2852 = vpop.permute.xlu0 %2851
      %2853 = vrot.lane.b32.xlu0 %v2404, 48
      %v2854 = vpop.permute.xlu0 %2853
      %2855 = vrot.lane.b32.xlu0 %v2406, 48
      %v2856 = vpop.permute.xlu0 %2855
      %2857 = vrot.lane.b32.xlu0 %v2409, 48
      %v2858 = vpop.permute.xlu0 %2857
      %2859 = vrot.lane.b32.xlu0 %v2411, 48
      %v2860 = vpop.permute.xlu0 %2859
      %2861 = vrot.lane.b32.xlu0 %v2414, 48
      %v2862 = vpop.permute.xlu0 %2861
      %2863 = vrot.lane.b32.xlu0 %v2416, 48
      %v2864 = vpop.permute.xlu0 %2863
      %2865 = vrot.lane.b32.xlu0 %v2419, 48
      %v2866 = vpop.permute.xlu0 %2865
      %2867 = vrot.lane.b32.xlu0 %v2421, 48
      %v2868 = vpop.permute.xlu0 %2867
      %2869 = vrot.lane.b32.xlu0 %v2424, 48
      %v2870 = vpop.permute.xlu0 %2869
      %2871 = vrot.lane.b32.xlu0 %v2426, 48
      %v2872 = vpop.permute.xlu0 %2871
      %2873 = vrot.lane.b32.xlu0 %v2429, 48
      %v2874 = vpop.permute.xlu0 %2873
      %2875 = vrot.lane.b32.xlu0 %v2431, 48
      %v2876 = vpop.permute.xlu0 %2875
      %2877 = vrot.lane.b32.xlu0 %v2434, 48
      %v2878 = vpop.permute.xlu0 %2877
      %2879 = vrot.lane.b32.xlu0 %v2436, 48
      %v2880 = vpop.permute.xlu0 %2879
      %2881 = vrot.lane.b32.xlu0 %v2439, 48
      %v2882 = vpop.permute.xlu0 %2881
      %2883 = vrot.lane.b32.xlu0 %v2441, 48
      %v2884 = vpop.permute.xlu0 %2883
      %2885 = vrot.lane.b32.xlu0 %v2444, 48
      %v2886 = vpop.permute.xlu0 %2885
      %2887 = vrot.lane.b32.xlu0 %v2446, 48
      %v2888 = vpop.permute.xlu0 %2887
      %2889 = vrot.lane.b32.xlu0 %v2449, 48
      %v2890 = vpop.permute.xlu0 %2889
      %2891 = vrot.lane.b32.xlu0 %v2451, 48
      %v2892 = vpop.permute.xlu0 %2891
      %2893 = vrot.lane.b32.xlu0 %v2454, 48
      %v2894 = vpop.permute.xlu0 %2893
      %2895 = vrot.lane.b32.xlu0 %v2456, 48
      %v2896 = vpop.permute.xlu0 %2895
      %2897 = vrot.lane.b32.xlu0 %v2590, 48
      %v2898 = vpop.permute.xlu0 %2897
      %2899 = vrot.lane.b32.xlu0 %v2592, 48
      %v2900 = vpop.permute.xlu0 %2899
      %2933 = vrot.lane.b32.xlu0 %v2261, 64
      %v2934 = vpop.permute.xlu0 %2933
      %2935 = vrot.lane.b32.xlu0 %v2262, 64
      %v2936 = vpop.permute.xlu0 %2935
      %2937 = vrot.lane.b32.xlu0 %v2265, 64
      %v2938 = vpop.permute.xlu0 %2937
      %2939 = vrot.lane.b32.xlu0 %v2266, 64
      %v2940 = vpop.permute.xlu0 %2939
      %2941 = vrot.lane.b32.xlu0 %v2269, 64
      %v2942 = vpop.permute.xlu0 %2941
      %2943 = vrot.lane.b32.xlu0 %v2270, 64
      %v2944 = vpop.permute.xlu0 %2943
      %2945 = vrot.lane.b32.xlu0 %v2273, 64
      %v2946 = vpop.permute.xlu0 %2945
      %2947 = vrot.lane.b32.xlu0 %v2274, 64
      %v2948 = vpop.permute.xlu0 %2947
      %2949 = vrot.lane.b32.xlu0 %v2277, 64
      %v2950 = vpop.permute.xlu0 %2949
      %2951 = vrot.lane.b32.xlu0 %v2278, 64
      %v2952 = vpop.permute.xlu0 %2951
      %2953 = vrot.lane.b32.xlu0 %v2281, 64
      %v2954 = vpop.permute.xlu0 %2953
      %2955 = vrot.lane.b32.xlu0 %v2282, 64
      %v2956 = vpop.permute.xlu0 %2955
      %2957 = vrot.lane.b32.xlu0 %v2285, 64
      %v2958 = vpop.permute.xlu0 %2957
      %2959 = vrot.lane.b32.xlu0 %v2286, 64
      %v2960 = vpop.permute.xlu0 %2959
      %2961 = vrot.lane.b32.xlu0 %v2289, 64
      %v2962 = vpop.permute.xlu0 %2961
      %2963 = vrot.lane.b32.xlu0 %v2290, 64
      %v2964 = vpop.permute.xlu0 %2963
      %2965 = vrot.lane.b32.xlu0 %v2293, 64
      %v2966 = vpop.permute.xlu0 %2965
      %2967 = vrot.lane.b32.xlu0 %v2294, 64
      %v2968 = vpop.permute.xlu0 %2967
      %2969 = vrot.lane.b32.xlu0 %v2297, 64
      %v2970 = vpop.permute.xlu0 %2969
      %2971 = vrot.lane.b32.xlu0 %v2298, 64
      %v2972 = vpop.permute.xlu0 %2971
      %2973 = vrot.lane.b32.xlu0 %v2301, 64
      %v2974 = vpop.permute.xlu0 %2973
      %2975 = vrot.lane.b32.xlu0 %v2302, 64
      %v2976 = vpop.permute.xlu0 %2975
      %2977 = vrot.lane.b32.xlu0 %v2305, 64
      %v2978 = vpop.permute.xlu0 %2977
      %2979 = vrot.lane.b32.xlu0 %v2306, 64
      %v2980 = vpop.permute.xlu0 %2979
      %2981 = vrot.lane.b32.xlu0 %v2309, 64
      %v2982 = vpop.permute.xlu0 %2981
      %2983 = vrot.lane.b32.xlu0 %v2310, 64
      %v2984 = vpop.permute.xlu0 %2983
      %2985 = vrot.lane.b32.xlu0 %v2313, 64
      %v2986 = vpop.permute.xlu0 %2985
      %2987 = vrot.lane.b32.xlu0 %v2314, 64
      %v2988 = vpop.permute.xlu0 %2987
      %2989 = vrot.lane.b32.xlu0 %v2317, 64
      %v2990 = vpop.permute.xlu0 %2989
      %2991 = vrot.lane.b32.xlu0 %v2318, 64
      %v2992 = vpop.permute.xlu0 %2991
      %2993 = vrot.lane.b32.xlu0 %v2321, 64
      %v2994 = vpop.permute.xlu0 %2993
      %2995 = vrot.lane.b32.xlu0 %v2322, 64
      %v2996 = vpop.permute.xlu0 %2995
      %3029 = vrot.lane.b32.xlu0 %v2512, 80
      %v3030 = vpop.permute.xlu0 %3029
      %3031 = vrot.lane.b32.xlu0 %v2514, 80
      %v3032 = vpop.permute.xlu0 %3031
      %3033 = vrot.lane.b32.xlu0 %v2517, 80
      %v3034 = vpop.permute.xlu0 %3033
      %3035 = vrot.lane.b32.xlu0 %v2519, 80
      %v3036 = vpop.permute.xlu0 %3035
      %3037 = vrot.lane.b32.xlu0 %v2522, 80
      %v3038 = vpop.permute.xlu0 %3037
      %3039 = vrot.lane.b32.xlu0 %v2524, 80
      %v3040 = vpop.permute.xlu0 %3039
      %3041 = vrot.lane.b32.xlu0 %v2527, 80
      %v3042 = vpop.permute.xlu0 %3041
      %3043 = vrot.lane.b32.xlu0 %v2529, 80
      %v3044 = vpop.permute.xlu0 %3043
      %3045 = vrot.lane.b32.xlu0 %v2532, 80
      %v3046 = vpop.permute.xlu0 %3045
      %3047 = vrot.lane.b32.xlu0 %v2534, 80
      %v3048 = vpop.permute.xlu0 %3047
      %3049 = vrot.lane.b32.xlu0 %v2537, 80
      %v3050 = vpop.permute.xlu0 %3049
      %3051 = vrot.lane.b32.xlu0 %v2539, 80
      %v3052 = vpop.permute.xlu0 %3051
      %3053 = vrot.lane.b32.xlu0 %v2542, 80
      %v3054 = vpop.permute.xlu0 %3053
      %3055 = vrot.lane.b32.xlu0 %v2544, 80
      %v3056 = vpop.permute.xlu0 %3055
      %3057 = vrot.lane.b32.xlu0 %v2547, 80
      %v3058 = vpop.permute.xlu0 %3057
      %3059 = vrot.lane.b32.xlu0 %v2549, 80
      %v3060 = vpop.permute.xlu0 %3059
      %3061 = vrot.lane.b32.xlu0 %v2552, 80
      %v3062 = vpop.permute.xlu0 %3061
      %3063 = vrot.lane.b32.xlu0 %v2554, 80
      %v3064 = vpop.permute.xlu0 %3063
      %3065 = vrot.lane.b32.xlu0 %v2557, 80
      %v3066 = vpop.permute.xlu0 %3065
      %3067 = vrot.lane.b32.xlu0 %v2559, 80
      %v3068 = vpop.permute.xlu0 %3067
      %3069 = vrot.lane.b32.xlu0 %v2562, 80
      %v3070 = vpop.permute.xlu0 %3069
      %3071 = vrot.lane.b32.xlu0 %v2564, 80
      %v3072 = vpop.permute.xlu0 %3071
      %3073 = vrot.lane.b32.xlu0 %v2567, 80
      %v3074 = vpop.permute.xlu0 %3073
      %3075 = vrot.lane.b32.xlu0 %v2569, 80
      %v3076 = vpop.permute.xlu0 %3075
      %3077 = vrot.lane.b32.xlu0 %v2572, 80
      %v3078 = vpop.permute.xlu0 %3077
      %3079 = vrot.lane.b32.xlu0 %v2574, 80
      %v3080 = vpop.permute.xlu0 %3079
      %3081 = vrot.lane.b32.xlu0 %v2577, 80
      %v3082 = vpop.permute.xlu0 %3081
      %3083 = vrot.lane.b32.xlu0 %v2579, 80
      %v3084 = vpop.permute.xlu0 %3083
      %3085 = vrot.lane.b32.xlu0 %v2582, 80
      %v3086 = vpop.permute.xlu0 %3085
      %3087 = vrot.lane.b32.xlu0 %v2584, 80
      %v3088 = vpop.permute.xlu0 %3087
      %3089 = vrot.lane.b32.xlu0 %v2596, 80
      %v3090 = vpop.permute.xlu0 %3089
      %3091 = vrot.lane.b32.xlu0 %v2598, 80
      %v3092 = vpop.permute.xlu0 %3091
      %3125 = vrot.lane.b32.xlu0 %v2389, 96
      %v3126 = vpop.permute.xlu0 %3125
      %3127 = vrot.lane.b32.xlu0 %v2391, 96
      %v3128 = vpop.permute.xlu0 %3127
      %3129 = vrot.lane.b32.xlu0 %v2394, 96
      %v3130 = vpop.permute.xlu0 %3129
      %3131 = vrot.lane.b32.xlu0 %v2396, 96
      %v3132 = vpop.permute.xlu0 %3131
      %3133 = vrot.lane.b32.xlu0 %v2399, 96
      %v3134 = vpop.permute.xlu0 %3133
      %3135 = vrot.lane.b32.xlu0 %v2401, 96
      %v3136 = vpop.permute.xlu0 %3135
      %3137 = vrot.lane.b32.xlu0 %v2404, 96
      %v3138 = vpop.permute.xlu0 %3137
      %3139 = vrot.lane.b32.xlu0 %v2406, 96
      %v3140 = vpop.permute.xlu0 %3139
      %3141 = vrot.lane.b32.xlu0 %v2409, 96
      %v3142 = vpop.permute.xlu0 %3141
      %3143 = vrot.lane.b32.xlu0 %v2411, 96
      %v3144 = vpop.permute.xlu0 %3143
      %3145 = vrot.lane.b32.xlu0 %v2414, 96
      %v3146 = vpop.permute.xlu0 %3145
      %3147 = vrot.lane.b32.xlu0 %v2416, 96
      %v3148 = vpop.permute.xlu0 %3147
      %3149 = vrot.lane.b32.xlu0 %v2419, 96
      %v3150 = vpop.permute.xlu0 %3149
      %3151 = vrot.lane.b32.xlu0 %v2421, 96
      %v3152 = vpop.permute.xlu0 %3151
      %3153 = vrot.lane.b32.xlu0 %v2424, 96
      %v3154 = vpop.permute.xlu0 %3153
      %3155 = vrot.lane.b32.xlu0 %v2426, 96
      %v3156 = vpop.permute.xlu0 %3155
      %3157 = vrot.lane.b32.xlu0 %v2429, 96
      %v3158 = vpop.permute.xlu0 %3157
      %3159 = vrot.lane.b32.xlu0 %v2431, 96
      %v3160 = vpop.permute.xlu0 %3159
      %3161 = vrot.lane.b32.xlu0 %v2434, 96
      %v3162 = vpop.permute.xlu0 %3161
      %3163 = vrot.lane.b32.xlu0 %v2436, 96
      %v3164 = vpop.permute.xlu0 %3163
      %3165 = vrot.lane.b32.xlu0 %v2439, 96
      %v3166 = vpop.permute.xlu0 %3165
      %3167 = vrot.lane.b32.xlu0 %v2441, 96
      %v3168 = vpop.permute.xlu0 %3167
      %3169 = vrot.lane.b32.xlu0 %v2444, 96
      %v3170 = vpop.permute.xlu0 %3169
      %3171 = vrot.lane.b32.xlu0 %v2446, 96
      %v3172 = vpop.permute.xlu0 %3171
      %3173 = vrot.lane.b32.xlu0 %v2449, 96
      %v3174 = vpop.permute.xlu0 %3173
      %3175 = vrot.lane.b32.xlu0 %v2451, 96
      %v3176 = vpop.permute.xlu0 %3175
      %3177 = vrot.lane.b32.xlu0 %v2454, 96
      %v3178 = vpop.permute.xlu0 %3177
      %3179 = vrot.lane.b32.xlu0 %v2456, 96
      %v3180 = vpop.permute.xlu0 %3179
      %3181 = vrot.lane.b32.xlu0 %v2590, 96
      %v3182 = vpop.permute.xlu0 %3181
      %3183 = vrot.lane.b32.xlu0 %v2592, 96
      %v3184 = vpop.permute.xlu0 %3183
      %3185 = vrot.lane.b32.xlu0 %v2604, 96
      %v3186 = vpop.permute.xlu0 %3185
      %3187 = vrot.lane.b32.xlu0 %v2606, 96
      %v3188 = vpop.permute.xlu0 %3187
      %3221 = vrot.lane.b32.xlu0 %v2265, 112
      %v3222 = vpop.permute.xlu0 %3221
      %3223 = vrot.lane.b32.xlu0 %v2266, 112
      %v3224 = vpop.permute.xlu0 %3223
      %3225 = vrot.lane.b32.xlu0 %v2269, 112
      %v3226 = vpop.permute.xlu0 %3225
      %3227 = vrot.lane.b32.xlu0 %v2270, 112
      %v3228 = vpop.permute.xlu0 %3227
      %3229 = vrot.lane.b32.xlu0 %v2273, 112
      %v3230 = vpop.permute.xlu0 %3229
      %3231 = vrot.lane.b32.xlu0 %v2274, 112
      %v3232 = vpop.permute.xlu0 %3231
      %3233 = vrot.lane.b32.xlu0 %v2277, 112
      %v3234 = vpop.permute.xlu0 %3233
      %3235 = vrot.lane.b32.xlu0 %v2278, 112
      %v3236 = vpop.permute.xlu0 %3235
      %3237 = vrot.lane.b32.xlu0 %v2281, 112
      %v3238 = vpop.permute.xlu0 %3237
      %3239 = vrot.lane.b32.xlu0 %v2282, 112
      %v3240 = vpop.permute.xlu0 %3239
      %3241 = vrot.lane.b32.xlu0 %v2285, 112
      %v3242 = vpop.permute.xlu0 %3241
      %3243 = vrot.lane.b32.xlu0 %v2286, 112
      %v3244 = vpop.permute.xlu0 %3243
      %3245 = vrot.lane.b32.xlu0 %v2289, 112
      %v3246 = vpop.permute.xlu0 %3245
      %3247 = vrot.lane.b32.xlu0 %v2290, 112
      %v3248 = vpop.permute.xlu0 %3247
      %3249 = vrot.lane.b32.xlu0 %v2293, 112
      %v3250 = vpop.permute.xlu0 %3249
      %3251 = vrot.lane.b32.xlu0 %v2294, 112
      %v3252 = vpop.permute.xlu0 %3251
      %3253 = vrot.lane.b32.xlu0 %v2297, 112
      %v3254 = vpop.permute.xlu0 %3253
      %3255 = vrot.lane.b32.xlu0 %v2298, 112
      %v3256 = vpop.permute.xlu0 %3255
      %3257 = vrot.lane.b32.xlu0 %v2301, 112
      %v3258 = vpop.permute.xlu0 %3257
      %3259 = vrot.lane.b32.xlu0 %v2302, 112
      %v3260 = vpop.permute.xlu0 %3259
      %3261 = vrot.lane.b32.xlu0 %v2305, 112
      %v3262 = vpop.permute.xlu0 %3261
      %3263 = vrot.lane.b32.xlu0 %v2306, 112
      %v3264 = vpop.permute.xlu0 %3263
      %3265 = vrot.lane.b32.xlu0 %v2309, 112
      %v3266 = vpop.permute.xlu0 %3265
      %3267 = vrot.lane.b32.xlu0 %v2310, 112
      %v3268 = vpop.permute.xlu0 %3267
      %3269 = vrot.lane.b32.xlu0 %v2313, 112
      %v3270 = vpop.permute.xlu0 %3269
      %3271 = vrot.lane.b32.xlu0 %v2314, 112
      %v3272 = vpop.permute.xlu0 %3271
      %3273 = vrot.lane.b32.xlu0 %v2317, 112
      %v3274 = vpop.permute.xlu0 %3273
      %3275 = vrot.lane.b32.xlu0 %v2318, 112
      %v3276 = vpop.permute.xlu0 %3275
      %3277 = vrot.lane.b32.xlu0 %v2321, 112
      %v3278 = vpop.permute.xlu0 %3277
      %3279 = vrot.lane.b32.xlu0 %v2322, 112
      %v3280 = vpop.permute.xlu0 %3279
      %3281 = vrot.lane.b32.xlu0 %v2325, 112
      %v3282 = vpop.permute.xlu0 %3281
      %3283 = vrot.lane.b32.xlu0 %v2326, 112
      %v3284 = vpop.permute.xlu0 %3283
      %v3317 = vsel %vm1511, %v2379, %v2646
      %v3318 = vsel %vm1511, %v2381, %v2648
      %v3319 = vsel %vm1511, %v2384, %v2650
      %v3320 = vsel %vm1511, %v2386, %v2652
      %v3321 = vsel %vm1511, %v2389, %v2654
      %v3322 = vsel %vm1511, %v2391, %v2656
      %v3323 = vsel %vm1511, %v2394, %v2658
      %v3324 = vsel %vm1511, %v2396, %v2660
      %v3325 = vsel %vm1511, %v2399, %v2662
      %v3326 = vsel %vm1511, %v2401, %v2664
      %v3327 = vsel %vm1511, %v2404, %v2666
      %v3328 = vsel %vm1511, %v2406, %v2668
      %v3329 = vsel %vm1511, %v2409, %v2670
      %v3330 = vsel %vm1511, %v2411, %v2672
      %v3331 = vsel %vm1511, %v2414, %v2674
      %v3332 = vsel %vm1511, %v2416, %v2676
      %v3333 = vsel %vm1511, %v2419, %v2678
      %v3334 = vsel %vm1511, %v2421, %v2680
      %v3335 = vsel %vm1511, %v2424, %v2682
      %v3336 = vsel %vm1511, %v2426, %v2684
      %v3337 = vsel %vm1511, %v2429, %v2686
      %v3338 = vsel %vm1511, %v2431, %v2688
      %v3339 = vsel %vm1511, %v2434, %v2690
      %v3340 = vsel %vm1511, %v2436, %v2692
      %v3341 = vsel %vm1511, %v2439, %v2694
      %v3342 = vsel %vm1511, %v2441, %v2696
      %v3343 = vsel %vm1511, %v2444, %v2698
      %v3344 = vsel %vm1511, %v2446, %v2700
      %v3345 = vsel %vm1511, %v2449, %v2702
      %v3346 = vsel %vm1511, %v2451, %v2704
      %v3347 = vsel %vm1511, %v2454, %v2706
      %v3348 = vsel %vm1511, %v2456, %v2708
      %v3349 = vsel %vm1577, %v3317, %v2742
      %v3350 = vsel %vm1577, %v3318, %v2744
      %v3351 = vsel %vm1577, %v3319, %v2746
      %v3352 = vsel %vm1577, %v3320, %v2748
      %v3353 = vsel %vm1577, %v3321, %v2750
      %v3354 = vsel %vm1577, %v3322, %v2752
      %v3355 = vsel %vm1577, %v3323, %v2754
      %v3356 = vsel %vm1577, %v3324, %v2756
      %v3357 = vsel %vm1577, %v3325, %v2758
      %v3358 = vsel %vm1577, %v3326, %v2760
      %v3359 = vsel %vm1577, %v3327, %v2762
      %v3360 = vsel %vm1577, %v3328, %v2764
      %v3361 = vsel %vm1577, %v3329, %v2766
      %v3362 = vsel %vm1577, %v3330, %v2768
      %v3363 = vsel %vm1577, %v3331, %v2770
      %v3364 = vsel %vm1577, %v3332, %v2772
      %v3365 = vsel %vm1577, %v3333, %v2774
      %v3366 = vsel %vm1577, %v3334, %v2776
      %v3367 = vsel %vm1577, %v3335, %v2778
      %v3368 = vsel %vm1577, %v3336, %v2780
      %v3369 = vsel %vm1577, %v3337, %v2782
      %v3370 = vsel %vm1577, %v3338, %v2784
      %v3371 = vsel %vm1577, %v3339, %v2786
      %v3372 = vsel %vm1577, %v3340, %v2788
      %v3373 = vsel %vm1577, %v3341, %v2790
      %v3374 = vsel %vm1577, %v3342, %v2792
      %v3375 = vsel %vm1577, %v3343, %v2794
      %v3376 = vsel %vm1577, %v3344, %v2796
      %v3377 = vsel %vm1577, %v3345, %v2798
      %v3378 = vsel %vm1577, %v3346, %v2800
      %v3379 = vsel %vm1577, %v3347, %v2802
      %v3380 = vsel %vm1577, %v3348, %v2804
      %v3381 = vsel %vm1643, %v3349, %v2838
      %v3382 = vsel %vm1643, %v3350, %v2840
      %v3383 = vsel %vm1643, %v3351, %v2842
      %v3384 = vsel %vm1643, %v3352, %v2844
      %v3385 = vsel %vm1643, %v3353, %v2846
      %v3386 = vsel %vm1643, %v3354, %v2848
      %v3387 = vsel %vm1643, %v3355, %v2850
      %v3388 = vsel %vm1643, %v3356, %v2852
      %v3389 = vsel %vm1643, %v3357, %v2854
      %v3390 = vsel %vm1643, %v3358, %v2856
      %v3391 = vsel %vm1643, %v3359, %v2858
      %v3392 = vsel %vm1643, %v3360, %v2860
      %v3393 = vsel %vm1643, %v3361, %v2862
      %v3394 = vsel %vm1643, %v3362, %v2864
      %v3395 = vsel %vm1643, %v3363, %v2866
      %v3396 = vsel %vm1643, %v3364, %v2868
      %v3397 = vsel %vm1643, %v3365, %v2870
      %v3398 = vsel %vm1643, %v3366, %v2872
      %v3399 = vsel %vm1643, %v3367, %v2874
      %v3400 = vsel %vm1643, %v3368, %v2876
      %v3401 = vsel %vm1643, %v3369, %v2878
      %v3402 = vsel %vm1643, %v3370, %v2880
      %v3403 = vsel %vm1643, %v3371, %v2882
      %v3404 = vsel %vm1643, %v3372, %v2884
      %v3405 = vsel %vm1643, %v3373, %v2886
      %v3406 = vsel %vm1643, %v3374, %v2888
      %v3407 = vsel %vm1643, %v3375, %v2890
      %v3408 = vsel %vm1643, %v3376, %v2892
      %v3409 = vsel %vm1643, %v3377, %v2894
      %v3410 = vsel %vm1643, %v3378, %v2896
      %v3411 = vsel %vm1643, %v3379, %v2898
      %v3412 = vsel %vm1643, %v3380, %v2900
      %v3413 = vsel %vm1709, %v3381, %v2934
      %v3414 = vsel %vm1709, %v3382, %v2936
      %v3415 = vsel %vm1709, %v3383, %v2938
      %v3416 = vsel %vm1709, %v3384, %v2940
      %v3417 = vsel %vm1709, %v3385, %v2942
      %v3418 = vsel %vm1709, %v3386, %v2944
      %v3419 = vsel %vm1709, %v3387, %v2946
      %v3420 = vsel %vm1709, %v3388, %v2948
      %v3421 = vsel %vm1709, %v3389, %v2950
      %v3422 = vsel %vm1709, %v3390, %v2952
      %v3423 = vsel %vm1709, %v3391, %v2954
      %v3424 = vsel %vm1709, %v3392, %v2956
      %v3425 = vsel %vm1709, %v3393, %v2958
      %v3426 = vsel %vm1709, %v3394, %v2960
      %v3427 = vsel %vm1709, %v3395, %v2962
      %v3428 = vsel %vm1709, %v3396, %v2964
      %v3429 = vsel %vm1709, %v3397, %v2966
      %v3430 = vsel %vm1709, %v3398, %v2968
      %v3431 = vsel %vm1709, %v3399, %v2970
      %v3432 = vsel %vm1709, %v3400, %v2972
      %v3433 = vsel %vm1709, %v3401, %v2974
      %v3434 = vsel %vm1709, %v3402, %v2976
      %v3435 = vsel %vm1709, %v3403, %v2978
      %v3436 = vsel %vm1709, %v3404, %v2980
      %v3437 = vsel %vm1709, %v3405, %v2982
      %v3438 = vsel %vm1709, %v3406, %v2984
      %v3439 = vsel %vm1709, %v3407, %v2986
      %v3440 = vsel %vm1709, %v3408, %v2988
      %v3441 = vsel %vm1709, %v3409, %v2990
      %v3442 = vsel %vm1709, %v3410, %v2992
      %v3443 = vsel %vm1709, %v3411, %v2994
      %v3444 = vsel %vm1709, %v3412, %v2996
      %vm3445 = vcmask 654336
      %v3446 = vsel %vm3445, %v3413, %v3030
      %v3447 = vsel %vm3445, %v3414, %v3032
      %v3448 = vsel %vm3445, %v3415, %v3034
      %v3449 = vsel %vm3445, %v3416, %v3036
      %v3450 = vsel %vm3445, %v3417, %v3038
      %v3451 = vsel %vm3445, %v3418, %v3040
      %v3452 = vsel %vm3445, %v3419, %v3042
      %v3453 = vsel %vm3445, %v3420, %v3044
      %v3454 = vsel %vm3445, %v3421, %v3046
      %v3455 = vsel %vm3445, %v3422, %v3048
      %v3456 = vsel %vm3445, %v3423, %v3050
      %v3457 = vsel %vm3445, %v3424, %v3052
      %v3458 = vsel %vm3445, %v3425, %v3054
      %v3459 = vsel %vm3445, %v3426, %v3056
      %v3460 = vsel %vm3445, %v3427, %v3058
      %v3461 = vsel %vm3445, %v3428, %v3060
      %v3462 = vsel %vm3445, %v3429, %v3062
      %v3463 = vsel %vm3445, %v3430, %v3064
      %v3464 = vsel %vm3445, %v3431, %v3066
      %v3465 = vsel %vm3445, %v3432, %v3068
      %v3466 = vsel %vm3445, %v3433, %v3070
      %v3467 = vsel %vm3445, %v3434, %v3072
      %v3468 = vsel %vm3445, %v3435, %v3074
      %v3469 = vsel %vm3445, %v3436, %v3076
      %v3470 = vsel %vm3445, %v3437, %v3078
      %v3471 = vsel %vm3445, %v3438, %v3080
      %v3472 = vsel %vm3445, %v3439, %v3082
      %v3473 = vsel %vm3445, %v3440, %v3084
      %v3474 = vsel %vm3445, %v3441, %v3086
      %v3475 = vsel %vm3445, %v3442, %v3088
      %v3476 = vsel %vm3445, %v3443, %v3090
      %v3477 = vsel %vm3445, %v3444, %v3092
      %vm3478 = vcmask 785408
      %v3479 = vsel %vm3478, %v3446, %v3126
      %v3480 = vsel %vm3478, %v3447, %v3128
      %v3481 = vsel %vm3478, %v3448, %v3130
      %v3482 = vsel %vm3478, %v3449, %v3132
      %v3483 = vsel %vm3478, %v3450, %v3134
      %v3484 = vsel %vm3478, %v3451, %v3136
      %v3485 = vsel %vm3478, %v3452, %v3138
      %v3486 = vsel %vm3478, %v3453, %v3140
      %v3487 = vsel %vm3478, %v3454, %v3142
      %v3488 = vsel %vm3478, %v3455, %v3144
      %v3489 = vsel %vm3478, %v3456, %v3146
      %v3490 = vsel %vm3478, %v3457, %v3148
      %v3491 = vsel %vm3478, %v3458, %v3150
      %v3492 = vsel %vm3478, %v3459, %v3152
      %v3493 = vsel %vm3478, %v3460, %v3154
      %v3494 = vsel %vm3478, %v3461, %v3156
      %v3495 = vsel %vm3478, %v3462, %v3158
      %v3496 = vsel %vm3478, %v3463, %v3160
      %v3497 = vsel %vm3478, %v3464, %v3162
      %v3498 = vsel %vm3478, %v3465, %v3164
      %v3499 = vsel %vm3478, %v3466, %v3166
      %v3500 = vsel %vm3478, %v3467, %v3168
      %v3501 = vsel %vm3478, %v3468, %v3170
      %v3502 = vsel %vm3478, %v3469, %v3172
      %v3503 = vsel %vm3478, %v3470, %v3174
      %v3504 = vsel %vm3478, %v3471, %v3176
      %v3505 = vsel %vm3478, %v3472, %v3178
      %v3506 = vsel %vm3478, %v3473, %v3180
      %v3507 = vsel %vm3478, %v3474, %v3182
      %v3508 = vsel %vm3478, %v3475, %v3184
      %v3509 = vsel %vm3478, %v3476, %v3186
      %v3510 = vsel %vm3478, %v3477, %v3188
      %vm3511 = vcmask 916480
      %v3512 = vsel %vm3511, %v3479, %v3222
      %v3513 = vsel %vm3511, %v3480, %v3224
      %v3514 = vsel %vm3511, %v3481, %v3226
      %v3515 = vsel %vm3511, %v3482, %v3228
      %v3516 = vsel %vm3511, %v3483, %v3230
      %v3517 = vsel %vm3511, %v3484, %v3232
      %v3518 = vsel %vm3511, %v3485, %v3234
      %v3519 = vsel %vm3511, %v3486, %v3236
      %v3520 = vsel %vm3511, %v3487, %v3238
      %v3521 = vsel %vm3511, %v3488, %v3240
      %v3522 = vsel %vm3511, %v3489, %v3242
      %v3523 = vsel %vm3511, %v3490, %v3244
      %v3524 = vsel %vm3511, %v3491, %v3246
      %v3525 = vsel %vm3511, %v3492, %v3248
      %v3526 = vsel %vm3511, %v3493, %v3250
      %v3527 = vsel %vm3511, %v3494, %v3252
      %v3528 = vsel %vm3511, %v3495, %v3254
      %v3529 = vsel %vm3511, %v3496, %v3256
      %v3530 = vsel %vm3511, %v3497, %v3258
      %v3531 = vsel %vm3511, %v3498, %v3260
      %v3532 = vsel %vm3511, %v3499, %v3262
      %v3533 = vsel %vm3511, %v3500, %v3264
      %v3534 = vsel %vm3511, %v3501, %v3266
      %v3535 = vsel %vm3511, %v3502, %v3268
      %v3536 = vsel %vm3511, %v3503, %v3270
      %v3537 = vsel %vm3511, %v3504, %v3272
      %v3538 = vsel %vm3511, %v3505, %v3274
      %v3539 = vsel %vm3511, %v3506, %v3276
      %v3540 = vsel %vm3511, %v3507, %v3278
      %v3541 = vsel %vm3511, %v3508, %v3280
      %v3542 = vsel %vm3511, %v3509, %v3282
      %v3543 = vsel %vm3511, %v3510, %v3284
      %v3544 = vpack.c.bf16 %v3513, %v3512
      %v3545 = vpack.c.bf16 %v2519, %v2517
      %v3546 = vpack.c.bf16 %v3515, %v3514
      %v3547 = vpack.c.bf16 %v2524, %v2522
      %v3548 = vpack.c.bf16 %v3517, %v3516
      %v3549 = vpack.c.bf16 %v2529, %v2527
      %v3550 = vpack.c.bf16 %v3519, %v3518
      %v3551 = vpack.c.bf16 %v2534, %v2532
      %v3552 = vpack.c.bf16 %v3521, %v3520
      %v3553 = vpack.c.bf16 %v2539, %v2537
      %v3554 = vpack.c.bf16 %v3523, %v3522
      %v3555 = vpack.c.bf16 %v2544, %v2542
      %v3556 = vpack.c.bf16 %v3525, %v3524
      %v3557 = vpack.c.bf16 %v2549, %v2547
      %v3558 = vpack.c.bf16 %v3527, %v3526
      %v3559 = vpack.c.bf16 %v2554, %v2552
      %v3560 = vpack.c.bf16 %v3529, %v3528
      %v3561 = vpack.c.bf16 %v2559, %v2557
      %v3562 = vpack.c.bf16 %v3531, %v3530
      %v3563 = vpack.c.bf16 %v2564, %v2562
      %v3564 = vpack.c.bf16 %v3533, %v3532
      %v3565 = vpack.c.bf16 %v2569, %v2567
      %v3566 = vpack.c.bf16 %v3535, %v3534
      %v3567 = vpack.c.bf16 %v2574, %v2572
      %v3568 = vpack.c.bf16 %v3537, %v3536
      %v3569 = vpack.c.bf16 %v2579, %v2577
      %v3570 = vpack.c.bf16 %v3539, %v3538
      %v3571 = vpack.c.bf16 %v2584, %v2582
      %v3572 = vpack.c.bf16 %v3541, %v3540
      %v3573 = vpack.c.bf16 %v2598, %v2596
      %v3574 = vpack.c.bf16 %v3543, %v3542
      %v3575 = vpack.c.bf16 %v2612, %v2610
      %v3576 = vld [vmem:[%s4] sm:$0xf]
      %v3577 = vld [vmem:[%s4 + $0x4] sm:$0xf]
      %v3578 = vld [vmem:[%s4 + $0x8] sm:$0xf]
      %v3579 = vld [vmem:[%s4 + $0xc] sm:$0xf]
      %v3580 = vld [vmem:[%s4 + $0x10] sm:$0xf]
      %v3581 = vld [vmem:[%s4 + $0x14] sm:$0xf]
      %v3582 = vld [vmem:[%s4 + $0x18] sm:$0xf]
      %v3583 = vld [vmem:[%s4 + $0x1c] sm:$0xf]
      %v3584 = vld [vmem:[%s4 + $0x20] sm:$0xf]
      %v3585 = vld [vmem:[%s4 + $0x24] sm:$0xf]
      %v3586 = vld [vmem:[%s4 + $0x28] sm:$0xf]
      %v3587 = vld [vmem:[%s4 + $0x2c] sm:$0xf]
      %v3588 = vld [vmem:[%s4 + $0x30] sm:$0xf]
      %v3589 = vld [vmem:[%s4 + $0x34] sm:$0xf]
      %v3590 = vld [vmem:[%s4 + $0x38] sm:$0xf]
      %v3591 = vld [vmem:[%s4 + $0x3c] sm:$0xf]
      %v3592 = vld [vmem:[%s4 + $0x40] sm:$0xf]
      %v3593 = vld [vmem:[%s4 + $0x44] sm:$0xf]
      %v3612 = vunpack.c.l.b16 %v3576
      %v3613 = vunpack.c.l.b16 %v3577
      %v3614 = vunpack.c.l.b16 %v3578
      %v3615 = vunpack.c.l.b16 %v3579
      %v3616 = vunpack.c.l.b16 %v3580
      %v3617 = vunpack.c.l.b16 %v3581
      %v3618 = vunpack.c.l.b16 %v3582
      %v3619 = vunpack.c.l.b16 %v3583
      %v3620 = vunpack.c.l.b16 %v3584
      %v3621 = vunpack.c.l.b16 %v3585
      %v3622 = vunpack.c.l.b16 %v3586
      %v3623 = vunpack.c.l.b16 %v3587
      %v3624 = vunpack.c.l.b16 %v3588
      %v3625 = vunpack.c.l.b16 %v3589
      %v3626 = vunpack.c.l.b16 %v3590
      %v3627 = vunpack.c.l.b16 %v3591
      %v3628 = vunpack.c.l.b16 %v3592
      %v3629 = vunpack.c.l.b16 %v3593
      %v3630 = vpack.c.b16 %v3613, %v3612
      %v3631 = vpack.c.b16 %v3615, %v3614
      %v3632 = vpack.c.b16 %v3617, %v3616
      %v3633 = vpack.c.b16 %v3619, %v3618
      %v3634 = vpack.c.b16 %v3621, %v3620
      %v3635 = vpack.c.b16 %v3623, %v3622
      %v3636 = vpack.c.b16 %v3625, %v3624
      %v3637 = vpack.c.b16 %v3627, %v3626
      %v3638 = vpack.c.b16 %v3629, %v3628
      %v3649 = vsel %vm1511, %v3545, 0
      %v3652 = vsel %vm1511, %v3547, 0
      %v3655 = vsel %vm1511, %v3549, 0
      %v3658 = vsel %vm1511, %v3551, 0
      %v3661 = vsel %vm1511, %v3553, 0
      %v3664 = vsel %vm1511, %v3555, 0
      %v3667 = vsel %vm1511, %v3557, 0
      %v3670 = vsel %vm1511, %v3559, 0
      %v3673 = vsel %vm1511, %v3561, 0
      %v3676 = vsel %vm1511, %v3563, 0
      %v3679 = vsel %vm1511, %v3565, 0
      %v3682 = vsel %vm1511, %v3567, 0
      %v3685 = vsel %vm1511, %v3569, 0
      %v3688 = vsel %vm1511, %v3571, 0
      %v3691 = vsel %vm1511, %v3573, 0
      %v3694 = vsel %vm1511, %v3575, 0
      %3696 = vmatprep.subr.bf16.mxu0 0
      %3697 = vmatpush1.bf16.msra.mxu0 %v3630
      %3698 = vmatprep.subr.bf16.mxu0 0
      %3699 = vmatpush1.bf16.msra.mxu0 %v3631
      %3700 = vmatprep.subr.bf16.mxu0 0
      %3701 = vmatpush1.bf16.msra.mxu0 %v3632
      %3702 = vmatprep.subr.bf16.mxu0 0
      %3703 = vmatpush1.bf16.msra.mxu0 %v3633
      %3704 = vmatprep.subr.bf16.mxu0 0
      %3705 = vmatpush1.bf16.msra.mxu0 %v3634
      %3706 = vmatprep.subr.bf16.mxu0 0
      %3707 = vmatpush1.bf16.msra.mxu0 %v3635
      %3708 = vmatprep.subr.bf16.mxu0 0
      %3709 = vmatpush1.bf16.msra.mxu0 %v3636
      %3710 = vmatprep.subr.bf16.mxu0 0
      %3711 = vmatpush1.bf16.msra.mxu0 %v3637
      %3712 = vmatprep.subr.bf16.mxu0 0
      %3713 = vmatpush1.bf16.msra.mxu0 %v3638
      %3714 = vmatprep.subr.bf16.mxu0 0
      %3715 = vmatpush1.bf16.msra.mxu0 0
      %3716 = vmatprep.subr.bf16.mxu0 0
      %3717 = vmatpush1.bf16.msra.mxu0 0
      %3718 = vmatprep.subr.bf16.mxu0 0
      %3719 = vmatpush1.bf16.msra.mxu0 0
      %3720 = vmatprep.subr.bf16.mxu0 0
      %3721 = vmatpush1.bf16.msra.mxu0 0
      %3722 = vmatprep.subr.bf16.mxu0 0
      %3723 = vmatpush1.bf16.msra.mxu0 0
      %3724 = vmatprep.subr.bf16.mxu0 0
      %3725 = vmatpush1.bf16.msra.mxu0 0
      %3726 = vmatprep.subr.bf16.mxu0 0
      %3727 = vmatpush1.bf16.msra.mxu0 0
      %3728 = vmatprep.mubr.bf16.mxu0 %v3649
      %3729 = vmatmul.mubr.bf16.gmra.mrb[0].mxu0 %v3544
      %v3730 = vpop.f32.mrb[0].mxu0
      %v3731 = vadd.f32 0.0, %v3730
      %v3732 = vpop.f32.mrb[0].mxu0
      %v3733 = vpop.f32.mrb[0].mxu0
      %v3734 = vadd.f32 0.0, %v3733
      %v3735 = vpop.f32.mrb[0].mxu0
      %3736 = vmatprep.mubr.bf16.mxu0 %v3652
      %3737 = vmatmul.mubr.bf16.gmra.mrb[0].mxu0 %v3546
      %v3738 = vpop.f32.mrb[0].mxu0
      %v3739 = vadd.f32 0.0, %v3738
      %v3740 = vpop.f32.mrb[0].mxu0
      %v3741 = vpop.f32.mrb[0].mxu0
      %v3742 = vadd.f32 0.0, %v3741
      %v3743 = vpop.f32.mrb[0].mxu0
      %3744 = vmatprep.mubr.bf16.mxu0 %v3655
      %3745 = vmatmul.mubr.bf16.gmra.mrb[0].mxu0 %v3548
      %v3746 = vpop.f32.mrb[0].mxu0
      %v3747 = vadd.f32 0.0, %v3746
      %v3748 = vpop.f32.mrb[0].mxu0
      %v3749 = vpop.f32.mrb[0].mxu0
      %v3750 = vadd.f32 0.0, %v3749
      %v3751 = vpop.f32.mrb[0].mxu0
      %3752 = vmatprep.mubr.bf16.mxu0 %v3658
      %3753 = vmatmul.mubr.bf16.gmra.mrb[0].mxu0 %v3550
      %v3754 = vpop.f32.mrb[0].mxu0
      %v3755 = vadd.f32 0.0, %v3754
      %v3756 = vpop.f32.mrb[0].mxu0
      %v3757 = vpop.f32.mrb[0].mxu0
      %v3758 = vadd.f32 0.0, %v3757
      %v3759 = vpop.f32.mrb[0].mxu0
      %3760 = vmatprep.mubr.bf16.mxu0 %v3661
      %3761 = vmatmul.mubr.bf16.gmra.mrb[0].mxu0 %v3552
      %v3762 = vpop.f32.mrb[0].mxu0
      %v3763 = vadd.f32 0.0, %v3762
      %v3764 = vpop.f32.mrb[0].mxu0
      %v3765 = vpop.f32.mrb[0].mxu0
      %v3766 = vadd.f32 0.0, %v3765
      %v3767 = vpop.f32.mrb[0].mxu0
      %3768 = vmatprep.mubr.bf16.mxu0 %v3664
      %3769 = vmatmul.mubr.bf16.gmra.mrb[0].mxu0 %v3554
      %v3770 = vpop.f32.mrb[0].mxu0
      %v3771 = vadd.f32 0.0, %v3770
      %v3772 = vpop.f32.mrb[0].mxu0
      %v3773 = vpop.f32.mrb[0].mxu0
      %v3774 = vadd.f32 0.0, %v3773
      %v3775 = vpop.f32.mrb[0].mxu0
      %3776 = vmatprep.mubr.bf16.mxu0 %v3667
      %3777 = vmatmul.mubr.bf16.gmra.mrb[0].mxu0 %v3556
      %v3778 = vpop.f32.mrb[0].mxu0
      %v3779 = vadd.f32 0.0, %v3778
      %v3780 = vpop.f32.mrb[0].mxu0
      %v3781 = vpop.f32.mrb[0].mxu0
      %v3782 = vadd.f32 0.0, %v3781
      %v3783 = vpop.f32.mrb[0].mxu0
      %3784 = vmatprep.mubr.bf16.mxu0 %v3670
      %3785 = vmatmul.mubr.bf16.gmra.mrb[0].mxu0 %v3558
      %v3786 = vpop.f32.mrb[0].mxu0
      %v3787 = vadd.f32 0.0, %v3786
      %v3788 = vpop.f32.mrb[0].mxu0
      %v3789 = vpop.f32.mrb[0].mxu0
      %v3790 = vadd.f32 0.0, %v3789
      %v3791 = vpop.f32.mrb[0].mxu0
      %3792 = vmatprep.mubr.bf16.mxu0 %v3673
      %3793 = vmatmul.mubr.bf16.gmra.mrb[0].mxu0 %v3560
      %v3794 = vpop.f32.mrb[0].mxu0
      %v3795 = vadd.f32 0.0, %v3794
      %v3796 = vpop.f32.mrb[0].mxu0
      %v3797 = vpop.f32.mrb[0].mxu0
      %v3798 = vadd.f32 0.0, %v3797
      %v3799 = vpop.f32.mrb[0].mxu0
      %3800 = vmatprep.mubr.bf16.mxu0 %v3676
      %3801 = vmatmul.mubr.bf16.gmra.mrb[0].mxu0 %v3562
      %v3802 = vpop.f32.mrb[0].mxu0
      %v3803 = vadd.f32 0.0, %v3802
      %v3804 = vpop.f32.mrb[0].mxu0
      %v3805 = vpop.f32.mrb[0].mxu0
      %v3806 = vadd.f32 0.0, %v3805
      %v3807 = vpop.f32.mrb[0].mxu0
      %3808 = vmatprep.mubr.bf16.mxu0 %v3679
      %3809 = vmatmul.mubr.bf16.gmra.mrb[0].mxu0 %v3564
      %v3810 = vpop.f32.mrb[0].mxu0
      %v3811 = vadd.f32 0.0, %v3810
      %v3812 = vpop.f32.mrb[0].mxu0
      %v3813 = vpop.f32.mrb[0].mxu0
      %v3814 = vadd.f32 0.0, %v3813
      %v3815 = vpop.f32.mrb[0].mxu0
      %3816 = vmatprep.mubr.bf16.mxu0 %v3682
      %3817 = vmatmul.mubr.bf16.gmra.mrb[0].mxu0 %v3566
      %v3818 = vpop.f32.mrb[0].mxu0
      %v3819 = vadd.f32 0.0, %v3818
      %v3820 = vpop.f32.mrb[0].mxu0
      %v3821 = vpop.f32.mrb[0].mxu0
      %v3822 = vadd.f32 0.0, %v3821
      %v3823 = vpop.f32.mrb[0].mxu0
      %3824 = vmatprep.mubr.bf16.mxu0 %v3685
      %3825 = vmatmul.mubr.bf16.gmra.mrb[0].mxu0 %v3568
      %v3826 = vpop.f32.mrb[0].mxu0
      %v3827 = vadd.f32 0.0, %v3826
      %v3828 = vpop.f32.mrb[0].mxu0
      %v3829 = vpop.f32.mrb[0].mxu0
      %v3830 = vadd.f32 0.0, %v3829
      %v3831 = vpop.f32.mrb[0].mxu0
      %3832 = vmatprep.mubr.bf16.mxu0 %v3688
      %3833 = vmatmul.mubr.bf16.gmra.mrb[0].mxu0 %v3570
      %v3834 = vpop.f32.mrb[0].mxu0
      %v3835 = vadd.f32 0.0, %v3834
      %v3836 = vpop.f32.mrb[0].mxu0
      %v3837 = vpop.f32.mrb[0].mxu0
      %v3838 = vadd.f32 0.0, %v3837
      %v3839 = vpop.f32.mrb[0].mxu0
      %3840 = vmatprep.mubr.bf16.mxu0 %v3691
      %3841 = vmatmul.mubr.bf16.gmra.mrb[0].mxu0 %v3572
      %v3842 = vpop.f32.mrb[0].mxu0
      %v3843 = vadd.f32 0.0, %v3842
      %v3844 = vpop.f32.mrb[0].mxu0
      %v3845 = vpop.f32.mrb[0].mxu0
      %v3846 = vadd.f32 0.0, %v3845
      %v3847 = vpop.f32.mrb[0].mxu0
      %3848 = vmatprep.mubr.bf16.mxu0 %v3694
      %3849 = vmatmul.mubr.bf16.gmra.mrb[0].mxu0 %v3574
      %v3850 = vpop.f32.mrb[0].mxu0
      %v3851 = vadd.f32 0.0, %v3850
      %v3852 = vpop.f32.mrb[0].mxu0
      %v3853 = vpop.f32.mrb[0].mxu0
      %v3854 = vadd.f32 0.0, %v3853
      %v3855 = vpop.f32.mrb[0].mxu0
      %3856 = vdwg.mxu0
      %v3857 = vld [vmem:[%s5] sm:$0x1]
      %v3859 = vlaneseq
      %v3860 = vshrl.u32 %v3859, 7
      %v3861 = vsub.s32 0, %v3860
      %v3862 = vrot.slane %v3857, %v3861
      %v3864 = vmul.f32 %v3731, %v3862
      %v3865 = vmul.f32 %v3734, %v3862
      %v3866 = vmul.f32 %v3739, %v3862
      %v3867 = vmul.f32 %v3742, %v3862
      %v3868 = vmul.f32 %v3747, %v3862
      %v3869 = vmul.f32 %v3750, %v3862
      %v3870 = vmul.f32 %v3755, %v3862
      %v3871 = vmul.f32 %v3758, %v3862
      %v3872 = vmul.f32 %v3763, %v3862
      %v3873 = vmul.f32 %v3766, %v3862
      %v3874 = vmul.f32 %v3771, %v3862
      %v3875 = vmul.f32 %v3774, %v3862
      %v3876 = vmul.f32 %v3779, %v3862
      %v3877 = vmul.f32 %v3782, %v3862
      %v3878 = vmul.f32 %v3787, %v3862
      %v3879 = vmul.f32 %v3790, %v3862
      %v3880 = vmul.f32 %v3795, %v3862
      %v3881 = vmul.f32 %v3798, %v3862
      %v3882 = vmul.f32 %v3803, %v3862
      %v3883 = vmul.f32 %v3806, %v3862
      %v3884 = vmul.f32 %v3811, %v3862
      %v3885 = vmul.f32 %v3814, %v3862
      %v3886 = vmul.f32 %v3819, %v3862
      %v3887 = vmul.f32 %v3822, %v3862
      %v3888 = vmul.f32 %v3827, %v3862
      %v3889 = vmul.f32 %v3830, %v3862
      %v3890 = vmul.f32 %v3835, %v3862
      %v3891 = vmul.f32 %v3838, %v3862
      %v3892 = vmul.f32 %v3843, %v3862
      %v3893 = vmul.f32 %v3846, %v3862
      %v3894 = vmul.f32 %v3851, %v3862
      %v3895 = vmul.f32 %v3854, %v3862
      %v3896 = vld [vmem:[%s6] sm:$0x1]
      %v3898 = vlaneseq
      %v3899 = vshrl.u32 %v3898, 7
      %v3900 = vsub.s32 0, %v3899
      %v3901 = vrot.slane %v3896, %v3900
      %v3903 = vadd.f32 %v3864, %v3901
      %v3904 = vadd.f32 %v3865, %v3901
      %v3905 = vadd.f32 %v3866, %v3901
      %v3906 = vadd.f32 %v3867, %v3901
      %v3907 = vadd.f32 %v3868, %v3901
      %v3908 = vadd.f32 %v3869, %v3901
      %v3909 = vadd.f32 %v3870, %v3901
      %v3910 = vadd.f32 %v3871, %v3901
      %v3911 = vadd.f32 %v3872, %v3901
      %v3912 = vadd.f32 %v3873, %v3901
      %v3913 = vadd.f32 %v3874, %v3901
      %v3914 = vadd.f32 %v3875, %v3901
      %v3915 = vadd.f32 %v3876, %v3901
      %v3916 = vadd.f32 %v3877, %v3901
      %v3917 = vadd.f32 %v3878, %v3901
      %v3918 = vadd.f32 %v3879, %v3901
      %v3919 = vadd.f32 %v3880, %v3901
      %v3920 = vadd.f32 %v3881, %v3901
      %v3921 = vadd.f32 %v3882, %v3901
      %v3922 = vadd.f32 %v3883, %v3901
      %v3923 = vadd.f32 %v3884, %v3901
      %v3924 = vadd.f32 %v3885, %v3901
      %v3925 = vadd.f32 %v3886, %v3901
      %v3926 = vadd.f32 %v3887, %v3901
      %v3927 = vadd.f32 %v3888, %v3901
      %v3928 = vadd.f32 %v3889, %v3901
      %v3929 = vadd.f32 %v3890, %v3901
      %v3930 = vadd.f32 %v3891, %v3901
      %v3931 = vadd.f32 %v3892, %v3901
      %v3932 = vadd.f32 %v3893, %v3901
      %v3933 = vadd.f32 %v3894, %v3901
      %v3934 = vadd.f32 %v3895, %v3901
      %v3935 = vmax.f32 %v3903, 0.0
      %v3936 = vmax.f32 %v3904, 0.0
      %v3937 = vmax.f32 %v3905, 0.0
      %v3938 = vmax.f32 %v3906, 0.0
      %v3939 = vmax.f32 %v3907, 0.0
      %v3940 = vmax.f32 %v3908, 0.0
      %v3941 = vmax.f32 %v3909, 0.0
      %v3942 = vmax.f32 %v3910, 0.0
      %v3943 = vmax.f32 %v3911, 0.0
      %v3944 = vmax.f32 %v3912, 0.0
      %v3945 = vmax.f32 %v3913, 0.0
      %v3946 = vmax.f32 %v3914, 0.0
      %v3947 = vmax.f32 %v3915, 0.0
      %v3948 = vmax.f32 %v3916, 0.0
      %v3949 = vmax.f32 %v3917, 0.0
      %v3950 = vmax.f32 %v3918, 0.0
      %v3951 = vmax.f32 %v3919, 0.0
      %v3952 = vmax.f32 %v3920, 0.0
      %v3953 = vmax.f32 %v3921, 0.0
      %v3954 = vmax.f32 %v3922, 0.0
      %v3955 = vmax.f32 %v3923, 0.0
      %v3956 = vmax.f32 %v3924, 0.0
      %v3957 = vmax.f32 %v3925, 0.0
      %v3958 = vmax.f32 %v3926, 0.0
      %v3959 = vmax.f32 %v3927, 0.0
      %v3960 = vmax.f32 %v3928, 0.0
      %v3961 = vmax.f32 %v3929, 0.0
      %v3962 = vmax.f32 %v3930, 0.0
      %v3963 = vmax.f32 %v3931, 0.0
      %v3964 = vmax.f32 %v3932, 0.0
      %v3965 = vmax.f32 %v3933, 0.0
      %v3966 = vmax.f32 %v3934, 0.0
      %v3967 = vpack.c.bf16 %v500, %v498
      %v3968 = vpack.c.bf16 %v505, %v503
      %v3969 = vpack.c.bf16 %v510, %v508
      %v3970 = vpack.c.bf16 %v515, %v513
      %v3971 = vpack.c.bf16 %v520, %v518
      %v3972 = vpack.c.bf16 %v525, %v523
      %v3973 = vpack.c.bf16 %v530, %v528
      %v3974 = vpack.c.bf16 %v535, %v533
      %v3975 = vpack.c.bf16 %v540, %v538
      %v3976 = vpack.c.bf16 %v545, %v543
      %v3977 = vpack.c.bf16 %v550, %v548
      %v3978 = vpack.c.bf16 %v555, %v553
      %v3979 = vpack.c.bf16 %v560, %v558
      %v3980 = vpack.c.bf16 %v565, %v563
      %v3981 = vpack.c.bf16 %v570, %v568
      %v3982 = vpack.c.bf16 %v659, %v657
      %v3983 = vld [vmem:[%s7] sm:$0xf]
      %v3984 = vld [vmem:[%s8] sm:$0x1]
      %v3986 = vlaneseq
      %v3987 = vshrl.u32 %v3986, 7
      %v3988 = vsub.s32 0, %v3987
      %v3989 = vrot.slane %v3984, %v3988
      %v3992 = vsel %vm1478, %v3967, 0
      %v3995 = vsel %vm1478, %v3968, 0
      %v3998 = vsel %vm1478, %v3969, 0
      %v4001 = vsel %vm1478, %v3970, 0
      %v4004 = vsel %vm1478, %v3971, 0
      %v4007 = vsel %vm1478, %v3972, 0
      %v4010 = vsel %vm1478, %v3973, 0
      %v4013 = vsel %vm1478, %v3974, 0
      %v4016 = vsel %vm1478, %v3975, 0
      %v4019 = vsel %vm1478, %v3976, 0
      %v4022 = vsel %vm1478, %v3977, 0
      %v4025 = vsel %vm1478, %v3978, 0
      %v4028 = vsel %vm1478, %v3979, 0
      %v4031 = vsel %vm1478, %v3980, 0
      %v4034 = vsel %vm1478, %v3981, 0
      %v4037 = vsel %vm1478, %v3982, 0
      %v4040 = vsel %vm1843, %v3983, 0
      %4042 = vmatprep.subr.bf16.mxu0 0
      %4043 = vmatpush1.bf16.msra.mxu0 %v4040
      %4044 = vmatprep.subr.bf16.mxu0 0
      %4045 = vmatpush1.bf16.msra.mxu0 0
      %4046 = vmatprep.subr.bf16.mxu0 0
      %4047 = vmatpush1.bf16.msra.mxu0 0
      %4048 = vmatprep.subr.bf16.mxu0 0
      %4049 = vmatpush1.bf16.msra.mxu0 0
      %4050 = vmatprep.subr.bf16.mxu0 0
      %4051 = vmatpush1.bf16.msra.mxu0 0
      %4052 = vmatprep.subr.bf16.mxu0 0
      %4053 = vmatpush1.bf16.msra.mxu0 0
      %4054 = vmatprep.subr.bf16.mxu0 0
      %4055 = vmatpush1.bf16.msra.mxu0 0
      %4056 = vmatprep.subr.bf16.mxu0 0
      %4057 = vmatpush1.bf16.msra.mxu0 0
      %4058 = vmatprep.subr.bf16.mxu0 0
      %4059 = vmatpush1.bf16.msra.mxu0 0
      %4060 = vmatprep.subr.bf16.mxu0 0
      %4061 = vmatpush1.bf16.msra.mxu0 0
      %4062 = vmatprep.subr.bf16.mxu0 0
      %4063 = vmatpush1.bf16.msra.mxu0 0
      %4064 = vmatprep.subr.bf16.mxu0 0
      %4065 = vmatpush1.bf16.msra.mxu0 0
      %4066 = vmatprep.subr.bf16.mxu0 0
      %4067 = vmatpush1.bf16.msra.mxu0 0
      %4068 = vmatprep.subr.bf16.mxu0 0
      %4069 = vmatpush1.bf16.msra.mxu0 0
      %4070 = vmatprep.subr.bf16.mxu0 0
      %4071 = vmatpush1.bf16.msra.mxu0 0
      %4072 = vmatprep.subr.bf16.mxu0 0
      %4073 = vmatpush1.bf16.msra.mxu0 0
      %4074 = vmatprep.mubr.bf16.mxu0 0
      %4075 = vmatmul.mubr.bf16.gmra.mrb[0].mxu0 %v3992
      %v4076 = vpop.f32.mrb[0].mxu0
      %v4077 = vadd.f32 %v3989, %v4076
      %v4078 = vpop.f32.mrb[0].mxu0
      %v4079 = vpop.f32.mrb[0].mxu0
      %v4080 = vadd.f32 %v3989, %v4079
      %v4081 = vpop.f32.mrb[0].mxu0
      %4082 = vmatprep.mubr.bf16.mxu0 0
      %4083 = vmatmul.mubr.bf16.gmra.mrb[0].mxu0 %v3995
      %v4084 = vpop.f32.mrb[0].mxu0
      %v4085 = vadd.f32 %v3989, %v4084
      %v4086 = vpop.f32.mrb[0].mxu0
      %v4087 = vpop.f32.mrb[0].mxu0
      %v4088 = vadd.f32 %v3989, %v4087
      %v4089 = vpop.f32.mrb[0].mxu0
      %4090 = vmatprep.mubr.bf16.mxu0 0
      %4091 = vmatmul.mubr.bf16.gmra.mrb[0].mxu0 %v3998
      %v4092 = vpop.f32.mrb[0].mxu0
      %v4093 = vadd.f32 %v3989, %v4092
      %v4094 = vpop.f32.mrb[0].mxu0
      %v4095 = vpop.f32.mrb[0].mxu0
      %v4096 = vadd.f32 %v3989, %v4095
      %v4097 = vpop.f32.mrb[0].mxu0
      %4098 = vmatprep.mubr.bf16.mxu0 0
      %4099 = vmatmul.mubr.bf16.gmra.mrb[0].mxu0 %v4001
      %v4100 = vpop.f32.mrb[0].mxu0
      %v4101 = vadd.f32 %v3989, %v4100
      %v4102 = vpop.f32.mrb[0].mxu0
      %v4103 = vpop.f32.mrb[0].mxu0
      %v4104 = vadd.f32 %v3989, %v4103
      %v4105 = vpop.f32.mrb[0].mxu0
      %4106 = vmatprep.mubr.bf16.mxu0 0
      %4107 = vmatmul.mubr.bf16.gmra.mrb[0].mxu0 %v4004
      %v4108 = vpop.f32.mrb[0].mxu0
      %v4109 = vadd.f32 %v3989, %v4108
      %v4110 = vpop.f32.mrb[0].mxu0
      %v4111 = vpop.f32.mrb[0].mxu0
      %v4112 = vadd.f32 %v3989, %v4111
      %v4113 = vpop.f32.mrb[0].mxu0
      %4114 = vmatprep.mubr.bf16.mxu0 0
      %4115 = vmatmul.mubr.bf16.gmra.mrb[0].mxu0 %v4007
      %v4116 = vpop.f32.mrb[0].mxu0
      %v4117 = vadd.f32 %v3989, %v4116
      %v4118 = vpop.f32.mrb[0].mxu0
      %v4119 = vpop.f32.mrb[0].mxu0
      %v4120 = vadd.f32 %v3989, %v4119
      %v4121 = vpop.f32.mrb[0].mxu0
      %4122 = vmatprep.mubr.bf16.mxu0 0
      %4123 = vmatmul.mubr.bf16.gmra.mrb[0].mxu0 %v4010
      %v4124 = vpop.f32.mrb[0].mxu0
      %v4125 = vadd.f32 %v3989, %v4124
      %v4126 = vpop.f32.mrb[0].mxu0
      %v4127 = vpop.f32.mrb[0].mxu0
      %v4128 = vadd.f32 %v3989, %v4127
      %v4129 = vpop.f32.mrb[0].mxu0
      %4130 = vmatprep.mubr.bf16.mxu0 0
      %4131 = vmatmul.mubr.bf16.gmra.mrb[0].mxu0 %v4013
      %v4132 = vpop.f32.mrb[0].mxu0
      %v4133 = vadd.f32 %v3989, %v4132
      %v4134 = vpop.f32.mrb[0].mxu0
      %v4135 = vpop.f32.mrb[0].mxu0
      %v4136 = vadd.f32 %v3989, %v4135
      %v4137 = vpop.f32.mrb[0].mxu0
      %4138 = vmatprep.mubr.bf16.mxu0 0
      %4139 = vmatmul.mubr.bf16.gmra.mrb[0].mxu0 %v4016
      %v4140 = vpop.f32.mrb[0].mxu0
      %v4141 = vadd.f32 %v3989, %v4140
      %v4142 = vpop.f32.mrb[0].mxu0
      %v4143 = vpop.f32.mrb[0].mxu0
      %v4144 = vadd.f32 %v3989, %v4143
      %v4145 = vpop.f32.mrb[0].mxu0
      %4146 = vmatprep.mubr.bf16.mxu0 0
      %4147 = vmatmul.mubr.bf16.gmra.mrb[0].mxu0 %v4019
      %v4148 = vpop.f32.mrb[0].mxu0
      %v4149 = vadd.f32 %v3989, %v4148
      %v4150 = vpop.f32.mrb[0].mxu0
      %v4151 = vpop.f32.mrb[0].mxu0
      %v4152 = vadd.f32 %v3989, %v4151
      %v4153 = vpop.f32.mrb[0].mxu0
      %4154 = vmatprep.mubr.bf16.mxu0 0
      %4155 = vmatmul.mubr.bf16.gmra.mrb[0].mxu0 %v4022
      %v4156 = vpop.f32.mrb[0].mxu0
      %v4157 = vadd.f32 %v3989, %v4156
      %v4158 = vpop.f32.mrb[0].mxu0
      %v4159 = vpop.f32.mrb[0].mxu0
      %v4160 = vadd.f32 %v3989, %v4159
      %v4161 = vpop.f32.mrb[0].mxu0
      %4162 = vmatprep.mubr.bf16.mxu0 0
      %4163 = vmatmul.mubr.bf16.gmra.mrb[0].mxu0 %v4025
      %v4164 = vpop.f32.mrb[0].mxu0
      %v4165 = vadd.f32 %v3989, %v4164
      %v4166 = vpop.f32.mrb[0].mxu0
      %v4167 = vpop.f32.mrb[0].mxu0
      %v4168 = vadd.f32 %v3989, %v4167
      %v4169 = vpop.f32.mrb[0].mxu0
      %4170 = vmatprep.mubr.bf16.mxu0 0
      %4171 = vmatmul.mubr.bf16.gmra.mrb[0].mxu0 %v4028
      %v4172 = vpop.f32.mrb[0].mxu0
      %v4173 = vadd.f32 %v3989, %v4172
      %v4174 = vpop.f32.mrb[0].mxu0
      %v4175 = vpop.f32.mrb[0].mxu0
      %v4176 = vadd.f32 %v3989, %v4175
      %v4177 = vpop.f32.mrb[0].mxu0
      %4178 = vmatprep.mubr.bf16.mxu0 0
      %4179 = vmatmul.mubr.bf16.gmra.mrb[0].mxu0 %v4031
      %v4180 = vpop.f32.mrb[0].mxu0
      %v4181 = vadd.f32 %v3989, %v4180
      %v4182 = vpop.f32.mrb[0].mxu0
      %v4183 = vpop.f32.mrb[0].mxu0
      %v4184 = vadd.f32 %v3989, %v4183
      %v4185 = vpop.f32.mrb[0].mxu0
      %4186 = vmatprep.mubr.bf16.mxu0 0
      %4187 = vmatmul.mubr.bf16.gmra.mrb[0].mxu0 %v4034
      %v4188 = vpop.f32.mrb[0].mxu0
      %v4189 = vadd.f32 %v3989, %v4188
      %v4190 = vpop.f32.mrb[0].mxu0
      %v4191 = vpop.f32.mrb[0].mxu0
      %v4192 = vadd.f32 %v3989, %v4191
      %v4193 = vpop.f32.mrb[0].mxu0
      %4194 = vmatprep.mubr.bf16.mxu0 0
      %4195 = vmatmul.mubr.bf16.gmra.mrb[0].mxu0 %v4037
      %v4196 = vpop.f32.mrb[0].mxu0
      %v4197 = vadd.f32 %v3989, %v4196
      %v4198 = vpop.f32.mrb[0].mxu0
      %v4199 = vpop.f32.mrb[0].mxu0
      %v4200 = vadd.f32 %v3989, %v4199
      %v4201 = vpop.f32.mrb[0].mxu0
      %4202 = vdwg.mxu0
      %v4203 = vadd.f32 %v3935, %v4077
      %v4204 = vadd.f32 %v3936, %v4080
      %v4205 = vadd.f32 %v3937, %v4085
      %v4206 = vadd.f32 %v3938, %v4088
      %v4207 = vadd.f32 %v3939, %v4093
      %v4208 = vadd.f32 %v3940, %v4096
      %v4209 = vadd.f32 %v3941, %v4101
      %v4210 = vadd.f32 %v3942, %v4104
      %v4211 = vadd.f32 %v3943, %v4109
      %v4212 = vadd.f32 %v3944, %v4112
      %v4213 = vadd.f32 %v3945, %v4117
      %v4214 = vadd.f32 %v3946, %v4120
      %v4215 = vadd.f32 %v3947, %v4125
      %v4216 = vadd.f32 %v3948, %v4128
      %v4217 = vadd.f32 %v3949, %v4133
      %v4218 = vadd.f32 %v3950, %v4136
      %v4219 = vadd.f32 %v3951, %v4141
      %v4220 = vadd.f32 %v3952, %v4144
      %v4221 = vadd.f32 %v3953, %v4149
      %v4222 = vadd.f32 %v3954, %v4152
      %v4223 = vadd.f32 %v3955, %v4157
      %v4224 = vadd.f32 %v3956, %v4160
      %v4225 = vadd.f32 %v3957, %v4165
      %v4226 = vadd.f32 %v3958, %v4168
      %v4227 = vadd.f32 %v3959, %v4173
      %v4228 = vadd.f32 %v3960, %v4176
      %v4229 = vadd.f32 %v3961, %v4181
      %v4230 = vadd.f32 %v3962, %v4184
      %v4231 = vadd.f32 %v3963, %v4189
      %v4232 = vadd.f32 %v3964, %v4192
      %v4233 = vadd.f32 %v3965, %v4197
      %v4234 = vadd.f32 %v3966, %v4200
      %4235 = vst.msk [vmem:[%s332] sm:$0xff] %vm1511, %v4203
      %4236 = vst.msk [vmem:[%s332 + $0x8] sm:$0xff] %vm1511, %v4204
      %4237 = vst.msk [vmem:[%s332 + $0x10] sm:$0xff] %vm1511, %v4205
      %4238 = vst.msk [vmem:[%s332 + $0x18] sm:$0xff] %vm1511, %v4206
      %4239 = vst.msk [vmem:[%s332 + $0x20] sm:$0xff] %vm1511, %v4207
      %4240 = vst.msk [vmem:[%s332 + $0x28] sm:$0xff] %vm1511, %v4208
      %4241 = vst.msk [vmem:[%s332 + $0x30] sm:$0xff] %vm1511, %v4209
      %4242 = vst.msk [vmem:[%s332 + $0x38] sm:$0xff] %vm1511, %v4210
      %4243 = vst.msk [vmem:[%s332 + $0x40] sm:$0xff] %vm1511, %v4211
      %4244 = vst.msk [vmem:[%s332 + $0x48] sm:$0xff] %vm1511, %v4212
      %4245 = vst.msk [vmem:[%s332 + $0x50] sm:$0xff] %vm1511, %v4213
      %4246 = vst.msk [vmem:[%s332 + $0x58] sm:$0xff] %vm1511, %v4214
      %4247 = vst.msk [vmem:[%s332 + $0x60] sm:$0xff] %vm1511, %v4215
      %4248 = vst.msk [vmem:[%s332 + $0x68] sm:$0xff] %vm1511, %v4216
      %4249 = vst.msk [vmem:[%s332 + $0x70] sm:$0xff] %vm1511, %v4217
      %4250 = vst.msk [vmem:[%s332 + $0x78] sm:$0xff] %vm1511, %v4218
      %4251 = vst.msk [vmem:[%s332 + $0x80] sm:$0xff] %vm1511, %v4219
      %4252 = vst.msk [vmem:[%s332 + $0x88] sm:$0xff] %vm1511, %v4220
      %4253 = vst.msk [vmem:[%s332 + $0x90] sm:$0xff] %vm1511, %v4221
      %4254 = vst.msk [vmem:[%s332 + $0x98] sm:$0xff] %vm1511, %v4222
      %4255 = vst.msk [vmem:[%s332 + $0xa0] sm:$0xff] %vm1511, %v4223
      %4256 = vst.msk [vmem:[%s332 + $0xa8] sm:$0xff] %vm1511, %v4224
      %4257 = vst.msk [vmem:[%s332 + $0xb0] sm:$0xff] %vm1511, %v4225
      %4258 = vst.msk [vmem:[%s332 + $0xb8] sm:$0xff] %vm1511, %v4226
      %4259 = vst.msk [vmem:[%s332 + $0xc0] sm:$0xff] %vm1511, %v4227
      %4260 = vst.msk [vmem:[%s332 + $0xc8] sm:$0xff] %vm1511, %v4228
      %4261 = vst.msk [vmem:[%s332 + $0xd0] sm:$0xff] %vm1511, %v4229
      %4262 = vst.msk [vmem:[%s332 + $0xd8] sm:$0xff] %vm1511, %v4230
      %4263 = vst.msk [vmem:[%s332 + $0xe0] sm:$0xff] %vm1511, %v4231
      %4264 = vst.msk [vmem:[%s332 + $0xe8] sm:$0xff] %vm1511, %v4232
      %4265 = vst.msk [vmem:[%s332 + $0xf0] sm:$0xff] %vm1511, %v4233
      %4266 = vst.msk [vmem:[%s332 + $0xf8] sm:$0xff] %vm1511, %v4234
      %p4267 = scmp.lt.s32.totalorder %s20, 1
      %s4268 = scalar_select %p4267, %s20, 1
      %s4269 = smul.addr %s4268, 32
      %s4270 = smul.addr %s4269, 8
      %s4271 = scalar_lea.vmem %s9, %s4270
      // Predicated region
      $region57: #{rescnn_block.1} parent=55 // pred_check
        %p4272 = pneg %p232
      $region58: #{rescnn_block.1} parent=55 // pred_check_branch
        %4274 = sbr.rel (%p4272) target = $region60
      $region59: #{rescnn_block.1} parent=55 // pred_region
        _
      $region60: #{rescnn_block.1} parent=55 // pred_fallthru
        _
    $region56: #{rescnn_block.1} parent=5 // pred_fallthru
      _
    %p4275 = scmp.le.s32.totalorder 2, %s15
    // Predicated region
    $region61: #{rescnn_block.1} parent=5 // pred_check
      %p4276 = pneg %p4275
    $region62: #{rescnn_block.1} parent=5 // pred_check_branch
      %4278 = sbr.rel (%p4276) target = $region64
    $region63: #{rescnn_block.1} parent=5 // pred_region
      %s4279 = ssub.s32 %s15, 2
      // Predicated region
      $region65: #{rescnn_block.1} parent=63 // pred_check
        %p4280 = pneg %p238
      $region66: #{rescnn_block.1} parent=63 // pred_check_branch
        %4282 = sbr.rel (%p4280) target = $region68
      $region67: #{rescnn_block.1} parent=63 // pred_region
        %p4283 = scmp.lt.s32.totalorder %s21, 1
        %s4284 = scalar_select %p4283, %s21, 1
        %s4285 = smul.addr %s4284, 32
        %s4286 = smul.addr %s4285, 8
        %s4287 = scalar_lea.vmem %s9, %s4286
      $region68: #{rescnn_block.1} parent=63 // pred_fallthru
        _
    $region64: #{rescnn_block.1} parent=5 // pred_fallthru
      _
  $region6: #{rescnn_block.1} parent=0 // loop_footer
    %s19 = sadd.s32 1, %s15
  $region7: #{rescnn_block.1} parent=0 // loop_footer_branch
    %14 = sbr.rel target = $region3
  $region8: #{rescnn_block.1} parent=0 // loop_exit
    _

// kernel: rescnn_block.1
$region0: #{rescnn_block.1}
  #allocation0 [shape = 'u32[]', space=smem, size = 0x4, offset = 0x4, fixed_abs, tag = 'smem constant byte address 0x4 - core index']
  #allocation1 [shape = 'u32[144,128]{1,0:T(1,128)}', space=vmem, size = 0x12000, scoped, tag = 'internal scratch']
  #allocation2 [shape = 'f32[26,26,16]{2,1,0:T(8,128)}', space=vmem, size = 0x68000, scoped, tag = 'scratch operand']
  %s0 = inlined_call_operand.vmem [shape: bf16[2,18,18,8], index: 0, kind: input, shape index: {}]
  %s1 = inlined_call_operand.vmem [shape: bf16[72,16], index: 1, kind: input, shape index: {}]
  %s2 = inlined_call_operand.vmem [shape: f32[1,16], index: 2, kind: input, shape index: {}]
  %s3 = inlined_call_operand.vmem [shape: f32[1,16], index: 3, kind: input, shape index: {}]
  %s4 = inlined_call_operand.vmem [shape: bf16[144,16], index: 4, kind: input, shape index: {}]
  %s5 = inlined_call_operand.vmem [shape: f32[1,16], index: 5, kind: input, shape index: {}]
  %s6 = inlined_call_operand.vmem [shape: f32[1,16], index: 6, kind: input, shape index: {}]
  %s7 = inlined_call_operand.vmem [shape: bf16[8,16], index: 7, kind: input, shape index: {}]
  %s8 = inlined_call_operand.vmem [shape: f32[1,16], index: 8, kind: input, shape index: {}]
  %s9 = inlined_call_operand.vmem [shape: f32[2,256,16], index: 9, kind: output, shape index: {}]
  %s10 = sld [smem:[#allocation0]]
  $region69: #{rescnn_block.1} parent=0
    _
  %s12 = ssub.s32 1, %s10
  %s13 = scalar_select 0, %s12, %s10
  loop: start=0, step=1, limit=4
  $region2: #{rescnn_block.1} parent=0 // loop_pre_header
    _
  $region3: #{rescnn_block.1} parent=0 // loop_header
    %s15 = sphi 0, %s19
    %p16 = scmp.ge.s32.totalorder %s15, 4
    %s25 = sphi 0, %s27
    %s28 = sphi 0, %s25
    %s29 = sphi 0, %s28
    %s45 = sphi 0, %s29
    %s49 = sphi 0, %s49
    %s51 = sphi 0, %s49
    %s52 = sphi 0, %s51
    %s66 = sphi 0, %s52
    %s70 = sphi 0, %s70
    %s72 = sphi 0, %s70
    %s73 = sphi 0, %s72
    %s87 = sphi 0, %s73
    %s91 = sphi 0, %s91
    %s93 = sphi 0, %s91
    %s94 = sphi 0, %s93
    %s108 = sphi 0, %s94
    %s112 = sphi 0, %s112
    %s114 = sphi 0, %s112
    %s115 = sphi 0, %s114
    %s129 = sphi 0, %s115
    %s133 = sphi 0, %s133
    %s135 = sphi 0, %s133
    %s136 = sphi 0, %s135
    %s150 = sphi 0, %s136
    %s154 = sphi 0, %s154
    %s156 = sphi 0, %s154
    %s157 = sphi 0, %s156
    %s171 = sphi 0, %s157
    %s175 = sphi 0, %s175
    %s177 = sphi 0, %s175
    %s178 = sphi 0, %s177
    %s192 = sphi 0, %s178
    %s196 = sphi 0, %s196
    %s198 = sphi 0, %s196
    %s199 = sphi 0, %s198
    %s213 = sphi 0, %s199
    %s219 = sphi 0, %s221
    %s222 = sphi 0, %s219
    %s223 = sphi 0, %s222
    %s239 = sphi 0, %s223
  $region4: #{rescnn_block.1} parent=0 // loop_header_branch
    %18 = sbr.rel (%p16) target = $region8
  $region5: #{rescnn_block.1} parent=0 // loop_body
    %s20 = ssub.s32 %s15, 1
    %s21 = ssub.s32 %s15, 2
    %s22 = sadd.s32 %s15, 1
    %s23 = ssub.s32 %s15, %s22
    %p24 = scmp.eq.s32.totalorder %s23, 0
    %s26 = sadd.s32 %s25, 1
    %s27 = scalar_select %p24, %s25, %s26
    %p30 = pneg %p24
    %p31 = scmp.eq.s32.totalorder %s15, 1
    %p32 = por %p30, %p31
    %p33 = scmp.ne.s32.totalorder %s25, %s28
    %p34 = scmp.eq.s32.totalorder %s15, 0
    %p35 = por %p33, %p34
    %p36 = scmp.ne.s32.totalorder %s25, %s28
    %p37 = scmp.eq.s32.totalorder %s20, 1
    %p38 = por %p36, %p37
    %p39 = scmp.ne.s32.totalorder %s28, %s29
    %p40 = scmp.eq.s32.totalorder %s20, 0
    %p41 = por %p39, %p40
    %p42 = scmp.ne.s32.totalorder %s28, %s29
    %p43 = scmp.eq.s32.totalorder %s21, 1
    %p44 = por %p42, %p43
    %p46 = scmp.ne.s32.totalorder %s29, %s45
    %p47 = scmp.eq.s32.totalorder %s21, 0
    %p48 = por %p46, %p47
    %s50 = sadd.s32 %s49, 1
    %p53 = scmp.eq.s32.totalorder %s15, 1
    %p54 = scmp.ne.s32.totalorder %s49, %s51
    %p55 = scmp.eq.s32.totalorder %s15, 0
    %p56 = por %p54, %p55
    %p57 = scmp.ne.s32.totalorder %s49, %s51
    %p58 = scmp.eq.s32.totalorder %s20, 1
    %p59 = por %p57, %p58
    %p60 = scmp.ne.s32.totalorder %s51, %s52
    %p61 = scmp.eq.s32.totalorder %s20, 0
    %p62 = por %p60, %p61
    %p63 = scmp.ne.s32.totalorder %s51, %s52
    %p64 = scmp.eq.s32.totalorder %s21, 1
    %p65 = por %p63, %p64
    %p67 = scmp.ne.s32.totalorder %s52, %s66
    %p68 = scmp.eq.s32.totalorder %s21, 0
    %p69 = por %p67, %p68
    %s71 = sadd.s32 %s70, 1
    %p74 = scmp.eq.s32.totalorder %s15, 1
    %p75 = scmp.ne.s32.totalorder %s70, %s72
    %p76 = scmp.eq.s32.totalorder %s15, 0
    %p77 = por %p75, %p76
    %p78 = scmp.ne.s32.totalorder %s70, %s72
    %p79 = scmp.eq.s32.totalorder %s20, 1
    %p80 = por %p78, %p79
    %p81 = scmp.ne.s32.totalorder %s72, %s73
    %p82 = scmp.eq.s32.totalorder %s20, 0
    %p83 = por %p81, %p82
    %p84 = scmp.ne.s32.totalorder %s72, %s73
    %p85 = scmp.eq.s32.totalorder %s21, 1
    %p86 = por %p84, %p85
    %p88 = scmp.ne.s32.totalorder %s73, %s87
    %p89 = scmp.eq.s32.totalorder %s21, 0
    %p90 = por %p88, %p89
    %s92 = sadd.s32 %s91, 1
    %p95 = scmp.eq.s32.totalorder %s15, 1
    %p96 = scmp.ne.s32.totalorder %s91, %s93
    %p97 = scmp.eq.s32.totalorder %s15, 0
    %p98 = por %p96, %p97
    %p99 = scmp.ne.s32.totalorder %s91, %s93
    %p100 = scmp.eq.s32.totalorder %s20, 1
    %p101 = por %p99, %p100
    %p102 = scmp.ne.s32.totalorder %s93, %s94
    %p103 = scmp.eq.s32.totalorder %s20, 0
    %p104 = por %p102, %p103
    %p105 = scmp.ne.s32.totalorder %s93, %s94
    %p106 = scmp.eq.s32.totalorder %s21, 1
    %p107 = por %p105, %p106
    %p109 = scmp.ne.s32.totalorder %s94, %s108
    %p110 = scmp.eq.s32.totalorder %s21, 0
    %p111 = por %p109, %p110
    %s113 = sadd.s32 %s112, 1
    %p116 = scmp.eq.s32.totalorder %s15, 1
    %p117 = scmp.ne.s32.totalorder %s112, %s114
    %p118 = scmp.eq.s32.totalorder %s15, 0
    %p119 = por %p117, %p118
    %p120 = scmp.ne.s32.totalorder %s112, %s114
    %p121 = scmp.eq.s32.totalorder %s20, 1
    %p122 = por %p120, %p121
    %p123 = scmp.ne.s32.totalorder %s114, %s115
    %p124 = scmp.eq.s32.totalorder %s20, 0
    %p125 = por %p123, %p124
    %p126 = scmp.ne.s32.totalorder %s114, %s115
    %p127 = scmp.eq.s32.totalorder %s21, 1
    %p128 = por %p126, %p127
    %p130 = scmp.ne.s32.totalorder %s115, %s129
    %p131 = scmp.eq.s32.totalorder %s21, 0
    %p132 = por %p130, %p131
    %s134 = sadd.s32 %s133, 1
    %p137 = scmp.eq.s32.totalorder %s15, 1
    %p138 = scmp.ne.s32.totalorder %s133, %s135
    %p139 = scmp.eq.s32.totalorder %s15, 0
    %p140 = por %p138, %p139
    %p141 = scmp.ne.s32.totalorder %s133, %s135
    %p142 = scmp.eq.s32.totalorder %s20, 1
    %p143 = por %p141, %p142
    %p144 = scmp.ne.s32.totalorder %s135, %s136
    %p145 = scmp.eq.s32.totalorder %s20, 0
    %p146 = por %p144, %p145
    %p147 = scmp.ne.s32.totalorder %s135, %s136
    %p148 = scmp.eq.s32.totalorder %s21, 1
    %p149 = por %p147, %p148
    %p151 = scmp.ne.s32.totalorder %s136, %s150
    %p152 = scmp.eq.s32.totalorder %s21, 0
    %p153 = por %p151, %p152
    %s155 = sadd.s32 %s154, 1
    %p158 = scmp.eq.s32.totalorder %s15, 1
    %p159 = scmp.ne.s32.totalorder %s154, %s156
    %p160 = scmp.eq.s32.totalorder %s15, 0
    %p161 = por %p159, %p160
    %p162 = scmp.ne.s32.totalorder %s154, %s156
    %p163 = scmp.eq.s32.totalorder %s20, 1
    %p164 = por %p162, %p163
    %p165 = scmp.ne.s32.totalorder %s156, %s157
    %p166 = scmp.eq.s32.totalorder %s20, 0
    %p167 = por %p165, %p166
    %p168 = scmp.ne.s32.totalorder %s156, %s157
    %p169 = scmp.eq.s32.totalorder %s21, 1
    %p170 = por %p168, %p169
    %p172 = scmp.ne.s32.totalorder %s157, %s171
    %p173 = scmp.eq.s32.totalorder %s21, 0
    %p174 = por %p172, %p173
    %s176 = sadd.s32 %s175, 1
    %p179 = scmp.eq.s32.totalorder %s15, 1
    %p180 = scmp.ne.s32.totalorder %s175, %s177
    %p181 = scmp.eq.s32.totalorder %s15, 0
    %p182 = por %p180, %p181
    %p183 = scmp.ne.s32.totalorder %s175, %s177
    %p184 = scmp.eq.s32.totalorder %s20, 1
    %p185 = por %p183, %p184
    %p186 = scmp.ne.s32.totalorder %s177, %s178
    %p187 = scmp.eq.s32.totalorder %s20, 0
    %p188 = por %p186, %p187
    %p189 = scmp.ne.s32.totalorder %s177, %s178
    %p190 = scmp.eq.s32.totalorder %s21, 1
    %p191 = por %p189, %p190
    %p193 = scmp.ne.s32.totalorder %s178, %s192
    %p194 = scmp.eq.s32.totalorder %s21, 0
    %p195 = por %p193, %p194
    %s197 = sadd.s32 %s196, 1
    %p200 = scmp.eq.s32.totalorder %s15, 1
    %p201 = scmp.ne.s32.totalorder %s196, %s198
    %p202 = scmp.eq.s32.totalorder %s15, 0
    %p203 = por %p201, %p202
    %p204 = scmp.ne.s32.totalorder %s196, %s198
    %p205 = scmp.eq.s32.totalorder %s20, 1
    %p206 = por %p204, %p205
    %p207 = scmp.ne.s32.totalorder %s198, %s199
    %p208 = scmp.eq.s32.totalorder %s20, 0
    %p209 = por %p207, %p208
    %p210 = scmp.ne.s32.totalorder %s198, %s199
    %p211 = scmp.eq.s32.totalorder %s21, 1
    %p212 = por %p210, %p211
    %p214 = scmp.ne.s32.totalorder %s199, %s213
    %p215 = scmp.eq.s32.totalorder %s21, 0
    %p216 = por %p214, %p215
    %s217 = ssub.s32 %s15, %s22
    %p218 = scmp.eq.s32.totalorder %s217, 0
    %s220 = sadd.s32 %s219, 1
    %s221 = scalar_select %p218, %s219, %s220
    %p224 = pneg %p218
    %p225 = scmp.eq.s32.totalorder %s15, 1
    %p226 = por %p224, %p225
    %p227 = scmp.ne.s32.totalorder %s219, %s222
    %p228 = scmp.eq.s32.totalorder %s15, 0
    %p229 = por %p227, %p228
    %p230 = scmp.ne.s32.totalorder %s219, %s222
    %p231 = scmp.eq.s32.totalorder %s20, 1
    %p232 = por %p230, %p231
    %p233 = scmp.ne.s32.totalorder %s222, %s223
    %p234 = scmp.eq.s32.totalorder %s20, 0
    %p235 = por %p233, %p234
    %p236 = scmp.ne.s32.totalorder %s222, %s223
    %p237 = scmp.eq.s32.totalorder %s21, 1
    %p238 = por %p236, %p237
    %p240 = scmp.ne.s32.totalorder %s223, %s239
    %p241 = scmp.eq.s32.totalorder %s21, 0
    %p242 = por %p240, %p241
    %p243 = scmp.le.s32.totalorder 1, %s15
    %p244 = scmp.lt.s32.totalorder %s15, 3
    %p245 = pnand %p243, %p244
    %p246 = pneg %p245
    // Predicated region
    $region9: #{rescnn_block.1} parent=5 // pred_check
      _
    $region10: #{rescnn_block.1} parent=5 // pred_check_branch
      %248 = sbr.rel (%p245) target = $region12
    $region11: #{rescnn_block.1} parent=5 // pred_region
      %s249 = ssub.s32 %s15, 1
      // Predicated region
      $region13: #{rescnn_block.1} parent=11 // pred_check
        %p250 = pneg %p62
      $region14: #{rescnn_block.1} parent=11 // pred_check_branch
        %252 = sbr.rel (%p250) target = $region16
      $region15: #{rescnn_block.1} parent=11 // pred_region
        _
      $region16: #{rescnn_block.1} parent=11 // pred_fallthru
        _
      // Predicated region
      $region17: #{rescnn_block.1} parent=11 // pred_check
        %p253 = pneg %p83
      $region18: #{rescnn_block.1} parent=11 // pred_check_branch
        %255 = sbr.rel (%p253) target = $region20
      $region19: #{rescnn_block.1} parent=11 // pred_region
        _
      $region20: #{rescnn_block.1} parent=11 // pred_fallthru
        _
      // Predicated region
      $region21: #{rescnn_block.1} parent=11 // pred_check
        %p256 = pneg %p104
      $region22: #{rescnn_block.1} parent=11 // pred_check_branch
        %258 = sbr.rel (%p256) target = $region24
      $region23: #{rescnn_block.1} parent=11 // pred_region
        _
      $region24: #{rescnn_block.1} parent=11 // pred_fallthru
        _
      // Predicated region
      $region25: #{rescnn_block.1} parent=11 // pred_check
        %p259 = pneg %p125
      $region26: #{rescnn_block.1} parent=11 // pred_check_branch
        %261 = sbr.rel (%p259) target = $region28
      $region27: #{rescnn_block.1} parent=11 // pred_region
        _
      $region28: #{rescnn_block.1} parent=11 // pred_fallthru
        _
      // Predicated region
      $region29: #{rescnn_block.1} parent=11 // pred_check
        %p262 = pneg %p146
      $region30: #{rescnn_block.1} parent=11 // pred_check_branch
        %264 = sbr.rel (%p262) target = $region32
      $region31: #{rescnn_block.1} parent=11 // pred_region
        _
      $region32: #{rescnn_block.1} parent=11 // pred_fallthru
        _
      // Predicated region
      $region33: #{rescnn_block.1} parent=11 // pred_check
        %p265 = pneg %p167
      $region34: #{rescnn_block.1} parent=11 // pred_check_branch
        %267 = sbr.rel (%p265) target = $region36
      $region35: #{rescnn_block.1} parent=11 // pred_region
        _
      $region36: #{rescnn_block.1} parent=11 // pred_fallthru
        _
      // Predicated region
      $region37: #{rescnn_block.1} parent=11 // pred_check
        %p268 = pneg %p188
      $region38: #{rescnn_block.1} parent=11 // pred_check_branch
        %270 = sbr.rel (%p268) target = $region40
      $region39: #{rescnn_block.1} parent=11 // pred_region
        _
      $region40: #{rescnn_block.1} parent=11 // pred_fallthru
        _
      // Predicated region
      $region41: #{rescnn_block.1} parent=11 // pred_check
        %p271 = pneg %p209
      $region42: #{rescnn_block.1} parent=11 // pred_check_branch
        %273 = sbr.rel (%p271) target = $region44
      $region43: #{rescnn_block.1} parent=11 // pred_region
        _
      $region44: #{rescnn_block.1} parent=11 // pred_fallthru
        _
    $region12: #{rescnn_block.1} parent=5 // pred_fallthru
      _
    %p274 = scmp.lt.s32.totalorder %s15, 2
    // Predicated region
    $region45: #{rescnn_block.1} parent=5 // pred_check
      %p275 = pneg %p274
    $region46: #{rescnn_block.1} parent=5 // pred_check_branch
      %277 = sbr.rel (%p275) target = $region48
    $region47: #{rescnn_block.1} parent=5 // pred_region
      // Predicated region
      $region49: #{rescnn_block.1} parent=47 // pred_check
        %p278 = pneg %p35
      $region50: #{rescnn_block.1} parent=47 // pred_check_branch
        %280 = sbr.rel (%p278) target = $region52
      $region51: #{rescnn_block.1} parent=47 // pred_region
        %p281 = scmp.lt.s32.totalorder %s15, 1
        %s282 = scalar_select %p281, %s15, 1
        %s283 = smul.addr %s282, 54
        %s284 = smul.addr %s283, 4
        %s285 = scalar_lea.vmem %s0, %s284
      $region52: #{rescnn_block.1} parent=47 // pred_fallthru
        _
    $region48: #{rescnn_block.1} parent=5 // pred_fallthru
      _
    %p286 = scmp.le.s32.totalorder 1, %s15
    %p287 = scmp.lt.s32.totalorder %s15, 3
    %p288 = pnand %p286, %p287
    %p289 = pneg %p288
    // Predicated region
    $region53: #{rescnn_block.1} parent=5 // pred_check
      _
    $region54: #{rescnn_block.1} parent=5 // pred_check_branch
      %291 = sbr.rel (%p288) target = $region56
    $region55: #{rescnn_block.1} parent=5 // pred_region
      %s292 = ssub.s32 %s15, 1
      %p293 = scmp.lt.s32.totalorder %s20, 1
      %s294 = scalar_select %p293, %s20, 1
      %s295 = smul.addr %s294, 54
      %s296 = smul.addr %s295, 4
      %s297 = scalar_lea.vmem %s0, %s296
      %p298 = pneg %p41
      %p299 = pneg %p38
      %p300 = pneg %p62
      %p301 = pneg %p59
      %p302 = pneg %p83
      %p303 = pneg %p80
      %p304 = pneg %p104
      %p305 = pneg %p101
      %p306 = pneg %p125
      %p307 = pneg %p122
      %p308 = pneg %p146
      %p309 = pneg %p143
      %p310 = pneg %p167
      %p311 = pneg %p164
      %p312 = pneg %p188
      %p313 = pneg %p185
      %p314 = pneg %p209
      %p315 = pneg %p206
      %p316 = pneg %p235
      %p317 = pneg %p232
      %p318 = scmp.lt.s32.totalorder %s20, 1
      %s319 = scalar_select %p318, %s20, 1
      %s320 = smul.addr %s319, 32
      %s321 = smul.addr %s320, 8
      %s322 = scalar_lea.vmem %s9, %s321
      %p323 = scmp.lt.s32.totalorder %s20, 1
      %s324 = scalar_select %p323, %s20, 1
      %s325 = smul.addr %s324, 54
      %s326 = smul.addr %s325, 4
      %s327 = scalar_lea.vmem %s0, %s326
      %p328 = scmp.lt.s32.totalorder %s20, 1
      %s329 = scalar_select %p328, %s20, 1
      %s330 = smul.addr %s329, 32
      %s331 = smul.addr %s330, 8
      %s332 = scalar_lea.vmem %s9, %s331
      %v334 = vld [vmem:[%s327] sm:$0xf]
      %v335 = vld [vmem:[%s327 + $0x4] sm:$0xf]
      %v336 = vld [vmem:[%s327 + $0x8] sm:$0x1]
      %v337 = vld [vmem:[%s327 + $0xc] sm:$0xf]
      %v338 = vld [vmem:[%s327 + $0x10] sm:$0xf]
      %v339 = vld [vmem:[%s327 + $0x14] sm:$0x1]
      %v340 = vld [vmem:[%s327 + $0x18] sm:$0xf]
      %v341 = vld [vmem:[%s327 + $0x1c] sm:$0xf]
      %v342 = vld [vmem:[%s327 + $0x20] sm:$0x1]
      %v343 = vld [vmem:[%s327 + $0x24] sm:$0xf]
      %v344 = vld [vmem:[%s327 + $0x28] sm:$0xf]
      %v345 = vld [vmem:[%s327 + $0x2c] sm:$0x1]
      %v346 = vld [vmem:[%s327 + $0x30] sm:$0xf]
      %v347 = vld [vmem:[%s327 + $0x34] sm:$0xf]
      %v348 = vld [vmem:[%s327 + $0x38] sm:$0x1]
      %v349 = vld [vmem:[%s327 + $0x3c] sm:$0xf]
      %v350 = vld [vmem:[%s327 + $0x40] sm:$0xf]
      %v351 = vld [vmem:[%s327 + $0x44] sm:$0x1]
      %v352 = vld [vmem:[%s327 + $0x48] sm:$0xf]
      %v353 = vld [vmem:[%s327 + $0x4c] sm:$0xf]
      %v354 = vld [vmem:[%s327 + $0x50] sm:$0x1]
      %v355 = vld [vmem:[%s327 + $0x54] sm:$0xf]
      %v356 = vld [vmem:[%s327 + $0x58] sm:$0xf]
      %v357 = vld [vmem:[%s327 + $0x5c] sm:$0x1]
      %v358 = vld [vmem:[%s327 + $0x60] sm:$0xf]
      %v359 = vld [vmem:[%s327 + $0x64] sm:$0xf]
      %v360 = vld [vmem:[%s327 + $0x68] sm:$0x1]
      %v361 = vld [vmem:[%s327 + $0x6c] sm:$0xf]
      %v362 = vld [vmem:[%s327 + $0x70] sm:$0xf]
      %v363 = vld [vmem:[%s327 + $0x74] sm:$0x1]
      %v364 = vld [vmem:[%s327 + $0x78] sm:$0xf]
      %v365 = vld [vmem:[%s327 + $0x7c] sm:$0xf]
      %v366 = vld [vmem:[%s327 + $0x80] sm:$0x1]
      %v367 = vld [vmem:[%s327 + $0x84] sm:$0xf]
      %v368 = vld [vmem:[%s327 + $0x88] sm:$0xf]
      %v369 = vld [vmem:[%s327 + $0x8c] sm:$0x1]
      %v370 = vld [vmem:[%s327 + $0x90] sm:$0xf]
      %v371 = vld [vmem:[%s327 + $0x94] sm:$0xf]
      %v372 = vld [vmem:[%s327 + $0x98] sm:$0x1]
      %v373 = vld [vmem:[%s327 + $0x9c] sm:$0xf]
      %v374 = vld [vmem:[%s327 + $0xa0] sm:$0xf]
      %v375 = vld [vmem:[%s327 + $0xa4] sm:$0x1]
      %v376 = vld [vmem:[%s327 + $0xa8] sm:$0xf]
      %v377 = vld [vmem:[%s327 + $0xac] sm:$0xf]
      %v378 = vld [vmem:[%s327 + $0xb0] sm:$0x1]
      %v379 = vld [vmem:[%s327 + $0xb4] sm:$0xf]
      %v380 = vld [vmem:[%s327 + $0xb8] sm:$0xf]
      %v381 = vld [vmem:[%s327 + $0xbc] sm:$0x1]
      %v382 = vld [vmem:[%s327 + $0xc0] sm:$0xf]
      %v383 = vld [vmem:[%s327 + $0xc4] sm:$0xf]
      %v384 = vld [vmem:[%s327 + $0xc8] sm:$0x1]
      %v385 = vld [vmem:[%s327 + $0xcc] sm:$0xf]
      %v386 = vld [vmem:[%s327 + $0xd0] sm:$0xf]
      %v387 = vld [vmem:[%s327 + $0xd4] sm:$0x1]
      %v388 = vunpack.c.l.bf16 %v334
      %v389 = vunpack.c.l.bf16 %v335
      %v390 = vunpack.c.l.bf16 %v336
      %v391 = vunpack.c.l.bf16 %v337
      %v392 = vunpack.c.l.bf16 %v338
      %v393 = vunpack.c.l.bf16 %v339
      %v394 = vunpack.c.l.bf16 %v340
      %v395 = vunpack.c.l.bf16 %v341
      %v396 = vunpack.c.l.bf16 %v342
      %v397 = vunpack.c.l.bf16 %v343
      %v398 = vunpack.c.l.bf16 %v344
      %v399 = vunpack.c.l.bf16 %v345
      %v400 = vunpack.c.l.bf16 %v346
      %v401 = vunpack.c.l.bf16 %v347
      %v402 = vunpack.c.l.bf16 %v348
      %v403 = vunpack.c.l.bf16 %v349
      %v404 = vunpack.c.l.bf16 %v350
      %v405 = vunpack.c.l.bf16 %v351
      %v406 = vunpack.c.l.bf16 %v352
      %v407 = vunpack.c.l.bf16 %v353
      %v408 = vunpack.c.l.bf16 %v354
      %v409 = vunpack.c.l.bf16 %v355
      %v410 = vunpack.c.l.bf16 %v356
      %v411 = vunpack.c.l.bf16 %v357
      %v412 = vunpack.c.l.bf16 %v358
      %v413 = vunpack.c.l.bf16 %v359
      %v414 = vunpack.c.l.bf16 %v360
      %v415 = vunpack.c.l.bf16 %v361
      %v416 = vunpack.c.l.bf16 %v362
      %v417 = vunpack.c.l.bf16 %v363
      %v418 = vunpack.c.l.bf16 %v364
      %v419 = vunpack.c.l.bf16 %v365
      %v420 = vunpack.c.l.bf16 %v366
      %v421 = vunpack.c.l.bf16 %v367
      %v422 = vunpack.c.l.bf16 %v368
      %v423 = vunpack.c.l.bf16 %v369
      %v424 = vunpack.c.l.bf16 %v370
      %v425 = vunpack.c.l.bf16 %v371
      %v426 = vunpack.c.l.bf16 %v372
      %v427 = vunpack.c.l.bf16 %v373
      %v428 = vunpack.c.l.bf16 %v374
      %v429 = vunpack.c.l.bf16 %v375
      %v430 = vunpack.c.l.bf16 %v376
      %v431 = vunpack.c.l.bf16 %v377
      %v432 = vunpack.c.l.bf16 %v378
      %v433 = vunpack.c.l.bf16 %v379
      %v434 = vunpack.c.l.bf16 %v380
      %v435 = vunpack.c.l.bf16 %v381
      %v436 = vunpack.c.l.bf16 %v382
      %v437 = vunpack.c.l.bf16 %v383
      %v438 = vunpack.c.l.bf16 %v384
      %v439 = vunpack.c.l.bf16 %v385
      %v440 = vunpack.c.l.bf16 %v386
      %v441 = vunpack.c.l.bf16 %v387
      %vm490 = vcmask 1046528
      %v491 = vrot.slane %v388, 1
      %v492 = vrot.slane %v389, 1
      %v493 = vsel %vm490, %v491, %v492
      %v494 = vrot.slane %v390, 1
      %v495 = vsel %vm490, %v492, %v494
      %v496 = vrot.slane %v391, 1
      %v497 = vrot.slane %v392, 1
      %v498 = vsel %vm490, %v496, %v497
      %v499 = vrot.slane %v393, 1
      %v500 = vsel %vm490, %v497, %v499
      %v501 = vrot.slane %v394, 1
      %v502 = vrot.slane %v395, 1
      %v503 = vsel %vm490, %v501, %v502
      %v504 = vrot.slane %v396, 1
      %v505 = vsel %vm490, %v502, %v504
      %v506 = vrot.slane %v397, 1
      %v507 = vrot.slane %v398, 1
      %v508 = vsel %vm490, %v506, %v507
      %v509 = vrot.slane %v399, 1
      %v510 = vsel %vm490, %v507, %v509
      %v511 = vrot.slane %v400, 1
      %v512 = vrot.slane %v401, 1
      %v513 = vsel %vm490, %v511, %v512
      %v514 = vrot.slane %v402, 1
      %v515 = vsel %vm490, %v512, %v514
      %v516 = vrot.slane %v403, 1
      %v517 = vrot.slane %v404, 1
      %v518 = vsel %vm490, %v516, %v517
      %v519 = vrot.slane %v405, 1
      %v520 = vsel %vm490, %v517, %v519
      %v521 = vrot.slane %v406, 1
      %v522 = vrot.slane %v407, 1
      %v523 = vsel %vm490, %v521, %v522
      %v524 = vrot.slane %v408, 1
      %v525 = vsel %vm490, %v522, %v524
      %v526 = vrot.slane %v409, 1
      %v527 = vrot.slane %v410, 1
      %v528 = vsel %vm490, %v526, %v527
      %v529 = vrot.slane %v411, 1
      %v530 = vsel %vm490, %v527, %v529
      %v531 = vrot.slane %v412, 1
      %v532 = vrot.slane %v413, 1
      %v533 = vsel %vm490, %v531, %v532
      %v534 = vrot.slane %v414, 1
      %v535 = vsel %vm490, %v532, %v534
      %v536 = vrot.slane %v415, 1
      %v537 = vrot.slane %v416, 1
      %v538 = vsel %vm490, %v536, %v537
      %v539 = vrot.slane %v417, 1
      %v540 = vsel %vm490, %v537, %v539
      %v541 = vrot.slane %v418, 1
      %v542 = vrot.slane %v419, 1
      %v543 = vsel %vm490, %v541, %v542
      %v544 = vrot.slane %v420, 1
      %v545 = vsel %vm490, %v542, %v544
      %v546 = vrot.slane %v421, 1
      %v547 = vrot.slane %v422, 1
      %v548 = vsel %vm490, %v546, %v547
      %v549 = vrot.slane %v423, 1
      %v550 = vsel %vm490, %v547, %v549
      %v551 = vrot.slane %v424, 1
      %v552 = vrot.slane %v425, 1
      %v553 = vsel %vm490, %v551, %v552
      %v554 = vrot.slane %v426, 1
      %v555 = vsel %vm490, %v552, %v554
      %v556 = vrot.slane %v427, 1
      %v557 = vrot.slane %v428, 1
      %v558 = vsel %vm490, %v556, %v557
      %v559 = vrot.slane %v429, 1
      %v560 = vsel %vm490, %v557, %v559
      %v561 = vrot.slane %v430, 1
      %v562 = vrot.slane %v431, 1
      %v563 = vsel %vm490, %v561, %v562
      %v564 = vrot.slane %v432, 1
      %v565 = vsel %vm490, %v562, %v564
      %v566 = vrot.slane %v433, 1
      %v567 = vrot.slane %v434, 1
      %v568 = vsel %vm490, %v566, %v567
      %v569 = vrot.slane %v435, 1
      %v570 = vsel %vm490, %v567, %v569
      %vm603 = vcmask 1045504
      %v604 = vrot.slane %v388, 2
      %v605 = vrot.slane %v389, 2
      %v606 = vsel %vm603, %v604, %v605
      %v607 = vrot.slane %v390, 2
      %v608 = vsel %vm603, %v605, %v607
      %v609 = vrot.slane %v391, 2
      %v610 = vrot.slane %v392, 2
      %v611 = vsel %vm603, %v609, %v610
      %v612 = vrot.slane %v393, 2
      %v613 = vsel %vm603, %v610, %v612
      %v614 = vrot.slane %v394, 2
      %v615 = vrot.slane %v395, 2
      %v616 = vsel %vm603, %v614, %v615
      %v617 = vrot.slane %v396, 2
      %v618 = vsel %vm603, %v615, %v617
      %v619 = vrot.slane %v397, 2
      %v620 = vrot.slane %v398, 2
      %v621 = vsel %vm603, %v619, %v620
      %v622 = vrot.slane %v399, 2
      %v623 = vsel %vm603, %v620, %v622
      %v624 = vrot.slane %v400, 2
      %v625 = vrot.slane %v401, 2
      %v626 = vsel %vm603, %v624, %v625
      %v627 = vrot.slane %v402, 2
      %v628 = vsel %vm603, %v625, %v627
      %v629 = vrot.slane %v403, 2
      %v630 = vrot.slane %v404, 2
      %v631 = vsel %vm603, %v629, %v630
      %v632 = vrot.slane %v405, 2
      %v633 = vsel %vm603, %v630, %v632
      %v634 = vrot.slane %v406, 2
      %v635 = vrot.slane %v407, 2
      %v636 = vsel %vm603, %v634, %v635
      %v637 = vrot.slane %v408, 2
      %v638 = vsel %vm603, %v635, %v637
      %v639 = vrot.slane %v409, 2
      %v640 = vrot.slane %v410, 2
      %v641 = vsel %vm603, %v639, %v640
      %v642 = vrot.slane %v411, 2
      %v643 = vsel %vm603, %v640, %v642
      %v644 = vrot.slane %v412, 2
      %v645 = vrot.slane %v413, 2
      %v646 = vsel %vm603, %v644, %v645
      %v647 = vrot.slane %v414, 2
      %v648 = vsel %vm603, %v645, %v647
      %v649 = vrot.slane %v415, 2
      %v650 = vrot.slane %v416, 2
      %v651 = vsel %vm603, %v649, %v650
      %v652 = vrot.slane %v417, 2
      %v653 = vsel %vm603, %v650, %v652
      %v654 = vrot.slane %v418, 2
      %v655 = vrot.slane %v419, 2
      %v656 = vsel %vm603, %v654, %v655
      %v657 = vrot.slane %v420, 2
      %v658 = vsel %vm603, %v655, %v657
      %v659 = vrot.slane %v421, 2
      %v660 = vrot.slane %v422, 2
      %v661 = vsel %vm603, %v659, %v660
      %v662 = vrot.slane %v423, 2
      %v663 = vsel %vm603, %v660, %v662
      %v664 = vrot.slane %v424, 2
      %v665 = vrot.slane %v425, 2
      %v666 = vsel %vm603, %v664, %v665
      %v667 = vrot.slane %v426, 2
      %v668 = vsel %vm603, %v665, %v667
      %v669 = vrot.slane %v427, 2
      %v670 = vrot.slane %v428, 2
      %v671 = vsel %vm603, %v669, %v670
      %v672 = vrot.slane %v429, 2
      %v673 = vsel %vm603, %v670, %v672
      %v674 = vrot.slane %v430, 2
      %v675 = vrot.slane %v431, 2
      %v676 = vsel %vm603, %v674, %v675
      %v677 = vrot.slane %v432, 2
      %v678 = vsel %vm603, %v675, %v677
      %v679 = vrot.slane %v433, 2
      %v680 = vrot.slane %v434, 2
      %v681 = vsel %vm603, %v679, %v680
      %v682 = vrot.slane %v435, 2
      %v683 = vsel %vm603, %v680, %v682
      %v719 = vrot.slane %v436, 1
      %v720 = vrot.slane %v437, 1
      %v721 = vsel %vm490, %v719, %v720
      %v722 = vrot.slane %v438, 1
      %v723 = vsel %vm490, %v720, %v722
      %v726 = vrot.slane %v436, 2
      %v727 = vrot.slane %v437, 2
      %v728 = vsel %vm603, %v726, %v727
      %v729 = vrot.slane %v438, 2
      %v730 = vsel %vm603, %v727, %v729
      %v736 = vrot.slane %v439, 1
      %v737 = vrot.slane %v440, 1
      %v738 = vsel %vm490, %v736, %v737
      %v739 = vrot.slane %v441, 1
      %v740 = vsel %vm490, %v737, %v739
      %v743 = vrot.slane %v439, 2
      %v744 = vrot.slane %v440, 2
      %v745 = vsel %vm603, %v743, %v744
      %v746 = vrot.slane %v441, 2
      %v747 = vsel %vm603, %v744, %v746
      %v750 = vpack.c.bf16 %v389, %v388
      %v751 = vpack.c.bf16 %v392, %v391
      %v752 = vpack.c.bf16 %v395, %v394
      %v753 = vpack.c.bf16 %v398, %v397
      %v754 = vpack.c.bf16 %v401, %v400
      %v755 = vpack.c.bf16 %v404, %v403
      %v756 = vpack.c.bf16 %v407, %v406
      %v757 = vpack.c.bf16 %v410, %v409
      %v758 = vpack.c.bf16 %v413, %v412
      %v759 = vpack.c.bf16 %v416, %v415
      %v760 = vpack.c.bf16 %v419, %v418
      %v761 = vpack.c.bf16 %v422, %v421
      %v762 = vpack.c.bf16 %v425, %v424
      %v763 = vpack.c.bf16 %v428, %v427
      %v764 = vpack.c.bf16 %v431, %v430
      %v765 = vpack.c.bf16 %v434, %v433
      %v766 = vld [vmem:[%s1] sm:$0xf]
      %v767 = vpack.c.bf16 %v495, %v493
      %v768 = vpack.c.bf16 %v500, %v498
      %v769 = vpack.c.bf16 %v505, %v503
      %v770 = vpack.c.bf16 %v510, %v508
      %v771 = vpack.c.bf16 %v515, %v513
      %v772 = vpack.c.bf16 %v520, %v518
      %v773 = vpack.c.bf16 %v525, %v523
      %v774 = vpack.c.bf16 %v530, %v528
      %v775 = vpack.c.bf16 %v535, %v533
      %v776 = vpack.c.bf16 %v540, %v538
      %v777 = vpack.c.bf16 %v545, %v543
      %v778 = vpack.c.bf16 %v550, %v548
      %v779 = vpack.c.bf16 %v555, %v553
      %v780 = vpack.c.bf16 %v560, %v558
      %v781 = vpack.c.bf16 %v565, %v563
      %v782 = vpack.c.bf16 %v570, %v568
      %v783 = vld [vmem:[%s1 + $0x4] sm:$0xf]
      %vm784 = vcmask 64512
      %v786 = vsel %vm784, %v767, 0
      %v789 = vsel %vm784, %v768, 0
      %v792 = vsel %vm784, %v769, 0
      %v795 = vsel %vm784, %v770, 0
      %v798 = vsel %vm784, %v771, 0
      %v801 = vsel %vm784, %v772, 0
      %v804 = vsel %vm784, %v773, 0
      %v807 = vsel %vm784, %v774, 0
      %v810 = vsel %vm784, %v775, 0
      %v813 = vsel %vm784, %v776, 0
      %v816 = vsel %vm784, %v777, 0
      %v819 = vsel %vm784, %v778, 0
      %v822 = vsel %vm784, %v779, 0
      %v825 = vsel %vm784, %v780, 0
      %v828 = vsel %vm784, %v781, 0
      %v831 = vsel %vm784, %v782, 0
      %vm833 = vcmask 1043456
      %v835 = vsel %vm833, %v783, 0
      %837 = vmatprep.subr.bf16.mxu0 0
      %838 = vmatpush1.bf16.msra.mxu0 %v835
      %839 = vmatprep.subr.bf16.mxu0 0
      %840 = vmatpush1.bf16.msra.mxu0 0
      %841 = vmatprep.subr.bf16.mxu0 0
      %842 = vmatpush1.bf16.msra.mxu0 0
      %843 = vmatprep.subr.bf16.mxu0 0
      %844 = vmatpush1.bf16.msra.mxu0 0
      %845 = vmatprep.subr.bf16.mxu0 0
      %846 = vmatpush1.bf16.msra.mxu0 0
      %847 = vmatprep.subr.bf16.mxu0 0
      %848 = vmatpush1.bf16.msra.mxu0 0
      %849 = vmatprep.subr.bf16.mxu0 0
      %850 = vmatpush1.bf16.msra.mxu0 0
      %851 = vmatprep.subr.bf16.mxu0 0
      %852 = vmatpush1.bf16.msra.mxu0 0
      %853 = vmatprep.subr.bf16.mxu0 0
      %854 = vmatpush1.bf16.msra.mxu0 0
      %855 = vmatprep.subr.bf16.mxu0 0
      %856 = vmatpush1.bf16.msra.mxu0 0
      %857 = vmatprep.subr.bf16.mxu0 0
      %858 = vmatpush1.bf16.msra.mxu0 0
      %859 = vmatprep.subr.bf16.mxu0 0
      %860 = vmatpush1.bf16.msra.mxu0 0
      %861 = vmatprep.subr.bf16.mxu0 0
      %862 = vmatpush1.bf16.msra.mxu0 0
      %863 = vmatprep.subr.bf16.mxu0 0
      %864 = vmatpush1.bf16.msra.mxu0 0
      %865 = vmatprep.subr.bf16.mxu0 0
      %866 = vmatpush1.bf16.msra.mxu0 0
      %867 = vmatprep.subr.bf16.mxu0 0
      %868 = vmatpush1.bf16.msra.mxu0 0
      %869 = vmatprep.mubr.bf16.mxu0 0
      %870 = vmatmul.mubr.bf16.gmra.mrb[0].mxu0 %v786
      %v871 = vpop.f32.mrb[0].mxu0
      %v872 = vadd.f32 0.0, %v871
      %v873 = vpop.f32.mrb[0].mxu0
      %v874 = vpop.f32.mrb[0].mxu0
      %v875 = vadd.f32 0.0, %v874
      %v876 = vpop.f32.mrb[0].mxu0
      %877 = vmatprep.mubr.bf16.mxu0 0
      %878 = vmatmul.mubr.bf16.gmra.mrb[0].mxu0 %v789
      %v879 = vpop.f32.mrb[0].mxu0
      %v880 = vadd.f32 0.0, %v879
      %v881 = vpop.f32.mrb[0].mxu0
      %v882 = vpop.f32.mrb[0].mxu0
      %v883 = vadd.f32 0.0, %v882
      %v884 = vpop.f32.mrb[0].mxu0
      %885 = vmatprep.mubr.bf16.mxu0 0
      %886 = vmatmul.mubr.bf16.gmra.mrb[0].mxu0 %v792
      %v887 = vpop.f32.mrb[0].mxu0
      %v888 = vadd.f32 0.0, %v887
      %v889 = vpop.f32.mrb[0].mxu0
      %v890 = vpop.f32.mrb[0].mxu0
      %v891 = vadd.f32 0.0, %v890
      %v892 = vpop.f32.mrb[0].mxu0
      %893 = vmatprep.mubr.bf16.mxu0 0
      %894 = vmatmul.mubr.bf16.gmra.mrb[0].mxu0 %v795
      %v895 = vpop.f32.mrb[0].mxu0
      %v896 = vadd.f32 0.0, %v895
      %v897 = vpop.f32.mrb[0].mxu0
      %v898 = vpop.f32.mrb[0].mxu0
      %v899 = vadd.f32 0.0, %v898
      %v900 = vpop.f32.mrb[0].mxu0
      %901 = vmatprep.mubr.bf16.mxu0 0
      %902 = vmatmul.mubr.bf16.gmra.mrb[0].mxu0 %v798
      %v903 = vpop.f32.mrb[0].mxu0
      %v904 = vadd.f32 0.0, %v903
      %v905 = vpop.f32.mrb[0].mxu0
      %v906 = vpop.f32.mrb[0].mxu0
      %v907 = vadd.f32 0.0, %v906
      %v908 = vpop.f32.mrb[0].mxu0
      %909 = vmatprep.mubr.bf16.mxu0 0
      %910 = vmatmul.mubr.bf16.gmra.mrb[0].mxu0 %v801
      %v911 = vpop.f32.mrb[0].mxu0
      %v912 = vadd.f32 0.0, %v911
      %v913 = vpop.f32.mrb[0].mxu0
      %v914 = vpop.f32.mrb[0].mxu0
      %v915 = vadd.f32 0.0, %v914
      %v916 = vpop.f32.mrb[0].mxu0
      %917 = vmatprep.mubr.bf16.mxu0 0
      %918 = vmatmul.mubr.bf16.gmra.mrb[0].mxu0 %v804
      %v919 = vpop.f32.mrb[0].mxu0
      %v920 = vadd.f32 0.0, %v919
      %v921 = vpop.f32.mrb[0].mxu0
      %v922 = vpop.f32.mrb[0].mxu0
      %v923 = vadd.f32 0.0, %v922
      %v924 = vpop.f32.mrb[0].mxu0
      %925 = vmatprep.mubr.bf16.mxu0 0
      %926 = vmatmul.mubr.bf16.gmra.mrb[0].mxu0 %v807
      %v927 = vpop.f32.mrb[0].mxu0
      %v928 = vadd.f32 0.0, %v927
      %v929 = vpop.f32.mrb[0].mxu0
      %v930 = vpop.f32.mrb[0].mxu0
      %v931 = vadd.f32 0.0, %v930
      %v932 = vpop.f32.mrb[0].mxu0
      %933 = vmatprep.mubr.bf16.mxu0 0
      %934 = vmatmul.mubr.bf16.gmra.mrb[0].mxu0 %v810
      %v935 = vpop.f32.mrb[0].mxu0
      %v936 = vadd.f32 0.0, %v935
      %v937 = vpop.f32.mrb[0].mxu0
      %v938 = vpop.f32.mrb[0].mxu0
      %v939 = vadd.f32 0.0, %v938
      %v940 = vpop.f32.mrb[0].mxu0
      %941 = vmatprep.mubr.bf16.mxu0 0
      %942 = vmatmul.mubr.bf16.gmra.mrb[0].mxu0 %v813
      %v943 = vpop.f32.mrb[0].mxu0
      %v944 = vadd.f32 0.0, %v943
      %v945 = vpop.f32.mrb[0].mxu0
      %v946 = vpop.f32.mrb[0].mxu0
      %v947 = vadd.f32 0.0, %v946
      %v948 = vpop.f32.mrb[0].mxu0
      %949 = vmatprep.mubr.bf16.mxu0 0
      %950 = vmatmul.mubr.bf16.gmra.mrb[0].mxu0 %v816
      %v951 = vpop.f32.mrb[0].mxu0
      %v952 = vadd.f32 0.0, %v951
      %v953 = vpop.f32.mrb[0].mxu0
      %v954 = vpop.f32.mrb[0].mxu0
      %v955 = vadd.f32 0.0, %v954
      %v956 = vpop.f32.mrb[0].mxu0
      %957 = vmatprep.mubr.bf16.mxu0 0
      %958 = vmatmul.mubr.bf16.gmra.mrb[0].mxu0 %v819
      %v959 = vpop.f32.mrb[0].mxu0
      %v960 = vadd.f32 0.0, %v959
      %v961 = vpop.f32.mrb[0].mxu0
      %v962 = vpop.f32.mrb[0].mxu0
      %v963 = vadd.f32 0.0, %v962
      %v964 = vpop.f32.mrb[0].mxu0
      %965 = vmatprep.mubr.bf16.mxu0 0
      %966 = vmatmul.mubr.bf16.gmra.mrb[0].mxu0 %v822
      %v967 = vpop.f32.mrb[0].mxu0
      %v968 = vadd.f32 0.0, %v967
      %v969 = vpop.f32.mrb[0].mxu0
      %v970 = vpop.f32.mrb[0].mxu0
      %v971 = vadd.f32 0.0, %v970
      %v972 = vpop.f32.mrb[0].mxu0
      %973 = vmatprep.mubr.bf16.mxu0 0
      %974 = vmatmul.mubr.bf16.gmra.mrb[0].mxu0 %v825
      %v975 = vpop.f32.mrb[0].mxu0
      %v976 = vadd.f32 0.0, %v975
      %v977 = vpop.f32.mrb[0].mxu0
      %v978 = vpop.f32.mrb[0].mxu0
      %v979 = vadd.f32 0.0, %v978
      %v980 = vpop.f32.mrb[0].mxu0
      %981 = vmatprep.mubr.bf16.mxu0 0
      %982 = vmatmul.mubr.bf16.gmra.mrb[0].mxu0 %v828
      %v983 = vpop.f32.mrb[0].mxu0
      %v984 = vadd.f32 0.0, %v983
      %v985 = vpop.f32.mrb[0].mxu0
      %v986 = vpop.f32.mrb[0].mxu0
      %v987 = vadd.f32 0.0, %v986
      %v988 = vpop.f32.mrb[0].mxu0
      %989 = vmatprep.mubr.bf16.mxu0 0
      %990 = vmatmul.mubr.bf16.gmra.mrb[0].mxu0 %v831
      %v991 = vpop.f32.mrb[0].mxu0
      %v992 = vadd.f32 0.0, %v991
      %v993 = vpop.f32.mrb[0].mxu0
      %v994 = vpop.f32.mrb[0].mxu0
      %v995 = vadd.f32 0.0, %v994
      %v996 = vpop.f32.mrb[0].mxu0
      %997 = vdwg.mxu0
      %v999 = vsel %vm784, %v750, 0
      %v1002 = vsel %vm784, %v751, 0
      %v1005 = vsel %vm784, %v752, 0
      %v1008 = vsel %vm784, %v753, 0
      %v1011 = vsel %vm784, %v754, 0
      %v1014 = vsel %vm784, %v755, 0
      %v1017 = vsel %vm784, %v756, 0
      %v1020 = vsel %vm784, %v757, 0
      %v1023 = vsel %vm784, %v758, 0
      %v1026 = vsel %vm784, %v759, 0
      %v1029 = vsel %vm784, %v760, 0
      %v1032 = vsel %vm784, %v761, 0
      %v1035 = vsel %vm784, %v762, 0
      %v1038 = vsel %vm784, %v763, 0
      %v1041 = vsel %vm784, %v764, 0
      %v1044 = vsel %vm784, %v765, 0
      %v1047 = vsel %vm833, %v766, 0
      %1049 = vmatprep.subr.bf16.mxu0 0
      %1050 = vmatpush1.bf16.msra.mxu0 %v1047
      %1051 = vmatprep.subr.bf16.mxu0 0
      %1052 = vmatpush1.bf16.msra.mxu0 0
      %1053 = vmatprep.subr.bf16.mxu0 0
      %1054 = vmatpush1.bf16.msra.mxu0 0
      %1055 = vmatprep.subr.bf16.mxu0 0
      %1056 = vmatpush1.bf16.msra.mxu0 0
      %1057 = vmatprep.subr.bf16.mxu0 0
      %1058 = vmatpush1.bf16.msra.mxu0 0
      %1059 = vmatprep.subr.bf16.mxu0 0
      %1060 = vmatpush1.bf16.msra.mxu0 0
      %1061 = vmatprep.subr.bf16.mxu0 0
      %1062 = vmatpush1.bf16.msra.mxu0 0
      %1063 = vmatprep.subr.bf16.mxu0 0
      %1064 = vmatpush1.bf16.msra.mxu0 0
      %1065 = vmatprep.subr.bf16.mxu0 0
      %1066 = vmatpush1.bf16.msra.mxu0 0
      %1067 = vmatprep.subr.bf16.mxu0 0
      %1068 = vmatpush1.bf16.msra.mxu0 0
      %1069 = vmatprep.subr.bf16.mxu0 0
      %1070 = vmatpush1.bf16.msra.mxu0 0
      %1071 = vmatprep.subr.bf16.mxu0 0
      %1072 = vmatpush1.bf16.msra.mxu0 0
      %1073 = vmatprep.subr.bf16.mxu0 0
      %1074 = vmatpush1.bf16.msra.mxu0 0
      %1075 = vmatprep.subr.bf16.mxu0 0
      %1076 = vmatpush1.bf16.msra.mxu0 0
      %1077 = vmatprep.subr.bf16.mxu0 0
      %1078 = vmatpush1.bf16.msra.mxu0 0
      %1079 = vmatprep.subr.bf16.mxu0 0
      %1080 = vmatpush1.bf16.msra.mxu0 0
      %1081 = vmatprep.mubr.bf16.mxu0 0
      %1082 = vmatmul.mubr.bf16.gmra.mrb[0].mxu0 %v999
      %v1083 = vpop.f32.mrb[0].mxu0
      %v1084 = vadd.f32 %v872, %v1083
      %v1085 = vpop.f32.mrb[0].mxu0
      %v1086 = vpop.f32.mrb[0].mxu0
      %v1087 = vadd.f32 %v875, %v1086
      %v1088 = vpop.f32.mrb[0].mxu0
      %1089 = vmatprep.mubr.bf16.mxu0 0
      %1090 = vmatmul.mubr.bf16.gmra.mrb[0].mxu0 %v1002
      %v1091 = vpop.f32.mrb[0].mxu0
      %v1092 = vadd.f32 %v880, %v1091
      %v1093 = vpop.f32.mrb[0].mxu0
      %v1094 = vpop.f32.mrb[0].mxu0
      %v1095 = vadd.f32 %v883, %v1094
      %v1096 = vpop.f32.mrb[0].mxu0
      %1097 = vmatprep.mubr.bf16.mxu0 0
      %1098 = vmatmul.mubr.bf16.gmra.mrb[0].mxu0 %v1005
      %v1099 = vpop.f32.mrb[0].mxu0
      %v1100 = vadd.f32 %v888, %v1099
      %v1101 = vpop.f32.mrb[0].mxu0
      %v1102 = vpop.f32.mrb[0].mxu0
      %v1103 = vadd.f32 %v891, %v1102
      %v1104 = vpop.f32.mrb[0].mxu0
      %1105 = vmatprep.mubr.bf16.mxu0 0
      %1106 = vmatmul.mubr.bf16.gmra.mrb[0].mxu0 %v1008
      %v1107 = vpop.f32.mrb[0].mxu0
      %v1108 = vadd.f32 %v896, %v1107
      %v1109 = vpop.f32.mrb[0].mxu0
      %v1110 = vpop.f32.mrb[0].mxu0
      %v1111 = vadd.f32 %v899, %v1110
      %v1112 = vpop.f32.mrb[0].mxu0
      %1113 = vmatprep.mubr.bf16.mxu0 0
      %1114 = vmatmul.mubr.bf16.gmra.mrb[0].mxu0 %v1011
      %v1115 = vpop.f32.mrb[0].mxu0
      %v1116 = vadd.f32 %v904, %v1115
      %v1117 = vpop.f32.mrb[0].mxu0
      %v1118 = vpop.f32.mrb[0].mxu0
      %v1119 = vadd.f32 %v907, %v1118
      %v1120 = vpop.f32.mrb[0].mxu0
      %1121 = vmatprep.mubr.bf16.mxu0 0
      %1122 = vmatmul.mubr.bf16.gmra.mrb[0].mxu0 %v1014
      %v1123 = vpop.f32.mrb[0].mxu0
      %v1124 = vadd.f32 %v912, %v1123
      %v1125 = vpop.f32.mrb[0].mxu0
      %v1126 = vpop.f32.mrb[0].mxu0
      %v1127 = vadd.f32 %v915, %v1126
      %v1128 = vpop.f32.mrb[0].mxu0
      %1129 = vmatprep.mubr.bf16.mxu0 0
      %1130 = vmatmul.mubr.bf16.gmra.mrb[0].mxu0 %v1017
      %v1131 = vpop.f32.mrb[0].mxu0
      %v1132 = vadd.f32 %v920, %v1131
      %v1133 = vpop.f32.mrb[0].mxu0
      %v1134 = vpop.f32.mrb[0].mxu0
      %v1135 = vadd.f32 %v923, %v1134
      %v1136 = vpop.f32.mrb[0].mxu0
      %1137 = vmatprep.mubr.bf16.mxu0 0
      %1138 = vmatmul.mubr.bf16.gmra.mrb[0].mxu0 %v1020
      %v1139 = vpop.f32.mrb[0].mxu0
      %v1140 = vadd.f32 %v928, %v1139
      %v1141 = vpop.f32.mrb[0].mxu0
      %v1142 = vpop.f32.mrb[0].mxu0
      %v1143 = vadd.f32 %v931, %v1142
      %v1144 = vpop.f32.mrb[0].mxu0
      %1145 = vmatprep.mubr.bf16.mxu0 0
      %1146 = vmatmul.mubr.bf16.gmra.mrb[0].mxu0 %v1023
      %v1147 = vpop.f32.mrb[0].mxu0
      %v1148 = vadd.f32 %v936, %v1147
      %v1149 = vpop.f32.mrb[0].mxu0
      %v1150 = vpop.f32.mrb[0].mxu0
      %v1151 = vadd.f32 %v939, %v1150
      %v1152 = vpop.f32.mrb[0].mxu0
      %1153 = vmatprep.mubr.bf16.mxu0 0
      %1154 = vmatmul.mubr.bf16.gmra.mrb[0].mxu0 %v1026
      %v1155 = vpop.f32.mrb[0].mxu0
      %v1156 = vadd.f32 %v944, %v1155
      %v1157 = vpop.f32.mrb[0].mxu0
      %v1158 = vpop.f32.mrb[0].mxu0
      %v1159 = vadd.f32 %v947, %v1158
      %v1160 = vpop.f32.mrb[0].mxu0
      %1161 = vmatprep.mubr.bf16.mxu0 0
      %1162 = vmatmul.mubr.bf16.gmra.mrb[0].mxu0 %v1029
      %v1163 = vpop.f32.mrb[0].mxu0
      %v1164 = vadd.f32 %v952, %v1163
      %v1165 = vpop.f32.mrb[0].mxu0
      %v1166 = vpop.f32.mrb[0].mxu0
      %v1167 = vadd.f32 %v955, %v1166
      %v1168 = vpop.f32.mrb[0].mxu0
      %1169 = vmatprep.mubr.bf16.mxu0 0
      %1170 = vmatmul.mubr.bf16.gmra.mrb[0].mxu0 %v1032
      %v1171 = vpop.f32.mrb[0].mxu0
      %v1172 = vadd.f32 %v960, %v1171
      %v1173 = vpop.f32.mrb[0].mxu0
      %v1174 = vpop.f32.mrb[0].mxu0
      %v1175 = vadd.f32 %v963, %v1174
      %v1176 = vpop.f32.mrb[0].mxu0
      %1177 = vmatprep.mubr.bf16.mxu0 0
      %1178 = vmatmul.mubr.bf16.gmra.mrb[0].mxu0 %v1035
      %v1179 = vpop.f32.mrb[0].mxu0
      %v1180 = vadd.f32 %v968, %v1179
      %v1181 = vpop.f32.mrb[0].mxu0
      %v1182 = vpop.f32.mrb[0].mxu0
      %v1183 = vadd.f32 %v971, %v1182
      %v1184 = vpop.f32.mrb[0].mxu0
      %1185 = vmatprep.mubr.bf16.mxu0 0
      %1186 = vmatmul.mubr.bf16.gmra.mrb[0].mxu0 %v1038
      %v1187 = vpop.f32.mrb[0].mxu0
      %v1188 = vadd.f32 %v976, %v1187
      %v1189 = vpop.f32.mrb[0].mxu0
      %v1190 = vpop.f32.mrb[0].mxu0
      %v1191 = vadd.f32 %v979, %v1190
      %v1192 = vpop.f32.mrb[0].mxu0
      %1193 = vmatprep.mubr.bf16.mxu0 0
      %1194 = vmatmul.mubr.bf16.gmra.mrb[0].mxu0 %v1041
      %v1195 = vpop.f32.mrb[0].mxu0
      %v1196 = vadd.f32 %v984, %v1195
      %v1197 = vpop.f32.mrb[0].mxu0
      %v1198 = vpop.f32.mrb[0].mxu0
      %v1199 = vadd.f32 %v987, %v1198
      %v1200 = vpop.f32.mrb[0].mxu0
      %1201 = vmatprep.mubr.bf16.mxu0 0
      %1202 = vmatmul.mubr.bf16.gmra.mrb[0].mxu0 %v1044
      %v1203 = vpop.f32.mrb[0].mxu0
      %v1204 = vadd.f32 %v992, %v1203
      %v1205 = vpop.f32.mrb[0].mxu0
      %v1206 = vpop.f32.mrb[0].mxu0
      %v1207 = vadd.f32 %v995, %v1206
      %v1208 = vpop.f32.mrb[0].mxu0
      %1209 = vdwg.mxu0
      %v1210 = vpack.c.bf16 %v608, %v606
      %v1211 = vpack.c.bf16 %v613, %v611
      %v1212 = vpack.c.bf16 %v618, %v616
      %v1213 = vpack.c.bf16 %v623, %v621
      %v1214 = vpack.c.bf16 %v628, %v626
      %v1215 = vpack.c.bf16 %v633, %v631
      %v1216 = vpack.c.bf16 %v638, %v636
      %v1217 = vpack.c.bf16 %v643, %v641
      %v1218 = vpack.c.bf16 %v648, %v646
      %v1219 = vpack.c.bf16 %v653, %v651
      %v1220 = vpack.c.bf16 %v658, %v656
      %v1221 = vpack.c.bf16 %v663, %v661
      %v1222 = vpack.c.bf16 %v668, %v666
      %v1223 = vpack.c.bf16 %v673, %v671
      %v1224 = vpack.c.bf16 %v678, %v676
      %v1225 = vpack.c.bf16 %v683, %v681
      %v1226 = vld [vmem:[%s1 + $0x8] sm:$0xf]
      %v1228 = vsel %vm784, %v1210, 0
      %v1231 = vsel %vm784, %v1211, 0
      %v1234 = vsel %vm784, %v1212, 0
      %v1237 = vsel %vm784, %v1213, 0
      %v1240 = vsel %vm784, %v1214, 0
      %v1243 = vsel %vm784, %v1215, 0
      %v1246 = vsel %vm784, %v1216, 0
      %v1249 = vsel %vm784, %v1217, 0
      %v1252 = vsel %vm784, %v1218, 0
      %v1255 = vsel %vm784, %v1219, 0
      %v1258 = vsel %vm784, %v1220, 0
      %v1261 = vsel %vm784, %v1221, 0
      %v1264 = vsel %vm784, %v1222, 0
      %v1267 = vsel %vm784, %v1223, 0
      %v1270 = vsel %vm784, %v1224, 0
      %v1273 = vsel %vm784, %v1225, 0
      %v1276 = vsel %vm833, %v1226, 0
      %1278 = vmatprep.subr.bf16.mxu0 0
      %1279 = vmatpush1.bf16.msra.mxu0 %v1276
      %1280 = vmatprep.subr.bf16.mxu0 0
      %1281 = vmatpush1.bf16.msra.mxu0 0
      %1282 = vmatprep.subr.bf16.mxu0 0
      %1283 = vmatpush1.bf16.msra.mxu0 0
      %1284 = vmatprep.subr.bf16.mxu0 0
      %1285 = vmatpush1.bf16.msra.mxu0 0
      %1286 = vmatprep.subr.bf16.mxu0 0
      %1287 = vmatpush1.bf16.msra.mxu0 0
      %1288 = vmatprep.subr.bf16.mxu0 0
      %1289 = vmatpush1.bf16.msra.mxu0 0
      %1290 = vmatprep.subr.bf16.mxu0 0
      %1291 = vmatpush1.bf16.msra.mxu0 0
      %1292 = vmatprep.subr.bf16.mxu0 0
      %1293 = vmatpush1.bf16.msra.mxu0 0
      %1294 = vmatprep.subr.bf16.mxu0 0
      %1295 = vmatpush1.bf16.msra.mxu0 0
      %1296 = vmatprep.subr.bf16.mxu0 0
      %1297 = vmatpush1.bf16.msra.mxu0 0
      %1298 = vmatprep.subr.bf16.mxu0 0
      %1299 = vmatpush1.bf16.msra.mxu0 0
      %1300 = vmatprep.subr.bf16.mxu0 0
      %1301 = vmatpush1.bf16.msra.mxu0 0
      %1302 = vmatprep.subr.bf16.mxu0 0
      %1303 = vmatpush1.bf16.msra.mxu0 0
      %1304 = vmatprep.subr.bf16.mxu0 0
      %1305 = vmatpush1.bf16.msra.mxu0 0
      %1306 = vmatprep.subr.bf16.mxu0 0
      %1307 = vmatpush1.bf16.msra.mxu0 0
      %1308 = vmatprep.subr.bf16.mxu0 0
      %1309 = vmatpush1.bf16.msra.mxu0 0
      %1310 = vmatprep.mubr.bf16.mxu0 0
      %1311 = vmatmul.mubr.bf16.gmra.mrb[0].mxu0 %v1228
      %v1312 = vpop.f32.mrb[0].mxu0
      %v1313 = vadd.f32 0.0, %v1312
      %v1314 = vpop.f32.mrb[0].mxu0
      %v1315 = vpop.f32.mrb[0].mxu0
      %v1316 = vadd.f32 0.0, %v1315
      %v1317 = vpop.f32.mrb[0].mxu0
      %1318 = vmatprep.mubr.bf16.mxu0 0
      %1319 = vmatmul.mubr.bf16.gmra.mrb[0].mxu0 %v1231
      %v1320 = vpop.f32.mrb[0].mxu0
      %v1321 = vadd.f32 0.0, %v1320
      %v1322 = vpop.f32.mrb[0].mxu0
      %v1323 = vpop.f32.mrb[0].mxu0
      %v1324 = vadd.f32 0.0, %v1323
      %v1325 = vpop.f32.mrb[0].mxu0
      %1326 = vmatprep.mubr.bf16.mxu0 0
      %1327 = vmatmul.mubr.bf16.gmra.mrb[0].mxu0 %v1234
      %v1328 = vpop.f32.mrb[0].mxu0
      %v1329 = vadd.f32 0.0, %v1328
      %v1330 = vpop.f32.mrb[0].mxu0
      %v1331 = vpop.f32.mrb[0].mxu0
      %v1332 = vadd.f32 0.0, %v1331
      %v1333 = vpop.f32.mrb[0].mxu0
      %1334 = vmatprep.mubr.bf16.mxu0 0
      %1335 = vmatmul.mubr.bf16.gmra.mrb[0].mxu0 %v1237
      %v1336 = vpop.f32.mrb[0].mxu0
      %v1337 = vadd.f32 0.0, %v1336
      %v1338 = vpop.f32.mrb[0].mxu0
      %v1339 = vpop.f32.mrb[0].mxu0
      %v1340 = vadd.f32 0.0, %v1339
      %v1341 = vpop.f32.mrb[0].mxu0
      %1342 = vmatprep.mubr.bf16.mxu0 0
      %1343 = vmatmul.mubr.bf16.gmra.mrb[0].mxu0 %v1240
      %v1344 = vpop.f32.mrb[0].mxu0
      %v1345 = vadd.f32 0.0, %v1344
      %v1346 = vpop.f32.mrb[0].mxu0
      %v1347 = vpop.f32.mrb[0].mxu0
      %v1348 = vadd.f32 0.0, %v1347
      %v1349 = vpop.f32.mrb[0].mxu0
      %1350 = vmatprep.mubr.bf16.mxu0 0
      %1351 = vmatmul.mubr.bf16.gmra.mrb[0].mxu0 %v1243
      %v1352 = vpop.f32.mrb[0].mxu0
      %v1353 = vadd.f32 0.0, %v1352
      %v1354 = vpop.f32.mrb[0].mxu0
      %v1355 = vpop.f32.mrb[0].mxu0
      %v1356 = vadd.f32 0.0, %v1355
      %v1357 = vpop.f32.mrb[0].mxu0
      %1358 = vmatprep.mubr.bf16.mxu0 0
      %1359 = vmatmul.mubr.bf16.gmra.mrb[0].mxu0 %v1246
      %v1360 = vpop.f32.mrb[0].mxu0
      %v1361 = vadd.f32 0.0, %v1360
      %v1362 = vpop.f32.mrb[0].mxu0
      %v1363 = vpop.f32.mrb[0].mxu0
      %v1364 = vadd.f32 0.0, %v1363
      %v1365 = vpop.f32.mrb[0].mxu0
      %1366 = vmatprep.mubr.bf16.mxu0 0
      %1367 = vmatmul.mubr.bf16.gmra.mrb[0].mxu0 %v1249
      %v1368 = vpop.f32.mrb[0].mxu0
      %v1369 = vadd.f32 0.0, %v1368
      %v1370 = vpop.f32.mrb[0].mxu0
      %v1371 = vpop.f32.mrb[0].mxu0
      %v1372 = vadd.f32 0.0, %v1371
      %v1373 = vpop.f32.mrb[0].mxu0
      %1374 = vmatprep.mubr.bf16.mxu0 0
      %1375 = vmatmul.mubr.bf16.gmra.mrb[0].mxu0 %v1252
      %v1376 = vpop.f32.mrb[0].mxu0
      %v1377 = vadd.f32 0.0, %v1376
      %v1378 = vpop.f32.mrb[0].mxu0
      %v1379 = vpop.f32.mrb[0].mxu0
      %v1380 = vadd.f32 0.0, %v1379
      %v1381 = vpop.f32.mrb[0].mxu0
      %1382 = vmatprep.mubr.bf16.mxu0 0
      %1383 = vmatmul.mubr.bf16.gmra.mrb[0].mxu0 %v1255
      %v1384 = vpop.f32.mrb[0].mxu0
      %v1385 = vadd.f32 0.0, %v1384
      %v1386 = vpop.f32.mrb[0].mxu0
      %v1387 = vpop.f32.mrb[0].mxu0
      %v1388 = vadd.f32 0.0, %v1387
      %v1389 = vpop.f32.mrb[0].mxu0
      %1390 = vmatprep.mubr.bf16.mxu0 0
      %1391 = vmatmul.mubr.bf16.gmra.mrb[0].mxu0 %v1258
      %v1392 = vpop.f32.mrb[0].mxu0
      %v1393 = vadd.f32 0.0, %v1392
      %v1394 = vpop.f32.mrb[0].mxu0
      %v1395 = vpop.f32.mrb[0].mxu0
      %v1396 = vadd.f32 0.0, %v1395
      %v1397 = vpop.f32.mrb[0].mxu0
      %1398 = vmatprep.mubr.bf16.mxu0 0
      %1399 = vmatmul.mubr.bf16.gmra.mrb[0].mxu0 %v1261
      %v1400 = vpop.f32.mrb[0].mxu0
      %v1401 = vadd.f32 0.0, %v1400
      %v1402 = vpop.f32.mrb[0].mxu0
      %v1403 = vpop.f32.mrb[0].mxu0
      %v1404 = vadd.f32 0.0, %v1403
      %v1405 = vpop.f32.mrb[0].mxu0
      %1406 = vmatprep.mubr.bf16.mxu0 0
      %1407 = vmatmul.mubr.bf16.gmra.mrb[0].mxu0 %v1264
      %v1408 = vpop.f32.mrb[0].mxu0
      %v1409 = vadd.f32 0.0, %v1408
      %v1410 = vpop.f32.mrb[0].mxu0
      %v1411 = vpop.f32.mrb[0].mxu0
      %v1412 = vadd.f32 0.0, %v1411
      %v1413 = vpop.f32.mrb[0].mxu0
      %1414 = vmatprep.mubr.bf16.mxu0 0
      %1415 = vmatmul.mubr.bf16.gmra.mrb[0].mxu0 %v1267
      %v1416 = vpop.f32.mrb[0].mxu0
      %v1417 = vadd.f32 0.0, %v1416
      %v1418 = vpop.f32.mrb[0].mxu0
      %v1419 = vpop.f32.mrb[0].mxu0
      %v1420 = vadd.f32 0.0, %v1419
      %v1421 = vpop.f32.mrb[0].mxu0
      %1422 = vmatprep.mubr.bf16.mxu0 0
      %1423 = vmatmul.mubr.bf16.gmra.mrb[0].mxu0 %v1270
      %v1424 = vpop.f32.mrb[0].mxu0
      %v1425 = vadd.f32 0.0, %v1424
      %v1426 = vpop.f32.mrb[0].mxu0
      %v1427 = vpop.f32.mrb[0].mxu0
      %v1428 = vadd.f32 0.0, %v1427
      %v1429 = vpop.f32.mrb[0].mxu0
      %1430 = vmatprep.mubr.bf16.mxu0 0
      %1431 = vmatmul.mubr.bf16.gmra.mrb[0].mxu0 %v1273
      %v1432 = vpop.f32.mrb[0].mxu0
      %v1433 = vadd.f32 0.0, %v1432
      %v1434 = vpop.f32.mrb[0].mxu0
      %v1435 = vpop.f32.mrb[0].mxu0
      %v1436 = vadd.f32 0.0, %v1435
      %v1437 = vpop.f32.mrb[0].mxu0
      %1438 = vdwg.mxu0
      %v1439 = vadd.f32 %v1084, %v1313
      %v1440 = vadd.f32 %v1087, %v1316
      %v1441 = vadd.f32 %v1092, %v1321
      %v1442 = vadd.f32 %v1095, %v1324
      %v1443 = vadd.f32 %v1100, %v1329
      %v1444 = vadd.f32 %v1103, %v1332
      %v1445 = vadd.f32 %v1108, %v1337
      %v1446 = vadd.f32 %v1111, %v1340
      %v1447 = vadd.f32 %v1116, %v1345
      %v1448 = vadd.f32 %v1119, %v1348
      %v1449 = vadd.f32 %v1124, %v1353
      %v1450 = vadd.f32 %v1127, %v1356
      %v1451 = vadd.f32 %v1132, %v1361
      %v1452 = vadd.f32 %v1135, %v1364
      %v1453 = vadd.f32 %v1140, %v1369
      %v1454 = vadd.f32 %v1143, %v1372
      %v1455 = vadd.f32 %v1148, %v1377
      %v1456 = vadd.f32 %v1151, %v1380
      %v1457 = vadd.f32 %v1156, %v1385
      %v1458 = vadd.f32 %v1159, %v1388
      %v1459 = vadd.f32 %v1164, %v1393
      %v1460 = vadd.f32 %v1167, %v1396
      %v1461 = vadd.f32 %v1172, %v1401
      %v1462 = vadd.f32 %v1175, %v1404
      %v1463 = vadd.f32 %v1180, %v1409
      %v1464 = vadd.f32 %v1183, %v1412
      %v1465 = vadd.f32 %v1188, %v1417
      %v1466 = vadd.f32 %v1191, %v1420
      %v1467 = vadd.f32 %v1196, %v1425
      %v1468 = vadd.f32 %v1199, %v1428
      %v1469 = vadd.f32 %v1204, %v1433
      %v1470 = vadd.f32 %v1207, %v1436
      %v1471 = vpack.c.bf16 %v437, %v436
      %v1472 = vld [vmem:[%s1 + $0xc] sm:$0xf]
      %v1474 = vsel %vm784, %v1471, 0
      %v1477 = vsel %vm833, %v1472, 0
      %1479 = vmatprep.subr.bf16.mxu0 0
      %1480 = vmatpush1.bf16.msra.mxu0 %v1477
      %1481 = vmatprep.subr.bf16.mxu0 0
      %1482 = vmatpush1.bf16.msra.mxu0 0
      %1483 = vmatprep.subr.bf16.mxu0 0
      %1484 = vmatpush1.bf16.msra.mxu0 0
      %1485 = vmatprep.subr.bf16.mxu0 0
      %1486 = vmatpush1.bf16.msra.mxu0 0
      %1487 = vmatprep.subr.bf16.mxu0 0
      %1488 = vmatpush1.bf16.msra.mxu0 0
      %1489 = vmatprep.subr.bf16.mxu0 0
      %1490 = vmatpush1.bf16.msra.mxu0 0
      %1491 = vmatprep.subr.bf16.mxu0 0
      %1492 = vmatpush1.bf16.msra.mxu0 0
      %1493 = vmatprep.subr.bf16.mxu0 0
      %1494 = vmatpush1.bf16.msra.mxu0 0
      %1495 = vmatprep.subr.bf16.mxu0 0
      %1496 = vmatpush1.bf16.msra.mxu0 0
      %1497 = vmatprep.subr.bf16.mxu0 0
      %1498 = vmatpush1.bf16.msra.mxu0 0
      %1499 = vmatprep.subr.bf16.mxu0 0
      %1500 = vmatpush1.bf16.msra.mxu0 0
      %1501 = vmatprep.subr.bf16.mxu0 0
      %1502 = vmatpush1.bf16.msra.mxu0 0
      %1503 = vmatprep.subr.bf16.mxu0 0
      %1504 = vmatpush1.bf16.msra.mxu0 0
      %1505 = vmatprep.subr.bf16.mxu0 0
      %1506 = vmatpush1.bf16.msra.mxu0 0
      %1507 = vmatprep.subr.bf16.mxu0 0
      %1508 = vmatpush1.bf16.msra.mxu0 0
      %1509 = vmatprep.subr.bf16.mxu0 0
      %1510 = vmatpush1.bf16.msra.mxu0 0
      %1511 = vmatprep.mubr.bf16.mxu0 0
      %1512 = vmatmul.mubr.bf16.gmra.mrb[0].mxu0 %v1002
      %v1513 = vpop.f32.mrb[0].mxu0
      %v1514 = vadd.f32 0.0, %v1513
      %v1515 = vpop.f32.mrb[0].mxu0
      %v1516 = vpop.f32.mrb[0].mxu0
      %v1517 = vadd.f32 0.0, %v1516
      %v1518 = vpop.f32.mrb[0].mxu0
      %1519 = vmatprep.mubr.bf16.mxu0 0
      %1520 = vmatmul.mubr.bf16.gmra.mrb[0].mxu0 %v1005
      %v1521 = vpop.f32.mrb[0].mxu0
      %v1522 = vadd.f32 0.0, %v1521
      %v1523 = vpop.f32.mrb[0].mxu0
      %v1524 = vpop.f32.mrb[0].mxu0
      %v1525 = vadd.f32 0.0, %v1524
      %v1526 = vpop.f32.mrb[0].mxu0
      %1527 = vmatprep.mubr.bf16.mxu0 0
      %1528 = vmatmul.mubr.bf16.gmra.mrb[0].mxu0 %v1008
      %v1529 = vpop.f32.mrb[0].mxu0
      %v1530 = vadd.f32 0.0, %v1529
      %v1531 = vpop.f32.mrb[0].mxu0
      %v1532 = vpop.f32.mrb[0].mxu0
      %v1533 = vadd.f32 0.0, %v1532
      %v1534 = vpop.f32.mrb[0].mxu0
      %1535 = vmatprep.mubr.bf16.mxu0 0
      %1536 = vmatmul.mubr.bf16.gmra.mrb[0].mxu0 %v1011
      %v1537 = vpop.f32.mrb[0].mxu0
      %v1538 = vadd.f32 0.0, %v1537
      %v1539 = vpop.f32.mrb[0].mxu0
      %v1540 = vpop.f32.mrb[0].mxu0
      %v1541 = vadd.f32 0.0, %v1540
      %v1542 = vpop.f32.mrb[0].mxu0
      %1543 = vmatprep.mubr.bf16.mxu0 0
      %1544 = vmatmul.mubr.bf16.gmra.mrb[0].mxu0 %v1014
      %v1545 = vpop.f32.mrb[0].mxu0
      %v1546 = vadd.f32 0.0, %v1545
      %v1547 = vpop.f32.mrb[0].mxu0
      %v1548 = vpop.f32.mrb[0].mxu0
      %v1549 = vadd.f32 0.0, %v1548
      %v1550 = vpop.f32.mrb[0].mxu0
      %1551 = vmatprep.mubr.bf16.mxu0 0
      %1552 = vmatmul.mubr.bf16.gmra.mrb[0].mxu0 %v1017
      %v1553 = vpop.f32.mrb[0].mxu0
      %v1554 = vadd.f32 0.0, %v1553
      %v1555 = vpop.f32.mrb[0].mxu0
      %v1556 = vpop.f32.mrb[0].mxu0
      %v1557 = vadd.f32 0.0, %v1556
      %v1558 = vpop.f32.mrb[0].mxu0
      %1559 = vmatprep.mubr.bf16.mxu0 0
      %1560 = vmatmul.mubr.bf16.gmra.mrb[0].mxu0 %v1020
      %v1561 = vpop.f32.mrb[0].mxu0
      %v1562 = vadd.f32 0.0, %v1561
      %v1563 = vpop.f32.mrb[0].mxu0
      %v1564 = vpop.f32.mrb[0].mxu0
      %v1565 = vadd.f32 0.0, %v1564
      %v1566 = vpop.f32.mrb[0].mxu0
      %1567 = vmatprep.mubr.bf16.mxu0 0
      %1568 = vmatmul.mubr.bf16.gmra.mrb[0].mxu0 %v1023
      %v1569 = vpop.f32.mrb[0].mxu0
      %v1570 = vadd.f32 0.0, %v1569
      %v1571 = vpop.f32.mrb[0].mxu0
      %v1572 = vpop.f32.mrb[0].mxu0
      %v1573 = vadd.f32 0.0, %v1572
      %v1574 = vpop.f32.mrb[0].mxu0
      %1575 = vmatprep.mubr.bf16.mxu0 0
      %1576 = vmatmul.mubr.bf16.gmra.mrb[0].mxu0 %v1026
      %v1577 = vpop.f32.mrb[0].mxu0
      %v1578 = vadd.f32 0.0, %v1577
      %v1579 = vpop.f32.mrb[0].mxu0
      %v1580 = vpop.f32.mrb[0].mxu0
      %v1581 = vadd.f32 0.0, %v1580
      %v1582 = vpop.f32.mrb[0].mxu0
      %1583 = vmatprep.mubr.bf16.mxu0 0
      %1584 = vmatmul.mubr.bf16.gmra.mrb[0].mxu0 %v1029
      %v1585 = vpop.f32.mrb[0].mxu0
      %v1586 = vadd.f32 0.0, %v1585
      %v1587 = vpop.f32.mrb[0].mxu0
      %v1588 = vpop.f32.mrb[0].mxu0
      %v1589 = vadd.f32 0.0, %v1588
      %v1590 = vpop.f32.mrb[0].mxu0
      %1591 = vmatprep.mubr.bf16.mxu0 0
      %1592 = vmatmul.mubr.bf16.gmra.mrb[0].mxu0 %v1032
      %v1593 = vpop.f32.mrb[0].mxu0
      %v1594 = vadd.f32 0.0, %v1593
      %v1595 = vpop.f32.mrb[0].mxu0
      %v1596 = vpop.f32.mrb[0].mxu0
      %v1597 = vadd.f32 0.0, %v1596
      %v1598 = vpop.f32.mrb[0].mxu0
      %1599 = vmatprep.mubr.bf16.mxu0 0
      %1600 = vmatmul.mubr.bf16.gmra.mrb[0].mxu0 %v1035
      %v1601 = vpop.f32.mrb[0].mxu0
      %v1602 = vadd.f32 0.0, %v1601
      %v1603 = vpop.f32.mrb[0].mxu0
      %v1604 = vpop.f32.mrb[0].mxu0
      %v1605 = vadd.f32 0.0, %v1604
      %v1606 = vpop.f32.mrb[0].mxu0
      %1607 = vmatprep.mubr.bf16.mxu0 0
      %1608 = vmatmul.mubr.bf16.gmra.mrb[0].mxu0 %v1038
      %v1609 = vpop.f32.mrb[0].mxu0
      %v1610 = vadd.f32 0.0, %v1609
      %v1611 = vpop.f32.mrb[0].mxu0
      %v1612 = vpop.f32.mrb[0].mxu0
      %v1613 = vadd.f32 0.0, %v1612
      %v1614 = vpop.f32.mrb[0].mxu0
      %1615 = vmatprep.mubr.bf16.mxu0 0
      %1616 = vmatmul.mubr.bf16.gmra.mrb[0].mxu0 %v1041
      %v1617 = vpop.f32.mrb[0].mxu0
      %v1618 = vadd.f32 0.0, %v1617
      %v1619 = vpop.f32.mrb[0].mxu0
      %v1620 = vpop.f32.mrb[0].mxu0
      %v1621 = vadd.f32 0.0, %v1620
      %v1622 = vpop.f32.mrb[0].mxu0
      %1623 = vmatprep.mubr.bf16.mxu0 0
      %1624 = vmatmul.mubr.bf16.gmra.mrb[0].mxu0 %v1044
      %v1625 = vpop.f32.mrb[0].mxu0
      %v1626 = vadd.f32 0.0, %v1625
      %v1627 = vpop.f32.mrb[0].mxu0
      %v1628 = vpop.f32.mrb[0].mxu0
      %v1629 = vadd.f32 0.0, %v1628
      %v1630 = vpop.f32.mrb[0].mxu0
      %1631 = vmatprep.mubr.bf16.mxu0 0
      %1632 = vmatmul.mubr.bf16.gmra.mrb[0].mxu0 %v1474
      %v1633 = vpop.f32.mrb[0].mxu0
      %v1634 = vadd.f32 0.0, %v1633
      %v1635 = vpop.f32.mrb[0].mxu0
      %v1636 = vpop.f32.mrb[0].mxu0
      %v1637 = vadd.f32 0.0, %v1636
      %v1638 = vpop.f32.mrb[0].mxu0
      %1639 = vdwg.mxu0
      %v1640 = vadd.f32 %v1439, %v1514
      %v1641 = vadd.f32 %v1440, %v1517
      %v1642 = vadd.f32 %v1441, %v1522
      %v1643 = vadd.f32 %v1442, %v1525
      %v1644 = vadd.f32 %v1443, %v1530
      %v1645 = vadd.f32 %v1444, %v1533
      %v1646 = vadd.f32 %v1445, %v1538
      %v1647 = vadd.f32 %v1446, %v1541
      %v1648 = vadd.f32 %v1447, %v1546
      %v1649 = vadd.f32 %v1448, %v1549
      %v1650 = vadd.f32 %v1449, %v1554
      %v1651 = vadd.f32 %v1450, %v1557
      %v1652 = vadd.f32 %v1451, %v1562
      %v1653 = vadd.f32 %v1452, %v1565
      %v1654 = vadd.f32 %v1453, %v1570
      %v1655 = vadd.f32 %v1454, %v1573
      %v1656 = vadd.f32 %v1455, %v1578
      %v1657 = vadd.f32 %v1456, %v1581
      %v1658 = vadd.f32 %v1457, %v1586
      %v1659 = vadd.f32 %v1458, %v1589
      %v1660 = vadd.f32 %v1459, %v1594
      %v1661 = vadd.f32 %v1460, %v1597
      %v1662 = vadd.f32 %v1461, %v1602
      %v1663 = vadd.f32 %v1462, %v1605
      %v1664 = vadd.f32 %v1463, %v1610
      %v1665 = vadd.f32 %v1464, %v1613
      %v1666 = vadd.f32 %v1465, %v1618
      %v1667 = vadd.f32 %v1466, %v1621
      %v1668 = vadd.f32 %v1467, %v1626
      %v1669 = vadd.f32 %v1468, %v1629
      %v1670 = vadd.f32 %v1469, %v1634
      %v1671 = vadd.f32 %v1470, %v1637
      %v1672 = vpack.c.bf16 %v723, %v721
      %v1673 = vld [vmem:[%s1 + $0x10] sm:$0xf]
      %v1675 = vsel %vm784, %v1672, 0
      %v1678 = vsel %vm833, %v1673, 0
      %1680 = vmatprep.subr.bf16.mxu0 0
      %1681 = vmatpush1.bf16.msra.mxu0 %v1678
      %1682 = vmatprep.subr.bf16.mxu0 0
      %1683 = vmatpush1.bf16.msra.mxu0 0
      %1684 = vmatprep.subr.bf16.mxu0 0
      %1685 = vmatpush1.bf16.msra.mxu0 0
      %1686 = vmatprep.subr.bf16.mxu0 0
      %1687 = vmatpush1.bf16.msra.mxu0 0
      %1688 = vmatprep.subr.bf16.mxu0 0
      %1689 = vmatpush1.bf16.msra.mxu0 0
      %1690 = vmatprep.subr.bf16.mxu0 0
      %1691 = vmatpush1.bf16.msra.mxu0 0
      %1692 = vmatprep.subr.bf16.mxu0 0
      %1693 = vmatpush1.bf16.msra.mxu0 0
      %1694 = vmatprep.subr.bf16.mxu0 0
      %1695 = vmatpush1.bf16.msra.mxu0 0
      %1696 = vmatprep.subr.bf16.mxu0 0
      %1697 = vmatpush1.bf16.msra.mxu0 0
      %1698 = vmatprep.subr.bf16.mxu0 0
      %1699 = vmatpush1.bf16.msra.mxu0 0
      %1700 = vmatprep.subr.bf16.mxu0 0
      %1701 = vmatpush1.bf16.msra.mxu0 0
      %1702 = vmatprep.subr.bf16.mxu0 0
      %1703 = vmatpush1.bf16.msra.mxu0 0
      %1704 = vmatprep.subr.bf16.mxu0 0
      %1705 = vmatpush1.bf16.msra.mxu0 0
      %1706 = vmatprep.subr.bf16.mxu0 0
      %1707 = vmatpush1.bf16.msra.mxu0 0
      %1708 = vmatprep.subr.bf16.mxu0 0
      %1709 = vmatpush1.bf16.msra.mxu0 0
      %1710 = vmatprep.subr.bf16.mxu0 0
      %1711 = vmatpush1.bf16.msra.mxu0 0
      %1712 = vmatprep.mubr.bf16.mxu0 0
      %1713 = vmatmul.mubr.bf16.gmra.mrb[0].mxu0 %v789
      %v1714 = vpop.f32.mrb[0].mxu0
      %v1715 = vadd.f32 0.0, %v1714
      %v1716 = vpop.f32.mrb[0].mxu0
      %v1717 = vpop.f32.mrb[0].mxu0
      %v1718 = vadd.f32 0.0, %v1717
      %v1719 = vpop.f32.mrb[0].mxu0
      %1720 = vmatprep.mubr.bf16.mxu0 0
      %1721 = vmatmul.mubr.bf16.gmra.mrb[0].mxu0 %v792
      %v1722 = vpop.f32.mrb[0].mxu0
      %v1723 = vadd.f32 0.0, %v1722
      %v1724 = vpop.f32.mrb[0].mxu0
      %v1725 = vpop.f32.mrb[0].mxu0
      %v1726 = vadd.f32 0.0, %v1725
      %v1727 = vpop.f32.mrb[0].mxu0
      %1728 = vmatprep.mubr.bf16.mxu0 0
      %1729 = vmatmul.mubr.bf16.gmra.mrb[0].mxu0 %v795
      %v1730 = vpop.f32.mrb[0].mxu0
      %v1731 = vadd.f32 0.0, %v1730
      %v1732 = vpop.f32.mrb[0].mxu0
      %v1733 = vpop.f32.mrb[0].mxu0
      %v1734 = vadd.f32 0.0, %v1733
      %v1735 = vpop.f32.mrb[0].mxu0
      %1736 = vmatprep.mubr.bf16.mxu0 0
      %1737 = vmatmul.mubr.bf16.gmra.mrb[0].mxu0 %v798
      %v1738 = vpop.f32.mrb[0].mxu0
      %v1739 = vadd.f32 0.0, %v1738
      %v1740 = vpop.f32.mrb[0].mxu0
      %v1741 = vpop.f32.mrb[0].mxu0
      %v1742 = vadd.f32 0.0, %v1741
      %v1743 = vpop.f32.mrb[0].mxu0
      %1744 = vmatprep.mubr.bf16.mxu0 0
      %1745 = vmatmul.mubr.bf16.gmra.mrb[0].mxu0 %v801
      %v1746 = vpop.f32.mrb[0].mxu0
      %v1747 = vadd.f32 0.0, %v1746
      %v1748 = vpop.f32.mrb[0].mxu0
      %v1749 = vpop.f32.mrb[0].mxu0
      %v1750 = vadd.f32 0.0, %v1749
      %v1751 = vpop.f32.mrb[0].mxu0
      %1752 = vmatprep.mubr.bf16.mxu0 0
      %1753 = vmatmul.mubr.bf16.gmra.mrb[0].mxu0 %v804
      %v1754 = vpop.f32.mrb[0].mxu0
      %v1755 = vadd.f32 0.0, %v1754
      %v1756 = vpop.f32.mrb[0].mxu0
      %v1757 = vpop.f32.mrb[0].mxu0
      %v1758 = vadd.f32 0.0, %v1757
      %v1759 = vpop.f32.mrb[0].mxu0
      %1760 = vmatprep.mubr.bf16.mxu0 0
      %1761 = vmatmul.mubr.bf16.gmra.mrb[0].mxu0 %v807
      %v1762 = vpop.f32.mrb[0].mxu0
      %v1763 = vadd.f32 0.0, %v1762
      %v1764 = vpop.f32.mrb[0].mxu0
      %v1765 = vpop.f32.mrb[0].mxu0
      %v1766 = vadd.f32 0.0, %v1765
      %v1767 = vpop.f32.mrb[0].mxu0
      %1768 = vmatprep.mubr.bf16.mxu0 0
      %1769 = vmatmul.mubr.bf16.gmra.mrb[0].mxu0 %v810
      %v1770 = vpop.f32.mrb[0].mxu0
      %v1771 = vadd.f32 0.0, %v1770
      %v1772 = vpop.f32.mrb[0].mxu0
      %v1773 = vpop.f32.mrb[0].mxu0
      %v1774 = vadd.f32 0.0, %v1773
      %v1775 = vpop.f32.mrb[0].mxu0
      %1776 = vmatprep.mubr.bf16.mxu0 0
      %1777 = vmatmul.mubr.bf16.gmra.mrb[0].mxu0 %v813
      %v1778 = vpop.f32.mrb[0].mxu0
      %v1779 = vadd.f32 0.0, %v1778
      %v1780 = vpop.f32.mrb[0].mxu0
      %v1781 = vpop.f32.mrb[0].mxu0
      %v1782 = vadd.f32 0.0, %v1781
      %v1783 = vpop.f32.mrb[0].mxu0
      %1784 = vmatprep.mubr.bf16.mxu0 0
      %1785 = vmatmul.mubr.bf16.gmra.mrb[0].mxu0 %v816
      %v1786 = vpop.f32.mrb[0].mxu0
      %v1787 = vadd.f32 0.0, %v1786
      %v1788 = vpop.f32.mrb[0].mxu0
      %v1789 = vpop.f32.mrb[0].mxu0
      %v1790 = vadd.f32 0.0, %v1789
      %v1791 = vpop.f32.mrb[0].mxu0
      %1792 = vmatprep.mubr.bf16.mxu0 0
      %1793 = vmatmul.mubr.bf16.gmra.mrb[0].mxu0 %v819
      %v1794 = vpop.f32.mrb[0].mxu0
      %v1795 = vadd.f32 0.0, %v1794
      %v1796 = vpop.f32.mrb[0].mxu0
      %v1797 = vpop.f32.mrb[0].mxu0
      %v1798 = vadd.f32 0.0, %v1797
      %v1799 = vpop.f32.mrb[0].mxu0
      %1800 = vmatprep.mubr.bf16.mxu0 0
      %1801 = vmatmul.mubr.bf16.gmra.mrb[0].mxu0 %v822
      %v1802 = vpop.f32.mrb[0].mxu0
      %v1803 = vadd.f32 0.0, %v1802
      %v1804 = vpop.f32.mrb[0].mxu0
      %v1805 = vpop.f32.mrb[0].mxu0
      %v1806 = vadd.f32 0.0, %v1805
      %v1807 = vpop.f32.mrb[0].mxu0
      %1808 = vmatprep.mubr.bf16.mxu0 0
      %1809 = vmatmul.mubr.bf16.gmra.mrb[0].mxu0 %v825
      %v1810 = vpop.f32.mrb[0].mxu0
      %v1811 = vadd.f32 0.0, %v1810
      %v1812 = vpop.f32.mrb[0].mxu0
      %v1813 = vpop.f32.mrb[0].mxu0
      %v1814 = vadd.f32 0.0, %v1813
      %v1815 = vpop.f32.mrb[0].mxu0
      %1816 = vmatprep.mubr.bf16.mxu0 0
      %1817 = vmatmul.mubr.bf16.gmra.mrb[0].mxu0 %v828
      %v1818 = vpop.f32.mrb[0].mxu0
      %v1819 = vadd.f32 0.0, %v1818
      %v1820 = vpop.f32.mrb[0].mxu0
      %v1821 = vpop.f32.mrb[0].mxu0
      %v1822 = vadd.f32 0.0, %v1821
      %v1823 = vpop.f32.mrb[0].mxu0
      %1824 = vmatprep.mubr.bf16.mxu0 0
      %1825 = vmatmul.mubr.bf16.gmra.mrb[0].mxu0 %v831
      %v1826 = vpop.f32.mrb[0].mxu0
      %v1827 = vadd.f32 0.0, %v1826
      %v1828 = vpop.f32.mrb[0].mxu0
      %v1829 = vpop.f32.mrb[0].mxu0
      %v1830 = vadd.f32 0.0, %v1829
      %v1831 = vpop.f32.mrb[0].mxu0
      %1832 = vmatprep.mubr.bf16.mxu0 0
      %1833 = vmatmul.mubr.bf16.gmra.mrb[0].mxu0 %v1675
      %v1834 = vpop.f32.mrb[0].mxu0
      %v1835 = vadd.f32 0.0, %v1834
      %v1836 = vpop.f32.mrb[0].mxu0
      %v1837 = vpop.f32.mrb[0].mxu0
      %v1838 = vadd.f32 0.0, %v1837
      %v1839 = vpop.f32.mrb[0].mxu0
      %1840 = vdwg.mxu0
      %v1841 = vadd.f32 %v1640, %v1715
      %v1842 = vadd.f32 %v1641, %v1718
      %v1843 = vadd.f32 %v1642, %v1723
      %v1844 = vadd.f32 %v1643, %v1726
      %v1845 = vadd.f32 %v1644, %v1731
      %v1846 = vadd.f32 %v1645, %v1734
      %v1847 = vadd.f32 %v1646, %v1739
      %v1848 = vadd.f32 %v1647, %v1742
      %v1849 = vadd.f32 %v1648, %v1747
      %v1850 = vadd.f32 %v1649, %v1750
      %v1851 = vadd.f32 %v1650, %v1755
      %v1852 = vadd.f32 %v1651, %v1758
      %v1853 = vadd.f32 %v1652, %v1763
      %v1854 = vadd.f32 %v1653, %v1766
      %v1855 = vadd.f32 %v1654, %v1771
      %v1856 = vadd.f32 %v1655, %v1774
      %v1857 = vadd.f32 %v1656, %v1779
      %v1858 = vadd.f32 %v1657, %v1782
      %v1859 = vadd.f32 %v1658, %v1787
      %v1860 = vadd.f32 %v1659, %v1790
      %v1861 = vadd.f32 %v1660, %v1795
      %v1862 = vadd.f32 %v1661, %v1798
      %v1863 = vadd.f32 %v1662, %v1803
      %v1864 = vadd.f32 %v1663, %v1806
      %v1865 = vadd.f32 %v1664, %v1811
      %v1866 = vadd.f32 %v1665, %v1814
      %v1867 = vadd.f32 %v1666, %v1819
      %v1868 = vadd.f32 %v1667, %v1822
      %v1869 = vadd.f32 %v1668, %v1827
      %v1870 = vadd.f32 %v1669, %v1830
      %v1871 = vadd.f32 %v1670, %v1835
      %v1872 = vadd.f32 %v1671, %v1838
      %v1873 = vpack.c.bf16 %v730, %v728
      %v1874 = vld [vmem:[%s1 + $0x14] sm:$0xf]
      %v1876 = vsel %vm784, %v1873, 0
      %v1879 = vsel %vm833, %v1874, 0
      %1881 = vmatprep.subr.bf16.mxu0 0
      %1882 = vmatpush1.bf16.msra.mxu0 %v1879
      %1883 = vmatprep.subr.bf16.mxu0 0
      %1884 = vmatpush1.bf16.msra.mxu0 0
      %1885 = vmatprep.subr.bf16.mxu0 0
      %1886 = vmatpush1.bf16.msra.mxu0 0
      %1887 = vmatprep.subr.bf16.mxu0 0
      %1888 = vmatpush1.bf16.msra.mxu0 0
      %1889 = vmatprep.subr.bf16.mxu0 0
      %1890 = vmatpush1.bf16.msra.mxu0 0
      %1891 = vmatprep.subr.bf16.mxu0 0
      %1892 = vmatpush1.bf16.msra.mxu0 0
      %1893 = vmatprep.subr.bf16.mxu0 0
      %1894 = vmatpush1.bf16.msra.mxu0 0
      %1895 = vmatprep.subr.bf16.mxu0 0
      %1896 = vmatpush1.bf16.msra.mxu0 0
      %1897 = vmatprep.subr.bf16.mxu0 0
      %1898 = vmatpush1.bf16.msra.mxu0 0
      %1899 = vmatprep.subr.bf16.mxu0 0
      %1900 = vmatpush1.bf16.msra.mxu0 0
      %1901 = vmatprep.subr.bf16.mxu0 0
      %1902 = vmatpush1.bf16.msra.mxu0 0
      %1903 = vmatprep.subr.bf16.mxu0 0
      %1904 = vmatpush1.bf16.msra.mxu0 0
      %1905 = vmatprep.subr.bf16.mxu0 0
      %1906 = vmatpush1.bf16.msra.mxu0 0
      %1907 = vmatprep.subr.bf16.mxu0 0
      %1908 = vmatpush1.bf16.msra.mxu0 0
      %1909 = vmatprep.subr.bf16.mxu0 0
      %1910 = vmatpush1.bf16.msra.mxu0 0
      %1911 = vmatprep.subr.bf16.mxu0 0
      %1912 = vmatpush1.bf16.msra.mxu0 0
      %1913 = vmatprep.mubr.bf16.mxu0 0
      %1914 = vmatmul.mubr.bf16.gmra.mrb[0].mxu0 %v1231
      %v1915 = vpop.f32.mrb[0].mxu0
      %v1916 = vadd.f32 0.0, %v1915
      %v1917 = vpop.f32.mrb[0].mxu0
      %v1918 = vpop.f32.mrb[0].mxu0
      %v1919 = vadd.f32 0.0, %v1918
      %v1920 = vpop.f32.mrb[0].mxu0
      %1921 = vmatprep.mubr.bf16.mxu0 0
      %1922 = vmatmul.mubr.bf16.gmra.mrb[0].mxu0 %v1234
      %v1923 = vpop.f32.mrb[0].mxu0
      %v1924 = vadd.f32 0.0, %v1923
      %v1925 = vpop.f32.mrb[0].mxu0
      %v1926 = vpop.f32.mrb[0].mxu0
      %v1927 = vadd.f32 0.0, %v1926
      %v1928 = vpop.f32.mrb[0].mxu0
      %1929 = vmatprep.mubr.bf16.mxu0 0
      %1930 = vmatmul.mubr.bf16.gmra.mrb[0].mxu0 %v1237
      %v1931 = vpop.f32.mrb[0].mxu0
      %v1932 = vadd.f32 0.0, %v1931
      %v1933 = vpop.f32.mrb[0].mxu0
      %v1934 = vpop.f32.mrb[0].mxu0
      %v1935 = vadd.f32 0.0, %v1934
      %v1936 = vpop.f32.mrb[0].mxu0
      %1937 = vmatprep.mubr.bf16.mxu0 0
      %1938 = vmatmul.mubr.bf16.gmra.mrb[0].mxu0 %v1240
      %v1939 = vpop.f32.mrb[0].mxu0
      %v1940 = vadd.f32 0.0, %v1939
      %v1941 = vpop.f32.mrb[0].mxu0
      %v1942 = vpop.f32.mrb[0].mxu0
      %v1943 = vadd.f32 0.0, %v1942
      %v1944 = vpop.f32.mrb[0].mxu0
      %1945 = vmatprep.mubr.bf16.mxu0 0
      %1946 = vmatmul.mubr.bf16.gmra.mrb[0].mxu0 %v1243
      %v1947 = vpop.f32.mrb[0].mxu0
      %v1948 = vadd.f32 0.0, %v1947
      %v1949 = vpop.f32.mrb[0].mxu0
      %v1950 = vpop.f32.mrb[0].mxu0
      %v1951 = vadd.f32 0.0, %v1950
      %v1952 = vpop.f32.mrb[0].mxu0
      %1953 = vmatprep.mubr.bf16.mxu0 0
      %1954 = vmatmul.mubr.bf16.gmra.mrb[0].mxu0 %v1246
      %v1955 = vpop.f32.mrb[0].mxu0
      %v1956 = vadd.f32 0.0, %v1955
      %v1957 = vpop.f32.mrb[0].mxu0
      %v1958 = vpop.f32.mrb[0].mxu0
      %v1959 = vadd.f32 0.0, %v1958
      %v1960 = vpop.f32.mrb[0].mxu0
      %1961 = vmatprep.mubr.bf16.mxu0 0
      %1962 = vmatmul.mubr.bf16.gmra.mrb[0].mxu0 %v1249
      %v1963 = vpop.f32.mrb[0].mxu0
      %v1964 = vadd.f32 0.0, %v1963
      %v1965 = vpop.f32.mrb[0].mxu0
      %v1966 = vpop.f32.mrb[0].mxu0
      %v1967 = vadd.f32 0.0, %v1966
      %v1968 = vpop.f32.mrb[0].mxu0
      %1969 = vmatprep.mubr.bf16.mxu0 0
      %1970 = vmatmul.mubr.bf16.gmra.mrb[0].mxu0 %v1252
      %v1971 = vpop.f32.mrb[0].mxu0
      %v1972 = vadd.f32 0.0, %v1971
      %v1973 = vpop.f32.mrb[0].mxu0
      %v1974 = vpop.f32.mrb[0].mxu0
      %v1975 = vadd.f32 0.0, %v1974
      %v1976 = vpop.f32.mrb[0].mxu0
      %1977 = vmatprep.mubr.bf16.mxu0 0
      %1978 = vmatmul.mubr.bf16.gmra.mrb[0].mxu0 %v1255
      %v1979 = vpop.f32.mrb[0].mxu0
      %v1980 = vadd.f32 0.0, %v1979
      %v1981 = vpop.f32.mrb[0].mxu0
      %v1982 = vpop.f32.mrb[0].mxu0
      %v1983 = vadd.f32 0.0, %v1982
      %v1984 = vpop.f32.mrb[0].mxu0
      %1985 = vmatprep.mubr.bf16.mxu0 0
      %1986 = vmatmul.mubr.bf16.gmra.mrb[0].mxu0 %v1258
      %v1987 = vpop.f32.mrb[0].mxu0
      %v1988 = vadd.f32 0.0, %v1987
      %v1989 = vpop.f32.mrb[0].mxu0
      %v1990 = vpop.f32.mrb[0].mxu0
      %v1991 = vadd.f32 0.0, %v1990
      %v1992 = vpop.f32.mrb[0].mxu0
      %1993 = vmatprep.mubr.bf16.mxu0 0
      %1994 = vmatmul.mubr.bf16.gmra.mrb[0].mxu0 %v1261
      %v1995 = vpop.f32.mrb[0].mxu0
      %v1996 = vadd.f32 0.0, %v1995
      %v1997 = vpop.f32.mrb[0].mxu0
      %v1998 = vpop.f32.mrb[0].mxu0
      %v1999 = vadd.f32 0.0, %v1998
      %v2000 = vpop.f32.mrb[0].mxu0
      %2001 = vmatprep.mubr.bf16.mxu0 0
      %2002 = vmatmul.mubr.bf16.gmra.mrb[0].mxu0 %v1264
      %v2003 = vpop.f32.mrb[0].mxu0
      %v2004 = vadd.f32 0.0, %v2003
      %v2005 = vpop.f32.mrb[0].mxu0
      %v2006 = vpop.f32.mrb[0].mxu0
      %v2007 = vadd.f32 0.0, %v2006
      %v2008 = vpop.f32.mrb[0].mxu0
      %2009 = vmatprep.mubr.bf16.mxu0 0
      %2010 = vmatmul.mubr.bf16.gmra.mrb[0].mxu0 %v1267
      %v2011 = vpop.f32.mrb[0].mxu0
      %v2012 = vadd.f32 0.0, %v2011
      %v2013 = vpop.f32.mrb[0].mxu0
      %v2014 = vpop.f32.mrb[0].mxu0
      %v2015 = vadd.f32 0.0, %v2014
      %v2016 = vpop.f32.mrb[0].mxu0
      %2017 = vmatprep.mubr.bf16.mxu0 0
      %2018 = vmatmul.mubr.bf16.gmra.mrb[0].mxu0 %v1270
      %v2019 = vpop.f32.mrb[0].mxu0
      %v2020 = vadd.f32 0.0, %v2019
      %v2021 = vpop.f32.mrb[0].mxu0
      %v2022 = vpop.f32.mrb[0].mxu0
      %v2023 = vadd.f32 0.0, %v2022
      %v2024 = vpop.f32.mrb[0].mxu0
      %2025 = vmatprep.mubr.bf16.mxu0 0
      %2026 = vmatmul.mubr.bf16.gmra.mrb[0].mxu0 %v1273
      %v2027 = vpop.f32.mrb[0].mxu0
      %v2028 = vadd.f32 0.0, %v2027
      %v2029 = vpop.f32.mrb[0].mxu0
      %v2030 = vpop.f32.mrb[0].mxu0
      %v2031 = vadd.f32 0.0, %v2030
      %v2032 = vpop.f32.mrb[0].mxu0
      %2033 = vmatprep.mubr.bf16.mxu0 0
      %2034 = vmatmul.mubr.bf16.gmra.mrb[0].mxu0 %v1876
      %v2035 = vpop.f32.mrb[0].mxu0
      %v2036 = vadd.f32 0.0, %v2035
      %v2037 = vpop.f32.mrb[0].mxu0
      %v2038 = vpop.f32.mrb[0].mxu0
      %v2039 = vadd.f32 0.0, %v2038
      %v2040 = vpop.f32.mrb[0].mxu0
      %2041 = vdwg.mxu0
      %v2042 = vadd.f32 %v1841, %v1916
      %v2043 = vadd.f32 %v1842, %v1919
      %v2044 = vadd.f32 %v1843, %v1924
      %v2045 = vadd.f32 %v1844, %v1927
      %v2046 = vadd.f32 %v1845, %v1932
      %v2047 = vadd.f32 %v1846, %v1935
      %v2048 = vadd.f32 %v1847, %v1940
      %v2049 = vadd.f32 %v1848, %v1943
      %v2050 = vadd.f32 %v1849, %v1948
      %v2051 = vadd.f32 %v1850, %v1951
      %v2052 = vadd.f32 %v1851, %v1956
      %v2053 = vadd.f32 %v1852, %v1959
      %v2054 = vadd.f32 %v1853, %v1964
      %v2055 = vadd.f32 %v1854, %v1967
      %v2056 = vadd.f32 %v1855, %v1972
      %v2057 = vadd.f32 %v1856, %v1975
      %v2058 = vadd.f32 %v1857, %v1980
      %v2059 = vadd.f32 %v1858, %v1983
      %v2060 = vadd.f32 %v1859, %v1988
      %v2061 = vadd.f32 %v1860, %v1991
      %v2062 = vadd.f32 %v1861, %v1996
      %v2063 = vadd.f32 %v1862, %v1999
      %v2064 = vadd.f32 %v1863, %v2004
      %v2065 = vadd.f32 %v1864, %v2007
      %v2066 = vadd.f32 %v1865, %v2012
      %v2067 = vadd.f32 %v1866, %v2015
      %v2068 = vadd.f32 %v1867, %v2020
      %v2069 = vadd.f32 %v1868, %v2023
      %v2070 = vadd.f32 %v1869, %v2028
      %v2071 = vadd.f32 %v1870, %v2031
      %v2072 = vadd.f32 %v1871, %v2036
      %v2073 = vadd.f32 %v1872, %v2039
      %v2074 = vpack.c.bf16 %v440, %v439
      %v2075 = vld [vmem:[%s1 + $0x18] sm:$0xf]
      %v2077 = vsel %vm784, %v2074, 0
      %v2080 = vsel %vm833, %v2075, 0
      %2082 = vmatprep.subr.bf16.mxu0 0
      %2083 = vmatpush1.bf16.msra.mxu0 %v2080
      %2084 = vmatprep.subr.bf16.mxu0 0
      %2085 = vmatpush1.bf16.msra.mxu0 0
      %2086 = vmatprep.subr.bf16.mxu0 0
      %2087 = vmatpush1.bf16.msra.mxu0 0
      %2088 = vmatprep.subr.bf16.mxu0 0
      %2089 = vmatpush1.bf16.msra.mxu0 0
      %2090 = vmatprep.subr.bf16.mxu0 0
      %2091 = vmatpush1.bf16.msra.mxu0 0
      %2092 = vmatprep.subr.bf16.mxu0 0
      %2093 = vmatpush1.bf16.msra.mxu0 0
      %2094 = vmatprep.subr.bf16.mxu0 0
      %2095 = vmatpush1.bf16.msra.mxu0 0
      %2096 = vmatprep.subr.bf16.mxu0 0
      %2097 = vmatpush1.bf16.msra.mxu0 0
      %2098 = vmatprep.subr.bf16.mxu0 0
      %2099 = vmatpush1.bf16.msra.mxu0 0
      %2100 = vmatprep.subr.bf16.mxu0 0
      %2101 = vmatpush1.bf16.msra.mxu0 0
      %2102 = vmatprep.subr.bf16.mxu0 0
      %2103 = vmatpush1.bf16.msra.mxu0 0
      %2104 = vmatprep.subr.bf16.mxu0 0
      %2105 = vmatpush1.bf16.msra.mxu0 0
      %2106 = vmatprep.subr.bf16.mxu0 0
      %2107 = vmatpush1.bf16.msra.mxu0 0
      %2108 = vmatprep.subr.bf16.mxu0 0
      %2109 = vmatpush1.bf16.msra.mxu0 0
      %2110 = vmatprep.subr.bf16.mxu0 0
      %2111 = vmatpush1.bf16.msra.mxu0 0
      %2112 = vmatprep.subr.bf16.mxu0 0
      %2113 = vmatpush1.bf16.msra.mxu0 0
      %2114 = vmatprep.mubr.bf16.mxu0 0
      %2115 = vmatmul.mubr.bf16.gmra.mrb[0].mxu0 %v1005
      %v2116 = vpop.f32.mrb[0].mxu0
      %v2117 = vadd.f32 0.0, %v2116
      %v2118 = vpop.f32.mrb[0].mxu0
      %v2119 = vpop.f32.mrb[0].mxu0
      %v2120 = vadd.f32 0.0, %v2119
      %v2121 = vpop.f32.mrb[0].mxu0
      %2122 = vmatprep.mubr.bf16.mxu0 0
      %2123 = vmatmul.mubr.bf16.gmra.mrb[0].mxu0 %v1008
      %v2124 = vpop.f32.mrb[0].mxu0
      %v2125 = vadd.f32 0.0, %v2124
      %v2126 = vpop.f32.mrb[0].mxu0
      %v2127 = vpop.f32.mrb[0].mxu0
      %v2128 = vadd.f32 0.0, %v2127
      %v2129 = vpop.f32.mrb[0].mxu0
      %2130 = vmatprep.mubr.bf16.mxu0 0
      %2131 = vmatmul.mubr.bf16.gmra.mrb[0].mxu0 %v1011
      %v2132 = vpop.f32.mrb[0].mxu0
      %v2133 = vadd.f32 0.0, %v2132
      %v2134 = vpop.f32.mrb[0].mxu0
      %v2135 = vpop.f32.mrb[0].mxu0
      %v2136 = vadd.f32 0.0, %v2135
      %v2137 = vpop.f32.mrb[0].mxu0
      %2138 = vmatprep.mubr.bf16.mxu0 0
      %2139 = vmatmul.mubr.bf16.gmra.mrb[0].mxu0 %v1014
      %v2140 = vpop.f32.mrb[0].mxu0
      %v2141 = vadd.f32 0.0, %v2140
      %v2142 = vpop.f32.mrb[0].mxu0
      %v2143 = vpop.f32.mrb[0].mxu0
      %v2144 = vadd.f32 0.0, %v2143
      %v2145 = vpop.f32.mrb[0].mxu0
      %2146 = vmatprep.mubr.bf16.mxu0 0
      %2147 = vmatmul.mubr.bf16.gmra.mrb[0].mxu0 %v1017
      %v2148 = vpop.f32.mrb[0].mxu0
      %v2149 = vadd.f32 0.0, %v2148
      %v2150 = vpop.f32.mrb[0].mxu0
      %v2151 = vpop.f32.mrb[0].mxu0
      %v2152 = vadd.f32 0.0, %v2151
      %v2153 = vpop.f32.mrb[0].mxu0
      %2154 = vmatprep.mubr.bf16.mxu0 0
      %2155 = vmatmul.mubr.bf16.gmra.mrb[0].mxu0 %v1020
      %v2156 = vpop.f32.mrb[0].mxu0
      %v2157 = vadd.f32 0.0, %v2156
      %v2158 = vpop.f32.mrb[0].mxu0
      %v2159 = vpop.f32.mrb[0].mxu0
      %v2160 = vadd.f32 0.0, %v2159
      %v2161 = vpop.f32.mrb[0].mxu0
      %2162 = vmatprep.mubr.bf16.mxu0 0
      %2163 = vmatmul.mubr.bf16.gmra.mrb[0].mxu0 %v1023
      %v2164 = vpop.f32.mrb[0].mxu0
      %v2165 = vadd.f32 0.0, %v2164
      %v2166 = vpop.f32.mrb[0].mxu0
      %v2167 = vpop.f32.mrb[0].mxu0
      %v2168 = vadd.f32 0.0, %v2167
      %v2169 = vpop.f32.mrb[0].mxu0
      %2170 = vmatprep.mubr.bf16.mxu0 0
      %2171 = vmatmul.mubr.bf16.gmra.mrb[0].mxu0 %v1026
      %v2172 = vpop.f32.mrb[0].mxu0
      %v2173 = vadd.f32 0.0, %v2172
      %v2174 = vpop.f32.mrb[0].mxu0
      %v2175 = vpop.f32.mrb[0].mxu0
      %v2176 = vadd.f32 0.0, %v2175
      %v2177 = vpop.f32.mrb[0].mxu0
      %2178 = vmatprep.mubr.bf16.mxu0 0
      %2179 = vmatmul.mubr.bf16.gmra.mrb[0].mxu0 %v1029
      %v2180 = vpop.f32.mrb[0].mxu0
      %v2181 = vadd.f32 0.0, %v2180
      %v2182 = vpop.f32.mrb[0].mxu0
      %v2183 = vpop.f32.mrb[0].mxu0
      %v2184 = vadd.f32 0.0, %v2183
      %v2185 = vpop.f32.mrb[0].mxu0
      %2186 = vmatprep.mubr.bf16.mxu0 0
      %2187 = vmatmul.mubr.bf16.gmra.mrb[0].mxu0 %v1032
      %v2188 = vpop.f32.mrb[0].mxu0
      %v2189 = vadd.f32 0.0, %v2188
      %v2190 = vpop.f32.mrb[0].mxu0
      %v2191 = vpop.f32.mrb[0].mxu0
      %v2192 = vadd.f32 0.0, %v2191
      %v2193 = vpop.f32.mrb[0].mxu0
      %2194 = vmatprep.mubr.bf16.mxu0 0
      %2195 = vmatmul.mubr.bf16.gmra.mrb[0].mxu0 %v1035
      %v2196 = vpop.f32.mrb[0].mxu0
      %v2197 = vadd.f32 0.0, %v2196
      %v2198 = vpop.f32.mrb[0].mxu0
      %v2199 = vpop.f32.mrb[0].mxu0
      %v2200 = vadd.f32 0.0, %v2199
      %v2201 = vpop.f32.mrb[0].mxu0
      %2202 = vmatprep.mubr.bf16.mxu0 0
      %2203 = vmatmul.mubr.bf16.gmra.mrb[0].mxu0 %v1038
      %v2204 = vpop.f32.mrb[0].mxu0
      %v2205 = vadd.f32 0.0, %v2204
      %v2206 = vpop.f32.mrb[0].mxu0
      %v2207 = vpop.f32.mrb[0].mxu0
      %v2208 = vadd.f32 0.0, %v2207
      %v2209 = vpop.f32.mrb[0].mxu0
      %2210 = vmatprep.mubr.bf16.mxu0 0
      %2211 = vmatmul.mubr.bf16.gmra.mrb[0].mxu0 %v1041
      %v2212 = vpop.f32.mrb[0].mxu0
      %v2213 = vadd.f32 0.0, %v2212
      %v2214 = vpop.f32.mrb[0].mxu0
      %v2215 = vpop.f32.mrb[0].mxu0
      %v2216 = vadd.f32 0.0, %v2215
      %v2217 = vpop.f32.mrb[0].mxu0
      %2218 = vmatprep.mubr.bf16.mxu0 0
      %2219 = vmatmul.mubr.bf16.gmra.mrb[0].mxu0 %v1044
      %v2220 = vpop.f32.mrb[0].mxu0
      %v2221 = vadd.f32 0.0, %v2220
      %v2222 = vpop.f32.mrb[0].mxu0
      %v2223 = vpop.f32.mrb[0].mxu0
      %v2224 = vadd.f32 0.0, %v2223
      %v2225 = vpop.f32.mrb[0].mxu0
      %2226 = vmatprep.mubr.bf16.mxu0 0
      %2227 = vmatmul.mubr.bf16.gmra.mrb[0].mxu0 %v1474
      %v2228 = vpop.f32.mrb[0].mxu0
      %v2229 = vadd.f32 0.0, %v2228
      %v2230 = vpop.f32.mrb[0].mxu0
      %v2231 = vpop.f32.mrb[0].mxu0
      %v2232 = vadd.f32 0.0, %v2231
      %v2233 = vpop.f32.mrb[0].mxu0
      %2234 = vmatprep.mubr.bf16.mxu0 0
      %2235 = vmatmul.mubr.bf16.gmra.mrb[0].mxu0 %v2077
      %v2236 = vpop.f32.mrb[0].mxu0
      %v2237 = vadd.f32 0.0, %v2236
      %v2238 = vpop.f32.mrb[0].mxu0
      %v2239 = vpop.f32.mrb[0].mxu0
      %v2240 = vadd.f32 0.0, %v2239
      %v2241 = vpop.f32.mrb[0].mxu0
      %2242 = vdwg.mxu0
      %v2243 = vadd.f32 %v2042, %v2117
      %v2244 = vadd.f32 %v2043, %v2120
      %v2245 = vadd.f32 %v2044, %v2125
      %v2246 = vadd.f32 %v2045, %v2128
      %v2247 = vadd.f32 %v2046, %v2133
      %v2248 = vadd.f32 %v2047, %v2136
      %v2249 = vadd.f32 %v2048, %v2141
      %v2250 = vadd.f32 %v2049, %v2144
      %v2251 = vadd.f32 %v2050, %v2149
      %v2252 = vadd.f32 %v2051, %v2152
      %v2253 = vadd.f32 %v2052, %v2157
      %v2254 = vadd.f32 %v2053, %v2160
      %v2255 = vadd.f32 %v2054, %v2165
      %v2256 = vadd.f32 %v2055, %v2168
      %v2257 = vadd.f32 %v2056, %v2173
      %v2258 = vadd.f32 %v2057, %v2176
      %v2259 = vadd.f32 %v2058, %v2181
      %v2260 = vadd.f32 %v2059, %v2184
      %v2261 = vadd.f32 %v2060, %v2189
      %v2262 = vadd.f32 %v2061, %v2192
      %v2263 = vadd.f32 %v2062, %v2197
      %v2264 = vadd.f32 %v2063, %v2200
      %v2265 = vadd.f32 %v2064, %v2205
      %v2266 = vadd.f32 %v2065, %v2208
      %v2267 = vadd.f32 %v2066, %v2213
      %v2268 = vadd.f32 %v2067, %v2216
      %v2269 = vadd.f32 %v2068, %v2221
      %v2270 = vadd.f32 %v2069, %v2224
      %v2271 = vadd.f32 %v2070, %v2229
      %v2272 = vadd.f32 %v2071, %v2232
      %v2273 = vadd.f32 %v2072, %v2237
      %v2274 = vadd.f32 %v2073, %v2240
      %v2275 = vpack.c.bf16 %v740, %v738
      %v2276 = vld [vmem:[%s1 + $0x1c] sm:$0xf]
      %v2278 = vsel %vm784, %v2275, 0
      %v2281 = vsel %vm833, %v2276, 0
      %2283 = vmatprep.subr.bf16.mxu0 0
      %2284 = vmatpush1.bf16.msra.mxu0 %v2281
      %2285 = vmatprep.subr.bf16.mxu0 0
      %2286 = vmatpush1.bf16.msra.mxu0 0
      %2287 = vmatprep.subr.bf16.mxu0 0
      %2288 = vmatpush1.bf16.msra.mxu0 0
      %2289 = vmatprep.subr.bf16.mxu0 0
      %2290 = vmatpush1.bf16.msra.mxu0 0
      %2291 = vmatprep.subr.bf16.mxu0 0
      %2292 = vmatpush1.bf16.msra.mxu0 0
      %2293 = vmatprep.subr.bf16.mxu0 0
      %2294 = vmatpush1.bf16.msra.mxu0 0
      %2295 = vmatprep.subr.bf16.mxu0 0
      %2296 = vmatpush1.bf16.msra.mxu0 0
      %2297 = vmatprep.subr.bf16.mxu0 0
      %2298 = vmatpush1.bf16.msra.mxu0 0
      %2299 = vmatprep.subr.bf16.mxu0 0
      %2300 = vmatpush1.bf16.msra.mxu0 0
      %2301 = vmatprep.subr.bf16.mxu0 0
      %2302 = vmatpush1.bf16.msra.mxu0 0
      %2303 = vmatprep.subr.bf16.mxu0 0
      %2304 = vmatpush1.bf16.msra.mxu0 0
      %2305 = vmatprep.subr.bf16.mxu0 0
      %2306 = vmatpush1.bf16.msra.mxu0 0
      %2307 = vmatprep.subr.bf16.mxu0 0
      %2308 = vmatpush1.bf16.msra.mxu0 0
      %2309 = vmatprep.subr.bf16.mxu0 0
      %2310 = vmatpush1.bf16.msra.mxu0 0
      %2311 = vmatprep.subr.bf16.mxu0 0
      %2312 = vmatpush1.bf16.msra.mxu0 0
      %2313 = vmatprep.subr.bf16.mxu0 0
      %2314 = vmatpush1.bf16.msra.mxu0 0
      %2315 = vmatprep.mubr.bf16.mxu0 0
      %2316 = vmatmul.mubr.bf16.gmra.mrb[0].mxu0 %v792
      %v2317 = vpop.f32.mrb[0].mxu0
      %v2318 = vadd.f32 0.0, %v2317
      %v2319 = vpop.f32.mrb[0].mxu0
      %v2320 = vpop.f32.mrb[0].mxu0
      %v2321 = vadd.f32 0.0, %v2320
      %v2322 = vpop.f32.mrb[0].mxu0
      %2323 = vmatprep.mubr.bf16.mxu0 0
      %2324 = vmatmul.mubr.bf16.gmra.mrb[0].mxu0 %v795
      %v2325 = vpop.f32.mrb[0].mxu0
      %v2326 = vadd.f32 0.0, %v2325
      %v2327 = vpop.f32.mrb[0].mxu0
      %v2328 = vpop.f32.mrb[0].mxu0
      %v2329 = vadd.f32 0.0, %v2328
      %v2330 = vpop.f32.mrb[0].mxu0
      %2331 = vmatprep.mubr.bf16.mxu0 0
      %2332 = vmatmul.mubr.bf16.gmra.mrb[0].mxu0 %v798
      %v2333 = vpop.f32.mrb[0].mxu0
      %v2334 = vadd.f32 0.0, %v2333
      %v2335 = vpop.f32.mrb[0].mxu0
      %v2336 = vpop.f32.mrb[0].mxu0
      %v2337 = vadd.f32 0.0, %v2336
      %v2338 = vpop.f32.mrb[0].mxu0
      %2339 = vmatprep.mubr.bf16.mxu0 0
      %2340 = vmatmul.mubr.bf16.gmra.mrb[0].mxu0 %v801
      %v2341 = vpop.f32.mrb[0].mxu0
      %v2342 = vadd.f32 0.0, %v2341
      %v2343 = vpop.f32.mrb[0].mxu0
      %v2344 = vpop.f32.mrb[0].mxu0
      %v2345 = vadd.f32 0.0, %v2344
      %v2346 = vpop.f32.mrb[0].mxu0
      %2347 = vmatprep.mubr.bf16.mxu0 0
      %2348 = vmatmul.mubr.bf16.gmra.mrb[0].mxu0 %v804
      %v2349 = vpop.f32.mrb[0].mxu0
      %v2350 = vadd.f32 0.0, %v2349
      %v2351 = vpop.f32.mrb[0].mxu0
      %v2352 = vpop.f32.mrb[0].mxu0
      %v2353 = vadd.f32 0.0, %v2352
      %v2354 = vpop.f32.mrb[0].mxu0
      %2355 = vmatprep.mubr.bf16.mxu0 0
      %2356 = vmatmul.mubr.bf16.gmra.mrb[0].mxu0 %v807
      %v2357 = vpop.f32.mrb[0].mxu0
      %v2358 = vadd.f32 0.0, %v2357
      %v2359 = vpop.f32.mrb[0].mxu0
      %v2360 = vpop.f32.mrb[0].mxu0
      %v2361 = vadd.f32 0.0, %v2360
      %v2362 = vpop.f32.mrb[0].mxu0
      %2363 = vmatprep.mubr.bf16.mxu0 0
      %2364 = vmatmul.mubr.bf16.gmra.mrb[0].mxu0 %v810
      %v2365 = vpop.f32.mrb[0].mxu0
      %v2366 = vadd.f32 0.0, %v2365
      %v2367 = vpop.f32.mrb[0].mxu0
      %v2368 = vpop.f32.mrb[0].mxu0
      %v2369 = vadd.f32 0.0, %v2368
      %v2370 = vpop.f32.mrb[0].mxu0
      %2371 = vmatprep.mubr.bf16.mxu0 0
      %2372 = vmatmul.mubr.bf16.gmra.mrb[0].mxu0 %v813
      %v2373 = vpop.f32.mrb[0].mxu0
      %v2374 = vadd.f32 0.0, %v2373
      %v2375 = vpop.f32.mrb[0].mxu0
      %v2376 = vpop.f32.mrb[0].mxu0
      %v2377 = vadd.f32 0.0, %v2376
      %v2378 = vpop.f32.mrb[0].mxu0
      %2379 = vmatprep.mubr.bf16.mxu0 0
      %2380 = vmatmul.mubr.bf16.gmra.mrb[0].mxu0 %v816
      %v2381 = vpop.f32.mrb[0].mxu0
      %v2382 = vadd.f32 0.0, %v2381
      %v2383 = vpop.f32.mrb[0].mxu0
      %v2384 = vpop.f32.mrb[0].mxu0
      %v2385 = vadd.f32 0.0, %v2384
      %v2386 = vpop.f32.mrb[0].mxu0
      %2387 = vmatprep.mubr.bf16.mxu0 0
      %2388 = vmatmul.mubr.bf16.gmra.mrb[0].mxu0 %v819
      %v2389 = vpop.f32.mrb[0].mxu0
      %v2390 = vadd.f32 0.0, %v2389
      %v2391 = vpop.f32.mrb[0].mxu0
      %v2392 = vpop.f32.mrb[0].mxu0
      %v2393 = vadd.f32 0.0, %v2392
      %v2394 = vpop.f32.mrb[0].mxu0
      %2395 = vmatprep.mubr.bf16.mxu0 0
      %2396 = vmatmul.mubr.bf16.gmra.mrb[0].mxu0 %v822
      %v2397 = vpop.f32.mrb[0].mxu0
      %v2398 = vadd.f32 0.0, %v2397
      %v2399 = vpop.f32.mrb[0].mxu0
      %v2400 = vpop.f32.mrb[0].mxu0
      %v2401 = vadd.f32 0.0, %v2400
      %v2402 = vpop.f32.mrb[0].mxu0
      %2403 = vmatprep.mubr.bf16.mxu0 0
      %2404 = vmatmul.mubr.bf16.gmra.mrb[0].mxu0 %v825
      %v2405 = vpop.f32.mrb[0].mxu0
      %v2406 = vadd.f32 0.0, %v2405
      %v2407 = vpop.f32.mrb[0].mxu0
      %v2408 = vpop.f32.mrb[0].mxu0
      %v2409 = vadd.f32 0.0, %v2408
      %v2410 = vpop.f32.mrb[0].mxu0
      %2411 = vmatprep.mubr.bf16.mxu0 0
      %2412 = vmatmul.mubr.bf16.gmra.mrb[0].mxu0 %v828
      %v2413 = vpop.f32.mrb[0].mxu0
      %v2414 = vadd.f32 0.0, %v2413
      %v2415 = vpop.f32.mrb[0].mxu0
      %v2416 = vpop.f32.mrb[0].mxu0
      %v2417 = vadd.f32 0.0, %v2416
      %v2418 = vpop.f32.mrb[0].mxu0
      %2419 = vmatprep.mubr.bf16.mxu0 0
      %2420 = vmatmul.mubr.bf16.gmra.mrb[0].mxu0 %v831
      %v2421 = vpop.f32.mrb[0].mxu0
      %v2422 = vadd.f32 0.0, %v2421
      %v2423 = vpop.f32.mrb[0].mxu0
      %v2424 = vpop.f32.mrb[0].mxu0
      %v2425 = vadd.f32 0.0, %v2424
      %v2426 = vpop.f32.mrb[0].mxu0
      %2427 = vmatprep.mubr.bf16.mxu0 0
      %2428 = vmatmul.mubr.bf16.gmra.mrb[0].mxu0 %v1675
      %v2429 = vpop.f32.mrb[0].mxu0
      %v2430 = vadd.f32 0.0, %v2429
      %v2431 = vpop.f32.mrb[0].mxu0
      %v2432 = vpop.f32.mrb[0].mxu0
      %v2433 = vadd.f32 0.0, %v2432
      %v2434 = vpop.f32.mrb[0].mxu0
      %2435 = vmatprep.mubr.bf16.mxu0 0
      %2436 = vmatmul.mubr.bf16.gmra.mrb[0].mxu0 %v2278
      %v2437 = vpop.f32.mrb[0].mxu0
      %v2438 = vadd.f32 0.0, %v2437
      %v2439 = vpop.f32.mrb[0].mxu0
      %v2440 = vpop.f32.mrb[0].mxu0
      %v2441 = vadd.f32 0.0, %v2440
      %v2442 = vpop.f32.mrb[0].mxu0
      %2443 = vdwg.mxu0
      %v2444 = vadd.f32 %v2243, %v2318
      %v2445 = vadd.f32 %v2244, %v2321
      %v2446 = vadd.f32 %v2245, %v2326
      %v2447 = vadd.f32 %v2246, %v2329
      %v2448 = vadd.f32 %v2247, %v2334
      %v2449 = vadd.f32 %v2248, %v2337
      %v2450 = vadd.f32 %v2249, %v2342
      %v2451 = vadd.f32 %v2250, %v2345
      %v2452 = vadd.f32 %v2251, %v2350
      %v2453 = vadd.f32 %v2252, %v2353
      %v2454 = vadd.f32 %v2253, %v2358
      %v2455 = vadd.f32 %v2254, %v2361
      %v2456 = vadd.f32 %v2255, %v2366
      %v2457 = vadd.f32 %v2256, %v2369
      %v2458 = vadd.f32 %v2257, %v2374
      %v2459 = vadd.f32 %v2258, %v2377
      %v2460 = vadd.f32 %v2259, %v2382
      %v2461 = vadd.f32 %v2260, %v2385
      %v2462 = vadd.f32 %v2261, %v2390
      %v2463 = vadd.f32 %v2262, %v2393
      %v2464 = vadd.f32 %v2263, %v2398
      %v2465 = vadd.f32 %v2264, %v2401
      %v2466 = vadd.f32 %v2265, %v2406
      %v2467 = vadd.f32 %v2266, %v2409
      %v2468 = vadd.f32 %v2267, %v2414
      %v2469 = vadd.f32 %v2268, %v2417
      %v2470 = vadd.f32 %v2269, %v2422
      %v2471 = vadd.f32 %v2270, %v2425
      %v2472 = vadd.f32 %v2271, %v2430
      %v2473 = vadd.f32 %v2272, %v2433
      %v2474 = vadd.f32 %v2273, %v2438
      %v2475 = vadd.f32 %v2274, %v2441
      %v2476 = vpack.c.bf16 %v747, %v745
      %v2477 = vld [vmem:[%s1 + $0x20] sm:$0xf]
      %v2479 = vsel %vm784, %v2476, 0
      %v2482 = vsel %vm833, %v2477, 0
      %2484 = vmatprep.subr.bf16.mxu0 0
      %2485 = vmatpush1.bf16.msra.mxu0 %v2482
      %2486 = vmatprep.subr.bf16.mxu0 0
      %2487 = vmatpush1.bf16.msra.mxu0 0
      %2488 = vmatprep.subr.bf16.mxu0 0
      %2489 = vmatpush1.bf16.msra.mxu0 0
      %2490 = vmatprep.subr.bf16.mxu0 0
      %2491 = vmatpush1.bf16.msra.mxu0 0
      %2492 = vmatprep.subr.bf16.mxu0 0
      %2493 = vmatpush1.bf16.msra.mxu0 0
      %2494 = vmatprep.subr.bf16.mxu0 0
      %2495 = vmatpush1.bf16.msra.mxu0 0
      %2496 = vmatprep.subr.bf16.mxu0 0
      %2497 = vmatpush1.bf16.msra.mxu0 0
      %2498 = vmatprep.subr.bf16.mxu0 0
      %2499 = vmatpush1.bf16.msra.mxu0 0
      %2500 = vmatprep.subr.bf16.mxu0 0
      %2501 = vmatpush1.bf16.msra.mxu0 0
      %2502 = vmatprep.subr.bf16.mxu0 0
      %2503 = vmatpush1.bf16.msra.mxu0 0
      %2504 = vmatprep.subr.bf16.mxu0 0
      %2505 = vmatpush1.bf16.msra.mxu0 0
      %2506 = vmatprep.subr.bf16.mxu0 0
      %2507 = vmatpush1.bf16.msra.mxu0 0
      %2508 = vmatprep.subr.bf16.mxu0 0
      %2509 = vmatpush1.bf16.msra.mxu0 0
      %2510 = vmatprep.subr.bf16.mxu0 0
      %2511 = vmatpush1.bf16.msra.mxu0 0
      %2512 = vmatprep.subr.bf16.mxu0 0
      %2513 = vmatpush1.bf16.msra.mxu0 0
      %2514 = vmatprep.subr.bf16.mxu0 0
      %2515 = vmatpush1.bf16.msra.mxu0 0
      %2516 = vmatprep.mubr.bf16.mxu0 0
      %2517 = vmatmul.mubr.bf16.gmra.mrb[0].mxu0 %v1234
      %v2518 = vpop.f32.mrb[0].mxu0
      %v2519 = vadd.f32 0.0, %v2518
      %v2520 = vpop.f32.mrb[0].mxu0
      %v2521 = vpop.f32.mrb[0].mxu0
      %v2522 = vadd.f32 0.0, %v2521
      %v2523 = vpop.f32.mrb[0].mxu0
      %2524 = vmatprep.mubr.bf16.mxu0 0
      %2525 = vmatmul.mubr.bf16.gmra.mrb[0].mxu0 %v1237
      %v2526 = vpop.f32.mrb[0].mxu0
      %v2527 = vadd.f32 0.0, %v2526
      %v2528 = vpop.f32.mrb[0].mxu0
      %v2529 = vpop.f32.mrb[0].mxu0
      %v2530 = vadd.f32 0.0, %v2529
      %v2531 = vpop.f32.mrb[0].mxu0
      %2532 = vmatprep.mubr.bf16.mxu0 0
      %2533 = vmatmul.mubr.bf16.gmra.mrb[0].mxu0 %v1240
      %v2534 = vpop.f32.mrb[0].mxu0
      %v2535 = vadd.f32 0.0, %v2534
      %v2536 = vpop.f32.mrb[0].mxu0
      %v2537 = vpop.f32.mrb[0].mxu0
      %v2538 = vadd.f32 0.0, %v2537
      %v2539 = vpop.f32.mrb[0].mxu0
      %2540 = vmatprep.mubr.bf16.mxu0 0
      %2541 = vmatmul.mubr.bf16.gmra.mrb[0].mxu0 %v1243
      %v2542 = vpop.f32.mrb[0].mxu0
      %v2543 = vadd.f32 0.0, %v2542
      %v2544 = vpop.f32.mrb[0].mxu0
      %v2545 = vpop.f32.mrb[0].mxu0
      %v2546 = vadd.f32 0.0, %v2545
      %v2547 = vpop.f32.mrb[0].mxu0
      %2548 = vmatprep.mubr.bf16.mxu0 0
      %2549 = vmatmul.mubr.bf16.gmra.mrb[0].mxu0 %v1246
      %v2550 = vpop.f32.mrb[0].mxu0
      %v2551 = vadd.f32 0.0, %v2550
      %v2552 = vpop.f32.mrb[0].mxu0
      %v2553 = vpop.f32.mrb[0].mxu0
      %v2554 = vadd.f32 0.0, %v2553
      %v2555 = vpop.f32.mrb[0].mxu0
      %2556 = vmatprep.mubr.bf16.mxu0 0
      %2557 = vmatmul.mubr.bf16.gmra.mrb[0].mxu0 %v1249
      %v2558 = vpop.f32.mrb[0].mxu0
      %v2559 = vadd.f32 0.0, %v2558
      %v2560 = vpop.f32.mrb[0].mxu0
      %v2561 = vpop.f32.mrb[0].mxu0
      %v2562 = vadd.f32 0.0, %v2561
      %v2563 = vpop.f32.mrb[0].mxu0
      %2564 = vmatprep.mubr.bf16.mxu0 0
      %2565 = vmatmul.mubr.bf16.gmra.mrb[0].mxu0 %v1252
      %v2566 = vpop.f32.mrb[0].mxu0
      %v2567 = vadd.f32 0.0, %v2566
      %v2568 = vpop.f32.mrb[0].mxu0
      %v2569 = vpop.f32.mrb[0].mxu0
      %v2570 = vadd.f32 0.0, %v2569
      %v2571 = vpop.f32.mrb[0].mxu0
      %2572 = vmatprep.mubr.bf16.mxu0 0
      %2573 = vmatmul.mubr.bf16.gmra.mrb[0].mxu0 %v1255
      %v2574 = vpop.f32.mrb[0].mxu0
      %v2575 = vadd.f32 0.0, %v2574
      %v2576 = vpop.f32.mrb[0].mxu0
      %v2577 = vpop.f32.mrb[0].mxu0
      %v2578 = vadd.f32 0.0, %v2577
      %v2579 = vpop.f32.mrb[0].mxu0
      %2580 = vmatprep.mubr.bf16.mxu0 0
      %2581 = vmatmul.mubr.bf16.gmra.mrb[0].mxu0 %v1258
      %v2582 = vpop.f32.mrb[0].mxu0
      %v2583 = vadd.f32 0.0, %v2582
      %v2584 = vpop.f32.mrb[0].mxu0
      %v2585 = vpop.f32.mrb[0].mxu0
      %v2586 = vadd.f32 0.0, %v2585
      %v2587 = vpop.f32.mrb[0].mxu0
      %2588 = vmatprep.mubr.bf16.mxu0 0
      %2589 = vmatmul.mubr.bf16.gmra.mrb[0].mxu0 %v1261
      %v2590 = vpop.f32.mrb[0].mxu0
      %v2591 = vadd.f32 0.0, %v2590
      %v2592 = vpop.f32.mrb[0].mxu0
      %v2593 = vpop.f32.mrb[0].mxu0
      %v2594 = vadd.f32 0.0, %v2593
      %v2595 = vpop.f32.mrb[0].mxu0
      %2596 = vmatprep.mubr.bf16.mxu0 0
      %2597 = vmatmul.mubr.bf16.gmra.mrb[0].mxu0 %v1264
      %v2598 = vpop.f32.mrb[0].mxu0
      %v2599 = vadd.f32 0.0, %v2598
      %v2600 = vpop.f32.mrb[0].mxu0
      %v2601 = vpop.f32.mrb[0].mxu0
      %v2602 = vadd.f32 0.0, %v2601
      %v2603 = vpop.f32.mrb[0].mxu0
      %2604 = vmatprep.mubr.bf16.mxu0 0
      %2605 = vmatmul.mubr.bf16.gmra.mrb[0].mxu0 %v1267
      %v2606 = vpop.f32.mrb[0].mxu0
      %v2607 = vadd.f32 0.0, %v2606
      %v2608 = vpop.f32.mrb[0].mxu0
      %v2609 = vpop.f32.mrb[0].mxu0
      %v2610 = vadd.f32 0.0, %v2609
      %v2611 = vpop.f32.mrb[0].mxu0
      %2612 = vmatprep.mubr.bf16.mxu0 0
      %2613 = vmatmul.mubr.bf16.gmra.mrb[0].mxu0 %v1270
      %v2614 = vpop.f32.mrb[0].mxu0
      %v2615 = vadd.f32 0.0, %v2614
      %v2616 = vpop.f32.mrb[0].mxu0
      %v2617 = vpop.f32.mrb[0].mxu0
      %v2618 = vadd.f32 0.0, %v2617
      %v2619 = vpop.f32.mrb[0].mxu0
      %2620 = vmatprep.mubr.bf16.mxu0 0
      %2621 = vmatmul.mubr.bf16.gmra.mrb[0].mxu0 %v1273
      %v2622 = vpop.f32.mrb[0].mxu0
      %v2623 = vadd.f32 0.0, %v2622
      %v2624 = vpop.f32.mrb[0].mxu0
      %v2625 = vpop.f32.mrb[0].mxu0
      %v2626 = vadd.f32 0.0, %v2625
      %v2627 = vpop.f32.mrb[0].mxu0
      %2628 = vmatprep.mubr.bf16.mxu0 0
      %2629 = vmatmul.mubr.bf16.gmra.mrb[0].mxu0 %v1876
      %v2630 = vpop.f32.mrb[0].mxu0
      %v2631 = vadd.f32 0.0, %v2630
      %v2632 = vpop.f32.mrb[0].mxu0
      %v2633 = vpop.f32.mrb[0].mxu0
      %v2634 = vadd.f32 0.0, %v2633
      %v2635 = vpop.f32.mrb[0].mxu0
      %2636 = vmatprep.mubr.bf16.mxu0 0
      %2637 = vmatmul.mubr.bf16.gmra.mrb[0].mxu0 %v2479
      %v2638 = vpop.f32.mrb[0].mxu0
      %v2639 = vadd.f32 0.0, %v2638
      %v2640 = vpop.f32.mrb[0].mxu0
      %v2641 = vpop.f32.mrb[0].mxu0
      %v2642 = vadd.f32 0.0, %v2641
      %v2643 = vpop.f32.mrb[0].mxu0
      %2644 = vdwg.mxu0
      %v2645 = vadd.f32 %v2444, %v2519
      %v2646 = vadd.f32 %v2445, %v2522
      %v2647 = vadd.f32 %v2446, %v2527
      %v2648 = vadd.f32 %v2447, %v2530
      %v2649 = vadd.f32 %v2448, %v2535
      %v2650 = vadd.f32 %v2449, %v2538
      %v2651 = vadd.f32 %v2450, %v2543
      %v2652 = vadd.f32 %v2451, %v2546
      %v2653 = vadd.f32 %v2452, %v2551
      %v2654 = vadd.f32 %v2453, %v2554
      %v2655 = vadd.f32 %v2454, %v2559
      %v2656 = vadd.f32 %v2455, %v2562
      %v2657 = vadd.f32 %v2456, %v2567
      %v2658 = vadd.f32 %v2457, %v2570
      %v2659 = vadd.f32 %v2458, %v2575
      %v2660 = vadd.f32 %v2459, %v2578
      %v2661 = vadd.f32 %v2460, %v2583
      %v2662 = vadd.f32 %v2461, %v2586
      %v2663 = vadd.f32 %v2462, %v2591
      %v2664 = vadd.f32 %v2463, %v2594
      %v2665 = vadd.f32 %v2464, %v2599
      %v2666 = vadd.f32 %v2465, %v2602
      %v2667 = vadd.f32 %v2466, %v2607
      %v2668 = vadd.f32 %v2467, %v2610
      %v2669 = vadd.f32 %v2468, %v2615
      %v2670 = vadd.f32 %v2469, %v2618
      %v2671 = vadd.f32 %v2470, %v2623
      %v2672 = vadd.f32 %v2471, %v2626
      %v2673 = vadd.f32 %v2472, %v2631
      %v2674 = vadd.f32 %v2473, %v2634
      %v2675 = vadd.f32 %v2474, %v2639
      %v2676 = vadd.f32 %v2475, %v2642
      %v2677 = vld [vmem:[%s2] sm:$0x1]
      %v2679 = vlaneseq
      %v2680 = vshrl.u32 %v2679, 7
      %v2681 = vsub.s32 0, %v2680
      %v2682 = vrot.slane %v2677, %v2681
      %v2684 = vmul.f32 %v2645, %v2682
      %v2685 = vmul.f32 %v2646, %v2682
      %v2686 = vmul.f32 %v2647, %v2682
      %v2687 = vmul.f32 %v2648, %v2682
      %v2688 = vmul.f32 %v2649, %v2682
      %v2689 = vmul.f32 %v2650, %v2682
      %v2690 = vmul.f32 %v2651, %v2682
      %v2691 = vmul.f32 %v2652, %v2682
      %v2692 = vmul.f32 %v2653, %v2682
      %v2693 = vmul.f32 %v2654, %v2682
      %v2694 = vmul.f32 %v2655, %v2682
      %v2695 = vmul.f32 %v2656, %v2682
      %v2696 = vmul.f32 %v2657, %v2682
      %v2697 = vmul.f32 %v2658, %v2682
      %v2698 = vmul.f32 %v2659, %v2682
      %v2699 = vmul.f32 %v2660, %v2682
      %v2700 = vmul.f32 %v2661, %v2682
      %v2701 = vmul.f32 %v2662, %v2682
      %v2702 = vmul.f32 %v2663, %v2682
      %v2703 = vmul.f32 %v2664, %v2682
      %v2704 = vmul.f32 %v2665, %v2682
      %v2705 = vmul.f32 %v2666, %v2682
      %v2706 = vmul.f32 %v2667, %v2682
      %v2707 = vmul.f32 %v2668, %v2682
      %v2708 = vmul.f32 %v2669, %v2682
      %v2709 = vmul.f32 %v2670, %v2682
      %v2710 = vmul.f32 %v2671, %v2682
      %v2711 = vmul.f32 %v2672, %v2682
      %v2712 = vmul.f32 %v2673, %v2682
      %v2713 = vmul.f32 %v2674, %v2682
      %v2714 = vmul.f32 %v2675, %v2682
      %v2715 = vmul.f32 %v2676, %v2682
      %v2716 = vld [vmem:[%s3] sm:$0x1]
      %v2718 = vlaneseq
      %v2719 = vshrl.u32 %v2718, 7
      %v2720 = vsub.s32 0, %v2719
      %v2721 = vrot.slane %v2716, %v2720
      %v2723 = vadd.f32 %v2684, %v2721
      %v2724 = vadd.f32 %v2685, %v2721
      %v2725 = vadd.f32 %v2686, %v2721
      %v2726 = vadd.f32 %v2687, %v2721
      %v2727 = vadd.f32 %v2688, %v2721
      %v2728 = vadd.f32 %v2689, %v2721
      %v2729 = vadd.f32 %v2690, %v2721
      %v2730 = vadd.f32 %v2691, %v2721
      %v2731 = vadd.f32 %v2692, %v2721
      %v2732 = vadd.f32 %v2693, %v2721
      %v2733 = vadd.f32 %v2694, %v2721
      %v2734 = vadd.f32 %v2695, %v2721
      %v2735 = vadd.f32 %v2696, %v2721
      %v2736 = vadd.f32 %v2697, %v2721
      %v2737 = vadd.f32 %v2698, %v2721
      %v2738 = vadd.f32 %v2699, %v2721
      %v2739 = vadd.f32 %v2700, %v2721
      %v2740 = vadd.f32 %v2701, %v2721
      %v2741 = vadd.f32 %v2702, %v2721
      %v2742 = vadd.f32 %v2703, %v2721
      %v2743 = vadd.f32 %v2704, %v2721
      %v2744 = vadd.f32 %v2705, %v2721
      %v2745 = vadd.f32 %v2706, %v2721
      %v2746 = vadd.f32 %v2707, %v2721
      %v2747 = vadd.f32 %v2708, %v2721
      %v2748 = vadd.f32 %v2709, %v2721
      %v2749 = vadd.f32 %v2710, %v2721
      %v2750 = vadd.f32 %v2711, %v2721
      %v2751 = vadd.f32 %v2712, %v2721
      %v2752 = vadd.f32 %v2713, %v2721
      %v2753 = vadd.f32 %v2714, %v2721
      %v2754 = vadd.f32 %v2715, %v2721
      %v2755 = vmax.f32 %v2723, 0.0
      %v2756 = vmax.f32 %v2724, 0.0
      %v2757 = vmax.f32 %v2725, 0.0
      %v2758 = vmax.f32 %v2726, 0.0
      %v2759 = vmax.f32 %v2727, 0.0
      %v2760 = vmax.f32 %v2728, 0.0
      %v2761 = vmax.f32 %v2729, 0.0
      %v2762 = vmax.f32 %v2730, 0.0
      %v2763 = vmax.f32 %v2731, 0.0
      %v2764 = vmax.f32 %v2732, 0.0
      %v2765 = vmax.f32 %v2733, 0.0
      %v2766 = vmax.f32 %v2734, 0.0
      %v2767 = vmax.f32 %v2735, 0.0
      %v2768 = vmax.f32 %v2736, 0.0
      %v2769 = vmax.f32 %v2737, 0.0
      %v2770 = vmax.f32 %v2738, 0.0
      %v2771 = vmax.f32 %v2739, 0.0
      %v2772 = vmax.f32 %v2740, 0.0
      %v2773 = vmax.f32 %v2741, 0.0
      %v2774 = vmax.f32 %v2742, 0.0
      %v2775 = vmax.f32 %v2743, 0.0
      %v2776 = vmax.f32 %v2744, 0.0
      %v2777 = vmax.f32 %v2745, 0.0
      %v2778 = vmax.f32 %v2746, 0.0
      %v2779 = vmax.f32 %v2747, 0.0
      %v2780 = vmax.f32 %v2748, 0.0
      %v2781 = vmax.f32 %v2749, 0.0
      %v2782 = vmax.f32 %v2750, 0.0
      %v2783 = vmax.f32 %v2751, 0.0
      %v2784 = vmax.f32 %v2752, 0.0
      %v2785 = vmax.f32 %v2753, 0.0
      %v2786 = vmax.f32 %v2754, 0.0
      %vm2787 = vcmask 130048
      %2788 = vst.msk [vmem:[#allocation2] sm:$0xff] %vm2787, 0.0
      %2789 = vst.msk [vmem:[#allocation2 + $0x8] sm:$0xff] %vm2787, 0.0
      %2790 = vst.msk [vmem:[#allocation2 + $0x10] sm:$0xff] %vm2787, 0.0
      %vm2791 = vcmask 123904
      %2792 = vst.msk [vmem:[#allocation2 + $0x18] sm:$0x3] %vm2791, 0.0
      %2793 = vst.msk [vmem:[#allocation2 + $0x20] sm:$0xff] %vm2787, 0.0
      %2794 = vst.msk [vmem:[#allocation2 + $0x28] sm:$0xff] %vm2787, 0.0
      %2795 = vst.msk [vmem:[#allocation2 + $0x30] sm:$0xff] %vm2787, 0.0
      %2796 = vst.msk [vmem:[#allocation2 + $0x38] sm:$0x3] %vm2791, 0.0
      %2797 = vst.msk [vmem:[#allocation2 + $0x40] sm:$0xff] %vm2787, 0.0
      %2798 = vst.msk [vmem:[#allocation2 + $0x48] sm:$0xff] %vm2787, 0.0
      %2799 = vst.msk [vmem:[#allocation2 + $0x50] sm:$0xff] %vm2787, 0.0
      %2800 = vst.msk [vmem:[#allocation2 + $0x58] sm:$0x3] %vm2791, 0.0
      %2801 = vst.msk [vmem:[#allocation2 + $0x60] sm:$0xff] %vm2787, 0.0
      %2802 = vst.msk [vmem:[#allocation2 + $0x68] sm:$0xff] %vm2787, 0.0
      %2803 = vst.msk [vmem:[#allocation2 + $0x70] sm:$0xff] %vm2787, 0.0
      %2804 = vst.msk [vmem:[#allocation2 + $0x78] sm:$0x3] %vm2791, 0.0
      %2805 = vst.msk [vmem:[#allocation2 + $0x80] sm:$0xff] %vm2787, 0.0
      %2806 = vst.msk [vmem:[#allocation2 + $0x88] sm:$0xff] %vm2787, 0.0
      %2807 = vst.msk [vmem:[#allocation2 + $0x90] sm:$0xff] %vm2787, 0.0
      %2808 = vst.msk [vmem:[#allocation2 + $0x98] sm:$0x3] %vm2791, 0.0
      %2809 = vst.msk [vmem:[#allocation2 + $0xa0] sm:$0xff] %vm2787, 0.0
      %2810 = vst.msk [vmem:[#allocation2 + $0xa8] sm:$0xff] %vm2787, 0.0
      %2811 = vst.msk [vmem:[#allocation2 + $0xb0] sm:$0xff] %vm2787, 0.0
      %2812 = vst.msk [vmem:[#allocation2 + $0xb8] sm:$0x3] %vm2791, 0.0
      %2813 = vst.msk [vmem:[#allocation2 + $0xc0] sm:$0xff] %vm2787, 0.0
      %2814 = vst.msk [vmem:[#allocation2 + $0xc8] sm:$0xff] %vm2787, 0.0
      %2815 = vst.msk [vmem:[#allocation2 + $0xd0] sm:$0xff] %vm2787, 0.0
      %2816 = vst.msk [vmem:[#allocation2 + $0xd8] sm:$0x3] %vm2791, 0.0
      %2817 = vst.msk [vmem:[#allocation2 + $0xe0] sm:$0xff] %vm2787, 0.0
      %2818 = vst.msk [vmem:[#allocation2 + $0xe8] sm:$0xff] %vm2787, 0.0
      %2819 = vst.msk [vmem:[#allocation2 + $0xf0] sm:$0xff] %vm2787, 0.0
      %2820 = vst.msk [vmem:[#allocation2 + $0xf8] sm:$0x3] %vm2791, 0.0
      %2821 = vst.msk [vmem:[#allocation2 + $0x100] sm:$0xff] %vm2787, 0.0
      %2822 = vst.msk [vmem:[#allocation2 + $0x108] sm:$0xff] %vm2787, 0.0
      %2823 = vst.msk [vmem:[#allocation2 + $0x110] sm:$0xff] %vm2787, 0.0
      %2824 = vst.msk [vmem:[#allocation2 + $0x118] sm:$0x3] %vm2791, 0.0
      %2825 = vst.msk [vmem:[#allocation2 + $0x120] sm:$0xff] %vm2787, 0.0
      %2826 = vst.msk [vmem:[#allocation2 + $0x128] sm:$0xff] %vm2787, 0.0
      %2827 = vst.msk [vmem:[#allocation2 + $0x130] sm:$0xff] %vm2787, 0.0
      %2828 = vst.msk [vmem:[#allocation2 + $0x138] sm:$0x3] %vm2791, 0.0
      %2829 = vst.msk [vmem:[#allocation2 + $0x140] sm:$0xff] %vm2787, 0.0
      %2830 = vst.msk [vmem:[#allocation2 + $0x148] sm:$0xff] %vm2787, 0.0
      %2831 = vst.msk [vmem:[#allocation2 + $0x150] sm:$0xff] %vm2787, 0.0
      %2832 = vst.msk [vmem:[#allocation2 + $0x158] sm:$0x3] %vm2791, 0.0
      %2833 = vst.msk [vmem:[#allocation2 + $0x160] sm:$0xff] %vm2787, 0.0
      %2834 = vst.msk [vmem:[#allocation2 + $0x168] sm:$0xff] %vm2787, 0.0
      %2835 = vst.msk [vmem:[#allocation2 + $0x170] sm:$0xff] %vm2787, 0.0
      %2836 = vst.msk [vmem:[#allocation2 + $0x178] sm:$0x3] %vm2791, 0.0
      %2837 = vst.msk [vmem:[#allocation2 + $0x180] sm:$0xff] %vm2787, 0.0
      %2838 = vst.msk [vmem:[#allocation2 + $0x188] sm:$0xff] %vm2787, 0.0
      %2839 = vst.msk [vmem:[#allocation2 + $0x190] sm:$0xff] %vm2787, 0.0
      %2840 = vst.msk [vmem:[#allocation2 + $0x198] sm:$0x3] %vm2791, 0.0
      %2841 = vst.msk [vmem:[#allocation2 + $0x1a0] sm:$0xff] %vm2787, 0.0
      %2842 = vst.msk [vmem:[#allocation2 + $0x1a8] sm:$0xff] %vm2787, 0.0
      %2843 = vst.msk [vmem:[#allocation2 + $0x1b0] sm:$0xff] %vm2787, 0.0
      %2844 = vst.msk [vmem:[#allocation2 + $0x1b8] sm:$0x3] %vm2791, 0.0
      %2845 = vst.msk [vmem:[#allocation2 + $0x1c0] sm:$0xff] %vm2787, 0.0
      %2846 = vst.msk [vmem:[#allocation2 + $0x1c8] sm:$0xff] %vm2787, 0.0
      %2847 = vst.msk [vmem:[#allocation2 + $0x1d0] sm:$0xff] %vm2787, 0.0
      %2848 = vst.msk [vmem:[#allocation2 + $0x1d8] sm:$0x3] %vm2791, 0.0
      %2849 = vst.msk [vmem:[#allocation2 + $0x1e0] sm:$0xff] %vm2787, 0.0
      %2850 = vst.msk [vmem:[#allocation2 + $0x1e8] sm:$0xff] %vm2787, 0.0
      %2851 = vst.msk [vmem:[#allocation2 + $0x1f0] sm:$0xff] %vm2787, 0.0
      %2852 = vst.msk [vmem:[#allocation2 + $0x1f8] sm:$0x3] %vm2791, 0.0
      %2853 = vst.msk [vmem:[#allocation2 + $0x200] sm:$0xff] %vm2787, 0.0
      %2854 = vst.msk [vmem:[#allocation2 + $0x208] sm:$0xff] %vm2787, 0.0
      %2855 = vst.msk [vmem:[#allocation2 + $0x210] sm:$0xff] %vm2787, 0.0
      %2856 = vst.msk [vmem:[#allocation2 + $0x218] sm:$0x3] %vm2791, 0.0
      %2857 = vst.msk [vmem:[#allocation2 + $0x220] sm:$0xff] %vm2787, 0.0
      %2858 = vst.msk [vmem:[#allocation2 + $0x228] sm:$0xff] %vm2787, 0.0
      %2859 = vst.msk [vmem:[#allocation2 + $0x230] sm:$0xff] %vm2787, 0.0
      %2860 = vst.msk [vmem:[#allocation2 + $0x238] sm:$0x3] %vm2791, 0.0
      %2861 = vst.msk [vmem:[#allocation2 + $0x240] sm:$0xff] %vm2787, 0.0
      %2862 = vst.msk [vmem:[#allocation2 + $0x248] sm:$0xff] %vm2787, 0.0
      %2863 = vst.msk [vmem:[#allocation2 + $0x250] sm:$0xff] %vm2787, 0.0
      %2864 = vst.msk [vmem:[#allocation2 + $0x258] sm:$0x3] %vm2791, 0.0
      %2865 = vst.msk [vmem:[#allocation2 + $0x260] sm:$0xff] %vm2787, 0.0
      %2866 = vst.msk [vmem:[#allocation2 + $0x268] sm:$0xff] %vm2787, 0.0
      %2867 = vst.msk [vmem:[#allocation2 + $0x270] sm:$0xff] %vm2787, 0.0
      %2868 = vst.msk [vmem:[#allocation2 + $0x278] sm:$0x3] %vm2791, 0.0
      %2869 = vst.msk [vmem:[#allocation2 + $0x280] sm:$0xff] %vm2787, 0.0
      %2870 = vst.msk [vmem:[#allocation2 + $0x288] sm:$0xff] %vm2787, 0.0
      %2871 = vst.msk [vmem:[#allocation2 + $0x290] sm:$0xff] %vm2787, 0.0
      %2872 = vst.msk [vmem:[#allocation2 + $0x298] sm:$0x3] %vm2791, 0.0
      %2873 = vst.msk [vmem:[#allocation2 + $0x2a0] sm:$0xff] %vm2787, 0.0
      %2874 = vst.msk [vmem:[#allocation2 + $0x2a8] sm:$0xff] %vm2787, 0.0
      %2875 = vst.msk [vmem:[#allocation2 + $0x2b0] sm:$0xff] %vm2787, 0.0
      %2876 = vst.msk [vmem:[#allocation2 + $0x2b8] sm:$0x3] %vm2791, 0.0
      %2877 = vst.msk [vmem:[#allocation2 + $0x2c0] sm:$0xff] %vm2787, 0.0
      %2878 = vst.msk [vmem:[#allocation2 + $0x2c8] sm:$0xff] %vm2787, 0.0
      %2879 = vst.msk [vmem:[#allocation2 + $0x2d0] sm:$0xff] %vm2787, 0.0
      %2880 = vst.msk [vmem:[#allocation2 + $0x2d8] sm:$0x3] %vm2791, 0.0
      %2881 = vst.msk [vmem:[#allocation2 + $0x2e0] sm:$0xff] %vm2787, 0.0
      %2882 = vst.msk [vmem:[#allocation2 + $0x2e8] sm:$0xff] %vm2787, 0.0
      %2883 = vst.msk [vmem:[#allocation2 + $0x2f0] sm:$0xff] %vm2787, 0.0
      %2884 = vst.msk [vmem:[#allocation2 + $0x2f8] sm:$0x3] %vm2791, 0.0
      %2885 = vst.msk [vmem:[#allocation2 + $0x300] sm:$0xff] %vm2787, 0.0
      %2886 = vst.msk [vmem:[#allocation2 + $0x308] sm:$0xff] %vm2787, 0.0
      %2887 = vst.msk [vmem:[#allocation2 + $0x310] sm:$0xff] %vm2787, 0.0
      %2888 = vst.msk [vmem:[#allocation2 + $0x318] sm:$0x3] %vm2791, 0.0
      %2889 = vst.msk [vmem:[#allocation2 + $0x320] sm:$0xff] %vm2787, 0.0
      %2890 = vst.msk [vmem:[#allocation2 + $0x328] sm:$0xff] %vm2787, 0.0
      %2891 = vst.msk [vmem:[#allocation2 + $0x330] sm:$0xff] %vm2787, 0.0
      %2892 = vst.msk [vmem:[#allocation2 + $0x338] sm:$0x3] %vm2791, 0.0
      %s2893 = scalar_lea.vmem [#allocation2], 256
      %2894 = vst.msk [vmem:[%s2893 + $0x8] sm:$0xff] %vm2787, %v2755
      %2895 = vst.msk [vmem:[%s2893 + $0x10] sm:$0xff] %vm2787, %v2756
      %2896 = vst.msk [vmem:[%s2893 + $0x28] sm:$0xff] %vm2787, %v2757
      %2897 = vst.msk [vmem:[%s2893 + $0x30] sm:$0xff] %vm2787, %v2758
      %2898 = vst.msk [vmem:[%s2893 + $0x48] sm:$0xff] %vm2787, %v2759
      %2899 = vst.msk [vmem:[%s2893 + $0x50] sm:$0xff] %vm2787, %v2760
      %2900 = vst.msk [vmem:[%s2893 + $0x68] sm:$0xff] %vm2787, %v2761
      %2901 = vst.msk [vmem:[%s2893 + $0x70] sm:$0xff] %vm2787, %v2762
      %2902 = vst.msk [vmem:[%s2893 + $0x88] sm:$0xff] %vm2787, %v2763
      %2903 = vst.msk [vmem:[%s2893 + $0x90] sm:$0xff] %vm2787, %v2764
      %2904 = vst.msk [vmem:[%s2893 + $0xa8] sm:$0xff] %vm2787, %v2765
      %2905 = vst.msk [vmem:[%s2893 + $0xb0] sm:$0xff] %vm2787, %v2766
      %2906 = vst.msk [vmem:[%s2893 + $0xc8] sm:$0xff] %vm2787, %v2767
      %2907 = vst.msk [vmem:[%s2893 + $0xd0] sm:$0xff] %vm2787, %v2768
      %2908 = vst.msk [vmem:[%s2893 + $0xe8] sm:$0xff] %vm2787, %v2769
      %2909 = vst.msk [vmem:[%s2893 + $0xf0] sm:$0xff] %vm2787, %v2770
      %2910 = vst.msk [vmem:[%s2893 + $0x108] sm:$0xff] %vm2787, %v2771
      %2911 = vst.msk [vmem:[%s2893 + $0x110] sm:$0xff] %vm2787, %v2772
      %2912 = vst.msk [vmem:[%s2893 + $0x128] sm:$0xff] %vm2787, %v2773
      %2913 = vst.msk [vmem:[%s2893 + $0x130] sm:$0xff] %vm2787, %v2774
      %2914 = vst.msk [vmem:[%s2893 + $0x148] sm:$0xff] %vm2787, %v2775
      %2915 = vst.msk [vmem:[%s2893 + $0x150] sm:$0xff] %vm2787, %v2776
      %2916 = vst.msk [vmem:[%s2893 + $0x168] sm:$0xff] %vm2787, %v2777
      %2917 = vst.msk [vmem:[%s2893 + $0x170] sm:$0xff] %vm2787, %v2778
      %2918 = vst.msk [vmem:[%s2893 + $0x188] sm:$0xff] %vm2787, %v2779
      %2919 = vst.msk [vmem:[%s2893 + $0x190] sm:$0xff] %vm2787, %v2780
      %2920 = vst.msk [vmem:[%s2893 + $0x1a8] sm:$0xff] %vm2787, %v2781
      %2921 = vst.msk [vmem:[%s2893 + $0x1b0] sm:$0xff] %vm2787, %v2782
      %2922 = vst.msk [vmem:[%s2893 + $0x1c8] sm:$0xff] %vm2787, %v2783
      %2923 = vst.msk [vmem:[%s2893 + $0x1d0] sm:$0xff] %vm2787, %v2784
      %2924 = vst.msk [vmem:[%s2893 + $0x1e8] sm:$0xff] %vm2787, %v2785
      %2925 = vst.msk [vmem:[%s2893 + $0x1f0] sm:$0xff] %vm2787, %v2786
      %v2926 = vld [vmem:[#allocation2 + $0xe0] sm:$0xff]
      %v2927 = vld [vmem:[#allocation2 + $0xe8] sm:$0xff]
      %v2928 = vld [vmem:[#allocation2 + $0xf0] sm:$0xff]
      %v2929 = vld [vmem:[#allocation2 + $0xf8] sm:$0x3]
      %v2930 = vld [vmem:[#allocation2 + $0x100] sm:$0xff]
      %v2931 = vld [vmem:[#allocation2 + $0x108] sm:$0xff]
      %v2932 = vld [vmem:[#allocation2 + $0x110] sm:$0xff]
      %v2933 = vld [vmem:[#allocation2 + $0x118] sm:$0x3]
      %v2934 = vld [vmem:[#allocation2 + $0x120] sm:$0xff]
      %v2935 = vld [vmem:[#allocation2 + $0x128] sm:$0xff]
      %v2936 = vld [vmem:[#allocation2 + $0x130] sm:$0xff]
      %v2937 = vld [vmem:[#allocation2 + $0x138] sm:$0x3]
      %v2938 = vld [vmem:[#allocation2 + $0x140] sm:$0xff]
      %v2939 = vld [vmem:[#allocation2 + $0x148] sm:$0xff]
      %v2940 = vld [vmem:[#allocation2 + $0x150] sm:$0xff]
      %v2941 = vld [vmem:[#allocation2 + $0x158] sm:$0x3]
      %v2942 = vld [vmem:[#allocation2 + $0x160] sm:$0xff]
      %v2943 = vld [vmem:[#allocation2 + $0x168] sm:$0xff]
      %v2944 = vld [vmem:[#allocation2 + $0x170] sm:$0xff]
      %v2945 = vld [vmem:[#allocation2 + $0x178] sm:$0x3]
      %v2946 = vld [vmem:[#allocation2 + $0x180] sm:$0xff]
      %v2947 = vld [vmem:[#allocation2 + $0x188] sm:$0xff]
      %v2948 = vld [vmem:[#allocation2 + $0x190] sm:$0xff]
      %v2949 = vld [vmem:[#allocation2 + $0x198] sm:$0x3]
      %v2950 = vld [vmem:[#allocation2 + $0x1a0] sm:$0xff]
      %v2951 = vld [vmem:[#allocation2 + $0x1a8] sm:$0xff]
      %v2952 = vld [vmem:[#allocation2 + $0x1b0] sm:$0xff]
      %v2953 = vld [vmem:[#allocation2 + $0x1b8] sm:$0x3]
      %v2954 = vld [vmem:[#allocation2 + $0x1c0] sm:$0xff]
      %v2955 = vld [vmem:[#allocation2 + $0x1c8] sm:$0xff]
      %v2956 = vld [vmem:[#allocation2 + $0x1d0] sm:$0xff]
      %v2957 = vld [vmem:[#allocation2 + $0x1d8] sm:$0x3]
      %v2958 = vld [vmem:[#allocation2 + $0x1e0] sm:$0xff]
      %v2959 = vld [vmem:[#allocation2 + $0x1e8] sm:$0xff]
      %v2960 = vld [vmem:[#allocation2 + $0x1f0] sm:$0xff]
      %v2961 = vld [vmem:[#allocation2 + $0x1f8] sm:$0x3]
      %v2962 = vld [vmem:[#allocation2 + $0x200] sm:$0xff]
      %v2963 = vld [vmem:[#allocation2 + $0x208] sm:$0xff]
      %v2964 = vld [vmem:[#allocation2 + $0x210] sm:$0xff]
      %v2965 = vld [vmem:[#allocation2 + $0x218] sm:$0x3]
      %v2966 = vld [vmem:[#allocation2 + $0x220] sm:$0xff]
      %v2967 = vld [vmem:[#allocation2 + $0x228] sm:$0xff]
      %v2968 = vld [vmem:[#allocation2 + $0x230] sm:$0xff]
      %v2969 = vld [vmem:[#allocation2 + $0x238] sm:$0x3]
      %v2970 = vld [vmem:[#allocation2 + $0x240] sm:$0xff]
      %v2971 = vld [vmem:[#allocation2 + $0x248] sm:$0xff]
      %v2972 = vld [vmem:[#allocation2 + $0x250] sm:$0xff]
      %v2973 = vld [vmem:[#allocation2 + $0x258] sm:$0x3]
      %v2974 = vld [vmem:[#allocation2 + $0x260] sm:$0xff]
      %v2975 = vld [vmem:[#allocation2 + $0x268] sm:$0xff]
      %v2976 = vld [vmem:[#allocation2 + $0x270] sm:$0xff]
      %v2977 = vld [vmem:[#allocation2 + $0x278] sm:$0x3]
      %v2978 = vld [vmem:[#allocation2 + $0x280] sm:$0xff]
      %v2979 = vld [vmem:[#allocation2 + $0x288] sm:$0xff]
      %v2980 = vld [vmem:[#allocation2 + $0x290] sm:$0xff]
      %v2981 = vld [vmem:[#allocation2 + $0x298] sm:$0x3]
      %v2982 = vld [vmem:[#allocation2 + $0x2a0] sm:$0xff]
      %v2983 = vld [vmem:[#allocation2 + $0x2a8] sm:$0xff]
      %v2984 = vld [vmem:[#allocation2 + $0x2b0] sm:$0xff]
      %v2985 = vld [vmem:[#allocation2 + $0x2b8] sm:$0x3]
      %v2986 = vld [vmem:[#allocation2 + $0x2c0] sm:$0xff]
      %v2987 = vld [vmem:[#allocation2 + $0x2c8] sm:$0xff]
      %v2988 = vld [vmem:[#allocation2 + $0x2d0] sm:$0xff]
      %v2989 = vld [vmem:[#allocation2 + $0x2d8] sm:$0x3]
      %v2990 = vld [vmem:[#allocation2 + $0x2e0] sm:$0xff]
      %v2991 = vld [vmem:[#allocation2 + $0x2e8] sm:$0xff]
      %v2992 = vld [vmem:[#allocation2 + $0x2f0] sm:$0xff]
      %v2993 = vld [vmem:[#allocation2 + $0x2f8] sm:$0x3]
      %v2994 = vld [vmem:[#allocation2 + $0x300] sm:$0xff]
      %v2995 = vld [vmem:[#allocation2 + $0x308] sm:$0xff]
      %v2996 = vld [vmem:[#allocation2 + $0x310] sm:$0xff]
      %v2997 = vld [vmem:[#allocation2 + $0x318] sm:$0x3]
      %vm3046 = vcmask 1040384
      %v3047 = vrot.slane %v2926, 7
      %v3048 = vrot.slane %v2927, 7
      %v3049 = vsel %vm3046, %v3047, %v3048
      %v3050 = vrot.slane %v2928, 7
      %v3051 = vsel %vm3046, %v3048, %v3050
      %v3052 = vrot.slane %v2930, 7
      %v3053 = vrot.slane %v2931, 7
      %v3054 = vsel %vm3046, %v3052, %v3053
      %v3055 = vrot.slane %v2932, 7
      %v3056 = vsel %vm3046, %v3053, %v3055
      %v3057 = vrot.slane %v2934, 7
      %v3058 = vrot.slane %v2935, 7
      %v3059 = vsel %vm3046, %v3057, %v3058
      %v3060 = vrot.slane %v2936, 7
      %v3061 = vsel %vm3046, %v3058, %v3060
      %v3062 = vrot.slane %v2938, 7
      %v3063 = vrot.slane %v2939, 7
      %v3064 = vsel %vm3046, %v3062, %v3063
      %v3065 = vrot.slane %v2940, 7
      %v3066 = vsel %vm3046, %v3063, %v3065
      %v3067 = vrot.slane %v2942, 7
      %v3068 = vrot.slane %v2943, 7
      %v3069 = vsel %vm3046, %v3067, %v3068
      %v3070 = vrot.slane %v2944, 7
      %v3071 = vsel %vm3046, %v3068, %v3070
      %v3072 = vrot.slane %v2946, 7
      %v3073 = vrot.slane %v2947, 7
      %v3074 = vsel %vm3046, %v3072, %v3073
      %v3075 = vrot.slane %v2948, 7
      %v3076 = vsel %vm3046, %v3073, %v3075
      %v3077 = vrot.slane %v2950, 7
      %v3078 = vrot.slane %v2951, 7
      %v3079 = vsel %vm3046, %v3077, %v3078
      %v3080 = vrot.slane %v2952, 7
      %v3081 = vsel %vm3046, %v3078, %v3080
      %v3082 = vrot.slane %v2954, 7
      %v3083 = vrot.slane %v2955, 7
      %v3084 = vsel %vm3046, %v3082, %v3083
      %v3085 = vrot.slane %v2956, 7
      %v3086 = vsel %vm3046, %v3083, %v3085
      %v3087 = vrot.slane %v2958, 7
      %v3088 = vrot.slane %v2959, 7
      %v3089 = vsel %vm3046, %v3087, %v3088
      %v3090 = vrot.slane %v2960, 7
      %v3091 = vsel %vm3046, %v3088, %v3090
      %v3092 = vrot.slane %v2962, 7
      %v3093 = vrot.slane %v2963, 7
      %v3094 = vsel %vm3046, %v3092, %v3093
      %v3095 = vrot.slane %v2964, 7
      %v3096 = vsel %vm3046, %v3093, %v3095
      %v3097 = vrot.slane %v2966, 7
      %v3098 = vrot.slane %v2967, 7
      %v3099 = vsel %vm3046, %v3097, %v3098
      %v3100 = vrot.slane %v2968, 7
      %v3101 = vsel %vm3046, %v3098, %v3100
      %v3102 = vrot.slane %v2970, 7
      %v3103 = vrot.slane %v2971, 7
      %v3104 = vsel %vm3046, %v3102, %v3103
      %v3105 = vrot.slane %v2972, 7
      %v3106 = vsel %vm3046, %v3103, %v3105
      %v3107 = vrot.slane %v2974, 7
      %v3108 = vrot.slane %v2975, 7
      %v3109 = vsel %vm3046, %v3107, %v3108
      %v3110 = vrot.slane %v2976, 7
      %v3111 = vsel %vm3046, %v3108, %v3110
      %v3112 = vrot.slane %v2978, 7
      %v3113 = vrot.slane %v2979, 7
      %v3114 = vsel %vm3046, %v3112, %v3113
      %v3115 = vrot.slane %v2980, 7
      %v3116 = vsel %vm3046, %v3113, %v3115
      %v3117 = vrot.slane %v2982, 7
      %v3118 = vrot.slane %v2983, 7
      %v3119 = vsel %vm3046, %v3117, %v3118
      %v3120 = vrot.slane %v2984, 7
      %v3121 = vsel %vm3046, %v3118, %v3120
      %v3122 = vrot.slane %v2986, 7
      %v3123 = vrot.slane %v2987, 7
      %v3124 = vsel %vm3046, %v3122, %v3123
      %v3125 = vrot.slane %v2988, 7
      %v3126 = vsel %vm3046, %v3123, %v3125
      %v3175 = vrot.slane %v2927, 1
      %v3176 = vrot.slane %v2928, 1
      %v3177 = vsel %vm490, %v3175, %v3176
      %v3178 = vrot.slane %v2929, 1
      %v3179 = vsel %vm490, %v3176, %v3178
      %v3180 = vrot.slane %v2931, 1
      %v3181 = vrot.slane %v2932, 1
      %v3182 = vsel %vm490, %v3180, %v3181
      %v3183 = vrot.slane %v2933, 1
      %v3184 = vsel %vm490, %v3181, %v3183
      %v3185 = vrot.slane %v2935, 1
      %v3186 = vrot.slane %v2936, 1
      %v3187 = vsel %vm490, %v3185, %v3186
      %v3188 = vrot.slane %v2937, 1
      %v3189 = vsel %vm490, %v3186, %v3188
      %v3190 = vrot.slane %v2939, 1
      %v3191 = vrot.slane %v2940, 1
      %v3192 = vsel %vm490, %v3190, %v3191
      %v3193 = vrot.slane %v2941, 1
      %v3194 = vsel %vm490, %v3191, %v3193
      %v3195 = vrot.slane %v2943, 1
      %v3196 = vrot.slane %v2944, 1
      %v3197 = vsel %vm490, %v3195, %v3196
      %v3198 = vrot.slane %v2945, 1
      %v3199 = vsel %vm490, %v3196, %v3198
      %v3200 = vrot.slane %v2947, 1
      %v3201 = vrot.slane %v2948, 1
      %v3202 = vsel %vm490, %v3200, %v3201
      %v3203 = vrot.slane %v2949, 1
      %v3204 = vsel %vm490, %v3201, %v3203
      %v3205 = vrot.slane %v2951, 1
      %v3206 = vrot.slane %v2952, 1
      %v3207 = vsel %vm490, %v3205, %v3206
      %v3208 = vrot.slane %v2953, 1
      %v3209 = vsel %vm490, %v3206, %v3208
      %v3210 = vrot.slane %v2955, 1
      %v3211 = vrot.slane %v2956, 1
      %v3212 = vsel %vm490, %v3210, %v3211
      %v3213 = vrot.slane %v2957, 1
      %v3214 = vsel %vm490, %v3211, %v3213
      %v3215 = vrot.slane %v2959, 1
      %v3216 = vrot.slane %v2960, 1
      %v3217 = vsel %vm490, %v3215, %v3216
      %v3218 = vrot.slane %v2961, 1
      %v3219 = vsel %vm490, %v3216, %v3218
      %v3220 = vrot.slane %v2963, 1
      %v3221 = vrot.slane %v2964, 1
      %v3222 = vsel %vm490, %v3220, %v3221
      %v3223 = vrot.slane %v2965, 1
      %v3224 = vsel %vm490, %v3221, %v3223
      %v3225 = vrot.slane %v2967, 1
      %v3226 = vrot.slane %v2968, 1
      %v3227 = vsel %vm490, %v3225, %v3226
      %v3228 = vrot.slane %v2969, 1
      %v3229 = vsel %vm490, %v3226, %v3228
      %v3230 = vrot.slane %v2971, 1
      %v3231 = vrot.slane %v2972, 1
      %v3232 = vsel %vm490, %v3230, %v3231
      %v3233 = vrot.slane %v2973, 1
      %v3234 = vsel %vm490, %v3231, %v3233
      %v3235 = vrot.slane %v2975, 1
      %v3236 = vrot.slane %v2976, 1
      %v3237 = vsel %vm490, %v3235, %v3236
      %v3238 = vrot.slane %v2977, 1
      %v3239 = vsel %vm490, %v3236, %v3238
      %v3240 = vrot.slane %v2979, 1
      %v3241 = vrot.slane %v2980, 1
      %v3242 = vsel %vm490, %v3240, %v3241
      %v3243 = vrot.slane %v2981, 1
      %v3244 = vsel %vm490, %v3241, %v3243
      %v3245 = vrot.slane %v2983, 1
      %v3246 = vrot.slane %v2984, 1
      %v3247 = vsel %vm490, %v3245, %v3246
      %v3248 = vrot.slane %v2985, 1
      %v3249 = vsel %vm490, %v3246, %v3248
      %v3250 = vrot.slane %v2987, 1
      %v3251 = vrot.slane %v2988, 1
      %v3252 = vsel %vm490, %v3250, %v3251
      %v3253 = vrot.slane %v2989, 1
      %v3254 = vsel %vm490, %v3251, %v3253
      %v3290 = vrot.slane %v2990, 7
      %v3291 = vrot.slane %v2991, 7
      %v3292 = vsel %vm3046, %v3290, %v3291
      %v3293 = vrot.slane %v2992, 7
      %v3294 = vsel %vm3046, %v3291, %v3293
      %v3298 = vrot.slane %v2991, 1
      %v3299 = vrot.slane %v2992, 1
      %v3300 = vsel %vm490, %v3298, %v3299
      %v3301 = vrot.slane %v2993, 1
      %v3302 = vsel %vm490, %v3299, %v3301
      %v3308 = vrot.slane %v2994, 7
      %v3309 = vrot.slane %v2995, 7
      %v3310 = vsel %vm3046, %v3308, %v3309
      %v3311 = vrot.slane %v2996, 7
      %v3312 = vsel %vm3046, %v3309, %v3311
      %v3316 = vrot.slane %v2995, 1
      %v3317 = vrot.slane %v2996, 1
      %v3318 = vsel %vm490, %v3316, %v3317
      %v3319 = vrot.slane %v2997, 1
      %v3320 = vsel %vm490, %v3317, %v3319
      %v3323 = vpack.c.bf16 %v3051, %v3049
      %v3324 = vpack.c.bf16 %v3056, %v3054
      %v3325 = vpack.c.bf16 %v3061, %v3059
      %v3326 = vpack.c.bf16 %v3066, %v3064
      %v3327 = vpack.c.bf16 %v3071, %v3069
      %v3328 = vpack.c.bf16 %v3076, %v3074
      %v3329 = vpack.c.bf16 %v3081, %v3079
      %v3330 = vpack.c.bf16 %v3086, %v3084
      %v3331 = vpack.c.bf16 %v3091, %v3089
      %v3332 = vpack.c.bf16 %v3096, %v3094
      %v3333 = vpack.c.bf16 %v3101, %v3099
      %v3334 = vpack.c.bf16 %v3106, %v3104
      %v3335 = vpack.c.bf16 %v3111, %v3109
      %v3336 = vpack.c.bf16 %v3116, %v3114
      %v3337 = vpack.c.bf16 %v3121, %v3119
      %v3338 = vpack.c.bf16 %v3126, %v3124
      %v3339 = vld [vmem:[%s4] sm:$0xf]
      %v3340 = vld [vmem:[%s4 + $0x4] sm:$0xf]
      %v3341 = vpack.c.bf16 %v2928, %v2927
      %v3342 = vpack.c.bf16 %v2932, %v2931
      %v3343 = vpack.c.bf16 %v2936, %v2935
      %v3344 = vpack.c.bf16 %v2940, %v2939
      %v3345 = vpack.c.bf16 %v2944, %v2943
      %v3346 = vpack.c.bf16 %v2948, %v2947
      %v3347 = vpack.c.bf16 %v2952, %v2951
      %v3348 = vpack.c.bf16 %v2956, %v2955
      %v3349 = vpack.c.bf16 %v2960, %v2959
      %v3350 = vpack.c.bf16 %v2964, %v2963
      %v3351 = vpack.c.bf16 %v2968, %v2967
      %v3352 = vpack.c.bf16 %v2972, %v2971
      %v3353 = vpack.c.bf16 %v2976, %v2975
      %v3354 = vpack.c.bf16 %v2980, %v2979
      %v3355 = vpack.c.bf16 %v2984, %v2983
      %v3356 = vpack.c.bf16 %v2988, %v2987
      %v3357 = vld [vmem:[%s4 + $0x8] sm:$0xf]
      %v3358 = vld [vmem:[%s4 + $0xc] sm:$0xf]
      %v3361 = vunpack.c.l.b16 %v3357
      %v3362 = vunpack.c.l.b16 %v3358
      %v3363 = vpack.c.b16 %v3362, %v3361
      %v3366 = vsel %vm2787, %v3341, 0
      %v3369 = vsel %vm2787, %v3342, 0
      %v3372 = vsel %vm2787, %v3343, 0
      %v3375 = vsel %vm2787, %v3344, 0
      %v3378 = vsel %vm2787, %v3345, 0
      %v3381 = vsel %vm2787, %v3346, 0
      %v3384 = vsel %vm2787, %v3347, 0
      %v3387 = vsel %vm2787, %v3348, 0
      %v3390 = vsel %vm2787, %v3349, 0
      %v3393 = vsel %vm2787, %v3350, 0
      %v3396 = vsel %vm2787, %v3351, 0
      %v3399 = vsel %vm2787, %v3352, 0
      %v3402 = vsel %vm2787, %v3353, 0
      %v3405 = vsel %vm2787, %v3354, 0
      %v3408 = vsel %vm2787, %v3355, 0
      %v3411 = vsel %vm2787, %v3356, 0
      %3413 = vmatprep.subr.bf16.mxu0 0
      %3414 = vmatpush1.bf16.msra.mxu0 %v3363
      %3415 = vmatprep.subr.bf16.mxu0 0
      %3416 = vmatpush1.bf16.msra.mxu0 0
      %3417 = vmatprep.subr.bf16.mxu0 0
      %3418 = vmatpush1.bf16.msra.mxu0 0
      %3419 = vmatprep.subr.bf16.mxu0 0
      %3420 = vmatpush1.bf16.msra.mxu0 0
      %3421 = vmatprep.subr.bf16.mxu0 0
      %3422 = vmatpush1.bf16.msra.mxu0 0
      %3423 = vmatprep.subr.bf16.mxu0 0
      %3424 = vmatpush1.bf16.msra.mxu0 0
      %3425 = vmatprep.subr.bf16.mxu0 0
      %3426 = vmatpush1.bf16.msra.mxu0 0
      %3427 = vmatprep.subr.bf16.mxu0 0
      %3428 = vmatpush1.bf16.msra.mxu0 0
      %3429 = vmatprep.subr.bf16.mxu0 0
      %3430 = vmatpush1.bf16.msra.mxu0 0
      %3431 = vmatprep.subr.bf16.mxu0 0
      %3432 = vmatpush1.bf16.msra.mxu0 0
      %3433 = vmatprep.subr.bf16.mxu0 0
      %3434 = vmatpush1.bf16.msra.mxu0 0
      %3435 = vmatprep.subr.bf16.mxu0 0
      %3436 = vmatpush1.bf16.msra.mxu0 0
      %3437 = vmatprep.subr.bf16.mxu0 0
      %3438 = vmatpush1.bf16.msra.mxu0 0
      %3439 = vmatprep.subr.bf16.mxu0 0
      %3440 = vmatpush1.bf16.msra.mxu0 0
      %3441 = vmatprep.subr.bf16.mxu0 0
      %3442 = vmatpush1.bf16.msra.mxu0 0
      %3443 = vmatprep.subr.bf16.mxu0 0
      %3444 = vmatpush1.bf16.msra.mxu0 0
      %3445 = vmatprep.mubr.bf16.mxu0 0
      %3446 = vmatmul.mubr.bf16.gmra.mrb[0].mxu0 %v3366
      %v3447 = vpop.f32.mrb[0].mxu0
      %v3448 = vadd.f32 0.0, %v3447
      %v3449 = vpop.f32.mrb[0].mxu0
      %v3450 = vpop.f32.mrb[0].mxu0
      %v3451 = vadd.f32 0.0, %v3450
      %v3452 = vpop.f32.mrb[0].mxu0
      %3453 = vmatprep.mubr.bf16.mxu0 0
      %3454 = vmatmul.mubr.bf16.gmra.mrb[0].mxu0 %v3369
      %v3455 = vpop.f32.mrb[0].mxu0
      %v3456 = vadd.f32 0.0, %v3455
      %v3457 = vpop.f32.mrb[0].mxu0
      %v3458 = vpop.f32.mrb[0].mxu0
      %v3459 = vadd.f32 0.0, %v3458
      %v3460 = vpop.f32.mrb[0].mxu0
      %3461 = vmatprep.mubr.bf16.mxu0 0
      %3462 = vmatmul.mubr.bf16.gmra.mrb[0].mxu0 %v3372
      %v3463 = vpop.f32.mrb[0].mxu0
      %v3464 = vadd.f32 0.0, %v3463
      %v3465 = vpop.f32.mrb[0].mxu0
      %v3466 = vpop.f32.mrb[0].mxu0
      %v3467 = vadd.f32 0.0, %v3466
      %v3468 = vpop.f32.mrb[0].mxu0
      %3469 = vmatprep.mubr.bf16.mxu0 0
      %3470 = vmatmul.mubr.bf16.gmra.mrb[0].mxu0 %v3375
      %v3471 = vpop.f32.mrb[0].mxu0
      %v3472 = vadd.f32 0.0, %v3471
      %v3473 = vpop.f32.mrb[0].mxu0
      %v3474 = vpop.f32.mrb[0].mxu0
      %v3475 = vadd.f32 0.0, %v3474
      %v3476 = vpop.f32.mrb[0].mxu0
      %3477 = vmatprep.mubr.bf16.mxu0 0
      %3478 = vmatmul.mubr.bf16.gmra.mrb[0].mxu0 %v3378
      %v3479 = vpop.f32.mrb[0].mxu0
      %v3480 = vadd.f32 0.0, %v3479
      %v3481 = vpop.f32.mrb[0].mxu0
      %v3482 = vpop.f32.mrb[0].mxu0
      %v3483 = vadd.f32 0.0, %v3482
      %v3484 = vpop.f32.mrb[0].mxu0
      %3485 = vmatprep.mubr.bf16.mxu0 0
      %3486 = vmatmul.mubr.bf16.gmra.mrb[0].mxu0 %v3381
      %v3487 = vpop.f32.mrb[0].mxu0
      %v3488 = vadd.f32 0.0, %v3487
      %v3489 = vpop.f32.mrb[0].mxu0
      %v3490 = vpop.f32.mrb[0].mxu0
      %v3491 = vadd.f32 0.0, %v3490
      %v3492 = vpop.f32.mrb[0].mxu0
      %3493 = vmatprep.mubr.bf16.mxu0 0
      %3494 = vmatmul.mubr.bf16.gmra.mrb[0].mxu0 %v3384
      %v3495 = vpop.f32.mrb[0].mxu0
      %v3496 = vadd.f32 0.0, %v3495
      %v3497 = vpop.f32.mrb[0].mxu0
      %v3498 = vpop.f32.mrb[0].mxu0
      %v3499 = vadd.f32 0.0, %v3498
      %v3500 = vpop.f32.mrb[0].mxu0
      %3501 = vmatprep.mubr.bf16.mxu0 0
      %3502 = vmatmul.mubr.bf16.gmra.mrb[0].mxu0 %v3387
      %v3503 = vpop.f32.mrb[0].mxu0
      %v3504 = vadd.f32 0.0, %v3503
      %v3505 = vpop.f32.mrb[0].mxu0
      %v3506 = vpop.f32.mrb[0].mxu0
      %v3507 = vadd.f32 0.0, %v3506
      %v3508 = vpop.f32.mrb[0].mxu0
      %3509 = vmatprep.mubr.bf16.mxu0 0
      %3510 = vmatmul.mubr.bf16.gmra.mrb[0].mxu0 %v3390
      %v3511 = vpop.f32.mrb[0].mxu0
      %v3512 = vadd.f32 0.0, %v3511
      %v3513 = vpop.f32.mrb[0].mxu0
      %v3514 = vpop.f32.mrb[0].mxu0
      %v3515 = vadd.f32 0.0, %v3514
      %v3516 = vpop.f32.mrb[0].mxu0
      %3517 = vmatprep.mubr.bf16.mxu0 0
      %3518 = vmatmul.mubr.bf16.gmra.mrb[0].mxu0 %v3393
      %v3519 = vpop.f32.mrb[0].mxu0
      %v3520 = vadd.f32 0.0, %v3519
      %v3521 = vpop.f32.mrb[0].mxu0
      %v3522 = vpop.f32.mrb[0].mxu0
      %v3523 = vadd.f32 0.0, %v3522
      %v3524 = vpop.f32.mrb[0].mxu0
      %3525 = vmatprep.mubr.bf16.mxu0 0
      %3526 = vmatmul.mubr.bf16.gmra.mrb[0].mxu0 %v3396
      %v3527 = vpop.f32.mrb[0].mxu0
      %v3528 = vadd.f32 0.0, %v3527
      %v3529 = vpop.f32.mrb[0].mxu0
      %v3530 = vpop.f32.mrb[0].mxu0
      %v3531 = vadd.f32 0.0, %v3530
      %v3532 = vpop.f32.mrb[0].mxu0
      %3533 = vmatprep.mubr.bf16.mxu0 0
      %3534 = vmatmul.mubr.bf16.gmra.mrb[0].mxu0 %v3399
      %v3535 = vpop.f32.mrb[0].mxu0
      %v3536 = vadd.f32 0.0, %v3535
      %v3537 = vpop.f32.mrb[0].mxu0
      %v3538 = vpop.f32.mrb[0].mxu0
      %v3539 = vadd.f32 0.0, %v3538
      %v3540 = vpop.f32.mrb[0].mxu0
      %3541 = vmatprep.mubr.bf16.mxu0 0
      %3542 = vmatmul.mubr.bf16.gmra.mrb[0].mxu0 %v3402
      %v3543 = vpop.f32.mrb[0].mxu0
      %v3544 = vadd.f32 0.0, %v3543
      %v3545 = vpop.f32.mrb[0].mxu0
      %v3546 = vpop.f32.mrb[0].mxu0
      %v3547 = vadd.f32 0.0, %v3546
      %v3548 = vpop.f32.mrb[0].mxu0
      %3549 = vmatprep.mubr.bf16.mxu0 0
      %3550 = vmatmul.mubr.bf16.gmra.mrb[0].mxu0 %v3405
      %v3551 = vpop.f32.mrb[0].mxu0
      %v3552 = vadd.f32 0.0, %v3551
      %v3553 = vpop.f32.mrb[0].mxu0
      %v3554 = vpop.f32.mrb[0].mxu0
      %v3555 = vadd.f32 0.0, %v3554
      %v3556 = vpop.f32.mrb[0].mxu0
      %3557 = vmatprep.mubr.bf16.mxu0 0
      %3558 = vmatmul.mubr.bf16.gmra.mrb[0].mxu0 %v3408
      %v3559 = vpop.f32.mrb[0].mxu0
      %v3560 = vadd.f32 0.0, %v3559
      %v3561 = vpop.f32.mrb[0].mxu0
      %v3562 = vpop.f32.mrb[0].mxu0
      %v3563 = vadd.f32 0.0, %v3562
      %v3564 = vpop.f32.mrb[0].mxu0
      %3565 = vmatprep.mubr.bf16.mxu0 0
      %3566 = vmatmul.mubr.bf16.gmra.mrb[0].mxu0 %v3411
      %v3567 = vpop.f32.mrb[0].mxu0
      %v3568 = vadd.f32 0.0, %v3567
      %v3569 = vpop.f32.mrb[0].mxu0
      %v3570 = vpop.f32.mrb[0].mxu0
      %v3571 = vadd.f32 0.0, %v3570
      %v3572 = vpop.f32.mrb[0].mxu0
      %3573 = vdwg.mxu0
      %v3576 = vunpack.c.l.b16 %v3339
      %v3577 = vunpack.c.l.b16 %v3340
      %v3578 = vpack.c.b16 %v3577, %v3576
      %v3581 = vsel %vm2787, %v3323, 0
      %v3584 = vsel %vm2787, %v3324, 0
      %v3587 = vsel %vm2787, %v3325, 0
      %v3590 = vsel %vm2787, %v3326, 0
      %v3593 = vsel %vm2787, %v3327, 0
      %v3596 = vsel %vm2787, %v3328, 0
      %v3599 = vsel %vm2787, %v3329, 0
      %v3602 = vsel %vm2787, %v3330, 0
      %v3605 = vsel %vm2787, %v3331, 0
      %v3608 = vsel %vm2787, %v3332, 0
      %v3611 = vsel %vm2787, %v3333, 0
      %v3614 = vsel %vm2787, %v3334, 0
      %v3617 = vsel %vm2787, %v3335, 0
      %v3620 = vsel %vm2787, %v3336, 0
      %v3623 = vsel %vm2787, %v3337, 0
      %v3626 = vsel %vm2787, %v3338, 0
      %3628 = vmatprep.subr.bf16.mxu0 0
      %3629 = vmatpush1.bf16.msra.mxu0 %v3578
      %3630 = vmatprep.subr.bf16.mxu0 0
      %3631 = vmatpush1.bf16.msra.mxu0 0
      %3632 = vmatprep.subr.bf16.mxu0 0
      %3633 = vmatpush1.bf16.msra.mxu0 0
      %3634 = vmatprep.subr.bf16.mxu0 0
      %3635 = vmatpush1.bf16.msra.mxu0 0
      %3636 = vmatprep.subr.bf16.mxu0 0
      %3637 = vmatpush1.bf16.msra.mxu0 0
      %3638 = vmatprep.subr.bf16.mxu0 0
      %3639 = vmatpush1.bf16.msra.mxu0 0
      %3640 = vmatprep.subr.bf16.mxu0 0
      %3641 = vmatpush1.bf16.msra.mxu0 0
      %3642 = vmatprep.subr.bf16.mxu0 0
      %3643 = vmatpush1.bf16.msra.mxu0 0
      %3644 = vmatprep.subr.bf16.mxu0 0
      %3645 = vmatpush1.bf16.msra.mxu0 0
      %3646 = vmatprep.subr.bf16.mxu0 0
      %3647 = vmatpush1.bf16.msra.mxu0 0
      %3648 = vmatprep.subr.bf16.mxu0 0
      %3649 = vmatpush1.bf16.msra.mxu0 0
      %3650 = vmatprep.subr.bf16.mxu0 0
      %3651 = vmatpush1.bf16.msra.mxu0 0
      %3652 = vmatprep.subr.bf16.mxu0 0
      %3653 = vmatpush1.bf16.msra.mxu0 0
      %3654 = vmatprep.subr.bf16.mxu0 0
      %3655 = vmatpush1.bf16.msra.mxu0 0
      %3656 = vmatprep.subr.bf16.mxu0 0
      %3657 = vmatpush1.bf16.msra.mxu0 0
      %3658 = vmatprep.subr.bf16.mxu0 0
      %3659 = vmatpush1.bf16.msra.mxu0 0
      %3660 = vmatprep.mubr.bf16.mxu0 0
      %3661 = vmatmul.mubr.bf16.gmra.mrb[0].mxu0 %v3581
      %v3662 = vpop.f32.mrb[0].mxu0
      %v3663 = vadd.f32 %v3448, %v3662
      %v3664 = vpop.f32.mrb[0].mxu0
      %v3665 = vpop.f32.mrb[0].mxu0
      %v3666 = vadd.f32 %v3451, %v3665
      %v3667 = vpop.f32.mrb[0].mxu0
      %3668 = vmatprep.mubr.bf16.mxu0 0
      %3669 = vmatmul.mubr.bf16.gmra.mrb[0].mxu0 %v3584
      %v3670 = vpop.f32.mrb[0].mxu0
      %v3671 = vadd.f32 %v3456, %v3670
      %v3672 = vpop.f32.mrb[0].mxu0
      %v3673 = vpop.f32.mrb[0].mxu0
      %v3674 = vadd.f32 %v3459, %v3673
      %v3675 = vpop.f32.mrb[0].mxu0
      %3676 = vmatprep.mubr.bf16.mxu0 0
      %3677 = vmatmul.mubr.bf16.gmra.mrb[0].mxu0 %v3587
      %v3678 = vpop.f32.mrb[0].mxu0
      %v3679 = vadd.f32 %v3464, %v3678
      %v3680 = vpop.f32.mrb[0].mxu0
      %v3681 = vpop.f32.mrb[0].mxu0
      %v3682 = vadd.f32 %v3467, %v3681
      %v3683 = vpop.f32.mrb[0].mxu0
      %3684 = vmatprep.mubr.bf16.mxu0 0
      %3685 = vmatmul.mubr.bf16.gmra.mrb[0].mxu0 %v3590
      %v3686 = vpop.f32.mrb[0].mxu0
      %v3687 = vadd.f32 %v3472, %v3686
      %v3688 = vpop.f32.mrb[0].mxu0
      %v3689 = vpop.f32.mrb[0].mxu0
      %v3690 = vadd.f32 %v3475, %v3689
      %v3691 = vpop.f32.mrb[0].mxu0
      %3692 = vmatprep.mubr.bf16.mxu0 0
      %3693 = vmatmul.mubr.bf16.gmra.mrb[0].mxu0 %v3593
      %v3694 = vpop.f32.mrb[0].mxu0
      %v3695 = vadd.f32 %v3480, %v3694
      %v3696 = vpop.f32.mrb[0].mxu0
      %v3697 = vpop.f32.mrb[0].mxu0
      %v3698 = vadd.f32 %v3483, %v3697
      %v3699 = vpop.f32.mrb[0].mxu0
      %3700 = vmatprep.mubr.bf16.mxu0 0
      %3701 = vmatmul.mubr.bf16.gmra.mrb[0].mxu0 %v3596
      %v3702 = vpop.f32.mrb[0].mxu0
      %v3703 = vadd.f32 %v3488, %v3702
      %v3704 = vpop.f32.mrb[0].mxu0
      %v3705 = vpop.f32.mrb[0].mxu0
      %v3706 = vadd.f32 %v3491, %v3705
      %v3707 = vpop.f32.mrb[0].mxu0
      %3708 = vmatprep.mubr.bf16.mxu0 0
      %3709 = vmatmul.mubr.bf16.gmra.mrb[0].mxu0 %v3599
      %v3710 = vpop.f32.mrb[0].mxu0
      %v3711 = vadd.f32 %v3496, %v3710
      %v3712 = vpop.f32.mrb[0].mxu0
      %v3713 = vpop.f32.mrb[0].mxu0
      %v3714 = vadd.f32 %v3499, %v3713
      %v3715 = vpop.f32.mrb[0].mxu0
      %3716 = vmatprep.mubr.bf16.mxu0 0
      %3717 = vmatmul.mubr.bf16.gmra.mrb[0].mxu0 %v3602
      %v3718 = vpop.f32.mrb[0].mxu0
      %v3719 = vadd.f32 %v3504, %v3718
      %v3720 = vpop.f32.mrb[0].mxu0
      %v3721 = vpop.f32.mrb[0].mxu0
      %v3722 = vadd.f32 %v3507, %v3721
      %v3723 = vpop.f32.mrb[0].mxu0
      %3724 = vmatprep.mubr.bf16.mxu0 0
      %3725 = vmatmul.mubr.bf16.gmra.mrb[0].mxu0 %v3605
      %v3726 = vpop.f32.mrb[0].mxu0
      %v3727 = vadd.f32 %v3512, %v3726
      %v3728 = vpop.f32.mrb[0].mxu0
      %v3729 = vpop.f32.mrb[0].mxu0
      %v3730 = vadd.f32 %v3515, %v3729
      %v3731 = vpop.f32.mrb[0].mxu0
      %3732 = vmatprep.mubr.bf16.mxu0 0
      %3733 = vmatmul.mubr.bf16.gmra.mrb[0].mxu0 %v3608
      %v3734 = vpop.f32.mrb[0].mxu0
      %v3735 = vadd.f32 %v3520, %v3734
      %v3736 = vpop.f32.mrb[0].mxu0
      %v3737 = vpop.f32.mrb[0].mxu0
      %v3738 = vadd.f32 %v3523, %v3737
      %v3739 = vpop.f32.mrb[0].mxu0
      %3740 = vmatprep.mubr.bf16.mxu0 0
      %3741 = vmatmul.mubr.bf16.gmra.mrb[0].mxu0 %v3611
      %v3742 = vpop.f32.mrb[0].mxu0
      %v3743 = vadd.f32 %v3528, %v3742
      %v3744 = vpop.f32.mrb[0].mxu0
      %v3745 = vpop.f32.mrb[0].mxu0
      %v3746 = vadd.f32 %v3531, %v3745
      %v3747 = vpop.f32.mrb[0].mxu0
      %3748 = vmatprep.mubr.bf16.mxu0 0
      %3749 = vmatmul.mubr.bf16.gmra.mrb[0].mxu0 %v3614
      %v3750 = vpop.f32.mrb[0].mxu0
      %v3751 = vadd.f32 %v3536, %v3750
      %v3752 = vpop.f32.mrb[0].mxu0
      %v3753 = vpop.f32.mrb[0].mxu0
      %v3754 = vadd.f32 %v3539, %v3753
      %v3755 = vpop.f32.mrb[0].mxu0
      %3756 = vmatprep.mubr.bf16.mxu0 0
      %3757 = vmatmul.mubr.bf16.gmra.mrb[0].mxu0 %v3617
      %v3758 = vpop.f32.mrb[0].mxu0
      %v3759 = vadd.f32 %v3544, %v3758
      %v3760 = vpop.f32.mrb[0].mxu0
      %v3761 = vpop.f32.mrb[0].mxu0
      %v3762 = vadd.f32 %v3547, %v3761
      %v3763 = vpop.f32.mrb[0].mxu0
      %3764 = vmatprep.mubr.bf16.mxu0 0
      %3765 = vmatmul.mubr.bf16.gmra.mrb[0].mxu0 %v3620
      %v3766 = vpop.f32.mrb[0].mxu0
      %v3767 = vadd.f32 %v3552, %v3766
      %v3768 = vpop.f32.mrb[0].mxu0
      %v3769 = vpop.f32.mrb[0].mxu0
      %v3770 = vadd.f32 %v3555, %v3769
      %v3771 = vpop.f32.mrb[0].mxu0
      %3772 = vmatprep.mubr.bf16.mxu0 0
      %3773 = vmatmul.mubr.bf16.gmra.mrb[0].mxu0 %v3623
      %v3774 = vpop.f32.mrb[0].mxu0
      %v3775 = vadd.f32 %v3560, %v3774
      %v3776 = vpop.f32.mrb[0].mxu0
      %v3777 = vpop.f32.mrb[0].mxu0
      %v3778 = vadd.f32 %v3563, %v3777
      %v3779 = vpop.f32.mrb[0].mxu0
      %3780 = vmatprep.mubr.bf16.mxu0 0
      %3781 = vmatmul.mubr.bf16.gmra.mrb[0].mxu0 %v3626
      %v3782 = vpop.f32.mrb[0].mxu0
      %v3783 = vadd.f32 %v3568, %v3782
      %v3784 = vpop.f32.mrb[0].mxu0
      %v3785 = vpop.f32.mrb[0].mxu0
      %v3786 = vadd.f32 %v3571, %v3785
      %v3787 = vpop.f32.mrb[0].mxu0
      %3788 = vdwg.mxu0
      %v3789 = vpack.c.bf16 %v3179, %v3177
      %v3790 = vpack.c.bf16 %v3184, %v3182
      %v3791 = vpack.c.bf16 %v3189, %v3187
      %v3792 = vpack.c.bf16 %v3194, %v3192
      %v3793 = vpack.c.bf16 %v3199, %v3197
      %v3794 = vpack.c.bf16 %v3204, %v3202
      %v3795 = vpack.c.bf16 %v3209, %v3207
      %v3796 = vpack.c.bf16 %v3214, %v3212
      %v3797 = vpack.c.bf16 %v3219, %v3217
      %v3798 = vpack.c.bf16 %v3224, %v3222
      %v3799 = vpack.c.bf16 %v3229, %v3227
      %v3800 = vpack.c.bf16 %v3234, %v3232
      %v3801 = vpack.c.bf16 %v3239, %v3237
      %v3802 = vpack.c.bf16 %v3244, %v3242
      %v3803 = vpack.c.bf16 %v3249, %v3247
      %v3804 = vpack.c.bf16 %v3254, %v3252
      %v3805 = vld [vmem:[%s4 + $0x10] sm:$0xf]
      %v3806 = vld [vmem:[%s4 + $0x14] sm:$0xf]
      %v3809 = vunpack.c.l.b16 %v3805
      %v3810 = vunpack.c.l.b16 %v3806
      %v3811 = vpack.c.b16 %v3810, %v3809
      %v3814 = vsel %vm2787, %v3789, 0
      %v3817 = vsel %vm2787, %v3790, 0
      %v3820 = vsel %vm2787, %v3791, 0
      %v3823 = vsel %vm2787, %v3792, 0
      %v3826 = vsel %vm2787, %v3793, 0
      %v3829 = vsel %vm2787, %v3794, 0
      %v3832 = vsel %vm2787, %v3795, 0
      %v3835 = vsel %vm2787, %v3796, 0
      %v3838 = vsel %vm2787, %v3797, 0
      %v3841 = vsel %vm2787, %v3798, 0
      %v3844 = vsel %vm2787, %v3799, 0
      %v3847 = vsel %vm2787, %v3800, 0
      %v3850 = vsel %vm2787, %v3801, 0
      %v3853 = vsel %vm2787, %v3802, 0
      %v3856 = vsel %vm2787, %v3803, 0
      %v3859 = vsel %vm2787, %v3804, 0
      %3861 = vmatprep.subr.bf16.mxu0 0
      %3862 = vmatpush1.bf16.msra.mxu0 %v3811
      %3863 = vmatprep.subr.bf16.mxu0 0
      %3864 = vmatpush1.bf16.msra.mxu0 0
      %3865 = vmatprep.subr.bf16.mxu0 0
      %3866 = vmatpush1.bf16.msra.mxu0 0
      %3867 = vmatprep.subr.bf16.mxu0 0
      %3868 = vmatpush1.bf16.msra.mxu0 0
      %3869 = vmatprep.subr.bf16.mxu0 0
      %3870 = vmatpush1.bf16.msra.mxu0 0
      %3871 = vmatprep.subr.bf16.mxu0 0
      %3872 = vmatpush1.bf16.msra.mxu0 0
      %3873 = vmatprep.subr.bf16.mxu0 0
      %3874 = vmatpush1.bf16.msra.mxu0 0
      %3875 = vmatprep.subr.bf16.mxu0 0
      %3876 = vmatpush1.bf16.msra.mxu0 0
      %3877 = vmatprep.subr.bf16.mxu0 0
      %3878 = vmatpush1.bf16.msra.mxu0 0
      %3879 = vmatprep.subr.bf16.mxu0 0
      %3880 = vmatpush1.bf16.msra.mxu0 0
      %3881 = vmatprep.subr.bf16.mxu0 0
      %3882 = vmatpush1.bf16.msra.mxu0 0
      %3883 = vmatprep.subr.bf16.mxu0 0
      %3884 = vmatpush1.bf16.msra.mxu0 0
      %3885 = vmatprep.subr.bf16.mxu0 0
      %3886 = vmatpush1.bf16.msra.mxu0 0
      %3887 = vmatprep.subr.bf16.mxu0 0
      %3888 = vmatpush1.bf16.msra.mxu0 0
      %3889 = vmatprep.subr.bf16.mxu0 0
      %3890 = vmatpush1.bf16.msra.mxu0 0
      %3891 = vmatprep.subr.bf16.mxu0 0
      %3892 = vmatpush1.bf16.msra.mxu0 0
      %3893 = vmatprep.mubr.bf16.mxu0 0
      %3894 = vmatmul.mubr.bf16.gmra.mrb[0].mxu0 %v3814
      %v3895 = vpop.f32.mrb[0].mxu0
      %v3896 = vadd.f32 0.0, %v3895
      %v3897 = vpop.f32.mrb[0].mxu0
      %v3898 = vpop.f32.mrb[0].mxu0
      %v3899 = vadd.f32 0.0, %v3898
      %v3900 = vpop.f32.mrb[0].mxu0
      %3901 = vmatprep.mubr.bf16.mxu0 0
      %3902 = vmatmul.mubr.bf16.gmra.mrb[0].mxu0 %v3817
      %v3903 = vpop.f32.mrb[0].mxu0
      %v3904 = vadd.f32 0.0, %v3903
      %v3905 = vpop.f32.mrb[0].mxu0
      %v3906 = vpop.f32.mrb[0].mxu0
      %v3907 = vadd.f32 0.0, %v3906
      %v3908 = vpop.f32.mrb[0].mxu0
      %3909 = vmatprep.mubr.bf16.mxu0 0
      %3910 = vmatmul.mubr.bf16.gmra.mrb[0].mxu0 %v3820
      %v3911 = vpop.f32.mrb[0].mxu0
      %v3912 = vadd.f32 0.0, %v3911
      %v3913 = vpop.f32.mrb[0].mxu0
      %v3914 = vpop.f32.mrb[0].mxu0
      %v3915 = vadd.f32 0.0, %v3914
      %v3916 = vpop.f32.mrb[0].mxu0
      %3917 = vmatprep.mubr.bf16.mxu0 0
      %3918 = vmatmul.mubr.bf16.gmra.mrb[0].mxu0 %v3823
      %v3919 = vpop.f32.mrb[0].mxu0
      %v3920 = vadd.f32 0.0, %v3919
      %v3921 = vpop.f32.mrb[0].mxu0
      %v3922 = vpop.f32.mrb[0].mxu0
      %v3923 = vadd.f32 0.0, %v3922
      %v3924 = vpop.f32.mrb[0].mxu0
      %3925 = vmatprep.mubr.bf16.mxu0 0
      %3926 = vmatmul.mubr.bf16.gmra.mrb[0].mxu0 %v3826
      %v3927 = vpop.f32.mrb[0].mxu0
      %v3928 = vadd.f32 0.0, %v3927
      %v3929 = vpop.f32.mrb[0].mxu0
      %v3930 = vpop.f32.mrb[0].mxu0
      %v3931 = vadd.f32 0.0, %v3930
      %v3932 = vpop.f32.mrb[0].mxu0
      %3933 = vmatprep.mubr.bf16.mxu0 0
      %3934 = vmatmul.mubr.bf16.gmra.mrb[0].mxu0 %v3829
      %v3935 = vpop.f32.mrb[0].mxu0
      %v3936 = vadd.f32 0.0, %v3935
      %v3937 = vpop.f32.mrb[0].mxu0
      %v3938 = vpop.f32.mrb[0].mxu0
      %v3939 = vadd.f32 0.0, %v3938
      %v3940 = vpop.f32.mrb[0].mxu0
      %3941 = vmatprep.mubr.bf16.mxu0 0
      %3942 = vmatmul.mubr.bf16.gmra.mrb[0].mxu0 %v3832
      %v3943 = vpop.f32.mrb[0].mxu0
      %v3944 = vadd.f32 0.0, %v3943
      %v3945 = vpop.f32.mrb[0].mxu0
      %v3946 = vpop.f32.mrb[0].mxu0
      %v3947 = vadd.f32 0.0, %v3946
      %v3948 = vpop.f32.mrb[0].mxu0
      %3949 = vmatprep.mubr.bf16.mxu0 0
      %3950 = vmatmul.mubr.bf16.gmra.mrb[0].mxu0 %v3835
      %v3951 = vpop.f32.mrb[0].mxu0
      %v3952 = vadd.f32 0.0, %v3951
      %v3953 = vpop.f32.mrb[0].mxu0
      %v3954 = vpop.f32.mrb[0].mxu0
      %v3955 = vadd.f32 0.0, %v3954
      %v3956 = vpop.f32.mrb[0].mxu0
      %3957 = vmatprep.mubr.bf16.mxu0 0
      %3958 = vmatmul.mubr.bf16.gmra.mrb[0].mxu0 %v3838
      %v3959 = vpop.f32.mrb[0].mxu0
      %v3960 = vadd.f32 0.0, %v3959
      %v3961 = vpop.f32.mrb[0].mxu0
      %v3962 = vpop.f32.mrb[0].mxu0
      %v3963 = vadd.f32 0.0, %v3962
      %v3964 = vpop.f32.mrb[0].mxu0
      %3965 = vmatprep.mubr.bf16.mxu0 0
      %3966 = vmatmul.mubr.bf16.gmra.mrb[0].mxu0 %v3841
      %v3967 = vpop.f32.mrb[0].mxu0
      %v3968 = vadd.f32 0.0, %v3967
      %v3969 = vpop.f32.mrb[0].mxu0
      %v3970 = vpop.f32.mrb[0].mxu0
      %v3971 = vadd.f32 0.0, %v3970
      %v3972 = vpop.f32.mrb[0].mxu0
      %3973 = vmatprep.mubr.bf16.mxu0 0
      %3974 = vmatmul.mubr.bf16.gmra.mrb[0].mxu0 %v3844
      %v3975 = vpop.f32.mrb[0].mxu0
      %v3976 = vadd.f32 0.0, %v3975
      %v3977 = vpop.f32.mrb[0].mxu0
      %v3978 = vpop.f32.mrb[0].mxu0
      %v3979 = vadd.f32 0.0, %v3978
      %v3980 = vpop.f32.mrb[0].mxu0
      %3981 = vmatprep.mubr.bf16.mxu0 0
      %3982 = vmatmul.mubr.bf16.gmra.mrb[0].mxu0 %v3847
      %v3983 = vpop.f32.mrb[0].mxu0
      %v3984 = vadd.f32 0.0, %v3983
      %v3985 = vpop.f32.mrb[0].mxu0
      %v3986 = vpop.f32.mrb[0].mxu0
      %v3987 = vadd.f32 0.0, %v3986
      %v3988 = vpop.f32.mrb[0].mxu0
      %3989 = vmatprep.mubr.bf16.mxu0 0
      %3990 = vmatmul.mubr.bf16.gmra.mrb[0].mxu0 %v3850
      %v3991 = vpop.f32.mrb[0].mxu0
      %v3992 = vadd.f32 0.0, %v3991
      %v3993 = vpop.f32.mrb[0].mxu0
      %v3994 = vpop.f32.mrb[0].mxu0
      %v3995 = vadd.f32 0.0, %v3994
      %v3996 = vpop.f32.mrb[0].mxu0
      %3997 = vmatprep.mubr.bf16.mxu0 0
      %3998 = vmatmul.mubr.bf16.gmra.mrb[0].mxu0 %v3853
      %v3999 = vpop.f32.mrb[0].mxu0
      %v4000 = vadd.f32 0.0, %v3999
      %v4001 = vpop.f32.mrb[0].mxu0
      %v4002 = vpop.f32.mrb[0].mxu0
      %v4003 = vadd.f32 0.0, %v4002
      %v4004 = vpop.f32.mrb[0].mxu0
      %4005 = vmatprep.mubr.bf16.mxu0 0
      %4006 = vmatmul.mubr.bf16.gmra.mrb[0].mxu0 %v3856
      %v4007 = vpop.f32.mrb[0].mxu0
      %v4008 = vadd.f32 0.0, %v4007
      %v4009 = vpop.f32.mrb[0].mxu0
      %v4010 = vpop.f32.mrb[0].mxu0
      %v4011 = vadd.f32 0.0, %v4010
      %v4012 = vpop.f32.mrb[0].mxu0
      %4013 = vmatprep.mubr.bf16.mxu0 0
      %4014 = vmatmul.mubr.bf16.gmra.mrb[0].mxu0 %v3859
      %v4015 = vpop.f32.mrb[0].mxu0
      %v4016 = vadd.f32 0.0, %v4015
      %v4017 = vpop.f32.mrb[0].mxu0
      %v4018 = vpop.f32.mrb[0].mxu0
      %v4019 = vadd.f32 0.0, %v4018
      %v4020 = vpop.f32.mrb[0].mxu0
      %4021 = vdwg.mxu0
      %v4022 = vadd.f32 %v3663, %v3896
      %v4023 = vadd.f32 %v3666, %v3899
      %v4024 = vadd.f32 %v3671, %v3904
      %v4025 = vadd.f32 %v3674, %v3907
      %v4026 = vadd.f32 %v3679, %v3912
      %v4027 = vadd.f32 %v3682, %v3915
      %v4028 = vadd.f32 %v3687, %v3920
      %v4029 = vadd.f32 %v3690, %v3923
      %v4030 = vadd.f32 %v3695, %v3928
      %v4031 = vadd.f32 %v3698, %v3931
      %v4032 = vadd.f32 %v3703, %v3936
      %v4033 = vadd.f32 %v3706, %v3939
      %v4034 = vadd.f32 %v3711, %v3944
      %v4035 = vadd.f32 %v3714, %v3947
      %v4036 = vadd.f32 %v3719, %v3952
      %v4037 = vadd.f32 %v3722, %v3955
      %v4038 = vadd.f32 %v3727, %v3960
      %v4039 = vadd.f32 %v3730, %v3963
      %v4040 = vadd.f32 %v3735, %v3968
      %v4041 = vadd.f32 %v3738, %v3971
      %v4042 = vadd.f32 %v3743, %v3976
      %v4043 = vadd.f32 %v3746, %v3979
      %v4044 = vadd.f32 %v3751, %v3984
      %v4045 = vadd.f32 %v3754, %v3987
      %v4046 = vadd.f32 %v3759, %v3992
      %v4047 = vadd.f32 %v3762, %v3995
      %v4048 = vadd.f32 %v3767, %v4000
      %v4049 = vadd.f32 %v3770, %v4003
      %v4050 = vadd.f32 %v3775, %v4008
      %v4051 = vadd.f32 %v3778, %v4011
      %v4052 = vadd.f32 %v3783, %v4016
      %v4053 = vadd.f32 %v3786, %v4019
      %v4054 = vpack.c.bf16 %v3294, %v3292
      %v4055 = vld [vmem:[%s4 + $0x18] sm:$0xf]
      %v4056 = vld [vmem:[%s4 + $0x1c] sm:$0xf]
      %v4059 = vunpack.c.l.b16 %v4055
      %v4060 = vunpack.c.l.b16 %v4056
      %v4061 = vpack.c.b16 %v4060, %v4059
      %v4064 = vsel %vm2787, %v4054, 0
      %4066 = vmatprep.subr.bf16.mxu0 0
      %4067 = vmatpush1.bf16.msra.mxu0 %v4061
      %4068 = vmatprep.subr.bf16.mxu0 0
      %4069 = vmatpush1.bf16.msra.mxu0 0
      %4070 = vmatprep.subr.bf16.mxu0 0
      %4071 = vmatpush1.bf16.msra.mxu0 0
      %4072 = vmatprep.subr.bf16.mxu0 0
      %4073 = vmatpush1.bf16.msra.mxu0 0
      %4074 = vmatprep.subr.bf16.mxu0 0
      %4075 = vmatpush1.bf16.msra.mxu0 0
      %4076 = vmatprep.subr.bf16.mxu0 0
      %4077 = vmatpush1.bf16.msra.mxu0 0
      %4078 = vmatprep.subr.bf16.mxu0 0
      %4079 = vmatpush1.bf16.msra.mxu0 0
      %4080 = vmatprep.subr.bf16.mxu0 0
      %4081 = vmatpush1.bf16.msra.mxu0 0
      %4082 = vmatprep.subr.bf16.mxu0 0
      %4083 = vmatpush1.bf16.msra.mxu0 0
      %4084 = vmatprep.subr.bf16.mxu0 0
      %4085 = vmatpush1.bf16.msra.mxu0 0
      %4086 = vmatprep.subr.bf16.mxu0 0
      %4087 = vmatpush1.bf16.msra.mxu0 0
      %4088 = vmatprep.subr.bf16.mxu0 0
      %4089 = vmatpush1.bf16.msra.mxu0 0
      %4090 = vmatprep.subr.bf16.mxu0 0
      %4091 = vmatpush1.bf16.msra.mxu0 0
      %4092 = vmatprep.subr.bf16.mxu0 0
      %4093 = vmatpush1.bf16.msra.mxu0 0
      %4094 = vmatprep.subr.bf16.mxu0 0
      %4095 = vmatpush1.bf16.msra.mxu0 0
      %4096 = vmatprep.subr.bf16.mxu0 0
      %4097 = vmatpush1.bf16.msra.mxu0 0
      %4098 = vmatprep.mubr.bf16.mxu0 0
      %4099 = vmatmul.mubr.bf16.gmra.mrb[0].mxu0 %v3584
      %v4100 = vpop.f32.mrb[0].mxu0
      %v4101 = vadd.f32 0.0, %v4100
      %v4102 = vpop.f32.mrb[0].mxu0
      %v4103 = vpop.f32.mrb[0].mxu0
      %v4104 = vadd.f32 0.0, %v4103
      %v4105 = vpop.f32.mrb[0].mxu0
      %4106 = vmatprep.mubr.bf16.mxu0 0
      %4107 = vmatmul.mubr.bf16.gmra.mrb[0].mxu0 %v3587
      %v4108 = vpop.f32.mrb[0].mxu0
      %v4109 = vadd.f32 0.0, %v4108
      %v4110 = vpop.f32.mrb[0].mxu0
      %v4111 = vpop.f32.mrb[0].mxu0
      %v4112 = vadd.f32 0.0, %v4111
      %v4113 = vpop.f32.mrb[0].mxu0
      %4114 = vmatprep.mubr.bf16.mxu0 0
      %4115 = vmatmul.mubr.bf16.gmra.mrb[0].mxu0 %v3590
      %v4116 = vpop.f32.mrb[0].mxu0
      %v4117 = vadd.f32 0.0, %v4116
      %v4118 = vpop.f32.mrb[0].mxu0
      %v4119 = vpop.f32.mrb[0].mxu0
      %v4120 = vadd.f32 0.0, %v4119
      %v4121 = vpop.f32.mrb[0].mxu0
      %4122 = vmatprep.mubr.bf16.mxu0 0
      %4123 = vmatmul.mubr.bf16.gmra.mrb[0].mxu0 %v3593
      %v4124 = vpop.f32.mrb[0].mxu0
      %v4125 = vadd.f32 0.0, %v4124
      %v4126 = vpop.f32.mrb[0].mxu0
      %v4127 = vpop.f32.mrb[0].mxu0
      %v4128 = vadd.f32 0.0, %v4127
      %v4129 = vpop.f32.mrb[0].mxu0
      %4130 = vmatprep.mubr.bf16.mxu0 0
      %4131 = vmatmul.mubr.bf16.gmra.mrb[0].mxu0 %v3596
      %v4132 = vpop.f32.mrb[0].mxu0
      %v4133 = vadd.f32 0.0, %v4132
      %v4134 = vpop.f32.mrb[0].mxu0
      %v4135 = vpop.f32.mrb[0].mxu0
      %v4136 = vadd.f32 0.0, %v4135
      %v4137 = vpop.f32.mrb[0].mxu0
      %4138 = vmatprep.mubr.bf16.mxu0 0
      %4139 = vmatmul.mubr.bf16.gmra.mrb[0].mxu0 %v3599
      %v4140 = vpop.f32.mrb[0].mxu0
      %v4141 = vadd.f32 0.0, %v4140
      %v4142 = vpop.f32.mrb[0].mxu0
      %v4143 = vpop.f32.mrb[0].mxu0
      %v4144 = vadd.f32 0.0, %v4143
      %v4145 = vpop.f32.mrb[0].mxu0
      %4146 = vmatprep.mubr.bf16.mxu0 0
      %4147 = vmatmul.mubr.bf16.gmra.mrb[0].mxu0 %v3602
      %v4148 = vpop.f32.mrb[0].mxu0
      %v4149 = vadd.f32 0.0, %v4148
      %v4150 = vpop.f32.mrb[0].mxu0
      %v4151 = vpop.f32.mrb[0].mxu0
      %v4152 = vadd.f32 0.0, %v4151
      %v4153 = vpop.f32.mrb[0].mxu0
      %4154 = vmatprep.mubr.bf16.mxu0 0
      %4155 = vmatmul.mubr.bf16.gmra.mrb[0].mxu0 %v3605
      %v4156 = vpop.f32.mrb[0].mxu0
      %v4157 = vadd.f32 0.0, %v4156
      %v4158 = vpop.f32.mrb[0].mxu0
      %v4159 = vpop.f32.mrb[0].mxu0
      %v4160 = vadd.f32 0.0, %v4159
      %v4161 = vpop.f32.mrb[0].mxu0
      %4162 = vmatprep.mubr.bf16.mxu0 0
      %4163 = vmatmul.mubr.bf16.gmra.mrb[0].mxu0 %v3608
      %v4164 = vpop.f32.mrb[0].mxu0
      %v4165 = vadd.f32 0.0, %v4164
      %v4166 = vpop.f32.mrb[0].mxu0
      %v4167 = vpop.f32.mrb[0].mxu0
      %v4168 = vadd.f32 0.0, %v4167
      %v4169 = vpop.f32.mrb[0].mxu0
      %4170 = vmatprep.mubr.bf16.mxu0 0
      %4171 = vmatmul.mubr.bf16.gmra.mrb[0].mxu0 %v3611
      %v4172 = vpop.f32.mrb[0].mxu0
      %v4173 = vadd.f32 0.0, %v4172
      %v4174 = vpop.f32.mrb[0].mxu0
      %v4175 = vpop.f32.mrb[0].mxu0
      %v4176 = vadd.f32 0.0, %v4175
      %v4177 = vpop.f32.mrb[0].mxu0
      %4178 = vmatprep.mubr.bf16.mxu0 0
      %4179 = vmatmul.mubr.bf16.gmra.mrb[0].mxu0 %v3614
      %v4180 = vpop.f32.mrb[0].mxu0
      %v4181 = vadd.f32 0.0, %v4180
      %v4182 = vpop.f32.mrb[0].mxu0
      %v4183 = vpop.f32.mrb[0].mxu0
      %v4184 = vadd.f32 0.0, %v4183
      %v4185 = vpop.f32.mrb[0].mxu0
      %4186 = vmatprep.mubr.bf16.mxu0 0
      %4187 = vmatmul.mubr.bf16.gmra.mrb[0].mxu0 %v3617
      %v4188 = vpop.f32.mrb[0].mxu0
      %v4189 = vadd.f32 0.0, %v4188
      %v4190 = vpop.f32.mrb[0].mxu0
      %v4191 = vpop.f32.mrb[0].mxu0
      %v4192 = vadd.f32 0.0, %v4191
      %v4193 = vpop.f32.mrb[0].mxu0
      %4194 = vmatprep.mubr.bf16.mxu0 0
      %4195 = vmatmul.mubr.bf16.gmra.mrb[0].mxu0 %v3620
      %v4196 = vpop.f32.mrb[0].mxu0
      %v4197 = vadd.f32 0.0, %v4196
      %v4198 = vpop.f32.mrb[0].mxu0
      %v4199 = vpop.f32.mrb[0].mxu0
      %v4200 = vadd.f32 0.0, %v4199
      %v4201 = vpop.f32.mrb[0].mxu0
      %4202 = vmatprep.mubr.bf16.mxu0 0
      %4203 = vmatmul.mubr.bf16.gmra.mrb[0].mxu0 %v3623
      %v4204 = vpop.f32.mrb[0].mxu0
      %v4205 = vadd.f32 0.0, %v4204
      %v4206 = vpop.f32.mrb[0].mxu0
      %v4207 = vpop.f32.mrb[0].mxu0
      %v4208 = vadd.f32 0.0, %v4207
      %v4209 = vpop.f32.mrb[0].mxu0
      %4210 = vmatprep.mubr.bf16.mxu0 0
      %4211 = vmatmul.mubr.bf16.gmra.mrb[0].mxu0 %v3626
      %v4212 = vpop.f32.mrb[0].mxu0
      %v4213 = vadd.f32 0.0, %v4212
      %v4214 = vpop.f32.mrb[0].mxu0
      %v4215 = vpop.f32.mrb[0].mxu0
      %v4216 = vadd.f32 0.0, %v4215
      %v4217 = vpop.f32.mrb[0].mxu0
      %4218 = vmatprep.mubr.bf16.mxu0 0
      %4219 = vmatmul.mubr.bf16.gmra.mrb[0].mxu0 %v4064
      %v4220 = vpop.f32.mrb[0].mxu0
      %v4221 = vadd.f32 0.0, %v4220
      %v4222 = vpop.f32.mrb[0].mxu0
      %v4223 = vpop.f32.mrb[0].mxu0
      %v4224 = vadd.f32 0.0, %v4223
      %v4225 = vpop.f32.mrb[0].mxu0
      %4226 = vdwg.mxu0
      %v4227 = vadd.f32 %v4022, %v4101
      %v4228 = vadd.f32 %v4023, %v4104
      %v4229 = vadd.f32 %v4024, %v4109
      %v4230 = vadd.f32 %v4025, %v4112
      %v4231 = vadd.f32 %v4026, %v4117
      %v4232 = vadd.f32 %v4027, %v4120
      %v4233 = vadd.f32 %v4028, %v4125
      %v4234 = vadd.f32 %v4029, %v4128
      %v4235 = vadd.f32 %v4030, %v4133
      %v4236 = vadd.f32 %v4031, %v4136
      %v4237 = vadd.f32 %v4032, %v4141
      %v4238 = vadd.f32 %v4033, %v4144
      %v4239 = vadd.f32 %v4034, %v4149
      %v4240 = vadd.f32 %v4035, %v4152
      %v4241 = vadd.f32 %v4036, %v4157
      %v4242 = vadd.f32 %v4037, %v4160
      %v4243 = vadd.f32 %v4038, %v4165
      %v4244 = vadd.f32 %v4039, %v4168
      %v4245 = vadd.f32 %v4040, %v4173
      %v4246 = vadd.f32 %v4041, %v4176
      %v4247 = vadd.f32 %v4042, %v4181
      %v4248 = vadd.f32 %v4043, %v4184
      %v4249 = vadd.f32 %v4044, %v4189
      %v4250 = vadd.f32 %v4045, %v4192
      %v4251 = vadd.f32 %v4046, %v4197
      %v4252 = vadd.f32 %v4047, %v4200
      %v4253 = vadd.f32 %v4048, %v4205
      %v4254 = vadd.f32 %v4049, %v4208
      %v4255 = vadd.f32 %v4050, %v4213
      %v4256 = vadd.f32 %v4051, %v4216
      %v4257 = vadd.f32 %v4052, %v4221
      %v4258 = vadd.f32 %v4053, %v4224
      %v4259 = vpack.c.bf16 %v2992, %v2991
      %v4260 = vld [vmem:[%s4 + $0x20] sm:$0xf]
      %v4261 = vld [vmem:[%s4 + $0x24] sm:$0xf]
      %v4264 = vunpack.c.l.b16 %v4260
      %v4265 = vunpack.c.l.b16 %v4261
      %v4266 = vpack.c.b16 %v4265, %v4264
      %v4269 = vsel %vm2787, %v4259, 0
      %4271 = vmatprep.subr.bf16.mxu0 0
      %4272 = vmatpush1.bf16.msra.mxu0 %v4266
      %4273 = vmatprep.subr.bf16.mxu0 0
      %4274 = vmatpush1.bf16.msra.mxu0 0
      %4275 = vmatprep.subr.bf16.mxu0 0
      %4276 = vmatpush1.bf16.msra.mxu0 0
      %4277 = vmatprep.subr.bf16.mxu0 0
      %4278 = vmatpush1.bf16.msra.mxu0 0
      %4279 = vmatprep.subr.bf16.mxu0 0
      %4280 = vmatpush1.bf16.msra.mxu0 0
      %4281 = vmatprep.subr.bf16.mxu0 0
      %4282 = vmatpush1.bf16.msra.mxu0 0
      %4283 = vmatprep.subr.bf16.mxu0 0
      %4284 = vmatpush1.bf16.msra.mxu0 0
      %4285 = vmatprep.subr.bf16.mxu0 0
      %4286 = vmatpush1.bf16.msra.mxu0 0
      %4287 = vmatprep.subr.bf16.mxu0 0
      %4288 = vmatpush1.bf16.msra.mxu0 0
      %4289 = vmatprep.subr.bf16.mxu0 0
      %4290 = vmatpush1.bf16.msra.mxu0 0
      %4291 = vmatprep.subr.bf16.mxu0 0
      %4292 = vmatpush1.bf16.msra.mxu0 0
      %4293 = vmatprep.subr.bf16.mxu0 0
      %4294 = vmatpush1.bf16.msra.mxu0 0
      %4295 = vmatprep.subr.bf16.mxu0 0
      %4296 = vmatpush1.bf16.msra.mxu0 0
      %4297 = vmatprep.subr.bf16.mxu0 0
      %4298 = vmatpush1.bf16.msra.mxu0 0
      %4299 = vmatprep.subr.bf16.mxu0 0
      %4300 = vmatpush1.bf16.msra.mxu0 0
      %4301 = vmatprep.subr.bf16.mxu0 0
      %4302 = vmatpush1.bf16.msra.mxu0 0
      %4303 = vmatprep.mubr.bf16.mxu0 0
      %4304 = vmatmul.mubr.bf16.gmra.mrb[0].mxu0 %v3369
      %v4305 = vpop.f32.mrb[0].mxu0
      %v4306 = vadd.f32 0.0, %v4305
      %v4307 = vpop.f32.mrb[0].mxu0
      %v4308 = vpop.f32.mrb[0].mxu0
      %v4309 = vadd.f32 0.0, %v4308
      %v4310 = vpop.f32.mrb[0].mxu0
      %4311 = vmatprep.mubr.bf16.mxu0 0
      %4312 = vmatmul.mubr.bf16.gmra.mrb[0].mxu0 %v3372
      %v4313 = vpop.f32.mrb[0].mxu0
      %v4314 = vadd.f32 0.0, %v4313
      %v4315 = vpop.f32.mrb[0].mxu0
      %v4316 = vpop.f32.mrb[0].mxu0
      %v4317 = vadd.f32 0.0, %v4316
      %v4318 = vpop.f32.mrb[0].mxu0
      %4319 = vmatprep.mubr.bf16.mxu0 0
      %4320 = vmatmul.mubr.bf16.gmra.mrb[0].mxu0 %v3375
      %v4321 = vpop.f32.mrb[0].mxu0
      %v4322 = vadd.f32 0.0, %v4321
      %v4323 = vpop.f32.mrb[0].mxu0
      %v4324 = vpop.f32.mrb[0].mxu0
      %v4325 = vadd.f32 0.0, %v4324
      %v4326 = vpop.f32.mrb[0].mxu0
      %4327 = vmatprep.mubr.bf16.mxu0 0
      %4328 = vmatmul.mubr.bf16.gmra.mrb[0].mxu0 %v3378
      %v4329 = vpop.f32.mrb[0].mxu0
      %v4330 = vadd.f32 0.0, %v4329
      %v4331 = vpop.f32.mrb[0].mxu0
      %v4332 = vpop.f32.mrb[0].mxu0
      %v4333 = vadd.f32 0.0, %v4332
      %v4334 = vpop.f32.mrb[0].mxu0
      %4335 = vmatprep.mubr.bf16.mxu0 0
      %4336 = vmatmul.mubr.bf16.gmra.mrb[0].mxu0 %v3381
      %v4337 = vpop.f32.mrb[0].mxu0
      %v4338 = vadd.f32 0.0, %v4337
      %v4339 = vpop.f32.mrb[0].mxu0
      %v4340 = vpop.f32.mrb[0].mxu0
      %v4341 = vadd.f32 0.0, %v4340
      %v4342 = vpop.f32.mrb[0].mxu0
      %4343 = vmatprep.mubr.bf16.mxu0 0
      %4344 = vmatmul.mubr.bf16.gmra.mrb[0].mxu0 %v3384
      %v4345 = vpop.f32.mrb[0].mxu0
      %v4346 = vadd.f32 0.0, %v4345
      %v4347 = vpop.f32.mrb[0].mxu0
      %v4348 = vpop.f32.mrb[0].mxu0
      %v4349 = vadd.f32 0.0, %v4348
      %v4350 = vpop.f32.mrb[0].mxu0
      %4351 = vmatprep.mubr.bf16.mxu0 0
      %4352 = vmatmul.mubr.bf16.gmra.mrb[0].mxu0 %v3387
      %v4353 = vpop.f32.mrb[0].mxu0
      %v4354 = vadd.f32 0.0, %v4353
      %v4355 = vpop.f32.mrb[0].mxu0
      %v4356 = vpop.f32.mrb[0].mxu0
      %v4357 = vadd.f32 0.0, %v4356
      %v4358 = vpop.f32.mrb[0].mxu0
      %4359 = vmatprep.mubr.bf16.mxu0 0
      %4360 = vmatmul.mubr.bf16.gmra.mrb[0].mxu0 %v3390
      %v4361 = vpop.f32.mrb[0].mxu0
      %v4362 = vadd.f32 0.0, %v4361
      %v4363 = vpop.f32.mrb[0].mxu0
      %v4364 = vpop.f32.mrb[0].mxu0
      %v4365 = vadd.f32 0.0, %v4364
      %v4366 = vpop.f32.mrb[0].mxu0
      %4367 = vmatprep.mubr.bf16.mxu0 0
      %4368 = vmatmul.mubr.bf16.gmra.mrb[0].mxu0 %v3393
      %v4369 = vpop.f32.mrb[0].mxu0
      %v4370 = vadd.f32 0.0, %v4369
      %v4371 = vpop.f32.mrb[0].mxu0
      %v4372 = vpop.f32.mrb[0].mxu0
      %v4373 = vadd.f32 0.0, %v4372
      %v4374 = vpop.f32.mrb[0].mxu0
      %4375 = vmatprep.mubr.bf16.mxu0 0
      %4376 = vmatmul.mubr.bf16.gmra.mrb[0].mxu0 %v3396
      %v4377 = vpop.f32.mrb[0].mxu0
      %v4378 = vadd.f32 0.0, %v4377
      %v4379 = vpop.f32.mrb[0].mxu0
      %v4380 = vpop.f32.mrb[0].mxu0
      %v4381 = vadd.f32 0.0, %v4380
      %v4382 = vpop.f32.mrb[0].mxu0
      %4383 = vmatprep.mubr.bf16.mxu0 0
      %4384 = vmatmul.mubr.bf16.gmra.mrb[0].mxu0 %v3399
      %v4385 = vpop.f32.mrb[0].mxu0
      %v4386 = vadd.f32 0.0, %v4385
      %v4387 = vpop.f32.mrb[0].mxu0
      %v4388 = vpop.f32.mrb[0].mxu0
      %v4389 = vadd.f32 0.0, %v4388
      %v4390 = vpop.f32.mrb[0].mxu0
      %4391 = vmatprep.mubr.bf16.mxu0 0
      %4392 = vmatmul.mubr.bf16.gmra.mrb[0].mxu0 %v3402
      %v4393 = vpop.f32.mrb[0].mxu0
      %v4394 = vadd.f32 0.0, %v4393
      %v4395 = vpop.f32.mrb[0].mxu0
      %v4396 = vpop.f32.mrb[0].mxu0
      %v4397 = vadd.f32 0.0, %v4396
      %v4398 = vpop.f32.mrb[0].mxu0
      %4399 = vmatprep.mubr.bf16.mxu0 0
      %4400 = vmatmul.mubr.bf16.gmra.mrb[0].mxu0 %v3405
      %v4401 = vpop.f32.mrb[0].mxu0
      %v4402 = vadd.f32 0.0, %v4401
      %v4403 = vpop.f32.mrb[0].mxu0
      %v4404 = vpop.f32.mrb[0].mxu0
      %v4405 = vadd.f32 0.0, %v4404
      %v4406 = vpop.f32.mrb[0].mxu0
      %4407 = vmatprep.mubr.bf16.mxu0 0
      %4408 = vmatmul.mubr.bf16.gmra.mrb[0].mxu0 %v3408
      %v4409 = vpop.f32.mrb[0].mxu0
      %v4410 = vadd.f32 0.0, %v4409
      %v4411 = vpop.f32.mrb[0].mxu0
      %v4412 = vpop.f32.mrb[0].mxu0
      %v4413 = vadd.f32 0.0, %v4412
      %v4414 = vpop.f32.mrb[0].mxu0
      %4415 = vmatprep.mubr.bf16.mxu0 0
      %4416 = vmatmul.mubr.bf16.gmra.mrb[0].mxu0 %v3411
      %v4417 = vpop.f32.mrb[0].mxu0
      %v4418 = vadd.f32 0.0, %v4417
      %v4419 = vpop.f32.mrb[0].mxu0
      %v4420 = vpop.f32.mrb[0].mxu0
      %v4421 = vadd.f32 0.0, %v4420
      %v4422 = vpop.f32.mrb[0].mxu0
      %4423 = vmatprep.mubr.bf16.mxu0 0
      %4424 = vmatmul.mubr.bf16.gmra.mrb[0].mxu0 %v4269
      %v4425 = vpop.f32.mrb[0].mxu0
      %v4426 = vadd.f32 0.0, %v4425
      %v4427 = vpop.f32.mrb[0].mxu0
      %v4428 = vpop.f32.mrb[0].mxu0
      %v4429 = vadd.f32 0.0, %v4428
      %v4430 = vpop.f32.mrb[0].mxu0
      %4431 = vdwg.mxu0
      %v4432 = vadd.f32 %v4227, %v4306
      %v4433 = vadd.f32 %v4228, %v4309
      %v4434 = vadd.f32 %v4229, %v4314
      %v4435 = vadd.f32 %v4230, %v4317
      %v4436 = vadd.f32 %v4231, %v4322
      %v4437 = vadd.f32 %v4232, %v4325
      %v4438 = vadd.f32 %v4233, %v4330
      %v4439 = vadd.f32 %v4234, %v4333
      %v4440 = vadd.f32 %v4235, %v4338
      %v4441 = vadd.f32 %v4236, %v4341
      %v4442 = vadd.f32 %v4237, %v4346
      %v4443 = vadd.f32 %v4238, %v4349
      %v4444 = vadd.f32 %v4239, %v4354
      %v4445 = vadd.f32 %v4240, %v4357
      %v4446 = vadd.f32 %v4241, %v4362
      %v4447 = vadd.f32 %v4242, %v4365
      %v4448 = vadd.f32 %v4243, %v4370
      %v4449 = vadd.f32 %v4244, %v4373
      %v4450 = vadd.f32 %v4245, %v4378
      %v4451 = vadd.f32 %v4246, %v4381
      %v4452 = vadd.f32 %v4247, %v4386
      %v4453 = vadd.f32 %v4248, %v4389
      %v4454 = vadd.f32 %v4249, %v4394
      %v4455 = vadd.f32 %v4250, %v4397
      %v4456 = vadd.f32 %v4251, %v4402
      %v4457 = vadd.f32 %v4252, %v4405
      %v4458 = vadd.f32 %v4253, %v4410
      %v4459 = vadd.f32 %v4254, %v4413
      %v4460 = vadd.f32 %v4255, %v4418
      %v4461 = vadd.f32 %v4256, %v4421
      %v4462 = vadd.f32 %v4257, %v4426
      %v4463 = vadd.f32 %v4258, %v4429
      %v4464 = vpack.c.bf16 %v3302, %v3300
      %v4465 = vld [vmem:[%s4 + $0x28] sm:$0xf]
      %v4466 = vld [vmem:[%s4 + $0x2c] sm:$0xf]
      %v4469 = vunpack.c.l.b16 %v4465
      %v4470 = vunpack.c.l.b16 %v4466
      %v4471 = vpack.c.b16 %v4470, %v4469
      %v4474 = vsel %vm2787, %v4464, 0
      %4476 = vmatprep.subr.bf16.mxu0 0
      %4477 = vmatpush1.bf16.msra.mxu0 %v4471
      %4478 = vmatprep.subr.bf16.mxu0 0
      %4479 = vmatpush1.bf16.msra.mxu0 0
      %4480 = vmatprep.subr.bf16.mxu0 0
      %4481 = vmatpush1.bf16.msra.mxu0 0
      %4482 = vmatprep.subr.bf16.mxu0 0
      %4483 = vmatpush1.bf16.msra.mxu0 0
      %4484 = vmatprep.subr.bf16.mxu0 0
      %4485 = vmatpush1.bf16.msra.mxu0 0
      %4486 = vmatprep.subr.bf16.mxu0 0
      %4487 = vmatpush1.bf16.msra.mxu0 0
      %4488 = vmatprep.subr.bf16.mxu0 0
      %4489 = vmatpush1.bf16.msra.mxu0 0
      %4490 = vmatprep.subr.bf16.mxu0 0
      %4491 = vmatpush1.bf16.msra.mxu0 0
      %4492 = vmatprep.subr.bf16.mxu0 0
      %4493 = vmatpush1.bf16.msra.mxu0 0
      %4494 = vmatprep.subr.bf16.mxu0 0
      %4495 = vmatpush1.bf16.msra.mxu0 0
      %4496 = vmatprep.subr.bf16.mxu0 0
      %4497 = vmatpush1.bf16.msra.mxu0 0
      %4498 = vmatprep.subr.bf16.mxu0 0
      %4499 = vmatpush1.bf16.msra.mxu0 0
      %4500 = vmatprep.subr.bf16.mxu0 0
      %4501 = vmatpush1.bf16.msra.mxu0 0
      %4502 = vmatprep.subr.bf16.mxu0 0
      %4503 = vmatpush1.bf16.msra.mxu0 0
      %4504 = vmatprep.subr.bf16.mxu0 0
      %4505 = vmatpush1.bf16.msra.mxu0 0
      %4506 = vmatprep.subr.bf16.mxu0 0
      %4507 = vmatpush1.bf16.msra.mxu0 0
      %4508 = vmatprep.mubr.bf16.mxu0 0
      %4509 = vmatmul.mubr.bf16.gmra.mrb[0].mxu0 %v3817
      %v4510 = vpop.f32.mrb[0].mxu0
      %v4511 = vadd.f32 0.0, %v4510
      %v4512 = vpop.f32.mrb[0].mxu0
      %v4513 = vpop.f32.mrb[0].mxu0
      %v4514 = vadd.f32 0.0, %v4513
      %v4515 = vpop.f32.mrb[0].mxu0
      %4516 = vmatprep.mubr.bf16.mxu0 0
      %4517 = vmatmul.mubr.bf16.gmra.mrb[0].mxu0 %v3820
      %v4518 = vpop.f32.mrb[0].mxu0
      %v4519 = vadd.f32 0.0, %v4518
      %v4520 = vpop.f32.mrb[0].mxu0
      %v4521 = vpop.f32.mrb[0].mxu0
      %v4522 = vadd.f32 0.0, %v4521
      %v4523 = vpop.f32.mrb[0].mxu0
      %4524 = vmatprep.mubr.bf16.mxu0 0
      %4525 = vmatmul.mubr.bf16.gmra.mrb[0].mxu0 %v3823
      %v4526 = vpop.f32.mrb[0].mxu0
      %v4527 = vadd.f32 0.0, %v4526
      %v4528 = vpop.f32.mrb[0].mxu0
      %v4529 = vpop.f32.mrb[0].mxu0
      %v4530 = vadd.f32 0.0, %v4529
      %v4531 = vpop.f32.mrb[0].mxu0
      %4532 = vmatprep.mubr.bf16.mxu0 0
      %4533 = vmatmul.mubr.bf16.gmra.mrb[0].mxu0 %v3826
      %v4534 = vpop.f32.mrb[0].mxu0
      %v4535 = vadd.f32 0.0, %v4534
      %v4536 = vpop.f32.mrb[0].mxu0
      %v4537 = vpop.f32.mrb[0].mxu0
      %v4538 = vadd.f32 0.0, %v4537
      %v4539 = vpop.f32.mrb[0].mxu0
      %4540 = vmatprep.mubr.bf16.mxu0 0
      %4541 = vmatmul.mubr.bf16.gmra.mrb[0].mxu0 %v3829
      %v4542 = vpop.f32.mrb[0].mxu0
      %v4543 = vadd.f32 0.0, %v4542
      %v4544 = vpop.f32.mrb[0].mxu0
      %v4545 = vpop.f32.mrb[0].mxu0
      %v4546 = vadd.f32 0.0, %v4545
      %v4547 = vpop.f32.mrb[0].mxu0
      %4548 = vmatprep.mubr.bf16.mxu0 0
      %4549 = vmatmul.mubr.bf16.gmra.mrb[0].mxu0 %v3832
      %v4550 = vpop.f32.mrb[0].mxu0
      %v4551 = vadd.f32 0.0, %v4550
      %v4552 = vpop.f32.mrb[0].mxu0
      %v4553 = vpop.f32.mrb[0].mxu0
      %v4554 = vadd.f32 0.0, %v4553
      %v4555 = vpop.f32.mrb[0].mxu0
      %4556 = vmatprep.mubr.bf16.mxu0 0
      %4557 = vmatmul.mubr.bf16.gmra.mrb[0].mxu0 %v3835
      %v4558 = vpop.f32.mrb[0].mxu0
      %v4559 = vadd.f32 0.0, %v4558
      %v4560 = vpop.f32.mrb[0].mxu0
      %v4561 = vpop.f32.mrb[0].mxu0
      %v4562 = vadd.f32 0.0, %v4561
      %v4563 = vpop.f32.mrb[0].mxu0
      %4564 = vmatprep.mubr.bf16.mxu0 0
      %4565 = vmatmul.mubr.bf16.gmra.mrb[0].mxu0 %v3838
      %v4566 = vpop.f32.mrb[0].mxu0
      %v4567 = vadd.f32 0.0, %v4566
      %v4568 = vpop.f32.mrb[0].mxu0
      %v4569 = vpop.f32.mrb[0].mxu0
      %v4570 = vadd.f32 0.0, %v4569
      %v4571 = vpop.f32.mrb[0].mxu0
      %4572 = vmatprep.mubr.bf16.mxu0 0
      %4573 = vmatmul.mubr.bf16.gmra.mrb[0].mxu0 %v3841
      %v4574 = vpop.f32.mrb[0].mxu0
      %v4575 = vadd.f32 0.0, %v4574
      %v4576 = vpop.f32.mrb[0].mxu0
      %v4577 = vpop.f32.mrb[0].mxu0
      %v4578 = vadd.f32 0.0, %v4577
      %v4579 = vpop.f32.mrb[0].mxu0
      %4580 = vmatprep.mubr.bf16.mxu0 0
      %4581 = vmatmul.mubr.bf16.gmra.mrb[0].mxu0 %v3844
      %v4582 = vpop.f32.mrb[0].mxu0
      %v4583 = vadd.f32 0.0, %v4582
      %v4584 = vpop.f32.mrb[0].mxu0
      %v4585 = vpop.f32.mrb[0].mxu0
      %v4586 = vadd.f32 0.0, %v4585
      %v4587 = vpop.f32.mrb[0].mxu0
      %4588 = vmatprep.mubr.bf16.mxu0 0
      %4589 = vmatmul.mubr.bf16.gmra.mrb[0].mxu0 %v3847
      %v4590 = vpop.f32.mrb[0].mxu0
      %v4591 = vadd.f32 0.0, %v4590
      %v4592 = vpop.f32.mrb[0].mxu0
      %v4593 = vpop.f32.mrb[0].mxu0
      %v4594 = vadd.f32 0.0, %v4593
      %v4595 = vpop.f32.mrb[0].mxu0
      %4596 = vmatprep.mubr.bf16.mxu0 0
      %4597 = vmatmul.mubr.bf16.gmra.mrb[0].mxu0 %v3850
      %v4598 = vpop.f32.mrb[0].mxu0
      %v4599 = vadd.f32 0.0, %v4598
      %v4600 = vpop.f32.mrb[0].mxu0
      %v4601 = vpop.f32.mrb[0].mxu0
      %v4602 = vadd.f32 0.0, %v4601
      %v4603 = vpop.f32.mrb[0].mxu0
      %4604 = vmatprep.mubr.bf16.mxu0 0
      %4605 = vmatmul.mubr.bf16.gmra.mrb[0].mxu0 %v3853
      %v4606 = vpop.f32.mrb[0].mxu0
      %v4607 = vadd.f32 0.0, %v4606
      %v4608 = vpop.f32.mrb[0].mxu0
      %v4609 = vpop.f32.mrb[0].mxu0
      %v4610 = vadd.f32 0.0, %v4609
      %v4611 = vpop.f32.mrb[0].mxu0
      %4612 = vmatprep.mubr.bf16.mxu0 0
      %4613 = vmatmul.mubr.bf16.gmra.mrb[0].mxu0 %v3856
      %v4614 = vpop.f32.mrb[0].mxu0
      %v4615 = vadd.f32 0.0, %v4614
      %v4616 = vpop.f32.mrb[0].mxu0
      %v4617 = vpop.f32.mrb[0].mxu0
      %v4618 = vadd.f32 0.0, %v4617
      %v4619 = vpop.f32.mrb[0].mxu0
      %4620 = vmatprep.mubr.bf16.mxu0 0
      %4621 = vmatmul.mubr.bf16.gmra.mrb[0].mxu0 %v3859
      %v4622 = vpop.f32.mrb[0].mxu0
      %v4623 = vadd.f32 0.0, %v4622
      %v4624 = vpop.f32.mrb[0].mxu0
      %v4625 = vpop.f32.mrb[0].mxu0
      %v4626 = vadd.f32 0.0, %v4625
      %v4627 = vpop.f32.mrb[0].mxu0
      %4628 = vmatprep.mubr.bf16.mxu0 0
      %4629 = vmatmul.mubr.bf16.gmra.mrb[0].mxu0 %v4474
      %v4630 = vpop.f32.mrb[0].mxu0
      %v4631 = vadd.f32 0.0, %v4630
      %v4632 = vpop.f32.mrb[0].mxu0
      %v4633 = vpop.f32.mrb[0].mxu0
      %v4634 = vadd.f32 0.0, %v4633
      %v4635 = vpop.f32.mrb[0].mxu0
      %4636 = vdwg.mxu0
      %v4637 = vadd.f32 %v4432, %v4511
      %v4638 = vadd.f32 %v4433, %v4514
      %v4639 = vadd.f32 %v4434, %v4519
      %v4640 = vadd.f32 %v4435, %v4522
      %v4641 = vadd.f32 %v4436, %v4527
      %v4642 = vadd.f32 %v4437, %v4530
      %v4643 = vadd.f32 %v4438, %v4535
      %v4644 = vadd.f32 %v4439, %v4538
      %v4645 = vadd.f32 %v4440, %v4543
      %v4646 = vadd.f32 %v4441, %v4546
      %v4647 = vadd.f32 %v4442, %v4551
      %v4648 = vadd.f32 %v4443, %v4554
      %v4649 = vadd.f32 %v4444, %v4559
      %v4650 = vadd.f32 %v4445, %v4562
      %v4651 = vadd.f32 %v4446, %v4567
      %v4652 = vadd.f32 %v4447, %v4570
      %v4653 = vadd.f32 %v4448, %v4575
      %v4654 = vadd.f32 %v4449, %v4578
      %v4655 = vadd.f32 %v4450, %v4583
      %v4656 = vadd.f32 %v4451, %v4586
      %v4657 = vadd.f32 %v4452, %v4591
      %v4658 = vadd.f32 %v4453, %v4594
      %v4659 = vadd.f32 %v4454, %v4599
      %v4660 = vadd.f32 %v4455, %v4602
      %v4661 = vadd.f32 %v4456, %v4607
      %v4662 = vadd.f32 %v4457, %v4610
      %v4663 = vadd.f32 %v4458, %v4615
      %v4664 = vadd.f32 %v4459, %v4618
      %v4665 = vadd.f32 %v4460, %v4623
      %v4666 = vadd.f32 %v4461, %v4626
      %v4667 = vadd.f32 %v4462, %v4631
      %v4668 = vadd.f32 %v4463, %v4634
      %v4669 = vpack.c.bf16 %v3312, %v3310
      %v4670 = vld [vmem:[%s4 + $0x30] sm:$0xf]
      %v4671 = vld [vmem:[%s4 + $0x34] sm:$0xf]
      %v4674 = vunpack.c.l.b16 %v4670
      %v4675 = vunpack.c.l.b16 %v4671
      %v4676 = vpack.c.b16 %v4675, %v4674
      %v4679 = vsel %vm2787, %v4669, 0
      %4681 = vmatprep.subr.bf16.mxu0 0
      %4682 = vmatpush1.bf16.msra.mxu0 %v4676
      %4683 = vmatprep.subr.bf16.mxu0 0
      %4684 = vmatpush1.bf16.msra.mxu0 0
      %4685 = vmatprep.subr.bf16.mxu0 0
      %4686 = vmatpush1.bf16.msra.mxu0 0
      %4687 = vmatprep.subr.bf16.mxu0 0
      %4688 = vmatpush1.bf16.msra.mxu0 0
      %4689 = vmatprep.subr.bf16.mxu0 0
      %4690 = vmatpush1.bf16.msra.mxu0 0
      %4691 = vmatprep.subr.bf16.mxu0 0
      %4692 = vmatpush1.bf16.msra.mxu0 0
      %4693 = vmatprep.subr.bf16.mxu0 0
      %4694 = vmatpush1.bf16.msra.mxu0 0
      %4695 = vmatprep.subr.bf16.mxu0 0
      %4696 = vmatpush1.bf16.msra.mxu0 0
      %4697 = vmatprep.subr.bf16.mxu0 0
      %4698 = vmatpush1.bf16.msra.mxu0 0
      %4699 = vmatprep.subr.bf16.mxu0 0
      %4700 = vmatpush1.bf16.msra.mxu0 0
      %4701 = vmatprep.subr.bf16.mxu0 0
      %4702 = vmatpush1.bf16.msra.mxu0 0
      %4703 = vmatprep.subr.bf16.mxu0 0
      %4704 = vmatpush1.bf16.msra.mxu0 0
      %4705 = vmatprep.subr.bf16.mxu0 0
      %4706 = vmatpush1.bf16.msra.mxu0 0
      %4707 = vmatprep.subr.bf16.mxu0 0
      %4708 = vmatpush1.bf16.msra.mxu0 0
      %4709 = vmatprep.subr.bf16.mxu0 0
      %4710 = vmatpush1.bf16.msra.mxu0 0
      %4711 = vmatprep.subr.bf16.mxu0 0
      %4712 = vmatpush1.bf16.msra.mxu0 0
      %4713 = vmatprep.mubr.bf16.mxu0 0
      %4714 = vmatmul.mubr.bf16.gmra.mrb[0].mxu0 %v3587
      %v4715 = vpop.f32.mrb[0].mxu0
      %v4716 = vadd.f32 0.0, %v4715
      %v4717 = vpop.f32.mrb[0].mxu0
      %v4718 = vpop.f32.mrb[0].mxu0
      %v4719 = vadd.f32 0.0, %v4718
      %v4720 = vpop.f32.mrb[0].mxu0
      %4721 = vmatprep.mubr.bf16.mxu0 0
      %4722 = vmatmul.mubr.bf16.gmra.mrb[0].mxu0 %v3590
      %v4723 = vpop.f32.mrb[0].mxu0
      %v4724 = vadd.f32 0.0, %v4723
      %v4725 = vpop.f32.mrb[0].mxu0
      %v4726 = vpop.f32.mrb[0].mxu0
      %v4727 = vadd.f32 0.0, %v4726
      %v4728 = vpop.f32.mrb[0].mxu0
      %4729 = vmatprep.mubr.bf16.mxu0 0
      %4730 = vmatmul.mubr.bf16.gmra.mrb[0].mxu0 %v3593
      %v4731 = vpop.f32.mrb[0].mxu0
      %v4732 = vadd.f32 0.0, %v4731
      %v4733 = vpop.f32.mrb[0].mxu0
      %v4734 = vpop.f32.mrb[0].mxu0
      %v4735 = vadd.f32 0.0, %v4734
      %v4736 = vpop.f32.mrb[0].mxu0
      %4737 = vmatprep.mubr.bf16.mxu0 0
      %4738 = vmatmul.mubr.bf16.gmra.mrb[0].mxu0 %v3596
      %v4739 = vpop.f32.mrb[0].mxu0
      %v4740 = vadd.f32 0.0, %v4739
      %v4741 = vpop.f32.mrb[0].mxu0
      %v4742 = vpop.f32.mrb[0].mxu0
      %v4743 = vadd.f32 0.0, %v4742
      %v4744 = vpop.f32.mrb[0].mxu0
      %4745 = vmatprep.mubr.bf16.mxu0 0
      %4746 = vmatmul.mubr.bf16.gmra.mrb[0].mxu0 %v3599
      %v4747 = vpop.f32.mrb[0].mxu0
      %v4748 = vadd.f32 0.0, %v4747
      %v4749 = vpop.f32.mrb[0].mxu0
      %v4750 = vpop.f32.mrb[0].mxu0
      %v4751 = vadd.f32 0.0, %v4750
      %v4752 = vpop.f32.mrb[0].mxu0
      %4753 = vmatprep.mubr.bf16.mxu0 0
      %4754 = vmatmul.mubr.bf16.gmra.mrb[0].mxu0 %v3602
      %v4755 = vpop.f32.mrb[0].mxu0
      %v4756 = vadd.f32 0.0, %v4755
      %v4757 = vpop.f32.mrb[0].mxu0
      %v4758 = vpop.f32.mrb[0].mxu0
      %v4759 = vadd.f32 0.0, %v4758
      %v4760 = vpop.f32.mrb[0].mxu0
      %4761 = vmatprep.mubr.bf16.mxu0 0
      %4762 = vmatmul.mubr.bf16.gmra.mrb[0].mxu0 %v3605
      %v4763 = vpop.f32.mrb[0].mxu0
      %v4764 = vadd.f32 0.0, %v4763
      %v4765 = vpop.f32.mrb[0].mxu0
      %v4766 = vpop.f32.mrb[0].mxu0
      %v4767 = vadd.f32 0.0, %v4766
      %v4768 = vpop.f32.mrb[0].mxu0
      %4769 = vmatprep.mubr.bf16.mxu0 0
      %4770 = vmatmul.mubr.bf16.gmra.mrb[0].mxu0 %v3608
      %v4771 = vpop.f32.mrb[0].mxu0
      %v4772 = vadd.f32 0.0, %v4771
      %v4773 = vpop.f32.mrb[0].mxu0
      %v4774 = vpop.f32.mrb[0].mxu0
      %v4775 = vadd.f32 0.0, %v4774
      %v4776 = vpop.f32.mrb[0].mxu0
      %4777 = vmatprep.mubr.bf16.mxu0 0
      %4778 = vmatmul.mubr.bf16.gmra.mrb[0].mxu0 %v3611
      %v4779 = vpop.f32.mrb[0].mxu0
      %v4780 = vadd.f32 0.0, %v4779
      %v4781 = vpop.f32.mrb[0].mxu0
      %v4782 = vpop.f32.mrb[0].mxu0
      %v4783 = vadd.f32 0.0, %v4782
      %v4784 = vpop.f32.mrb[0].mxu0
      %4785 = vmatprep.mubr.bf16.mxu0 0
      %4786 = vmatmul.mubr.bf16.gmra.mrb[0].mxu0 %v3614
      %v4787 = vpop.f32.mrb[0].mxu0
      %v4788 = vadd.f32 0.0, %v4787
      %v4789 = vpop.f32.mrb[0].mxu0
      %v4790 = vpop.f32.mrb[0].mxu0
      %v4791 = vadd.f32 0.0, %v4790
      %v4792 = vpop.f32.mrb[0].mxu0
      %4793 = vmatprep.mubr.bf16.mxu0 0
      %4794 = vmatmul.mubr.bf16.gmra.mrb[0].mxu0 %v3617
      %v4795 = vpop.f32.mrb[0].mxu0
      %v4796 = vadd.f32 0.0, %v4795
      %v4797 = vpop.f32.mrb[0].mxu0
      %v4798 = vpop.f32.mrb[0].mxu0
      %v4799 = vadd.f32 0.0, %v4798
      %v4800 = vpop.f32.mrb[0].mxu0
      %4801 = vmatprep.mubr.bf16.mxu0 0
      %4802 = vmatmul.mubr.bf16.gmra.mrb[0].mxu0 %v3620
      %v4803 = vpop.f32.mrb[0].mxu0
      %v4804 = vadd.f32 0.0, %v4803
      %v4805 = vpop.f32.mrb[0].mxu0
      %v4806 = vpop.f32.mrb[0].mxu0
      %v4807 = vadd.f32 0.0, %v4806
      %v4808 = vpop.f32.mrb[0].mxu0
      %4809 = vmatprep.mubr.bf16.mxu0 0
      %4810 = vmatmul.mubr.bf16.gmra.mrb[0].mxu0 %v3623
      %v4811 = vpop.f32.mrb[0].mxu0
      %v4812 = vadd.f32 0.0, %v4811
      %v4813 = vpop.f32.mrb[0].mxu0
      %v4814 = vpop.f32.mrb[0].mxu0
      %v4815 = vadd.f32 0.0, %v4814
      %v4816 = vpop.f32.mrb[0].mxu0
      %4817 = vmatprep.mubr.bf16.mxu0 0
      %4818 = vmatmul.mubr.bf16.gmra.mrb[0].mxu0 %v3626
      %v4819 = vpop.f32.mrb[0].mxu0
      %v4820 = vadd.f32 0.0, %v4819
      %v4821 = vpop.f32.mrb[0].mxu0
      %v4822 = vpop.f32.mrb[0].mxu0
      %v4823 = vadd.f32 0.0, %v4822
      %v4824 = vpop.f32.mrb[0].mxu0
      %4825 = vmatprep.mubr.bf16.mxu0 0
      %4826 = vmatmul.mubr.bf16.gmra.mrb[0].mxu0 %v4064
      %v4827 = vpop.f32.mrb[0].mxu0
      %v4828 = vadd.f32 0.0, %v4827
      %v4829 = vpop.f32.mrb[0].mxu0
      %v4830 = vpop.f32.mrb[0].mxu0
      %v4831 = vadd.f32 0.0, %v4830
      %v4832 = vpop.f32.mrb[0].mxu0
      %4833 = vmatprep.mubr.bf16.mxu0 0
      %4834 = vmatmul.mubr.bf16.gmra.mrb[0].mxu0 %v4679
      %v4835 = vpop.f32.mrb[0].mxu0
      %v4836 = vadd.f32 0.0, %v4835
      %v4837 = vpop.f32.mrb[0].mxu0
      %v4838 = vpop.f32.mrb[0].mxu0
      %v4839 = vadd.f32 0.0, %v4838
      %v4840 = vpop.f32.mrb[0].mxu0
      %4841 = vdwg.mxu0
      %v4842 = vadd.f32 %v4637, %v4716
      %v4843 = vadd.f32 %v4638, %v4719
      %v4844 = vadd.f32 %v4639, %v4724
      %v4845 = vadd.f32 %v4640, %v4727
      %v4846 = vadd.f32 %v4641, %v4732
      %v4847 = vadd.f32 %v4642, %v4735
      %v4848 = vadd.f32 %v4643, %v4740
      %v4849 = vadd.f32 %v4644, %v4743
      %v4850 = vadd.f32 %v4645, %v4748
      %v4851 = vadd.f32 %v4646, %v4751
      %v4852 = vadd.f32 %v4647, %v4756
      %v4853 = vadd.f32 %v4648, %v4759
      %v4854 = vadd.f32 %v4649, %v4764
      %v4855 = vadd.f32 %v4650, %v4767
      %v4856 = vadd.f32 %v4651, %v4772
      %v4857 = vadd.f32 %v4652, %v4775
      %v4858 = vadd.f32 %v4653, %v4780
      %v4859 = vadd.f32 %v4654, %v4783
      %v4860 = vadd.f32 %v4655, %v4788
      %v4861 = vadd.f32 %v4656, %v4791
      %v4862 = vadd.f32 %v4657, %v4796
      %v4863 = vadd.f32 %v4658, %v4799
      %v4864 = vadd.f32 %v4659, %v4804
      %v4865 = vadd.f32 %v4660, %v4807
      %v4866 = vadd.f32 %v4661, %v4812
      %v4867 = vadd.f32 %v4662, %v4815
      %v4868 = vadd.f32 %v4663, %v4820
      %v4869 = vadd.f32 %v4664, %v4823
      %v4870 = vadd.f32 %v4665, %v4828
      %v4871 = vadd.f32 %v4666, %v4831
      %v4872 = vadd.f32 %v4667, %v4836
      %v4873 = vadd.f32 %v4668, %v4839
      %v4874 = vpack.c.bf16 %v2996, %v2995
      %v4875 = vld [vmem:[%s4 + $0x38] sm:$0xf]
      %v4876 = vld [vmem:[%s4 + $0x3c] sm:$0xf]
      %v4879 = vunpack.c.l.b16 %v4875
      %v4880 = vunpack.c.l.b16 %v4876
      %v4881 = vpack.c.b16 %v4880, %v4879
      %v4884 = vsel %vm2787, %v4874, 0
      %4886 = vmatprep.subr.bf16.mxu0 0
      %4887 = vmatpush1.bf16.msra.mxu0 %v4881
      %4888 = vmatprep.subr.bf16.mxu0 0
      %4889 = vmatpush1.bf16.msra.mxu0 0
      %4890 = vmatprep.subr.bf16.mxu0 0
      %4891 = vmatpush1.bf16.msra.mxu0 0
      %4892 = vmatprep.subr.bf16.mxu0 0
      %4893 = vmatpush1.bf16.msra.mxu0 0
      %4894 = vmatprep.subr.bf16.mxu0 0
      %4895 = vmatpush1.bf16.msra.mxu0 0
      %4896 = vmatprep.subr.bf16.mxu0 0
      %4897 = vmatpush1.bf16.msra.mxu0 0
      %4898 = vmatprep.subr.bf16.mxu0 0
      %4899 = vmatpush1.bf16.msra.mxu0 0
      %4900 = vmatprep.subr.bf16.mxu0 0
      %4901 = vmatpush1.bf16.msra.mxu0 0
      %4902 = vmatprep.subr.bf16.mxu0 0
      %4903 = vmatpush1.bf16.msra.mxu0 0
      %4904 = vmatprep.subr.bf16.mxu0 0
      %4905 = vmatpush1.bf16.msra.mxu0 0
      %4906 = vmatprep.subr.bf16.mxu0 0
      %4907 = vmatpush1.bf16.msra.mxu0 0
      %4908 = vmatprep.subr.bf16.mxu0 0
      %4909 = vmatpush1.bf16.msra.mxu0 0
      %4910 = vmatprep.subr.bf16.mxu0 0
      %4911 = vmatpush1.bf16.msra.mxu0 0
      %4912 = vmatprep.subr.bf16.mxu0 0
      %4913 = vmatpush1.bf16.msra.mxu0 0
      %4914 = vmatprep.subr.bf16.mxu0 0
      %4915 = vmatpush1.bf16.msra.mxu0 0
      %4916 = vmatprep.subr.bf16.mxu0 0
      %4917 = vmatpush1.bf16.msra.mxu0 0
      %4918 = vmatprep.mubr.bf16.mxu0 0
      %4919 = vmatmul.mubr.bf16.gmra.mrb[0].mxu0 %v3372
      %v4920 = vpop.f32.mrb[0].mxu0
      %v4921 = vadd.f32 0.0, %v4920
      %v4922 = vpop.f32.mrb[0].mxu0
      %v4923 = vpop.f32.mrb[0].mxu0
      %v4924 = vadd.f32 0.0, %v4923
      %v4925 = vpop.f32.mrb[0].mxu0
      %4926 = vmatprep.mubr.bf16.mxu0 0
      %4927 = vmatmul.mubr.bf16.gmra.mrb[0].mxu0 %v3375
      %v4928 = vpop.f32.mrb[0].mxu0
      %v4929 = vadd.f32 0.0, %v4928
      %v4930 = vpop.f32.mrb[0].mxu0
      %v4931 = vpop.f32.mrb[0].mxu0
      %v4932 = vadd.f32 0.0, %v4931
      %v4933 = vpop.f32.mrb[0].mxu0
      %4934 = vmatprep.mubr.bf16.mxu0 0
      %4935 = vmatmul.mubr.bf16.gmra.mrb[0].mxu0 %v3378
      %v4936 = vpop.f32.mrb[0].mxu0
      %v4937 = vadd.f32 0.0, %v4936
      %v4938 = vpop.f32.mrb[0].mxu0
      %v4939 = vpop.f32.mrb[0].mxu0
      %v4940 = vadd.f32 0.0, %v4939
      %v4941 = vpop.f32.mrb[0].mxu0
      %4942 = vmatprep.mubr.bf16.mxu0 0
      %4943 = vmatmul.mubr.bf16.gmra.mrb[0].mxu0 %v3381
      %v4944 = vpop.f32.mrb[0].mxu0
      %v4945 = vadd.f32 0.0, %v4944
      %v4946 = vpop.f32.mrb[0].mxu0
      %v4947 = vpop.f32.mrb[0].mxu0
      %v4948 = vadd.f32 0.0, %v4947
      %v4949 = vpop.f32.mrb[0].mxu0
      %4950 = vmatprep.mubr.bf16.mxu0 0
      %4951 = vmatmul.mubr.bf16.gmra.mrb[0].mxu0 %v3384
      %v4952 = vpop.f32.mrb[0].mxu0
      %v4953 = vadd.f32 0.0, %v4952
      %v4954 = vpop.f32.mrb[0].mxu0
      %v4955 = vpop.f32.mrb[0].mxu0
      %v4956 = vadd.f32 0.0, %v4955
      %v4957 = vpop.f32.mrb[0].mxu0
      %4958 = vmatprep.mubr.bf16.mxu0 0
      %4959 = vmatmul.mubr.bf16.gmra.mrb[0].mxu0 %v3387
      %v4960 = vpop.f32.mrb[0].mxu0
      %v4961 = vadd.f32 0.0, %v4960
      %v4962 = vpop.f32.mrb[0].mxu0
      %v4963 = vpop.f32.mrb[0].mxu0
      %v4964 = vadd.f32 0.0, %v4963
      %v4965 = vpop.f32.mrb[0].mxu0
      %4966 = vmatprep.mubr.bf16.mxu0 0
      %4967 = vmatmul.mubr.bf16.gmra.mrb[0].mxu0 %v3390
      %v4968 = vpop.f32.mrb[0].mxu0
      %v4969 = vadd.f32 0.0, %v4968
      %v4970 = vpop.f32.mrb[0].mxu0
      %v4971 = vpop.f32.mrb[0].mxu0
      %v4972 = vadd.f32 0.0, %v4971
      %v4973 = vpop.f32.mrb[0].mxu0
      %4974 = vmatprep.mubr.bf16.mxu0 0
      %4975 = vmatmul.mubr.bf16.gmra.mrb[0].mxu0 %v3393
      %v4976 = vpop.f32.mrb[0].mxu0
      %v4977 = vadd.f32 0.0, %v4976
      %v4978 = vpop.f32.mrb[0].mxu0
      %v4979 = vpop.f32.mrb[0].mxu0
      %v4980 = vadd.f32 0.0, %v4979
      %v4981 = vpop.f32.mrb[0].mxu0
      %4982 = vmatprep.mubr.bf16.mxu0 0
      %4983 = vmatmul.mubr.bf16.gmra.mrb[0].mxu0 %v3396
      %v4984 = vpop.f32.mrb[0].mxu0
      %v4985 = vadd.f32 0.0, %v4984
      %v4986 = vpop.f32.mrb[0].mxu0
      %v4987 = vpop.f32.mrb[0].mxu0
      %v4988 = vadd.f32 0.0, %v4987
      %v4989 = vpop.f32.mrb[0].mxu0
      %4990 = vmatprep.mubr.bf16.mxu0 0
      %4991 = vmatmul.mubr.bf16.gmra.mrb[0].mxu0 %v3399
      %v4992 = vpop.f32.mrb[0].mxu0
      %v4993 = vadd.f32 0.0, %v4992
      %v4994 = vpop.f32.mrb[0].mxu0
      %v4995 = vpop.f32.mrb[0].mxu0
      %v4996 = vadd.f32 0.0, %v4995
      %v4997 = vpop.f32.mrb[0].mxu0
      %4998 = vmatprep.mubr.bf16.mxu0 0
      %4999 = vmatmul.mubr.bf16.gmra.mrb[0].mxu0 %v3402
      %v5000 = vpop.f32.mrb[0].mxu0
      %v5001 = vadd.f32 0.0, %v5000
      %v5002 = vpop.f32.mrb[0].mxu0
      %v5003 = vpop.f32.mrb[0].mxu0
      %v5004 = vadd.f32 0.0, %v5003
      %v5005 = vpop.f32.mrb[0].mxu0
      %5006 = vmatprep.mubr.bf16.mxu0 0
      %5007 = vmatmul.mubr.bf16.gmra.mrb[0].mxu0 %v3405
      %v5008 = vpop.f32.mrb[0].mxu0
      %v5009 = vadd.f32 0.0, %v5008
      %v5010 = vpop.f32.mrb[0].mxu0
      %v5011 = vpop.f32.mrb[0].mxu0
      %v5012 = vadd.f32 0.0, %v5011
      %v5013 = vpop.f32.mrb[0].mxu0
      %5014 = vmatprep.mubr.bf16.mxu0 0
      %5015 = vmatmul.mubr.bf16.gmra.mrb[0].mxu0 %v3408
      %v5016 = vpop.f32.mrb[0].mxu0
      %v5017 = vadd.f32 0.0, %v5016
      %v5018 = vpop.f32.mrb[0].mxu0
      %v5019 = vpop.f32.mrb[0].mxu0
      %v5020 = vadd.f32 0.0, %v5019
      %v5021 = vpop.f32.mrb[0].mxu0
      %5022 = vmatprep.mubr.bf16.mxu0 0
      %5023 = vmatmul.mubr.bf16.gmra.mrb[0].mxu0 %v3411
      %v5024 = vpop.f32.mrb[0].mxu0
      %v5025 = vadd.f32 0.0, %v5024
      %v5026 = vpop.f32.mrb[0].mxu0
      %v5027 = vpop.f32.mrb[0].mxu0
      %v5028 = vadd.f32 0.0, %v5027
      %v5029 = vpop.f32.mrb[0].mxu0
      %5030 = vmatprep.mubr.bf16.mxu0 0
      %5031 = vmatmul.mubr.bf16.gmra.mrb[0].mxu0 %v4269
      %v5032 = vpop.f32.mrb[0].mxu0
      %v5033 = vadd.f32 0.0, %v5032
      %v5034 = vpop.f32.mrb[0].mxu0
      %v5035 = vpop.f32.mrb[0].mxu0
      %v5036 = vadd.f32 0.0, %v5035
      %v5037 = vpop.f32.mrb[0].mxu0
      %5038 = vmatprep.mubr.bf16.mxu0 0
      %5039 = vmatmul.mubr.bf16.gmra.mrb[0].mxu0 %v4884
      %v5040 = vpop.f32.mrb[0].mxu0
      %v5041 = vadd.f32 0.0, %v5040
      %v5042 = vpop.f32.mrb[0].mxu0
      %v5043 = vpop.f32.mrb[0].mxu0
      %v5044 = vadd.f32 0.0, %v5043
      %v5045 = vpop.f32.mrb[0].mxu0
      %5046 = vdwg.mxu0
      %v5047 = vadd.f32 %v4842, %v4921
      %v5048 = vadd.f32 %v4843, %v4924
      %v5049 = vadd.f32 %v4844, %v4929
      %v5050 = vadd.f32 %v4845, %v4932
      %v5051 = vadd.f32 %v4846, %v4937
      %v5052 = vadd.f32 %v4847, %v4940
      %v5053 = vadd.f32 %v4848, %v4945
      %v5054 = vadd.f32 %v4849, %v4948
      %v5055 = vadd.f32 %v4850, %v4953
      %v5056 = vadd.f32 %v4851, %v4956
      %v5057 = vadd.f32 %v4852, %v4961
      %v5058 = vadd.f32 %v4853, %v4964
      %v5059 = vadd.f32 %v4854, %v4969
      %v5060 = vadd.f32 %v4855, %v4972
      %v5061 = vadd.f32 %v4856, %v4977
      %v5062 = vadd.f32 %v4857, %v4980
      %v5063 = vadd.f32 %v4858, %v4985
      %v5064 = vadd.f32 %v4859, %v4988
      %v5065 = vadd.f32 %v4860, %v4993
      %v5066 = vadd.f32 %v4861, %v4996
      %v5067 = vadd.f32 %v4862, %v5001
      %v5068 = vadd.f32 %v4863, %v5004
      %v5069 = vadd.f32 %v4864, %v5009
      %v5070 = vadd.f32 %v4865, %v5012
      %v5071 = vadd.f32 %v4866, %v5017
      %v5072 = vadd.f32 %v4867, %v5020
      %v5073 = vadd.f32 %v4868, %v5025
      %v5074 = vadd.f32 %v4869, %v5028
      %v5075 = vadd.f32 %v4870, %v5033
      %v5076 = vadd.f32 %v4871, %v5036
      %v5077 = vadd.f32 %v4872, %v5041
      %v5078 = vadd.f32 %v4873, %v5044
      %v5079 = vpack.c.bf16 %v3320, %v3318
      %v5080 = vld [vmem:[%s4 + $0x40] sm:$0xf]
      %v5081 = vld [vmem:[%s4 + $0x44] sm:$0xf]
      %v5084 = vunpack.c.l.b16 %v5080
      %v5085 = vunpack.c.l.b16 %v5081
      %v5086 = vpack.c.b16 %v5085, %v5084
      %v5089 = vsel %vm2787, %v5079, 0
      %5091 = vmatprep.subr.bf16.mxu0 0
      %5092 = vmatpush1.bf16.msra.mxu0 %v5086
      %5093 = vmatprep.subr.bf16.mxu0 0
      %5094 = vmatpush1.bf16.msra.mxu0 0
      %5095 = vmatprep.subr.bf16.mxu0 0
      %5096 = vmatpush1.bf16.msra.mxu0 0
      %5097 = vmatprep.subr.bf16.mxu0 0
      %5098 = vmatpush1.bf16.msra.mxu0 0
      %5099 = vmatprep.subr.bf16.mxu0 0
      %5100 = vmatpush1.bf16.msra.mxu0 0
      %5101 = vmatprep.subr.bf16.mxu0 0
      %5102 = vmatpush1.bf16.msra.mxu0 0
      %5103 = vmatprep.subr.bf16.mxu0 0
      %5104 = vmatpush1.bf16.msra.mxu0 0
      %5105 = vmatprep.subr.bf16.mxu0 0
      %5106 = vmatpush1.bf16.msra.mxu0 0
      %5107 = vmatprep.subr.bf16.mxu0 0
      %5108 = vmatpush1.bf16.msra.mxu0 0
      %5109 = vmatprep.subr.bf16.mxu0 0
      %5110 = vmatpush1.bf16.msra.mxu0 0
      %5111 = vmatprep.subr.bf16.mxu0 0
      %5112 = vmatpush1.bf16.msra.mxu0 0
      %5113 = vmatprep.subr.bf16.mxu0 0
      %5114 = vmatpush1.bf16.msra.mxu0 0
      %5115 = vmatprep.subr.bf16.mxu0 0
      %5116 = vmatpush1.bf16.msra.mxu0 0
      %5117 = vmatprep.subr.bf16.mxu0 0
      %5118 = vmatpush1.bf16.msra.mxu0 0
      %5119 = vmatprep.subr.bf16.mxu0 0
      %5120 = vmatpush1.bf16.msra.mxu0 0
      %5121 = vmatprep.subr.bf16.mxu0 0
      %5122 = vmatpush1.bf16.msra.mxu0 0
      %5123 = vmatprep.mubr.bf16.mxu0 0
      %5124 = vmatmul.mubr.bf16.gmra.mrb[0].mxu0 %v3820
      %v5125 = vpop.f32.mrb[0].mxu0
      %v5126 = vadd.f32 0.0, %v5125
      %v5127 = vpop.f32.mrb[0].mxu0
      %v5128 = vpop.f32.mrb[0].mxu0
      %v5129 = vadd.f32 0.0, %v5128
      %v5130 = vpop.f32.mrb[0].mxu0
      %5131 = vmatprep.mubr.bf16.mxu0 0
      %5132 = vmatmul.mubr.bf16.gmra.mrb[0].mxu0 %v3823
      %v5133 = vpop.f32.mrb[0].mxu0
      %v5134 = vadd.f32 0.0, %v5133
      %v5135 = vpop.f32.mrb[0].mxu0
      %v5136 = vpop.f32.mrb[0].mxu0
      %v5137 = vadd.f32 0.0, %v5136
      %v5138 = vpop.f32.mrb[0].mxu0
      %5139 = vmatprep.mubr.bf16.mxu0 0
      %5140 = vmatmul.mubr.bf16.gmra.mrb[0].mxu0 %v3826
      %v5141 = vpop.f32.mrb[0].mxu0
      %v5142 = vadd.f32 0.0, %v5141
      %v5143 = vpop.f32.mrb[0].mxu0
      %v5144 = vpop.f32.mrb[0].mxu0
      %v5145 = vadd.f32 0.0, %v5144
      %v5146 = vpop.f32.mrb[0].mxu0
      %5147 = vmatprep.mubr.bf16.mxu0 0
      %5148 = vmatmul.mubr.bf16.gmra.mrb[0].mxu0 %v3829
      %v5149 = vpop.f32.mrb[0].mxu0
      %v5150 = vadd.f32 0.0, %v5149
      %v5151 = vpop.f32.mrb[0].mxu0
      %v5152 = vpop.f32.mrb[0].mxu0
      %v5153 = vadd.f32 0.0, %v5152
      %v5154 = vpop.f32.mrb[0].mxu0
      %5155 = vmatprep.mubr.bf16.mxu0 0
      %5156 = vmatmul.mubr.bf16.gmra.mrb[0].mxu0 %v3832
      %v5157 = vpop.f32.mrb[0].mxu0
      %v5158 = vadd.f32 0.0, %v5157
      %v5159 = vpop.f32.mrb[0].mxu0
      %v5160 = vpop.f32.mrb[0].mxu0
      %v5161 = vadd.f32 0.0, %v5160
      %v5162 = vpop.f32.mrb[0].mxu0
      %5163 = vmatprep.mubr.bf16.mxu0 0
      %5164 = vmatmul.mubr.bf16.gmra.mrb[0].mxu0 %v3835
      %v5165 = vpop.f32.mrb[0].mxu0
      %v5166 = vadd.f32 0.0, %v5165
      %v5167 = vpop.f32.mrb[0].mxu0
      %v5168 = vpop.f32.mrb[0].mxu0
      %v5169 = vadd.f32 0.0, %v5168
      %v5170 = vpop.f32.mrb[0].mxu0
      %5171 = vmatprep.mubr.bf16.mxu0 0
      %5172 = vmatmul.mubr.bf16.gmra.mrb[0].mxu0 %v3838
      %v5173 = vpop.f32.mrb[0].mxu0
      %v5174 = vadd.f32 0.0, %v5173
      %v5175 = vpop.f32.mrb[0].mxu0
      %v5176 = vpop.f32.mrb[0].mxu0
      %v5177 = vadd.f32 0.0, %v5176
      %v5178 = vpop.f32.mrb[0].mxu0
      %5179 = vmatprep.mubr.bf16.mxu0 0
      %5180 = vmatmul.mubr.bf16.gmra.mrb[0].mxu0 %v3841
      %v5181 = vpop.f32.mrb[0].mxu0
      %v5182 = vadd.f32 0.0, %v5181
      %v5183 = vpop.f32.mrb[0].mxu0
      %v5184 = vpop.f32.mrb[0].mxu0
      %v5185 = vadd.f32 0.0, %v5184
      %v5186 = vpop.f32.mrb[0].mxu0
      %5187 = vmatprep.mubr.bf16.mxu0 0
      %5188 = vmatmul.mubr.bf16.gmra.mrb[0].mxu0 %v3844
      %v5189 = vpop.f32.mrb[0].mxu0
      %v5190 = vadd.f32 0.0, %v5189
      %v5191 = vpop.f32.mrb[0].mxu0
      %v5192 = vpop.f32.mrb[0].mxu0
      %v5193 = vadd.f32 0.0, %v5192
      %v5194 = vpop.f32.mrb[0].mxu0
      %5195 = vmatprep.mubr.bf16.mxu0 0
      %5196 = vmatmul.mubr.bf16.gmra.mrb[0].mxu0 %v3847
      %v5197 = vpop.f32.mrb[0].mxu0
      %v5198 = vadd.f32 0.0, %v5197
      %v5199 = vpop.f32.mrb[0].mxu0
      %v5200 = vpop.f32.mrb[0].mxu0
      %v5201 = vadd.f32 0.0, %v5200
      %v5202 = vpop.f32.mrb[0].mxu0
      %5203 = vmatprep.mubr.bf16.mxu0 0
      %5204 = vmatmul.mubr.bf16.gmra.mrb[0].mxu0 %v3850
      %v5205 = vpop.f32.mrb[0].mxu0
      %v5206 = vadd.f32 0.0, %v5205
      %v5207 = vpop.f32.mrb[0].mxu0
      %v5208 = vpop.f32.mrb[0].mxu0
      %v5209 = vadd.f32 0.0, %v5208
      %v5210 = vpop.f32.mrb[0].mxu0
      %5211 = vmatprep.mubr.bf16.mxu0 0
      %5212 = vmatmul.mubr.bf16.gmra.mrb[0].mxu0 %v3853
      %v5213 = vpop.f32.mrb[0].mxu0
      %v5214 = vadd.f32 0.0, %v5213
      %v5215 = vpop.f32.mrb[0].mxu0
      %v5216 = vpop.f32.mrb[0].mxu0
      %v5217 = vadd.f32 0.0, %v5216
      %v5218 = vpop.f32.mrb[0].mxu0
      %5219 = vmatprep.mubr.bf16.mxu0 0
      %5220 = vmatmul.mubr.bf16.gmra.mrb[0].mxu0 %v3856
      %v5221 = vpop.f32.mrb[0].mxu0
      %v5222 = vadd.f32 0.0, %v5221
      %v5223 = vpop.f32.mrb[0].mxu0
      %v5224 = vpop.f32.mrb[0].mxu0
      %v5225 = vadd.f32 0.0, %v5224
      %v5226 = vpop.f32.mrb[0].mxu0
      %5227 = vmatprep.mubr.bf16.mxu0 0
      %5228 = vmatmul.mubr.bf16.gmra.mrb[0].mxu0 %v3859
      %v5229 = vpop.f32.mrb[0].mxu0
      %v5230 = vadd.f32 0.0, %v5229
      %v5231 = vpop.f32.mrb[0].mxu0
      %v5232 = vpop.f32.mrb[0].mxu0
      %v5233 = vadd.f32 0.0, %v5232
      %v5234 = vpop.f32.mrb[0].mxu0
      %5235 = vmatprep.mubr.bf16.mxu0 0
      %5236 = vmatmul.mubr.bf16.gmra.mrb[0].mxu0 %v4474
      %v5237 = vpop.f32.mrb[0].mxu0
      %v5238 = vadd.f32 0.0, %v5237
      %v5239 = vpop.f32.mrb[0].mxu0
      %v5240 = vpop.f32.mrb[0].mxu0
      %v5241 = vadd.f32 0.0, %v5240
      %v5242 = vpop.f32.mrb[0].mxu0
      %5243 = vmatprep.mubr.bf16.mxu0 0
      %5244 = vmatmul.mubr.bf16.gmra.mrb[0].mxu0 %v5089
      %v5245 = vpop.f32.mrb[0].mxu0
      %v5246 = vadd.f32 0.0, %v5245
      %v5247 = vpop.f32.mrb[0].mxu0
      %v5248 = vpop.f32.mrb[0].mxu0
      %v5249 = vadd.f32 0.0, %v5248
      %v5250 = vpop.f32.mrb[0].mxu0
      %5251 = vdwg.mxu0
      %v5252 = vadd.f32 %v5047, %v5126
      %v5253 = vadd.f32 %v5048, %v5129
      %v5254 = vadd.f32 %v5049, %v5134
      %v5255 = vadd.f32 %v5050, %v5137
      %v5256 = vadd.f32 %v5051, %v5142
      %v5257 = vadd.f32 %v5052, %v5145
      %v5258 = vadd.f32 %v5053, %v5150
      %v5259 = vadd.f32 %v5054, %v5153
      %v5260 = vadd.f32 %v5055, %v5158
      %v5261 = vadd.f32 %v5056, %v5161
      %v5262 = vadd.f32 %v5057, %v5166
      %v5263 = vadd.f32 %v5058, %v5169
      %v5264 = vadd.f32 %v5059, %v5174
      %v5265 = vadd.f32 %v5060, %v5177
      %v5266 = vadd.f32 %v5061, %v5182
      %v5267 = vadd.f32 %v5062, %v5185
      %v5268 = vadd.f32 %v5063, %v5190
      %v5269 = vadd.f32 %v5064, %v5193
      %v5270 = vadd.f32 %v5065, %v5198
      %v5271 = vadd.f32 %v5066, %v5201
      %v5272 = vadd.f32 %v5067, %v5206
      %v5273 = vadd.f32 %v5068, %v5209
      %v5274 = vadd.f32 %v5069, %v5214
      %v5275 = vadd.f32 %v5070, %v5217
      %v5276 = vadd.f32 %v5071, %v5222
      %v5277 = vadd.f32 %v5072, %v5225
      %v5278 = vadd.f32 %v5073, %v5230
      %v5279 = vadd.f32 %v5074, %v5233
      %v5280 = vadd.f32 %v5075, %v5238
      %v5281 = vadd.f32 %v5076, %v5241
      %v5282 = vadd.f32 %v5077, %v5246
      %v5283 = vadd.f32 %v5078, %v5249
      %v5284 = vld [vmem:[%s5] sm:$0x1]
      %v5286 = vlaneseq
      %v5287 = vshrl.u32 %v5286, 7
      %v5288 = vsub.s32 0, %v5287
      %v5289 = vrot.slane %v5284, %v5288
      %v5291 = vmul.f32 %v5252, %v5289
      %v5292 = vmul.f32 %v5253, %v5289
      %v5293 = vmul.f32 %v5254, %v5289
      %v5294 = vmul.f32 %v5255, %v5289
      %v5295 = vmul.f32 %v5256, %v5289
      %v5296 = vmul.f32 %v5257, %v5289
      %v5297 = vmul.f32 %v5258, %v5289
      %v5298 = vmul.f32 %v5259, %v5289
      %v5299 = vmul.f32 %v5260, %v5289
      %v5300 = vmul.f32 %v5261, %v5289
      %v5301 = vmul.f32 %v5262, %v5289
      %v5302 = vmul.f32 %v5263, %v5289
      %v5303 = vmul.f32 %v5264, %v5289
      %v5304 = vmul.f32 %v5265, %v5289
      %v5305 = vmul.f32 %v5266, %v5289
      %v5306 = vmul.f32 %v5267, %v5289
      %v5307 = vmul.f32 %v5268, %v5289
      %v5308 = vmul.f32 %v5269, %v5289
      %v5309 = vmul.f32 %v5270, %v5289
      %v5310 = vmul.f32 %v5271, %v5289
      %v5311 = vmul.f32 %v5272, %v5289
      %v5312 = vmul.f32 %v5273, %v5289
      %v5313 = vmul.f32 %v5274, %v5289
      %v5314 = vmul.f32 %v5275, %v5289
      %v5315 = vmul.f32 %v5276, %v5289
      %v5316 = vmul.f32 %v5277, %v5289
      %v5317 = vmul.f32 %v5278, %v5289
      %v5318 = vmul.f32 %v5279, %v5289
      %v5319 = vmul.f32 %v5280, %v5289
      %v5320 = vmul.f32 %v5281, %v5289
      %v5321 = vmul.f32 %v5282, %v5289
      %v5322 = vmul.f32 %v5283, %v5289
      %v5323 = vld [vmem:[%s6] sm:$0x1]
      %v5325 = vlaneseq
      %v5326 = vshrl.u32 %v5325, 7
      %v5327 = vsub.s32 0, %v5326
      %v5328 = vrot.slane %v5323, %v5327
      %v5330 = vadd.f32 %v5291, %v5328
      %v5331 = vadd.f32 %v5292, %v5328
      %v5332 = vadd.f32 %v5293, %v5328
      %v5333 = vadd.f32 %v5294, %v5328
      %v5334 = vadd.f32 %v5295, %v5328
      %v5335 = vadd.f32 %v5296, %v5328
      %v5336 = vadd.f32 %v5297, %v5328
      %v5337 = vadd.f32 %v5298, %v5328
      %v5338 = vadd.f32 %v5299, %v5328
      %v5339 = vadd.f32 %v5300, %v5328
      %v5340 = vadd.f32 %v5301, %v5328
      %v5341 = vadd.f32 %v5302, %v5328
      %v5342 = vadd.f32 %v5303, %v5328
      %v5343 = vadd.f32 %v5304, %v5328
      %v5344 = vadd.f32 %v5305, %v5328
      %v5345 = vadd.f32 %v5306, %v5328
      %v5346 = vadd.f32 %v5307, %v5328
      %v5347 = vadd.f32 %v5308, %v5328
      %v5348 = vadd.f32 %v5309, %v5328
      %v5349 = vadd.f32 %v5310, %v5328
      %v5350 = vadd.f32 %v5311, %v5328
      %v5351 = vadd.f32 %v5312, %v5328
      %v5352 = vadd.f32 %v5313, %v5328
      %v5353 = vadd.f32 %v5314, %v5328
      %v5354 = vadd.f32 %v5315, %v5328
      %v5355 = vadd.f32 %v5316, %v5328
      %v5356 = vadd.f32 %v5317, %v5328
      %v5357 = vadd.f32 %v5318, %v5328
      %v5358 = vadd.f32 %v5319, %v5328
      %v5359 = vadd.f32 %v5320, %v5328
      %v5360 = vadd.f32 %v5321, %v5328
      %v5361 = vadd.f32 %v5322, %v5328
      %v5362 = vmax.f32 %v5330, 0.0
      %v5363 = vmax.f32 %v5331, 0.0
      %v5364 = vmax.f32 %v5332, 0.0
      %v5365 = vmax.f32 %v5333, 0.0
      %v5366 = vmax.f32 %v5334, 0.0
      %v5367 = vmax.f32 %v5335, 0.0
      %v5368 = vmax.f32 %v5336, 0.0
      %v5369 = vmax.f32 %v5337, 0.0
      %v5370 = vmax.f32 %v5338, 0.0
      %v5371 = vmax.f32 %v5339, 0.0
      %v5372 = vmax.f32 %v5340, 0.0
      %v5373 = vmax.f32 %v5341, 0.0
      %v5374 = vmax.f32 %v5342, 0.0
      %v5375 = vmax.f32 %v5343, 0.0
      %v5376 = vmax.f32 %v5344, 0.0
      %v5377 = vmax.f32 %v5345, 0.0
      %v5378 = vmax.f32 %v5346, 0.0
      %v5379 = vmax.f32 %v5347, 0.0
      %v5380 = vmax.f32 %v5348, 0.0
      %v5381 = vmax.f32 %v5349, 0.0
      %v5382 = vmax.f32 %v5350, 0.0
      %v5383 = vmax.f32 %v5351, 0.0
      %v5384 = vmax.f32 %v5352, 0.0
      %v5385 = vmax.f32 %v5353, 0.0
      %v5386 = vmax.f32 %v5354, 0.0
      %v5387 = vmax.f32 %v5355, 0.0
      %v5388 = vmax.f32 %v5356, 0.0
      %v5389 = vmax.f32 %v5357, 0.0
      %v5390 = vmax.f32 %v5358, 0.0
      %v5391 = vmax.f32 %v5359, 0.0
      %v5392 = vmax.f32 %v5360, 0.0
      %v5393 = vmax.f32 %v5361, 0.0
      %v5394 = vld [vmem:[%s7] sm:$0xf]
      %v5395 = vld [vmem:[%s8] sm:$0x1]
      %v5397 = vlaneseq
      %v5398 = vshrl.u32 %v5397, 7
      %v5399 = vsub.s32 0, %v5398
      %v5400 = vrot.slane %v5395, %v5399
      %v5403 = vsel %vm833, %v5394, 0
      %5405 = vmatprep.subr.bf16.mxu0 0
      %5406 = vmatpush1.bf16.msra.mxu0 %v5403
      %5407 = vmatprep.subr.bf16.mxu0 0
      %5408 = vmatpush1.bf16.msra.mxu0 0
      %5409 = vmatprep.subr.bf16.mxu0 0
      %5410 = vmatpush1.bf16.msra.mxu0 0
      %5411 = vmatprep.subr.bf16.mxu0 0
      %5412 = vmatpush1.bf16.msra.mxu0 0
      %5413 = vmatprep.subr.bf16.mxu0 0
      %5414 = vmatpush1.bf16.msra.mxu0 0
      %5415 = vmatprep.subr.bf16.mxu0 0
      %5416 = vmatpush1.bf16.msra.mxu0 0
      %5417 = vmatprep.subr.bf16.mxu0 0
      %5418 = vmatpush1.bf16.msra.mxu0 0
      %5419 = vmatprep.subr.bf16.mxu0 0
      %5420 = vmatpush1.bf16.msra.mxu0 0
      %5421 = vmatprep.subr.bf16.mxu0 0
      %5422 = vmatpush1.bf16.msra.mxu0 0
      %5423 = vmatprep.subr.bf16.mxu0 0
      %5424 = vmatpush1.bf16.msra.mxu0 0
      %5425 = vmatprep.subr.bf16.mxu0 0
      %5426 = vmatpush1.bf16.msra.mxu0 0
      %5427 = vmatprep.subr.bf16.mxu0 0
      %5428 = vmatpush1.bf16.msra.mxu0 0
      %5429 = vmatprep.subr.bf16.mxu0 0
      %5430 = vmatpush1.bf16.msra.mxu0 0
      %5431 = vmatprep.subr.bf16.mxu0 0
      %5432 = vmatpush1.bf16.msra.mxu0 0
      %5433 = vmatprep.subr.bf16.mxu0 0
      %5434 = vmatpush1.bf16.msra.mxu0 0
      %5435 = vmatprep.subr.bf16.mxu0 0
      %5436 = vmatpush1.bf16.msra.mxu0 0
      %5437 = vmatprep.mubr.bf16.mxu0 0
      %5438 = vmatmul.mubr.bf16.gmra.mrb[0].mxu0 %v789
      %v5439 = vpop.f32.mrb[0].mxu0
      %v5440 = vadd.f32 %v5400, %v5439
      %v5441 = vpop.f32.mrb[0].mxu0
      %v5442 = vpop.f32.mrb[0].mxu0
      %v5443 = vadd.f32 %v5400, %v5442
      %v5444 = vpop.f32.mrb[0].mxu0
      %5445 = vmatprep.mubr.bf16.mxu0 0
      %5446 = vmatmul.mubr.bf16.gmra.mrb[0].mxu0 %v792
      %v5447 = vpop.f32.mrb[0].mxu0
      %v5448 = vadd.f32 %v5400, %v5447
      %v5449 = vpop.f32.mrb[0].mxu0
      %v5450 = vpop.f32.mrb[0].mxu0
      %v5451 = vadd.f32 %v5400, %v5450
      %v5452 = vpop.f32.mrb[0].mxu0
      %5453 = vmatprep.mubr.bf16.mxu0 0
      %5454 = vmatmul.mubr.bf16.gmra.mrb[0].mxu0 %v795
      %v5455 = vpop.f32.mrb[0].mxu0
      %v5456 = vadd.f32 %v5400, %v5455
      %v5457 = vpop.f32.mrb[0].mxu0
      %v5458 = vpop.f32.mrb[0].mxu0
      %v5459 = vadd.f32 %v5400, %v5458
      %v5460 = vpop.f32.mrb[0].mxu0
      %5461 = vmatprep.mubr.bf16.mxu0 0
      %5462 = vmatmul.mubr.bf16.gmra.mrb[0].mxu0 %v798
      %v5463 = vpop.f32.mrb[0].mxu0
      %v5464 = vadd.f32 %v5400, %v5463
      %v5465 = vpop.f32.mrb[0].mxu0
      %v5466 = vpop.f32.mrb[0].mxu0
      %v5467 = vadd.f32 %v5400, %v5466
      %v5468 = vpop.f32.mrb[0].mxu0
      %5469 = vmatprep.mubr.bf16.mxu0 0
      %5470 = vmatmul.mubr.bf16.gmra.mrb[0].mxu0 %v801
      %v5471 = vpop.f32.mrb[0].mxu0
      %v5472 = vadd.f32 %v5400, %v5471
      %v5473 = vpop.f32.mrb[0].mxu0
      %v5474 = vpop.f32.mrb[0].mxu0
      %v5475 = vadd.f32 %v5400, %v5474
      %v5476 = vpop.f32.mrb[0].mxu0
      %5477 = vmatprep.mubr.bf16.mxu0 0
      %5478 = vmatmul.mubr.bf16.gmra.mrb[0].mxu0 %v804
      %v5479 = vpop.f32.mrb[0].mxu0
      %v5480 = vadd.f32 %v5400, %v5479
      %v5481 = vpop.f32.mrb[0].mxu0
      %v5482 = vpop.f32.mrb[0].mxu0
      %v5483 = vadd.f32 %v5400, %v5482
      %v5484 = vpop.f32.mrb[0].mxu0
      %5485 = vmatprep.mubr.bf16.mxu0 0
      %5486 = vmatmul.mubr.bf16.gmra.mrb[0].mxu0 %v807
      %v5487 = vpop.f32.mrb[0].mxu0
      %v5488 = vadd.f32 %v5400, %v5487
      %v5489 = vpop.f32.mrb[0].mxu0
      %v5490 = vpop.f32.mrb[0].mxu0
      %v5491 = vadd.f32 %v5400, %v5490
      %v5492 = vpop.f32.mrb[0].mxu0
      %5493 = vmatprep.mubr.bf16.mxu0 0
      %5494 = vmatmul.mubr.bf16.gmra.mrb[0].mxu0 %v810
      %v5495 = vpop.f32.mrb[0].mxu0
      %v5496 = vadd.f32 %v5400, %v5495
      %v5497 = vpop.f32.mrb[0].mxu0
      %v5498 = vpop.f32.mrb[0].mxu0
      %v5499 = vadd.f32 %v5400, %v5498
      %v5500 = vpop.f32.mrb[0].mxu0
      %5501 = vmatprep.mubr.bf16.mxu0 0
      %5502 = vmatmul.mubr.bf16.gmra.mrb[0].mxu0 %v813
      %v5503 = vpop.f32.mrb[0].mxu0
      %v5504 = vadd.f32 %v5400, %v5503
      %v5505 = vpop.f32.mrb[0].mxu0
      %v5506 = vpop.f32.mrb[0].mxu0
      %v5507 = vadd.f32 %v5400, %v5506
      %v5508 = vpop.f32.mrb[0].mxu0
      %5509 = vmatprep.mubr.bf16.mxu0 0
      %5510 = vmatmul.mubr.bf16.gmra.mrb[0].mxu0 %v816
      %v5511 = vpop.f32.mrb[0].mxu0
      %v5512 = vadd.f32 %v5400, %v5511
      %v5513 = vpop.f32.mrb[0].mxu0
      %v5514 = vpop.f32.mrb[0].mxu0
      %v5515 = vadd.f32 %v5400, %v5514
      %v5516 = vpop.f32.mrb[0].mxu0
      %5517 = vmatprep.mubr.bf16.mxu0 0
      %5518 = vmatmul.mubr.bf16.gmra.mrb[0].mxu0 %v819
      %v5519 = vpop.f32.mrb[0].mxu0
      %v5520 = vadd.f32 %v5400, %v5519
      %v5521 = vpop.f32.mrb[0].mxu0
      %v5522 = vpop.f32.mrb[0].mxu0
      %v5523 = vadd.f32 %v5400, %v5522
      %v5524 = vpop.f32.mrb[0].mxu0
      %5525 = vmatprep.mubr.bf16.mxu0 0
      %5526 = vmatmul.mubr.bf16.gmra.mrb[0].mxu0 %v822
      %v5527 = vpop.f32.mrb[0].mxu0
      %v5528 = vadd.f32 %v5400, %v5527
      %v5529 = vpop.f32.mrb[0].mxu0
      %v5530 = vpop.f32.mrb[0].mxu0
      %v5531 = vadd.f32 %v5400, %v5530
      %v5532 = vpop.f32.mrb[0].mxu0
      %5533 = vmatprep.mubr.bf16.mxu0 0
      %5534 = vmatmul.mubr.bf16.gmra.mrb[0].mxu0 %v825
      %v5535 = vpop.f32.mrb[0].mxu0
      %v5536 = vadd.f32 %v5400, %v5535
      %v5537 = vpop.f32.mrb[0].mxu0
      %v5538 = vpop.f32.mrb[0].mxu0
      %v5539 = vadd.f32 %v5400, %v5538
      %v5540 = vpop.f32.mrb[0].mxu0
      %5541 = vmatprep.mubr.bf16.mxu0 0
      %5542 = vmatmul.mubr.bf16.gmra.mrb[0].mxu0 %v828
      %v5543 = vpop.f32.mrb[0].mxu0
      %v5544 = vadd.f32 %v5400, %v5543
      %v5545 = vpop.f32.mrb[0].mxu0
      %v5546 = vpop.f32.mrb[0].mxu0
      %v5547 = vadd.f32 %v5400, %v5546
      %v5548 = vpop.f32.mrb[0].mxu0
      %5549 = vmatprep.mubr.bf16.mxu0 0
      %5550 = vmatmul.mubr.bf16.gmra.mrb[0].mxu0 %v831
      %v5551 = vpop.f32.mrb[0].mxu0
      %v5552 = vadd.f32 %v5400, %v5551
      %v5553 = vpop.f32.mrb[0].mxu0
      %v5554 = vpop.f32.mrb[0].mxu0
      %v5555 = vadd.f32 %v5400, %v5554
      %v5556 = vpop.f32.mrb[0].mxu0
      %5557 = vmatprep.mubr.bf16.mxu0 0
      %5558 = vmatmul.mubr.bf16.gmra.mrb[0].mxu0 %v1675
      %v5559 = vpop.f32.mrb[0].mxu0
      %v5560 = vadd.f32 %v5400, %v5559
      %v5561 = vpop.f32.mrb[0].mxu0
      %v5562 = vpop.f32.mrb[0].mxu0
      %v5563 = vadd.f32 %v5400, %v5562
      %v5564 = vpop.f32.mrb[0].mxu0
      %5565 = vdwg.mxu0
      %v5566 = vadd.f32 %v5362, %v5440
      %v5567 = vadd.f32 %v5363, %v5443
      %v5568 = vadd.f32 %v5364, %v5448
      %v5569 = vadd.f32 %v5365, %v5451
      %v5570 = vadd.f32 %v5366, %v5456
      %v5571 = vadd.f32 %v5367, %v5459
      %v5572 = vadd.f32 %v5368, %v5464
      %v5573 = vadd.f32 %v5369, %v5467
      %v5574 = vadd.f32 %v5370, %v5472
      %v5575 = vadd.f32 %v5371, %v5475
      %v5576 = vadd.f32 %v5372, %v5480
      %v5577 = vadd.f32 %v5373, %v5483
      %v5578 = vadd.f32 %v5374, %v5488
      %v5579 = vadd.f32 %v5375, %v5491
      %v5580 = vadd.f32 %v5376, %v5496
      %v5581 = vadd.f32 %v5377, %v5499
      %v5582 = vadd.f32 %v5378, %v5504
      %v5583 = vadd.f32 %v5379, %v5507
      %v5584 = vadd.f32 %v5380, %v5512
      %v5585 = vadd.f32 %v5381, %v5515
      %v5586 = vadd.f32 %v5382, %v5520
      %v5587 = vadd.f32 %v5383, %v5523
      %v5588 = vadd.f32 %v5384, %v5528
      %v5589 = vadd.f32 %v5385, %v5531
      %v5590 = vadd.f32 %v5386, %v5536
      %v5591 = vadd.f32 %v5387, %v5539
      %v5592 = vadd.f32 %v5388, %v5544
      %v5593 = vadd.f32 %v5389, %v5547
      %v5594 = vadd.f32 %v5390, %v5552
      %v5595 = vadd.f32 %v5391, %v5555
      %v5596 = vadd.f32 %v5392, %v5560
      %v5597 = vadd.f32 %v5393, %v5563
      %5598 = vst.msk [vmem:[%s332] sm:$0xff] %vm2787, %v5566
      %5599 = vst.msk [vmem:[%s332 + $0x8] sm:$0xff] %vm2787, %v5567
      %5600 = vst.msk [vmem:[%s332 + $0x10] sm:$0xff] %vm2787, %v5568
      %5601 = vst.msk [vmem:[%s332 + $0x18] sm:$0xff] %vm2787, %v5569
      %5602 = vst.msk [vmem:[%s332 + $0x20] sm:$0xff] %vm2787, %v5570
      %5603 = vst.msk [vmem:[%s332 + $0x28] sm:$0xff] %vm2787, %v5571
      %5604 = vst.msk [vmem:[%s332 + $0x30] sm:$0xff] %vm2787, %v5572
      %5605 = vst.msk [vmem:[%s332 + $0x38] sm:$0xff] %vm2787, %v5573
      %5606 = vst.msk [vmem:[%s332 + $0x40] sm:$0xff] %vm2787, %v5574
      %5607 = vst.msk [vmem:[%s332 + $0x48] sm:$0xff] %vm2787, %v5575
      %5608 = vst.msk [vmem:[%s332 + $0x50] sm:$0xff] %vm2787, %v5576
      %5609 = vst.msk [vmem:[%s332 + $0x58] sm:$0xff] %vm2787, %v5577
      %5610 = vst.msk [vmem:[%s332 + $0x60] sm:$0xff] %vm2787, %v5578
      %5611 = vst.msk [vmem:[%s332 + $0x68] sm:$0xff] %vm2787, %v5579
      %5612 = vst.msk [vmem:[%s332 + $0x70] sm:$0xff] %vm2787, %v5580
      %5613 = vst.msk [vmem:[%s332 + $0x78] sm:$0xff] %vm2787, %v5581
      %5614 = vst.msk [vmem:[%s332 + $0x80] sm:$0xff] %vm2787, %v5582
      %5615 = vst.msk [vmem:[%s332 + $0x88] sm:$0xff] %vm2787, %v5583
      %5616 = vst.msk [vmem:[%s332 + $0x90] sm:$0xff] %vm2787, %v5584
      %5617 = vst.msk [vmem:[%s332 + $0x98] sm:$0xff] %vm2787, %v5585
      %5618 = vst.msk [vmem:[%s332 + $0xa0] sm:$0xff] %vm2787, %v5586
      %5619 = vst.msk [vmem:[%s332 + $0xa8] sm:$0xff] %vm2787, %v5587
      %5620 = vst.msk [vmem:[%s332 + $0xb0] sm:$0xff] %vm2787, %v5588
      %5621 = vst.msk [vmem:[%s332 + $0xb8] sm:$0xff] %vm2787, %v5589
      %5622 = vst.msk [vmem:[%s332 + $0xc0] sm:$0xff] %vm2787, %v5590
      %5623 = vst.msk [vmem:[%s332 + $0xc8] sm:$0xff] %vm2787, %v5591
      %5624 = vst.msk [vmem:[%s332 + $0xd0] sm:$0xff] %vm2787, %v5592
      %5625 = vst.msk [vmem:[%s332 + $0xd8] sm:$0xff] %vm2787, %v5593
      %5626 = vst.msk [vmem:[%s332 + $0xe0] sm:$0xff] %vm2787, %v5594
      %5627 = vst.msk [vmem:[%s332 + $0xe8] sm:$0xff] %vm2787, %v5595
      %5628 = vst.msk [vmem:[%s332 + $0xf0] sm:$0xff] %vm2787, %v5596
      %5629 = vst.msk [vmem:[%s332 + $0xf8] sm:$0xff] %vm2787, %v5597
      %p5630 = scmp.lt.s32.totalorder %s20, 1
      %s5631 = scalar_select %p5630, %s20, 1
      %s5632 = smul.addr %s5631, 32
      %s5633 = smul.addr %s5632, 8
      %s5634 = scalar_lea.vmem %s9, %s5633
      // Predicated region
      $region57: #{rescnn_block.1} parent=55 // pred_check
        %p5635 = pneg %p232
      $region58: #{rescnn_block.1} parent=55 // pred_check_branch
        %5637 = sbr.rel (%p5635) target = $region60
      $region59: #{rescnn_block.1} parent=55 // pred_region
        _
      $region60: #{rescnn_block.1} parent=55 // pred_fallthru
        _
    $region56: #{rescnn_block.1} parent=5 // pred_fallthru
      _
    %p5638 = scmp.le.s32.totalorder 2, %s15
    // Predicated region
    $region61: #{rescnn_block.1} parent=5 // pred_check
      %p5639 = pneg %p5638
    $region62: #{rescnn_block.1} parent=5 // pred_check_branch
      %5641 = sbr.rel (%p5639) target = $region64
    $region63: #{rescnn_block.1} parent=5 // pred_region
      %s5642 = ssub.s32 %s15, 2
      // Predicated region
      $region65: #{rescnn_block.1} parent=63 // pred_check
        %p5643 = pneg %p238
      $region66: #{rescnn_block.1} parent=63 // pred_check_branch
        %5645 = sbr.rel (%p5643) target = $region68
      $region67: #{rescnn_block.1} parent=63 // pred_region
        %p5646 = scmp.lt.s32.totalorder %s21, 1
        %s5647 = scalar_select %p5646, %s21, 1
        %s5648 = smul.addr %s5647, 32
        %s5649 = smul.addr %s5648, 8
        %s5650 = scalar_lea.vmem %s9, %s5649
      $region68: #{rescnn_block.1} parent=63 // pred_fallthru
        _
    $region64: #{rescnn_block.1} parent=5 // pred_fallthru
      _
  $region6: #{rescnn_block.1} parent=0 // loop_footer
    %s19 = sadd.s32 1, %s15
  $region7: #{rescnn_block.1} parent=0 // loop_footer_branch
    %14 = sbr.rel target = $region3
  $region8: #{rescnn_block.1} parent=0 // loop_exit
    _

</llo_original>
